<compile_context>
chip_gen: v7x
topology: tpu7x:2x2x1
jax: 0.10.0
libtpu: 0.0.40
codegen_flags: <defaults>
</compile_context>

<pallas_src>
import functools

import jax
import jax.numpy as jnp
from jax.experimental import pallas as pl
from jax.experimental.pallas import tpu as pltpu


# ------------------------------ fused kernel -------------------------------

def _lenet_kernel(cols_ref, w1_ref, w2_hbm, wf1_hbm, wf2_ref, wf3_ref,
                  bias_ref, out_ref, w2_vmem, wf1_vmem, dma_sem, *, batch):
    f32, bf16 = jnp.float32, jnp.bfloat16
    B = batch
    SH = B * 16              # rows per h value: (b, ow<16) innermost
    ROWS = 14 * SH           # valid pool1 rows
    BLK = ROWS + 16          # per-corner block (16 zero tail rows for shifts)

    # Kick off conv2 / fc1 weight DMAs: they overlap conv1+pool1 (+conv2).
    w2_cp = pltpu.make_async_copy(w2_hbm, w2_vmem, dma_sem.at[0])
    wf1_cp = pltpu.make_async_copy(wf1_hbm, wf1_vmem, dma_sem.at[1])
    w2_cp.start()
    wf1_cp.start()

    biases = bias_ref[...]                               # (8, 128) f32
    b1, b2 = biases[0:1, :], biases[1:2, :]
    bfc1, bfc2, bfc3 = biases[2:3, :], biases[3:4, :], biases[4:5, :]

    # ---- conv1 (im2col matmul) + 2x2 maxpool1 + bias + ReLU ----------------
    # cols rows: (corner q, oh, b, ow) with ow padded 14->16 and 16 zero tail
    # rows per corner block; conv1 output channels land on lanes.
    y1 = jnp.dot(cols_ref[...], w1_ref[...],
                 preferred_element_type=f32)                      # (4*BLK, 128)
    m = jnp.maximum(jnp.maximum(y1[0 * BLK:1 * BLK, :], y1[1 * BLK:2 * BLK, :]),
                    jnp.maximum(y1[2 * BLK:3 * BLK, :], y1[3 * BLK:4 * BLK, :]))
    a1 = jnp.maximum(m + b1, 0.0)          # (BLK, 128); row = h*SH + b*16 + w
    # NOTE: rows with w in {14,15} and the 16 tail rows hold relu(bias)
    # "garbage"; valid conv2 outputs never read them (w = wo+kw <= 13 < 16).

    # ---- conv2 as ONE deep-K (K=3200) matmul --------------------------------
    # Shift a1 by kw rows once per kw (bf16 cast fused into the same pass);
    # every (kh,kw) tap patch is then a contiguous 16-row-aligned slice.
    a1s = [a1[kw:kw + ROWS, :].astype(bf16) for kw in range(5)]   # (ROWS, 128)
    lhs = jnp.concatenate(
        [a1s[kw][kh * SH: kh * SH + 10 * SH, :]
         for kh in range(5) for kw in range(5)], axis=1)          # (B*160, 3200)
    w2_cp.wait()
    z2 = jnp.maximum(
        jnp.dot(lhs, w2_vmem[...], preferred_element_type=f32) + b2, 0.0)
    # z2 row = ho*SH + b*16 + wo  (wo < 10 valid)

    # ---- maxpool2, H direction: max of aligned SH-row blocks ----------------
    zh = jnp.concatenate(
        [jnp.maximum(z2[(2 * j) * SH:(2 * j + 1) * SH, :],
                     z2[(2 * j + 1) * SH:(2 * j + 2) * SH, :])
         for j in range(5)], axis=0)       # (B*80, 128); row = oh*SH + b*16 + wo

    # ---- maxpool2, W direction: zw[r] = max(zh[r], zh[r+1]) -----------------
    # Only even-wo rows of zw are read below, so the row-pair max is exact.
    zh_nxt = jnp.concatenate([zh[1:, :], zh[:1, :]], axis=0)
    zw = jnp.maximum(zh, zh_nxt)

    # ---- fc1 input gather: single lane-concat of 25 positions per sample ----
    fc_rows = []
    for b in range(B):
        base = b * 16
        fc_rows.append(jnp.concatenate(
            [zw[oh * SH + base + 2 * ow: oh * SH + base + 2 * ow + 1, :]
             for oh in range(5) for ow in range(5)], axis=1))      # (1, 3200)
    fc_in = jnp.concatenate(fc_rows, axis=0).astype(bf16)          # (B, 3200)

    # ---- fc1 / fc2 / fc3 -----------------------------------------------------
    wf1_cp.wait()
    h1 = jnp.maximum(
        jnp.dot(fc_in, wf1_vmem[...], preferred_element_type=f32) + bfc1, 0.0)
    h2 = jnp.maximum(
        jnp.dot(h1.astype(bf16), wf2_ref[...], preferred_element_type=f32)
        + bfc2, 0.0)
    out = jnp.dot(h2.astype(bf16), wf3_ref[...],
                  preferred_element_type=f32) + bfc3
    out_ref[...] = out.astype(out_ref.dtype)     # (B, 128); first 10 lanes valid


# ---------------------- host-side staging / wrapper -------------------------

def _conv1_im2col(x):
    """(B,1,28,28) -> (4*(B*224+16), 32) bf16 im2col rows for conv1.

    Row order: (pool corner q=2*hi+wi, oh, b, ow) with ow padded 14->16 plus
    16 zero rows per corner block, so pool1 is a max of 4 aligned row blocks
    and every conv2 tap patch is a contiguous 16-row-aligned slice.
    Column order: tap = kh*5+kw (C=1), padded 25->32.
    """
    B = x.shape[0]
    xp = jnp.pad(x[:, 0], ((0, 0), (2, 2), (2, 2)))                      # (B,32,32)
    pats = jnp.stack([xp[:, kh:kh + 28, kw:kw + 28]
                      for kh in range(5) for kw in range(5)], axis=-1)   # (B,28,28,25)
    pats = pats.reshape(B, 14, 2, 14, 2, 25).transpose(2, 4, 1, 0, 3, 5)  # (hi,wi,oh,b,ow,tap)
    pats = jnp.pad(pats, ((0, 0), (0, 0), (0, 0), (0, 0), (0, 2), (0, 7)))
    cols = pats.reshape(4, B * 224, 32)
    cols = jnp.pad(cols, ((0, 0), (0, 16), (0, 0)))                      # -> B*224+16
    return cols.reshape(4 * (B * 224 + 16), 32).astype(jnp.bfloat16)


def prepare_params(p):
    """One-time packing: transpose / zero-pad to 128 lanes / bf16 cast."""
    def padv(v, n=128):
        return jnp.pad(v, (0, n - v.shape[0]))

    # conv1: (o,1,kh,kw) -> (tap=kh*5+kw, o), padded (32, 128).
    w1 = jnp.transpose(p["conv1_w"][:, 0], (1, 2, 0)).reshape(25, 6)
    w1 = jnp.pad(w1, ((0, 7), (0, 122))).astype(jnp.bfloat16)

    # conv2: (o,c,kh,kw) -> (kh,kw,c,o), pad c->128 o->128, reshape (3200,128)
    # so K index = (kh*5+kw)*128 + c (matches the kernel's lane-concat order).
    w2 = jnp.transpose(p["conv2_w"], (2, 3, 1, 0))
    w2 = jnp.pad(w2, ((0, 0), (0, 0), (0, 122), (0, 112)))
    w2 = w2.reshape(3200, 128).astype(jnp.bfloat16)

    # fc1: (120, c*25+h*5+w) -> (h,w,c,o), pad c->128 o->128, reshape (3200,128)
    # so K index = (h*5+w)*128 + c (matches the fc_in lane order).
    wf1 = p["fc1_w"].reshape(120, 16, 5, 5).transpose(2, 3, 1, 0)
    wf1 = jnp.pad(wf1, ((0, 0), (0, 0), (0, 112), (0, 8)))
    wf1 = wf1.reshape(3200, 128).astype(jnp.bfloat16)

    wf2 = jnp.pad(p["fc2_w"].T, ((0, 8), (0, 44))).astype(jnp.bfloat16)    # (128,128)
    wf3 = jnp.pad(p["fc3_w"].T, ((0, 44), (0, 118))).astype(jnp.bfloat16)  # (128,128)

    bias = jnp.stack([padv(p["conv1_b"]), padv(p["conv2_b"]),
                      padv(p["fc1_b"]), padv(p["fc2_b"]), padv(p["fc3_b"])])
    bias = jnp.pad(bias, ((0, 3), (0, 0))).astype(jnp.float32)             # (8, 128)

    return {"w1": w1, "w2": w2, "wf1": wf1, "wf2": wf2, "wf3": wf3, "bias": bias}


def _lenet_forward(packed, x):
    """x: (B, 1, 28, 28) float32 -> logits (B, 10)."""
    B = x.shape[0]
    BLK = B * 224 + 16
    cols = _conv1_im2col(x)                                    # (4*BLK, 32) bf16
    kernel = functools.partial(_lenet_kernel, batch=B)
    out = pl.pallas_call(
        kernel,
        out_shape=jax.ShapeDtypeStruct((B, 128), jnp.float32),
        grid=(1,),
        in_specs=[
            pl.BlockSpec((4 * BLK, 32), lambda i: (0, 0)),      # conv1 im2col (bf16)
            pl.BlockSpec((32, 128), lambda i: (0, 0)),          # conv1 weights
            pl.BlockSpec(memory_space=pl.ANY),                  # conv2 weights (HBM)
            pl.BlockSpec(memory_space=pl.ANY),                  # fc1 weights (HBM)
            pl.BlockSpec((128, 128), lambda i: (0, 0)),         # fc2 weights
            pl.BlockSpec((128, 128), lambda i: (0, 0)),         # fc3 weights
            pl.BlockSpec((8, 128), lambda i: (0, 0)),           # biases
        ],
        out_specs=pl.BlockSpec((B, 128), lambda i: (0, 0)),
        scratch_shapes=[
            pltpu.VMEM((3200, 128), jnp.bfloat16),              # conv2 weight buffer
            pltpu.VMEM((3200, 128), jnp.bfloat16),              # fc1 weight buffer
            pltpu.SemaphoreType.DMA((2,)),
        ],
        compiler_params=pltpu.CompilerParams(
            dimension_semantics=("arbitrary",)),
    )(cols, packed["w1"], packed["w2"], packed["wf1"],
      packed["wf2"], packed["wf3"], packed["bias"])
    return out[:, :10]


lenet_forward = jax.jit(_lenet_forward)


# --------------------------- params / reference -----------------------------

def init_params(key):
    def uni(k, shape, fan_in):
        bound = 1.0 / jnp.sqrt(jnp.float32(fan_in))
        return jax.random.uniform(k, shape, jnp.float32, -bound, bound)
    ks = jax.random.split(key, 10)
    return {
        "conv1_w": uni(ks[0], (6, 1, 5, 5), 1 * 25),
        "conv1_b": uni(ks[1], (6,), 1 * 25),
        "conv2_w": uni(ks[2], (16, 6, 5, 5), 6 * 25),
        "conv2_b": uni(ks[3], (16,), 6 * 25),
        "fc1_w": uni(ks[4], (120, 400), 400),
        "fc1_b": uni(ks[5], (120,), 400),
        "fc2_w": uni(ks[6], (84, 120), 120),
        "fc2_b": uni(ks[7], (84,), 120),
        "fc3_w": uni(ks[8], (10, 84), 84),
        "fc3_b": uni(ks[9], (10,), 84),
    }


def lenet_reference(p, x):
    """Pure-JAX f32/HIGHEST reference (ground truth)."""
    hp = jax.lax.Precision.HIGHEST

    def conv(x, w, b, pad):
        y = jax.lax.conv_general_dilated(
            x, w, window_strides=(1, 1), padding=[(pad, pad), (pad, pad)],
            dimension_numbers=("NCHW", "OIHW", "NCHW"), precision=hp)
        return jax.nn.relu(y + b.reshape(1, -1, 1, 1))

    def pool(x):
        return jax.lax.reduce_window(x, -jnp.inf, jax.lax.max,
                                     (1, 1, 2, 2), (1, 1, 2, 2), "VALID")

    x = pool(conv(x, p["conv1_w"], p["conv1_b"], 2))
    x = pool(conv(x, p["conv2_w"], p["conv2_b"], 0))
    x = x.reshape(x.shape[0], -1)
    x = jax.nn.relu(jnp.dot(x, p["fc1_w"].T, precision=hp) + p["fc1_b"])
    x = jax.nn.relu(jnp.dot(x, p["fc2_w"].T, precision=hp) + p["fc2_b"])
    return jnp.dot(x, p["fc3_w"].T, precision=hp) + p["fc3_b"]


# ---------------------------------- main ------------------------------------

if __name__ == "__main__":
    key = jax.random.PRNGKey(0)
    pkey, xkey = jax.random.split(key)
    params = init_params(pkey)
    packed = prepare_params(params)           # one-time weight packing

    # Classic LeNet input: batch=2, 1 channel, 28x28 (fc1 sees 16*5*5 = 400).
    x = jax.random.normal(xkey, (2, 1, 28, 28), jnp.float32)

    out = jax.block_until_ready(lenet_forward(packed, x))
    ref = jax.block_until_ready(lenet_reference(params, x))

    assert out.shape == (2, 10), out.shape
    # Kernel uses single-pass bf16-operand MXU matmuls with f32 accumulation;
    # tolerance covers bf16 operand rounding vs. the f32/HIGHEST reference.
    max_err = float(jnp.max(jnp.abs(out - ref)))
    assert jnp.allclose(out, ref, atol=2e-2, rtol=2e-2), max_err
    print("KERNEL_OK")
</pallas_src>

<mosaic_0001>
module attributes {stable_mosaic.version = 11 : i64} {
  func.func @_lenet_kernel(%arg0: i32, %arg1: memref<1856x32xbf16, #tpu.memory_space<vmem>>, %arg2: memref<32x128xbf16, #tpu.memory_space<vmem>>, %arg3: memref<3200x128xbf16, #tpu.memory_space<any>>, %arg4: memref<3200x128xbf16, #tpu.memory_space<any>>, %arg5: memref<128x128xbf16, #tpu.memory_space<vmem>>, %arg6: memref<128x128xbf16, #tpu.memory_space<vmem>>, %arg7: memref<8x128xf32, #tpu.memory_space<vmem>>, %arg8: memref<2x128xf32, #tpu.memory_space<vmem>>, %arg9: memref<3200x128xbf16, #tpu.memory_space<vmem>>, %arg10: memref<3200x128xbf16, #tpu.memory_space<vmem>>, %arg11: memref<2x!tpu.dma_semaphore, #tpu.memory_space<semaphore_mem>>) attributes {dimension_semantics = [#tpu.dimension_semantics<arbitrary>], iteration_bounds = array<i64: 1>, scalar_prefetch = 0 : i64, scratch_operands = 3 : i64, tpu.core_type = #tpu.core_type<tc>, window_params = [{pipeline_mode = #tpu.pipeline_mode<synchronous>, transform_indices = @transform_0, window_bounds = array<i64: 1856, 32>}, {pipeline_mode = #tpu.pipeline_mode<synchronous>, transform_indices = @transform_1, window_bounds = array<i64: 32, 128>}, {}, {}, {pipeline_mode = #tpu.pipeline_mode<synchronous>, transform_indices = @transform_4, window_bounds = array<i64: 128, 128>}, {pipeline_mode = #tpu.pipeline_mode<synchronous>, transform_indices = @transform_5, window_bounds = array<i64: 128, 128>}, {pipeline_mode = #tpu.pipeline_mode<synchronous>, transform_indices = @transform_6, window_bounds = array<i64: 8, 128>}, {pipeline_mode = #tpu.pipeline_mode<synchronous>, transform_indices = @transform_7, window_bounds = array<i64: 2, 128>}]} {
    %c0_i32 = arith.constant 0 : i32
    %0 = tpu.memref_slice %arg11[%c0_i32] : memref<2x!tpu.dma_semaphore, #tpu.memory_space<semaphore_mem>> -> memref<1x!tpu.dma_semaphore, #tpu.memory_space<semaphore_mem>>
    %1 = tpu.memref_squeeze %0 : memref<1x!tpu.dma_semaphore, #tpu.memory_space<semaphore_mem>> -> memref<!tpu.dma_semaphore, #tpu.memory_space<semaphore_mem>>
    tpu.enqueue_dma source(%arg3 : memref<3200x128xbf16, #tpu.memory_space<any>>) target(%arg9 : memref<3200x128xbf16, #tpu.memory_space<vmem>>) target_semaphore(%1 : memref<!tpu.dma_semaphore, #tpu.memory_space<semaphore_mem>>)
    %c1_i32 = arith.constant 1 : i32
    %2 = tpu.memref_slice %arg11[%c1_i32] : memref<2x!tpu.dma_semaphore, #tpu.memory_space<semaphore_mem>> -> memref<1x!tpu.dma_semaphore, #tpu.memory_space<semaphore_mem>>
    %3 = tpu.memref_squeeze %2 : memref<1x!tpu.dma_semaphore, #tpu.memory_space<semaphore_mem>> -> memref<!tpu.dma_semaphore, #tpu.memory_space<semaphore_mem>>
    tpu.enqueue_dma source(%arg4 : memref<3200x128xbf16, #tpu.memory_space<any>>) target(%arg10 : memref<3200x128xbf16, #tpu.memory_space<vmem>>) target_semaphore(%3 : memref<!tpu.dma_semaphore, #tpu.memory_space<semaphore_mem>>)
    %c0 = arith.constant 0 : index
    %c0_0 = arith.constant 0 : index
    %4 = vector.load %arg7[%c0, %c0_0] : memref<8x128xf32, #tpu.memory_space<vmem>>, vector<8x128xf32>
    %5 = vector.extract_strided_slice %4 {offsets = [0, 0], sizes = [1, 128], strides = [1, 1]} : vector<8x128xf32> to vector<1x128xf32>
    %6 = vector.extract_strided_slice %4 {offsets = [1, 0], sizes = [1, 128], strides = [1, 1]} : vector<8x128xf32> to vector<1x128xf32>
    %7 = vector.extract_strided_slice %4 {offsets = [2, 0], sizes = [1, 128], strides = [1, 1]} : vector<8x128xf32> to vector<1x128xf32>
    %8 = vector.extract_strided_slice %4 {offsets = [3, 0], sizes = [1, 128], strides = [1, 1]} : vector<8x128xf32> to vector<1x128xf32>
    %9 = vector.extract_strided_slice %4 {offsets = [4, 0], sizes = [1, 128], strides = [1, 1]} : vector<8x128xf32> to vector<1x128xf32>
    %c0_1 = arith.constant 0 : index
    %c0_2 = arith.constant 0 : index
    %10 = vector.load %arg1[%c0_1, %c0_2] : memref<1856x32xbf16, #tpu.memory_space<vmem>>, vector<1856x32xbf16>
    %c0_3 = arith.constant 0 : index
    %c0_4 = arith.constant 0 : index
    %11 = vector.load %arg2[%c0_3, %c0_4] : memref<32x128xbf16, #tpu.memory_space<vmem>>, vector<32x128xbf16>
    %cst = arith.constant dense<0.000000e+00> : vector<1856x128xf32>
    %12 = tpu.matmul %10, %11, %cst {dimension_numbers = #tpu.dot_dimension_numbers<[1], [0], [0], [1], [0, 0, 1, 1], [], []>} : vector<1856x32xbf16>, vector<32x128xbf16>, vector<1856x128xf32> -> vector<1856x128xf32>
    %13 = vector.extract_strided_slice %12 {offsets = [0, 0], sizes = [464, 128], strides = [1, 1]} : vector<1856x128xf32> to vector<464x128xf32>
    %14 = vector.extract_strided_slice %12 {offsets = [464, 0], sizes = [464, 128], strides = [1, 1]} : vector<1856x128xf32> to vector<464x128xf32>
    %15 = arith.maximumf %13, %14 : vector<464x128xf32>
    %16 = vector.extract_strided_slice %12 {offsets = [928, 0], sizes = [464, 128], strides = [1, 1]} : vector<1856x128xf32> to vector<464x128xf32>
    %17 = vector.extract_strided_slice %12 {offsets = [1392, 0], sizes = [464, 128], strides = [1, 1]} : vector<1856x128xf32> to vector<464x128xf32>
    %18 = arith.maximumf %16, %17 : vector<464x128xf32>
    %19 = arith.maximumf %15, %18 : vector<464x128xf32>
    %20 = vector.broadcast %5 : vector<1x128xf32> to vector<464x128xf32>
    %21 = arith.addf %19, %20 : vector<464x128xf32>
    %cst_5 = arith.constant 0.000000e+00 : f32
    %22 = vector.broadcast %cst_5 : f32 to vector<464x128xf32>
    %23 = arith.maximumf %21, %22 : vector<464x128xf32>
    %24 = vector.extract_strided_slice %23 {offsets = [0, 0], sizes = [448, 128], strides = [1, 1]} : vector<464x128xf32> to vector<448x128xf32>
    %25 = arith.truncf %24 : vector<448x128xf32> to vector<448x128xbf16>
    %26 = vector.extract_strided_slice %23 {offsets = [1, 0], sizes = [448, 128], strides = [1, 1]} : vector<464x128xf32> to vector<448x128xf32>
    %27 = arith.truncf %26 : vector<448x128xf32> to vector<448x128xbf16>
    %28 = vector.extract_strided_slice %23 {offsets = [2, 0], sizes = [448, 128], strides = [1, 1]} : vector<464x128xf32> to vector<448x128xf32>
    %29 = arith.truncf %28 : vector<448x128xf32> to vector<448x128xbf16>
    %30 = vector.extract_strided_slice %23 {offsets = [3, 0], sizes = [448, 128], strides = [1, 1]} : vector<464x128xf32> to vector<448x128xf32>
    %31 = arith.truncf %30 : vector<448x128xf32> to vector<448x128xbf16>
    %32 = vector.extract_strided_slice %23 {offsets = [4, 0], sizes = [448, 128], strides = [1, 1]} : vector<464x128xf32> to vector<448x128xf32>
    %33 = arith.truncf %32 : vector<448x128xf32> to vector<448x128xbf16>
    %34 = vector.extract_strided_slice %25 {offsets = [0, 0], sizes = [320, 128], strides = [1, 1]} : vector<448x128xbf16> to vector<320x128xbf16>
    %35 = vector.extract_strided_slice %27 {offsets = [0, 0], sizes = [320, 128], strides = [1, 1]} : vector<448x128xbf16> to vector<320x128xbf16>
    %36 = vector.extract_strided_slice %29 {offsets = [0, 0], sizes = [320, 128], strides = [1, 1]} : vector<448x128xbf16> to vector<320x128xbf16>
    %37 = vector.extract_strided_slice %31 {offsets = [0, 0], sizes = [320, 128], strides = [1, 1]} : vector<448x128xbf16> to vector<320x128xbf16>
    %38 = vector.extract_strided_slice %33 {offsets = [0, 0], sizes = [320, 128], strides = [1, 1]} : vector<448x128xbf16> to vector<320x128xbf16>
    %39 = vector.extract_strided_slice %25 {offsets = [32, 0], sizes = [320, 128], strides = [1, 1]} : vector<448x128xbf16> to vector<320x128xbf16>
    %40 = vector.extract_strided_slice %27 {offsets = [32, 0], sizes = [320, 128], strides = [1, 1]} : vector<448x128xbf16> to vector<320x128xbf16>
    %41 = vector.extract_strided_slice %29 {offsets = [32, 0], sizes = [320, 128], strides = [1, 1]} : vector<448x128xbf16> to vector<320x128xbf16>
    %42 = vector.extract_strided_slice %31 {offsets = [32, 0], sizes = [320, 128], strides = [1, 1]} : vector<448x128xbf16> to vector<320x128xbf16>
    %43 = vector.extract_strided_slice %33 {offsets = [32, 0], sizes = [320, 128], strides = [1, 1]} : vector<448x128xbf16> to vector<320x128xbf16>
    %44 = vector.extract_strided_slice %25 {offsets = [64, 0], sizes = [320, 128], strides = [1, 1]} : vector<448x128xbf16> to vector<320x128xbf16>
    %45 = vector.extract_strided_slice %27 {offsets = [64, 0], sizes = [320, 128], strides = [1, 1]} : vector<448x128xbf16> to vector<320x128xbf16>
    %46 = vector.extract_strided_slice %29 {offsets = [64, 0], sizes = [320, 128], strides = [1, 1]} : vector<448x128xbf16> to vector<320x128xbf16>
    %47 = vector.extract_strided_slice %31 {offsets = [64, 0], sizes = [320, 128], strides = [1, 1]} : vector<448x128xbf16> to vector<320x128xbf16>
    %48 = vector.extract_strided_slice %33 {offsets = [64, 0], sizes = [320, 128], strides = [1, 1]} : vector<448x128xbf16> to vector<320x128xbf16>
    %49 = vector.extract_strided_slice %25 {offsets = [96, 0], sizes = [320, 128], strides = [1, 1]} : vector<448x128xbf16> to vector<320x128xbf16>
    %50 = vector.extract_strided_slice %27 {offsets = [96, 0], sizes = [320, 128], strides = [1, 1]} : vector<448x128xbf16> to vector<320x128xbf16>
    %51 = vector.extract_strided_slice %29 {offsets = [96, 0], sizes = [320, 128], strides = [1, 1]} : vector<448x128xbf16> to vector<320x128xbf16>
    %52 = vector.extract_strided_slice %31 {offsets = [96, 0], sizes = [320, 128], strides = [1, 1]} : vector<448x128xbf16> to vector<320x128xbf16>
    %53 = vector.extract_strided_slice %33 {offsets = [96, 0], sizes = [320, 128], strides = [1, 1]} : vector<448x128xbf16> to vector<320x128xbf16>
    %54 = vector.extract_strided_slice %25 {offsets = [128, 0], sizes = [320, 128], strides = [1, 1]} : vector<448x128xbf16> to vector<320x128xbf16>
    %55 = vector.extract_strided_slice %27 {offsets = [128, 0], sizes = [320, 128], strides = [1, 1]} : vector<448x128xbf16> to vector<320x128xbf16>
    %56 = vector.extract_strided_slice %29 {offsets = [128, 0], sizes = [320, 128], strides = [1, 1]} : vector<448x128xbf16> to vector<320x128xbf16>
    %57 = vector.extract_strided_slice %31 {offsets = [128, 0], sizes = [320, 128], strides = [1, 1]} : vector<448x128xbf16> to vector<320x128xbf16>
    %58 = vector.extract_strided_slice %33 {offsets = [128, 0], sizes = [320, 128], strides = [1, 1]} : vector<448x128xbf16> to vector<320x128xbf16>
    %59 = tpu.concatenate %34, %35, %36, %37, %38, %39, %40, %41, %42, %43, %44, %45, %46, %47, %48, %49 in 1 : vector<320x128xbf16>, vector<320x128xbf16>, vector<320x128xbf16>, vector<320x128xbf16>, vector<320x128xbf16>, vector<320x128xbf16>, vector<320x128xbf16>, vector<320x128xbf16>, vector<320x128xbf16>, vector<320x128xbf16>, vector<320x128xbf16>, vector<320x128xbf16>, vector<320x128xbf16>, vector<320x128xbf16>, vector<320x128xbf16>, vector<320x128xbf16> -> vector<320x2048xbf16>
    %60 = tpu.concatenate %50, %51, %52, %53, %54, %55, %56, %57, %58 in 1 : vector<320x128xbf16>, vector<320x128xbf16>, vector<320x128xbf16>, vector<320x128xbf16>, vector<320x128xbf16>, vector<320x128xbf16>, vector<320x128xbf16>, vector<320x128xbf16>, vector<320x128xbf16> -> vector<320x1152xbf16>
    %61 = tpu.concatenate %59, %60 in 1 : vector<320x2048xbf16>, vector<320x1152xbf16> -> vector<320x3200xbf16>
    %c0_i32_6 = arith.constant 0 : i32
    %62 = tpu.memref_slice %arg11[%c0_i32_6] : memref<2x!tpu.dma_semaphore, #tpu.memory_space<semaphore_mem>> -> memref<1x!tpu.dma_semaphore, #tpu.memory_space<semaphore_mem>>
    %63 = tpu.memref_squeeze %62 : memref<1x!tpu.dma_semaphore, #tpu.memory_space<semaphore_mem>> -> memref<!tpu.dma_semaphore, #tpu.memory_space<semaphore_mem>>
    tpu.wait_dma2 semaphore(%63 : memref<!tpu.dma_semaphore, #tpu.memory_space<semaphore_mem>>) src(%arg3 : memref<3200x128xbf16, #tpu.memory_space<any>>) dst(%arg9 : memref<3200x128xbf16, #tpu.memory_space<vmem>>)
    %c0_7 = arith.constant 0 : index
    %c0_8 = arith.constant 0 : index
    %64 = vector.load %arg9[%c0_7, %c0_8] : memref<3200x128xbf16, #tpu.memory_space<vmem>>, vector<3200x128xbf16>
    %cst_9 = arith.constant dense<0.000000e+00> : vector<320x128xf32>
    %65 = tpu.matmul %61, %64, %cst_9 {dimension_numbers = #tpu.dot_dimension_numbers<[1], [0], [0], [1], [0, 0, 1, 1], [], []>} : vector<320x3200xbf16>, vector<3200x128xbf16>, vector<320x128xf32> -> vector<320x128xf32>
    %66 = vector.broadcast %6 : vector<1x128xf32> to vector<320x128xf32>
    %67 = arith.addf %65, %66 : vector<320x128xf32>
    %cst_10 = arith.constant 0.000000e+00 : f32
    %68 = vector.broadcast %cst_10 : f32 to vector<320x128xf32>
    %69 = arith.maximumf %67, %68 : vector<320x128xf32>
    %70 = vector.extract_strided_slice %69 {offsets = [0, 0], sizes = [32, 128], strides = [1, 1]} : vector<320x128xf32> to vector<32x128xf32>
    %71 = vector.extract_strided_slice %69 {offsets = [32, 0], sizes = [32, 128], strides = [1, 1]} : vector<320x128xf32> to vector<32x128xf32>
    %72 = arith.maximumf %70, %71 : vector<32x128xf32>
    %73 = vector.extract_strided_slice %69 {offsets = [64, 0], sizes = [32, 128], strides = [1, 1]} : vector<320x128xf32> to vector<32x128xf32>
    %74 = vector.extract_strided_slice %69 {offsets = [96, 0], sizes = [32, 128], strides = [1, 1]} : vector<320x128xf32> to vector<32x128xf32>
    %75 = arith.maximumf %73, %74 : vector<32x128xf32>
    %76 = vector.extract_strided_slice %69 {offsets = [128, 0], sizes = [32, 128], strides = [1, 1]} : vector<320x128xf32> to vector<32x128xf32>
    %77 = vector.extract_strided_slice %69 {offsets = [160, 0], sizes = [32, 128], strides = [1, 1]} : vector<320x128xf32> to vector<32x128xf32>
    %78 = arith.maximumf %76, %77 : vector<32x128xf32>
    %79 = vector.extract_strided_slice %69 {offsets = [192, 0], sizes = [32, 128], strides = [1, 1]} : vector<320x128xf32> to vector<32x128xf32>
    %80 = vector.extract_strided_slice %69 {offsets = [224, 0], sizes = [32, 128], strides = [1, 1]} : vector<320x128xf32> to vector<32x128xf32>
    %81 = arith.maximumf %79, %80 : vector<32x128xf32>
    %82 = vector.extract_strided_slice %69 {offsets = [256, 0], sizes = [32, 128], strides = [1, 1]} : vector<320x128xf32> to vector<32x128xf32>
    %83 = vector.extract_strided_slice %69 {offsets = [288, 0], sizes = [32, 128], strides = [1, 1]} : vector<320x128xf32> to vector<32x128xf32>
    %84 = arith.maximumf %82, %83 : vector<32x128xf32>
    %85 = tpu.concatenate %72, %75, %78, %81, %84 in 0 : vector<32x128xf32>, vector<32x128xf32>, vector<32x128xf32>, vector<32x128xf32>, vector<32x128xf32> -> vector<160x128xf32>
    %86 = vector.extract_strided_slice %85 {offsets = [1, 0], sizes = [159, 128], strides = [1, 1]} : vector<160x128xf32> to vector<159x128xf32>
    %87 = vector.extract_strided_slice %85 {offsets = [0, 0], sizes = [1, 128], strides = [1, 1]} : vector<160x128xf32> to vector<1x128xf32>
    %88 = tpu.concatenate %86, %87 in 0 : vector<159x128xf32>, vector<1x128xf32> -> vector<160x128xf32>
    %89 = arith.maximumf %85, %88 : vector<160x128xf32>
    %90 = vector.extract_strided_slice %89 {offsets = [0, 0], sizes = [1, 128], strides = [1, 1]} : vector<160x128xf32> to vector<1x128xf32>
    %91 = vector.extract_strided_slice %89 {offsets = [2, 0], sizes = [1, 128], strides = [1, 1]} : vector<160x128xf32> to vector<1x128xf32>
    %92 = vector.extract_strided_slice %89 {offsets = [4, 0], sizes = [1, 128], strides = [1, 1]} : vector<160x128xf32> to vector<1x128xf32>
    %93 = vector.extract_strided_slice %89 {offsets = [6, 0], sizes = [1, 128], strides = [1, 1]} : vector<160x128xf32> to vector<1x128xf32>
    %94 = vector.extract_strided_slice %89 {offsets = [8, 0], sizes = [1, 128], strides = [1, 1]} : vector<160x128xf32> to vector<1x128xf32>
    %95 = vector.extract_strided_slice %89 {offsets = [32, 0], sizes = [1, 128], strides = [1, 1]} : vector<160x128xf32> to vector<1x128xf32>
    %96 = vector.extract_strided_slice %89 {offsets = [34, 0], sizes = [1, 128], strides = [1, 1]} : vector<160x128xf32> to vector<1x128xf32>
    %97 = vector.extract_strided_slice %89 {offsets = [36, 0], sizes = [1, 128], strides = [1, 1]} : vector<160x128xf32> to vector<1x128xf32>
    %98 = vector.extract_strided_slice %89 {offsets = [38, 0], sizes = [1, 128], strides = [1, 1]} : vector<160x128xf32> to vector<1x128xf32>
    %99 = vector.extract_strided_slice %89 {offsets = [40, 0], sizes = [1, 128], strides = [1, 1]} : vector<160x128xf32> to vector<1x128xf32>
    %100 = vector.extract_strided_slice %89 {offsets = [64, 0], sizes = [1, 128], strides = [1, 1]} : vector<160x128xf32> to vector<1x128xf32>
    %101 = vector.extract_strided_slice %89 {offsets = [66, 0], sizes = [1, 128], strides = [1, 1]} : vector<160x128xf32> to vector<1x128xf32>
    %102 = vector.extract_strided_slice %89 {offsets = [68, 0], sizes = [1, 128], strides = [1, 1]} : vector<160x128xf32> to vector<1x128xf32>
    %103 = vector.extract_strided_slice %89 {offsets = [70, 0], sizes = [1, 128], strides = [1, 1]} : vector<160x128xf32> to vector<1x128xf32>
    %104 = vector.extract_strided_slice %89 {offsets = [72, 0], sizes = [1, 128], strides = [1, 1]} : vector<160x128xf32> to vector<1x128xf32>
    %105 = vector.extract_strided_slice %89 {offsets = [96, 0], sizes = [1, 128], strides = [1, 1]} : vector<160x128xf32> to vector<1x128xf32>
    %106 = vector.extract_strided_slice %89 {offsets = [98, 0], sizes = [1, 128], strides = [1, 1]} : vector<160x128xf32> to vector<1x128xf32>
    %107 = vector.extract_strided_slice %89 {offsets = [100, 0], sizes = [1, 128], strides = [1, 1]} : vector<160x128xf32> to vector<1x128xf32>
    %108 = vector.extract_strided_slice %89 {offsets = [102, 0], sizes = [1, 128], strides = [1, 1]} : vector<160x128xf32> to vector<1x128xf32>
    %109 = vector.extract_strided_slice %89 {offsets = [104, 0], sizes = [1, 128], strides = [1, 1]} : vector<160x128xf32> to vector<1x128xf32>
    %110 = vector.extract_strided_slice %89 {offsets = [128, 0], sizes = [1, 128], strides = [1, 1]} : vector<160x128xf32> to vector<1x128xf32>
    %111 = vector.extract_strided_slice %89 {offsets = [130, 0], sizes = [1, 128], strides = [1, 1]} : vector<160x128xf32> to vector<1x128xf32>
    %112 = vector.extract_strided_slice %89 {offsets = [132, 0], sizes = [1, 128], strides = [1, 1]} : vector<160x128xf32> to vector<1x128xf32>
    %113 = vector.extract_strided_slice %89 {offsets = [134, 0], sizes = [1, 128], strides = [1, 1]} : vector<160x128xf32> to vector<1x128xf32>
    %114 = vector.extract_strided_slice %89 {offsets = [136, 0], sizes = [1, 128], strides = [1, 1]} : vector<160x128xf32> to vector<1x128xf32>
    %115 = tpu.concatenate %90, %91, %92, %93, %94, %95, %96, %97, %98, %99, %100, %101, %102, %103, %104, %105 in 1 : vector<1x128xf32>, vector<1x128xf32>, vector<1x128xf32>, vector<1x128xf32>, vector<1x128xf32>, vector<1x128xf32>, vector<1x128xf32>, vector<1x128xf32>, vector<1x128xf32>, vector<1x128xf32>, vector<1x128xf32>, vector<1x128xf32>, vector<1x128xf32>, vector<1x128xf32>, vector<1x128xf32>, vector<1x128xf32> -> vector<1x2048xf32>
    %116 = tpu.concatenate %106, %107, %108, %109, %110, %111, %112, %113, %114 in 1 : vector<1x128xf32>, vector<1x128xf32>, vector<1x128xf32>, vector<1x128xf32>, vector<1x128xf32>, vector<1x128xf32>, vector<1x128xf32>, vector<1x128xf32>, vector<1x128xf32> -> vector<1x1152xf32>
    %117 = tpu.concatenate %115, %116 in 1 : vector<1x2048xf32>, vector<1x1152xf32> -> vector<1x3200xf32>
    %118 = vector.extract_strided_slice %89 {offsets = [16, 0], sizes = [1, 128], strides = [1, 1]} : vector<160x128xf32> to vector<1x128xf32>
    %119 = vector.extract_strided_slice %89 {offsets = [18, 0], sizes = [1, 128], strides = [1, 1]} : vector<160x128xf32> to vector<1x128xf32>
    %120 = vector.extract_strided_slice %89 {offsets = [20, 0], sizes = [1, 128], strides = [1, 1]} : vector<160x128xf32> to vector<1x128xf32>
    %121 = vector.extract_strided_slice %89 {offsets = [22, 0], sizes = [1, 128], strides = [1, 1]} : vector<160x128xf32> to vector<1x128xf32>
    %122 = vector.extract_strided_slice %89 {offsets = [24, 0], sizes = [1, 128], strides = [1, 1]} : vector<160x128xf32> to vector<1x128xf32>
    %123 = vector.extract_strided_slice %89 {offsets = [48, 0], sizes = [1, 128], strides = [1, 1]} : vector<160x128xf32> to vector<1x128xf32>
    %124 = vector.extract_strided_slice %89 {offsets = [50, 0], sizes = [1, 128], strides = [1, 1]} : vector<160x128xf32> to vector<1x128xf32>
    %125 = vector.extract_strided_slice %89 {offsets = [52, 0], sizes = [1, 128], strides = [1, 1]} : vector<160x128xf32> to vector<1x128xf32>
    %126 = vector.extract_strided_slice %89 {offsets = [54, 0], sizes = [1, 128], strides = [1, 1]} : vector<160x128xf32> to vector<1x128xf32>
    %127 = vector.extract_strided_slice %89 {offsets = [56, 0], sizes = [1, 128], strides = [1, 1]} : vector<160x128xf32> to vector<1x128xf32>
    %128 = vector.extract_strided_slice %89 {offsets = [80, 0], sizes = [1, 128], strides = [1, 1]} : vector<160x128xf32> to vector<1x128xf32>
    %129 = vector.extract_strided_slice %89 {offsets = [82, 0], sizes = [1, 128], strides = [1, 1]} : vector<160x128xf32> to vector<1x128xf32>
    %130 = vector.extract_strided_slice %89 {offsets = [84, 0], sizes = [1, 128], strides = [1, 1]} : vector<160x128xf32> to vector<1x128xf32>
    %131 = vector.extract_strided_slice %89 {offsets = [86, 0], sizes = [1, 128], strides = [1, 1]} : vector<160x128xf32> to vector<1x128xf32>
    %132 = vector.extract_strided_slice %89 {offsets = [88, 0], sizes = [1, 128], strides = [1, 1]} : vector<160x128xf32> to vector<1x128xf32>
    %133 = vector.extract_strided_slice %89 {offsets = [112, 0], sizes = [1, 128], strides = [1, 1]} : vector<160x128xf32> to vector<1x128xf32>
    %134 = vector.extract_strided_slice %89 {offsets = [114, 0], sizes = [1, 128], strides = [1, 1]} : vector<160x128xf32> to vector<1x128xf32>
    %135 = vector.extract_strided_slice %89 {offsets = [116, 0], sizes = [1, 128], strides = [1, 1]} : vector<160x128xf32> to vector<1x128xf32>
    %136 = vector.extract_strided_slice %89 {offsets = [118, 0], sizes = [1, 128], strides = [1, 1]} : vector<160x128xf32> to vector<1x128xf32>
    %137 = vector.extract_strided_slice %89 {offsets = [120, 0], sizes = [1, 128], strides = [1, 1]} : vector<160x128xf32> to vector<1x128xf32>
    %138 = vector.extract_strided_slice %89 {offsets = [144, 0], sizes = [1, 128], strides = [1, 1]} : vector<160x128xf32> to vector<1x128xf32>
    %139 = vector.extract_strided_slice %89 {offsets = [146, 0], sizes = [1, 128], strides = [1, 1]} : vector<160x128xf32> to vector<1x128xf32>
    %140 = vector.extract_strided_slice %89 {offsets = [148, 0], sizes = [1, 128], strides = [1, 1]} : vector<160x128xf32> to vector<1x128xf32>
    %141 = vector.extract_strided_slice %89 {offsets = [150, 0], sizes = [1, 128], strides = [1, 1]} : vector<160x128xf32> to vector<1x128xf32>
    %142 = vector.extract_strided_slice %89 {offsets = [152, 0], sizes = [1, 128], strides = [1, 1]} : vector<160x128xf32> to vector<1x128xf32>
    %143 = tpu.concatenate %118, %119, %120, %121, %122, %123, %124, %125, %126, %127, %128, %129, %130, %131, %132, %133 in 1 : vector<1x128xf32>, vector<1x128xf32>, vector<1x128xf32>, vector<1x128xf32>, vector<1x128xf32>, vector<1x128xf32>, vector<1x128xf32>, vector<1x128xf32>, vector<1x128xf32>, vector<1x128xf32>, vector<1x128xf32>, vector<1x128xf32>, vector<1x128xf32>, vector<1x128xf32>, vector<1x128xf32>, vector<1x128xf32> -> vector<1x2048xf32>
    %144 = tpu.concatenate %134, %135, %136, %137, %138, %139, %140, %141, %142 in 1 : vector<1x128xf32>, vector<1x128xf32>, vector<1x128xf32>, vector<1x128xf32>, vector<1x128xf32>, vector<1x128xf32>, vector<1x128xf32>, vector<1x128xf32>, vector<1x128xf32> -> vector<1x1152xf32>
    %145 = tpu.concatenate %143, %144 in 1 : vector<1x2048xf32>, vector<1x1152xf32> -> vector<1x3200xf32>
    %146 = tpu.concatenate %117, %145 in 0 : vector<1x3200xf32>, vector<1x3200xf32> -> vector<2x3200xf32>
    %147 = arith.truncf %146 : vector<2x3200xf32> to vector<2x3200xbf16>
    %c1_i32_11 = arith.constant 1 : i32
    %148 = tpu.memref_slice %arg11[%c1_i32_11] : memref<2x!tpu.dma_semaphore, #tpu.memory_space<semaphore_mem>> -> memref<1x!tpu.dma_semaphore, #tpu.memory_space<semaphore_mem>>
    %149 = tpu.memref_squeeze %148 : memref<1x!tpu.dma_semaphore, #tpu.memory_space<semaphore_mem>> -> memref<!tpu.dma_semaphore, #tpu.memory_space<semaphore_mem>>
    tpu.wait_dma2 semaphore(%149 : memref<!tpu.dma_semaphore, #tpu.memory_space<semaphore_mem>>) src(%arg4 : memref<3200x128xbf16, #tpu.memory_space<any>>) dst(%arg10 : memref<3200x128xbf16, #tpu.memory_space<vmem>>)
    %c0_12 = arith.constant 0 : index
    %c0_13 = arith.constant 0 : index
    %150 = vector.load %arg10[%c0_12, %c0_13] : memref<3200x128xbf16, #tpu.memory_space<vmem>>, vector<3200x128xbf16>
    %cst_14 = arith.constant dense<0.000000e+00> : vector<2x128xf32>
    %151 = tpu.matmul %147, %150, %cst_14 {dimension_numbers = #tpu.dot_dimension_numbers<[1], [0], [0], [1], [0, 0, 1, 1], [], []>} : vector<2x3200xbf16>, vector<3200x128xbf16>, vector<2x128xf32> -> vector<2x128xf32>
    %152 = vector.broadcast %7 : vector<1x128xf32> to vector<2x128xf32>
    %153 = arith.addf %151, %152 : vector<2x128xf32>
    %cst_15 = arith.constant 0.000000e+00 : f32
    %154 = vector.broadcast %cst_15 : f32 to vector<2x128xf32>
    %155 = arith.maximumf %153, %154 : vector<2x128xf32>
    %156 = arith.truncf %155 : vector<2x128xf32> to vector<2x128xbf16>
    %c0_16 = arith.constant 0 : index
    %c0_17 = arith.constant 0 : index
    %157 = vector.load %arg5[%c0_16, %c0_17] : memref<128x128xbf16, #tpu.memory_space<vmem>>, vector<128x128xbf16>
    %cst_18 = arith.constant dense<0.000000e+00> : vector<2x128xf32>
    %158 = tpu.matmul %156, %157, %cst_18 {dimension_numbers = #tpu.dot_dimension_numbers<[1], [0], [0], [1], [0, 0, 1, 1], [], []>} : vector<2x128xbf16>, vector<128x128xbf16>, vector<2x128xf32> -> vector<2x128xf32>
    %159 = vector.broadcast %8 : vector<1x128xf32> to vector<2x128xf32>
    %160 = arith.addf %158, %159 : vector<2x128xf32>
    %cst_19 = arith.constant 0.000000e+00 : f32
    %161 = vector.broadcast %cst_19 : f32 to vector<2x128xf32>
    %162 = arith.maximumf %160, %161 : vector<2x128xf32>
    %163 = arith.truncf %162 : vector<2x128xf32> to vector<2x128xbf16>
    %c0_20 = arith.constant 0 : index
    %c0_21 = arith.constant 0 : index
    %164 = vector.load %arg6[%c0_20, %c0_21] : memref<128x128xbf16, #tpu.memory_space<vmem>>, vector<128x128xbf16>
    %cst_22 = arith.constant dense<0.000000e+00> : vector<2x128xf32>
    %165 = tpu.matmul %163, %164, %cst_22 {dimension_numbers = #tpu.dot_dimension_numbers<[1], [0], [0], [1], [0, 0, 1, 1], [], []>} : vector<2x128xbf16>, vector<128x128xbf16>, vector<2x128xf32> -> vector<2x128xf32>
    %166 = vector.broadcast %9 : vector<1x128xf32> to vector<2x128xf32>
    %167 = arith.addf %165, %166 : vector<2x128xf32>
    %c0_23 = arith.constant 0 : index
    %c0_24 = arith.constant 0 : index
    %168 = vector.load %arg8[%c0_23, %c0_24] : memref<2x128xf32, #tpu.memory_space<vmem>>, vector<2x128xf32>
    tpu.vector_store %arg8[%c0_23, %c0_24], %167 {strides = array<i32>} : memref<2x128xf32, #tpu.memory_space<vmem>>, vector<2x128xf32>,
    return
  }
  func.func @transform_0(%arg0: i32) -> (i32, i32) {
    %c0_i32 = arith.constant 0 : i32
    %c0_i32_0 = arith.constant 0 : i32
    %c0_i32_1 = arith.constant 0 : i32
    return %c0_i32, %c0_i32_0 : i32, i32
  }
  func.func @transform_1(%arg0: i32) -> (i32, i32) {
    %c0_i32 = arith.constant 0 : i32
    %c0_i32_0 = arith.constant 0 : i32
    %c0_i32_1 = arith.constant 0 : i32
    return %c0_i32, %c0_i32_0 : i32, i32
  }
  func.func @transform_4(%arg0: i32) -> (i32, i32) {
    %c0_i32 = arith.constant 0 : i32
    %c0_i32_0 = arith.constant 0 : i32
    %c0_i32_1 = arith.constant 0 : i32
    return %c0_i32, %c0_i32_0 : i32, i32
  }
  func.func @transform_5(%arg0: i32) -> (i32, i32) {
    %c0_i32 = arith.constant 0 : i32
    %c0_i32_0 = arith.constant 0 : i32
    %c0_i32_1 = arith.constant 0 : i32
    return %c0_i32, %c0_i32_0 : i32, i32
  }
  func.func @transform_6(%arg0: i32) -> (i32, i32) {
    %c0_i32 = arith.constant 0 : i32
    %c0_i32_0 = arith.constant 0 : i32
    %c0_i32_1 = arith.constant 0 : i32
    return %c0_i32, %c0_i32_0 : i32, i32
  }
  func.func @transform_7(%arg0: i32) -> (i32, i32) {
    %c0_i32 = arith.constant 0 : i32
    %c0_i32_0 = arith.constant 0 : i32
    %c0_i32_1 = arith.constant 0 : i32
    return %c0_i32, %c0_i32_0 : i32, i32
  }
}

</mosaic_0001>

<llo_original>
// kernel: _lenet_forward.1
$region0: #{_lenet_forward.1}
  #allocation0 [shape = 'u32[]', space=smem, size = 0x4, offset = 0x4, fixed_abs, tag = 'smem constant byte address 0x4 - core index']
  #allocation1 [shape = 'u32[144,128]{1,0:T(1,128)}', space=vmem, size = 0x12000, scoped, tag = 'internal scratch']
  #allocation2 [shape = 'bf16[3200,128]{1,0:T(16,128)(2,1)}', space=vmem, size = 0xc8000, scoped, tag = 'scratch operand']
  #allocation3 [shape = 'bf16[3200,128]{1,0:T(16,128)(2,1)}', space=vmem, size = 0xc8000, scoped, tag = 'scratch operand']
  #allocation4 [shape = 's32[2]{0}', space=sflag, size = 0x8, scoped, tag = 'scratch operand']
  #allocation7 [shape = 's32[]', space=sflag, size = 0x4, offset = 0, fixed_abs, tag = 'sflag constant byte address 0x0 - dummy sync flag']
  #allocation8 [shape = 's32[]', space=sflag, size = 0x4, offset = 0, fixed_abs, tag = 'sflag constant byte address 0x0 - dummy sync flag']
  %s0 = inlined_call_operand.vmem [shape: bf16[1856,32], index: 0, kind: input, shape index: {}]
  %s1 = inlined_call_operand.vmem [shape: bf16[32,128], index: 1, kind: input, shape index: {}]
  %s2 = inlined_call_operand.vmem [shape: bf16[3200,128], index: 2, kind: input, shape index: {}]
  %s3 = inlined_call_operand.vmem [shape: bf16[3200,128], index: 3, kind: input, shape index: {}]
  %s4 = inlined_call_operand.vmem [shape: bf16[128,128], index: 4, kind: input, shape index: {}]
  %s5 = inlined_call_operand.vmem [shape: bf16[128,128], index: 5, kind: input, shape index: {}]
  %s6 = inlined_call_operand.vmem [shape: f32[8,128], index: 6, kind: input, shape index: {}]
  %s7 = inlined_call_operand.hbm [shape: f32[2,128], index: 7, kind: output, shape index: {}]
  %s8 = sld [smem:[#allocation0]]
  $region98: #{_lenet_forward.1} parent=0
    _
  %s10 = ssub.s32 1, %s8
  %s11 = scalar_select 0, %s10, %s8
  $region1: #{_lenet_forward.1} parent=0
    #allocation5 [shape = 'u8[1024]{0}', space=vmem, size = 0x400, scoped, tag = 'output window, operand 0, single buffered']
    #allocation6 [shape = 's32[1]{0}', space=sflag, size = 0x4, scoped, tag = 'scoped memory for _lenet_forward.1']
    %12 = vsyncpa [#allocation6], 0
    // Predicated region
    $region2: #{_lenet_forward.1} parent=1 // pred_check
      _
    $region3: #{_lenet_forward.1} parent=1 // pred_check_branch
      %14 = sbr.rel (0) target = $region5
    $region4: #{_lenet_forward.1} parent=1 // pred_region
      _
    $region5: #{_lenet_forward.1} parent=1 // pred_fallthru
      _
    // Predicated region
    $region6: #{_lenet_forward.1} parent=1 // pred_check
      _
    $region7: #{_lenet_forward.1} parent=1 // pred_check_branch
      %16 = sbr.rel (0) target = $region9
    $region8: #{_lenet_forward.1} parent=1 // pred_region
      _
    $region9: #{_lenet_forward.1} parent=1 // pred_fallthru
      _
    // Predicated region
    $region10: #{_lenet_forward.1} parent=1 // pred_check
      _
    $region11: #{_lenet_forward.1} parent=1 // pred_check_branch
      %18 = sbr.rel (0) target = $region13
    $region12: #{_lenet_forward.1} parent=1 // pred_region
      _
    $region13: #{_lenet_forward.1} parent=1 // pred_fallthru
      _
    // Predicated region
    $region14: #{_lenet_forward.1} parent=1 // pred_check
      _
    $region15: #{_lenet_forward.1} parent=1 // pred_check_branch
      %20 = sbr.rel (0) target = $region17
    $region16: #{_lenet_forward.1} parent=1 // pred_region
      _
    $region17: #{_lenet_forward.1} parent=1 // pred_fallthru
      _
    // Predicated region
    $region18: #{_lenet_forward.1} parent=1 // pred_check
      _
    $region19: #{_lenet_forward.1} parent=1 // pred_check_branch
      %22 = sbr.rel (0) target = $region21
    $region20: #{_lenet_forward.1} parent=1 // pred_region
      _
    $region21: #{_lenet_forward.1} parent=1 // pred_fallthru
      _
    %p25 = scmp.lt.u32.totalorder 1600, 8
    %p26 = pneg %p25
    // Predicated region
    $region22: #{_lenet_forward.1} parent=1 // pred_check
      _
    $region23: #{_lenet_forward.1} parent=1 // pred_check_branch
      %28 = sbr.rel (%p25) target = $region25
    $region24: #{_lenet_forward.1} parent=1 // pred_region
      %s43 = sand.u32 1600, 7
      %p44 = scmp.eq.s32.totalorder %s43, 0
      // Predicated region
      $region37: #{_lenet_forward.1} parent=24 // pred_check
        %p45 = pneg %p44
      $region38: #{_lenet_forward.1} parent=24 // pred_check_branch
        %47 = sbr.rel (%p45) target = $region40
      $region39: #{_lenet_forward.1} parent=24 // pred_region
        loop: start=0, step=1, limit=1
        $region41: #{_lenet_forward.1} parent=39 // loop_pre_header
          _
        $region42: #{_lenet_forward.1} parent=39 // loop_header
          %s49 = sphi 0, %s53
          %p50 = scmp.ge.s32.totalorder %s49, 1
          %s54 = sphi %s2, %s2
          %s55 = sphi [#allocation2], [#allocation2]
        $region43: #{_lenet_forward.1} parent=39 // loop_header_branch
          %52 = sbr.rel (%p50) target = $region47
        $region44: #{_lenet_forward.1} parent=39 // loop_body
          %v56 = vld [vmem:[%s54] sm:$0xff]
          %57 = vst [vmem:[%s55] sm:$0xff] %v56
          %v58 = vld [vmem:[%s54 + $0x8] sm:$0xff]
          %59 = vst [vmem:[%s55 + $0x8] sm:$0xff] %v58
          %v60 = vld [vmem:[%s54 + $0x10] sm:$0xff]
          %61 = vst [vmem:[%s55 + $0x10] sm:$0xff] %v60
          %v62 = vld [vmem:[%s54 + $0x18] sm:$0xff]
          %63 = vst [vmem:[%s55 + $0x18] sm:$0xff] %v62
          %v64 = vld [vmem:[%s54 + $0x20] sm:$0xff]
          %65 = vst [vmem:[%s55 + $0x20] sm:$0xff] %v64
          %v66 = vld [vmem:[%s54 + $0x28] sm:$0xff]
          %67 = vst [vmem:[%s55 + $0x28] sm:$0xff] %v66
          %v68 = vld [vmem:[%s54 + $0x30] sm:$0xff]
          %69 = vst [vmem:[%s55 + $0x30] sm:$0xff] %v68
          %v70 = vld [vmem:[%s54 + $0x38] sm:$0xff]
          %71 = vst [vmem:[%s55 + $0x38] sm:$0xff] %v70
          %v72 = vld [vmem:[%s54 + $0x40] sm:$0xff]
          %73 = vst [vmem:[%s55 + $0x40] sm:$0xff] %v72
          %v74 = vld [vmem:[%s54 + $0x48] sm:$0xff]
          %75 = vst [vmem:[%s55 + $0x48] sm:$0xff] %v74
          %v76 = vld [vmem:[%s54 + $0x50] sm:$0xff]
          %77 = vst [vmem:[%s55 + $0x50] sm:$0xff] %v76
          %v78 = vld [vmem:[%s54 + $0x58] sm:$0xff]
          %79 = vst [vmem:[%s55 + $0x58] sm:$0xff] %v78
          %v80 = vld [vmem:[%s54 + $0x60] sm:$0xff]
          %81 = vst [vmem:[%s55 + $0x60] sm:$0xff] %v80
          %v82 = vld [vmem:[%s54 + $0x68] sm:$0xff]
          %83 = vst [vmem:[%s55 + $0x68] sm:$0xff] %v82
          %v84 = vld [vmem:[%s54 + $0x70] sm:$0xff]
          %85 = vst [vmem:[%s55 + $0x70] sm:$0xff] %v84
          %v86 = vld [vmem:[%s54 + $0x78] sm:$0xff]
          %87 = vst [vmem:[%s55 + $0x78] sm:$0xff] %v86
          %v88 = vld [vmem:[%s54 + $0x80] sm:$0xff]
          %89 = vst [vmem:[%s55 + $0x80] sm:$0xff] %v88
          %v90 = vld [vmem:[%s54 + $0x88] sm:$0xff]
          %91 = vst [vmem:[%s55 + $0x88] sm:$0xff] %v90
          %v92 = vld [vmem:[%s54 + $0x90] sm:$0xff]
          %93 = vst [vmem:[%s55 + $0x90] sm:$0xff] %v92
          %v94 = vld [vmem:[%s54 + $0x98] sm:$0xff]
          %95 = vst [vmem:[%s55 + $0x98] sm:$0xff] %v94
          %v96 = vld [vmem:[%s54 + $0xa0] sm:$0xff]
          %97 = vst [vmem:[%s55 + $0xa0] sm:$0xff] %v96
          %v98 = vld [vmem:[%s54 + $0xa8] sm:$0xff]
          %99 = vst [vmem:[%s55 + $0xa8] sm:$0xff] %v98
          %v100 = vld [vmem:[%s54 + $0xb0] sm:$0xff]
          %101 = vst [vmem:[%s55 + $0xb0] sm:$0xff] %v100
          %v102 = vld [vmem:[%s54 + $0xb8] sm:$0xff]
          %103 = vst [vmem:[%s55 + $0xb8] sm:$0xff] %v102
          %v104 = vld [vmem:[%s54 + $0xc0] sm:$0xff]
          %105 = vst [vmem:[%s55 + $0xc0] sm:$0xff] %v104
          %v106 = vld [vmem:[%s54 + $0xc8] sm:$0xff]
          %107 = vst [vmem:[%s55 + $0xc8] sm:$0xff] %v106
          %v108 = vld [vmem:[%s54 + $0xd0] sm:$0xff]
          %109 = vst [vmem:[%s55 + $0xd0] sm:$0xff] %v108
          %v110 = vld [vmem:[%s54 + $0xd8] sm:$0xff]
          %111 = vst [vmem:[%s55 + $0xd8] sm:$0xff] %v110
          %v112 = vld [vmem:[%s54 + $0xe0] sm:$0xff]
          %113 = vst [vmem:[%s55 + $0xe0] sm:$0xff] %v112
          %v114 = vld [vmem:[%s54 + $0xe8] sm:$0xff]
          %115 = vst [vmem:[%s55 + $0xe8] sm:$0xff] %v114
          %v116 = vld [vmem:[%s54 + $0xf0] sm:$0xff]
          %117 = vst [vmem:[%s55 + $0xf0] sm:$0xff] %v116
          %v118 = vld [vmem:[%s54 + $0xf8] sm:$0xff]
          %119 = vst [vmem:[%s55 + $0xf8] sm:$0xff] %v118
          %v120 = vld [vmem:[%s54 + $0x100] sm:$0xff]
          %121 = vst [vmem:[%s55 + $0x100] sm:$0xff] %v120
          %v122 = vld [vmem:[%s54 + $0x108] sm:$0xff]
          %123 = vst [vmem:[%s55 + $0x108] sm:$0xff] %v122
          %v124 = vld [vmem:[%s54 + $0x110] sm:$0xff]
          %125 = vst [vmem:[%s55 + $0x110] sm:$0xff] %v124
          %v126 = vld [vmem:[%s54 + $0x118] sm:$0xff]
          %127 = vst [vmem:[%s55 + $0x118] sm:$0xff] %v126
          %v128 = vld [vmem:[%s54 + $0x120] sm:$0xff]
          %129 = vst [vmem:[%s55 + $0x120] sm:$0xff] %v128
          %v130 = vld [vmem:[%s54 + $0x128] sm:$0xff]
          %131 = vst [vmem:[%s55 + $0x128] sm:$0xff] %v130
          %v132 = vld [vmem:[%s54 + $0x130] sm:$0xff]
          %133 = vst [vmem:[%s55 + $0x130] sm:$0xff] %v132
          %v134 = vld [vmem:[%s54 + $0x138] sm:$0xff]
          %135 = vst [vmem:[%s55 + $0x138] sm:$0xff] %v134
          %v136 = vld [vmem:[%s54 + $0x140] sm:$0xff]
          %137 = vst [vmem:[%s55 + $0x140] sm:$0xff] %v136
          %v138 = vld [vmem:[%s54 + $0x148] sm:$0xff]
          %139 = vst [vmem:[%s55 + $0x148] sm:$0xff] %v138
          %v140 = vld [vmem:[%s54 + $0x150] sm:$0xff]
          %141 = vst [vmem:[%s55 + $0x150] sm:$0xff] %v140
          %v142 = vld [vmem:[%s54 + $0x158] sm:$0xff]
          %143 = vst [vmem:[%s55 + $0x158] sm:$0xff] %v142
          %v144 = vld [vmem:[%s54 + $0x160] sm:$0xff]
          %145 = vst [vmem:[%s55 + $0x160] sm:$0xff] %v144
          %v146 = vld [vmem:[%s54 + $0x168] sm:$0xff]
          %147 = vst [vmem:[%s55 + $0x168] sm:$0xff] %v146
          %v148 = vld [vmem:[%s54 + $0x170] sm:$0xff]
          %149 = vst [vmem:[%s55 + $0x170] sm:$0xff] %v148
          %v150 = vld [vmem:[%s54 + $0x178] sm:$0xff]
          %151 = vst [vmem:[%s55 + $0x178] sm:$0xff] %v150
          %v152 = vld [vmem:[%s54 + $0x180] sm:$0xff]
          %153 = vst [vmem:[%s55 + $0x180] sm:$0xff] %v152
          %v154 = vld [vmem:[%s54 + $0x188] sm:$0xff]
          %155 = vst [vmem:[%s55 + $0x188] sm:$0xff] %v154
          %v156 = vld [vmem:[%s54 + $0x190] sm:$0xff]
          %157 = vst [vmem:[%s55 + $0x190] sm:$0xff] %v156
          %v158 = vld [vmem:[%s54 + $0x198] sm:$0xff]
          %159 = vst [vmem:[%s55 + $0x198] sm:$0xff] %v158
          %v160 = vld [vmem:[%s54 + $0x1a0] sm:$0xff]
          %161 = vst [vmem:[%s55 + $0x1a0] sm:$0xff] %v160
          %v162 = vld [vmem:[%s54 + $0x1a8] sm:$0xff]
          %163 = vst [vmem:[%s55 + $0x1a8] sm:$0xff] %v162
          %v164 = vld [vmem:[%s54 + $0x1b0] sm:$0xff]
          %165 = vst [vmem:[%s55 + $0x1b0] sm:$0xff] %v164
          %v166 = vld [vmem:[%s54 + $0x1b8] sm:$0xff]
          %167 = vst [vmem:[%s55 + $0x1b8] sm:$0xff] %v166
          %v168 = vld [vmem:[%s54 + $0x1c0] sm:$0xff]
          %169 = vst [vmem:[%s55 + $0x1c0] sm:$0xff] %v168
          %v170 = vld [vmem:[%s54 + $0x1c8] sm:$0xff]
          %171 = vst [vmem:[%s55 + $0x1c8] sm:$0xff] %v170
          %v172 = vld [vmem:[%s54 + $0x1d0] sm:$0xff]
          %173 = vst [vmem:[%s55 + $0x1d0] sm:$0xff] %v172
          %v174 = vld [vmem:[%s54 + $0x1d8] sm:$0xff]
          %175 = vst [vmem:[%s55 + $0x1d8] sm:$0xff] %v174
          %v176 = vld [vmem:[%s54 + $0x1e0] sm:$0xff]
          %177 = vst [vmem:[%s55 + $0x1e0] sm:$0xff] %v176
          %v178 = vld [vmem:[%s54 + $0x1e8] sm:$0xff]
          %179 = vst [vmem:[%s55 + $0x1e8] sm:$0xff] %v178
          %v180 = vld [vmem:[%s54 + $0x1f0] sm:$0xff]
          %181 = vst [vmem:[%s55 + $0x1f0] sm:$0xff] %v180
          %v182 = vld [vmem:[%s54 + $0x1f8] sm:$0xff]
          %183 = vst [vmem:[%s55 + $0x1f8] sm:$0xff] %v182
          %v184 = vld [vmem:[%s54 + $0x200] sm:$0xff]
          %185 = vst [vmem:[%s55 + $0x200] sm:$0xff] %v184
          %v186 = vld [vmem:[%s54 + $0x208] sm:$0xff]
          %187 = vst [vmem:[%s55 + $0x208] sm:$0xff] %v186
          %v188 = vld [vmem:[%s54 + $0x210] sm:$0xff]
          %189 = vst [vmem:[%s55 + $0x210] sm:$0xff] %v188
          %v190 = vld [vmem:[%s54 + $0x218] sm:$0xff]
          %191 = vst [vmem:[%s55 + $0x218] sm:$0xff] %v190
          %v192 = vld [vmem:[%s54 + $0x220] sm:$0xff]
          %193 = vst [vmem:[%s55 + $0x220] sm:$0xff] %v192
          %v194 = vld [vmem:[%s54 + $0x228] sm:$0xff]
          %195 = vst [vmem:[%s55 + $0x228] sm:$0xff] %v194
          %v196 = vld [vmem:[%s54 + $0x230] sm:$0xff]
          %197 = vst [vmem:[%s55 + $0x230] sm:$0xff] %v196
          %v198 = vld [vmem:[%s54 + $0x238] sm:$0xff]
          %199 = vst [vmem:[%s55 + $0x238] sm:$0xff] %v198
          %v200 = vld [vmem:[%s54 + $0x240] sm:$0xff]
          %201 = vst [vmem:[%s55 + $0x240] sm:$0xff] %v200
          %v202 = vld [vmem:[%s54 + $0x248] sm:$0xff]
          %203 = vst [vmem:[%s55 + $0x248] sm:$0xff] %v202
          %v204 = vld [vmem:[%s54 + $0x250] sm:$0xff]
          %205 = vst [vmem:[%s55 + $0x250] sm:$0xff] %v204
          %v206 = vld [vmem:[%s54 + $0x258] sm:$0xff]
          %207 = vst [vmem:[%s55 + $0x258] sm:$0xff] %v206
          %v208 = vld [vmem:[%s54 + $0x260] sm:$0xff]
          %209 = vst [vmem:[%s55 + $0x260] sm:$0xff] %v208
          %v210 = vld [vmem:[%s54 + $0x268] sm:$0xff]
          %211 = vst [vmem:[%s55 + $0x268] sm:$0xff] %v210
          %v212 = vld [vmem:[%s54 + $0x270] sm:$0xff]
          %213 = vst [vmem:[%s55 + $0x270] sm:$0xff] %v212
          %v214 = vld [vmem:[%s54 + $0x278] sm:$0xff]
          %215 = vst [vmem:[%s55 + $0x278] sm:$0xff] %v214
          %v216 = vld [vmem:[%s54 + $0x280] sm:$0xff]
          %217 = vst [vmem:[%s55 + $0x280] sm:$0xff] %v216
          %v218 = vld [vmem:[%s54 + $0x288] sm:$0xff]
          %219 = vst [vmem:[%s55 + $0x288] sm:$0xff] %v218
          %v220 = vld [vmem:[%s54 + $0x290] sm:$0xff]
          %221 = vst [vmem:[%s55 + $0x290] sm:$0xff] %v220
          %v222 = vld [vmem:[%s54 + $0x298] sm:$0xff]
          %223 = vst [vmem:[%s55 + $0x298] sm:$0xff] %v222
          %v224 = vld [vmem:[%s54 + $0x2a0] sm:$0xff]
          %225 = vst [vmem:[%s55 + $0x2a0] sm:$0xff] %v224
          %v226 = vld [vmem:[%s54 + $0x2a8] sm:$0xff]
          %227 = vst [vmem:[%s55 + $0x2a8] sm:$0xff] %v226
          %v228 = vld [vmem:[%s54 + $0x2b0] sm:$0xff]
          %229 = vst [vmem:[%s55 + $0x2b0] sm:$0xff] %v228
          %v230 = vld [vmem:[%s54 + $0x2b8] sm:$0xff]
          %231 = vst [vmem:[%s55 + $0x2b8] sm:$0xff] %v230
          %v232 = vld [vmem:[%s54 + $0x2c0] sm:$0xff]
          %233 = vst [vmem:[%s55 + $0x2c0] sm:$0xff] %v232
          %v234 = vld [vmem:[%s54 + $0x2c8] sm:$0xff]
          %235 = vst [vmem:[%s55 + $0x2c8] sm:$0xff] %v234
          %v236 = vld [vmem:[%s54 + $0x2d0] sm:$0xff]
          %237 = vst [vmem:[%s55 + $0x2d0] sm:$0xff] %v236
          %v238 = vld [vmem:[%s54 + $0x2d8] sm:$0xff]
          %239 = vst [vmem:[%s55 + $0x2d8] sm:$0xff] %v238
          %v240 = vld [vmem:[%s54 + $0x2e0] sm:$0xff]
          %241 = vst [vmem:[%s55 + $0x2e0] sm:$0xff] %v240
          %v242 = vld [vmem:[%s54 + $0x2e8] sm:$0xff]
          %243 = vst [vmem:[%s55 + $0x2e8] sm:$0xff] %v242
          %v244 = vld [vmem:[%s54 + $0x2f0] sm:$0xff]
          %245 = vst [vmem:[%s55 + $0x2f0] sm:$0xff] %v244
          %v246 = vld [vmem:[%s54 + $0x2f8] sm:$0xff]
          %247 = vst [vmem:[%s55 + $0x2f8] sm:$0xff] %v246
          %v248 = vld [vmem:[%s54 + $0x300] sm:$0xff]
          %249 = vst [vmem:[%s55 + $0x300] sm:$0xff] %v248
          %v250 = vld [vmem:[%s54 + $0x308] sm:$0xff]
          %251 = vst [vmem:[%s55 + $0x308] sm:$0xff] %v250
          %v252 = vld [vmem:[%s54 + $0x310] sm:$0xff]
          %253 = vst [vmem:[%s55 + $0x310] sm:$0xff] %v252
          %v254 = vld [vmem:[%s54 + $0x318] sm:$0xff]
          %255 = vst [vmem:[%s55 + $0x318] sm:$0xff] %v254
          %v256 = vld [vmem:[%s54 + $0x320] sm:$0xff]
          %257 = vst [vmem:[%s55 + $0x320] sm:$0xff] %v256
          %v258 = vld [vmem:[%s54 + $0x328] sm:$0xff]
          %259 = vst [vmem:[%s55 + $0x328] sm:$0xff] %v258
          %v260 = vld [vmem:[%s54 + $0x330] sm:$0xff]
          %261 = vst [vmem:[%s55 + $0x330] sm:$0xff] %v260
          %v262 = vld [vmem:[%s54 + $0x338] sm:$0xff]
          %263 = vst [vmem:[%s55 + $0x338] sm:$0xff] %v262
          %v264 = vld [vmem:[%s54 + $0x340] sm:$0xff]
          %265 = vst [vmem:[%s55 + $0x340] sm:$0xff] %v264
          %v266 = vld [vmem:[%s54 + $0x348] sm:$0xff]
          %267 = vst [vmem:[%s55 + $0x348] sm:$0xff] %v266
          %v268 = vld [vmem:[%s54 + $0x350] sm:$0xff]
          %269 = vst [vmem:[%s55 + $0x350] sm:$0xff] %v268
          %v270 = vld [vmem:[%s54 + $0x358] sm:$0xff]
          %271 = vst [vmem:[%s55 + $0x358] sm:$0xff] %v270
          %v272 = vld [vmem:[%s54 + $0x360] sm:$0xff]
          %273 = vst [vmem:[%s55 + $0x360] sm:$0xff] %v272
          %v274 = vld [vmem:[%s54 + $0x368] sm:$0xff]
          %275 = vst [vmem:[%s55 + $0x368] sm:$0xff] %v274
          %v276 = vld [vmem:[%s54 + $0x370] sm:$0xff]
          %277 = vst [vmem:[%s55 + $0x370] sm:$0xff] %v276
          %v278 = vld [vmem:[%s54 + $0x378] sm:$0xff]
          %279 = vst [vmem:[%s55 + $0x378] sm:$0xff] %v278
          %v280 = vld [vmem:[%s54 + $0x380] sm:$0xff]
          %281 = vst [vmem:[%s55 + $0x380] sm:$0xff] %v280
          %v282 = vld [vmem:[%s54 + $0x388] sm:$0xff]
          %283 = vst [vmem:[%s55 + $0x388] sm:$0xff] %v282
          %v284 = vld [vmem:[%s54 + $0x390] sm:$0xff]
          %285 = vst [vmem:[%s55 + $0x390] sm:$0xff] %v284
          %v286 = vld [vmem:[%s54 + $0x398] sm:$0xff]
          %287 = vst [vmem:[%s55 + $0x398] sm:$0xff] %v286
          %v288 = vld [vmem:[%s54 + $0x3a0] sm:$0xff]
          %289 = vst [vmem:[%s55 + $0x3a0] sm:$0xff] %v288
          %v290 = vld [vmem:[%s54 + $0x3a8] sm:$0xff]
          %291 = vst [vmem:[%s55 + $0x3a8] sm:$0xff] %v290
          %v292 = vld [vmem:[%s54 + $0x3b0] sm:$0xff]
          %293 = vst [vmem:[%s55 + $0x3b0] sm:$0xff] %v292
          %v294 = vld [vmem:[%s54 + $0x3b8] sm:$0xff]
          %295 = vst [vmem:[%s55 + $0x3b8] sm:$0xff] %v294
          %v296 = vld [vmem:[%s54 + $0x3c0] sm:$0xff]
          %297 = vst [vmem:[%s55 + $0x3c0] sm:$0xff] %v296
          %v298 = vld [vmem:[%s54 + $0x3c8] sm:$0xff]
          %299 = vst [vmem:[%s55 + $0x3c8] sm:$0xff] %v298
          %v300 = vld [vmem:[%s54 + $0x3d0] sm:$0xff]
          %301 = vst [vmem:[%s55 + $0x3d0] sm:$0xff] %v300
          %v302 = vld [vmem:[%s54 + $0x3d8] sm:$0xff]
          %303 = vst [vmem:[%s55 + $0x3d8] sm:$0xff] %v302
          %v304 = vld [vmem:[%s54 + $0x3e0] sm:$0xff]
          %305 = vst [vmem:[%s55 + $0x3e0] sm:$0xff] %v304
          %v306 = vld [vmem:[%s54 + $0x3e8] sm:$0xff]
          %307 = vst [vmem:[%s55 + $0x3e8] sm:$0xff] %v306
          %v308 = vld [vmem:[%s54 + $0x3f0] sm:$0xff]
          %309 = vst [vmem:[%s55 + $0x3f0] sm:$0xff] %v308
          %v310 = vld [vmem:[%s54 + $0x3f8] sm:$0xff]
          %311 = vst [vmem:[%s55 + $0x3f8] sm:$0xff] %v310
          %v312 = vld [vmem:[%s54 + $0x400] sm:$0xff]
          %313 = vst [vmem:[%s55 + $0x400] sm:$0xff] %v312
          %v314 = vld [vmem:[%s54 + $0x408] sm:$0xff]
          %315 = vst [vmem:[%s55 + $0x408] sm:$0xff] %v314
          %v316 = vld [vmem:[%s54 + $0x410] sm:$0xff]
          %317 = vst [vmem:[%s55 + $0x410] sm:$0xff] %v316
          %v318 = vld [vmem:[%s54 + $0x418] sm:$0xff]
          %319 = vst [vmem:[%s55 + $0x418] sm:$0xff] %v318
          %v320 = vld [vmem:[%s54 + $0x420] sm:$0xff]
          %321 = vst [vmem:[%s55 + $0x420] sm:$0xff] %v320
          %v322 = vld [vmem:[%s54 + $0x428] sm:$0xff]
          %323 = vst [vmem:[%s55 + $0x428] sm:$0xff] %v322
          %v324 = vld [vmem:[%s54 + $0x430] sm:$0xff]
          %325 = vst [vmem:[%s55 + $0x430] sm:$0xff] %v324
          %v326 = vld [vmem:[%s54 + $0x438] sm:$0xff]
          %327 = vst [vmem:[%s55 + $0x438] sm:$0xff] %v326
          %v328 = vld [vmem:[%s54 + $0x440] sm:$0xff]
          %329 = vst [vmem:[%s55 + $0x440] sm:$0xff] %v328
          %v330 = vld [vmem:[%s54 + $0x448] sm:$0xff]
          %331 = vst [vmem:[%s55 + $0x448] sm:$0xff] %v330
          %v332 = vld [vmem:[%s54 + $0x450] sm:$0xff]
          %333 = vst [vmem:[%s55 + $0x450] sm:$0xff] %v332
          %v334 = vld [vmem:[%s54 + $0x458] sm:$0xff]
          %335 = vst [vmem:[%s55 + $0x458] sm:$0xff] %v334
          %v336 = vld [vmem:[%s54 + $0x460] sm:$0xff]
          %337 = vst [vmem:[%s55 + $0x460] sm:$0xff] %v336
          %v338 = vld [vmem:[%s54 + $0x468] sm:$0xff]
          %339 = vst [vmem:[%s55 + $0x468] sm:$0xff] %v338
          %v340 = vld [vmem:[%s54 + $0x470] sm:$0xff]
          %341 = vst [vmem:[%s55 + $0x470] sm:$0xff] %v340
          %v342 = vld [vmem:[%s54 + $0x478] sm:$0xff]
          %343 = vst [vmem:[%s55 + $0x478] sm:$0xff] %v342
          %v344 = vld [vmem:[%s54 + $0x480] sm:$0xff]
          %345 = vst [vmem:[%s55 + $0x480] sm:$0xff] %v344
          %v346 = vld [vmem:[%s54 + $0x488] sm:$0xff]
          %347 = vst [vmem:[%s55 + $0x488] sm:$0xff] %v346
          %v348 = vld [vmem:[%s54 + $0x490] sm:$0xff]
          %349 = vst [vmem:[%s55 + $0x490] sm:$0xff] %v348
          %v350 = vld [vmem:[%s54 + $0x498] sm:$0xff]
          %351 = vst [vmem:[%s55 + $0x498] sm:$0xff] %v350
          %v352 = vld [vmem:[%s54 + $0x4a0] sm:$0xff]
          %353 = vst [vmem:[%s55 + $0x4a0] sm:$0xff] %v352
          %v354 = vld [vmem:[%s54 + $0x4a8] sm:$0xff]
          %355 = vst [vmem:[%s55 + $0x4a8] sm:$0xff] %v354
          %v356 = vld [vmem:[%s54 + $0x4b0] sm:$0xff]
          %357 = vst [vmem:[%s55 + $0x4b0] sm:$0xff] %v356
          %v358 = vld [vmem:[%s54 + $0x4b8] sm:$0xff]
          %359 = vst [vmem:[%s55 + $0x4b8] sm:$0xff] %v358
          %v360 = vld [vmem:[%s54 + $0x4c0] sm:$0xff]
          %361 = vst [vmem:[%s55 + $0x4c0] sm:$0xff] %v360
          %v362 = vld [vmem:[%s54 + $0x4c8] sm:$0xff]
          %363 = vst [vmem:[%s55 + $0x4c8] sm:$0xff] %v362
          %v364 = vld [vmem:[%s54 + $0x4d0] sm:$0xff]
          %365 = vst [vmem:[%s55 + $0x4d0] sm:$0xff] %v364
          %v366 = vld [vmem:[%s54 + $0x4d8] sm:$0xff]
          %367 = vst [vmem:[%s55 + $0x4d8] sm:$0xff] %v366
          %v368 = vld [vmem:[%s54 + $0x4e0] sm:$0xff]
          %369 = vst [vmem:[%s55 + $0x4e0] sm:$0xff] %v368
          %v370 = vld [vmem:[%s54 + $0x4e8] sm:$0xff]
          %371 = vst [vmem:[%s55 + $0x4e8] sm:$0xff] %v370
          %v372 = vld [vmem:[%s54 + $0x4f0] sm:$0xff]
          %373 = vst [vmem:[%s55 + $0x4f0] sm:$0xff] %v372
          %v374 = vld [vmem:[%s54 + $0x4f8] sm:$0xff]
          %375 = vst [vmem:[%s55 + $0x4f8] sm:$0xff] %v374
          %v376 = vld [vmem:[%s54 + $0x500] sm:$0xff]
          %377 = vst [vmem:[%s55 + $0x500] sm:$0xff] %v376
          %v378 = vld [vmem:[%s54 + $0x508] sm:$0xff]
          %379 = vst [vmem:[%s55 + $0x508] sm:$0xff] %v378
          %v380 = vld [vmem:[%s54 + $0x510] sm:$0xff]
          %381 = vst [vmem:[%s55 + $0x510] sm:$0xff] %v380
          %v382 = vld [vmem:[%s54 + $0x518] sm:$0xff]
          %383 = vst [vmem:[%s55 + $0x518] sm:$0xff] %v382
          %v384 = vld [vmem:[%s54 + $0x520] sm:$0xff]
          %385 = vst [vmem:[%s55 + $0x520] sm:$0xff] %v384
          %v386 = vld [vmem:[%s54 + $0x528] sm:$0xff]
          %387 = vst [vmem:[%s55 + $0x528] sm:$0xff] %v386
          %v388 = vld [vmem:[%s54 + $0x530] sm:$0xff]
          %389 = vst [vmem:[%s55 + $0x530] sm:$0xff] %v388
          %v390 = vld [vmem:[%s54 + $0x538] sm:$0xff]
          %391 = vst [vmem:[%s55 + $0x538] sm:$0xff] %v390
          %v392 = vld [vmem:[%s54 + $0x540] sm:$0xff]
          %393 = vst [vmem:[%s55 + $0x540] sm:$0xff] %v392
          %v394 = vld [vmem:[%s54 + $0x548] sm:$0xff]
          %395 = vst [vmem:[%s55 + $0x548] sm:$0xff] %v394
          %v396 = vld [vmem:[%s54 + $0x550] sm:$0xff]
          %397 = vst [vmem:[%s55 + $0x550] sm:$0xff] %v396
          %v398 = vld [vmem:[%s54 + $0x558] sm:$0xff]
          %399 = vst [vmem:[%s55 + $0x558] sm:$0xff] %v398
          %v400 = vld [vmem:[%s54 + $0x560] sm:$0xff]
          %401 = vst [vmem:[%s55 + $0x560] sm:$0xff] %v400
          %v402 = vld [vmem:[%s54 + $0x568] sm:$0xff]
          %403 = vst [vmem:[%s55 + $0x568] sm:$0xff] %v402
          %v404 = vld [vmem:[%s54 + $0x570] sm:$0xff]
          %405 = vst [vmem:[%s55 + $0x570] sm:$0xff] %v404
          %v406 = vld [vmem:[%s54 + $0x578] sm:$0xff]
          %407 = vst [vmem:[%s55 + $0x578] sm:$0xff] %v406
          %v408 = vld [vmem:[%s54 + $0x580] sm:$0xff]
          %409 = vst [vmem:[%s55 + $0x580] sm:$0xff] %v408
          %v410 = vld [vmem:[%s54 + $0x588] sm:$0xff]
          %411 = vst [vmem:[%s55 + $0x588] sm:$0xff] %v410
          %v412 = vld [vmem:[%s54 + $0x590] sm:$0xff]
          %413 = vst [vmem:[%s55 + $0x590] sm:$0xff] %v412
          %v414 = vld [vmem:[%s54 + $0x598] sm:$0xff]
          %415 = vst [vmem:[%s55 + $0x598] sm:$0xff] %v414
          %v416 = vld [vmem:[%s54 + $0x5a0] sm:$0xff]
          %417 = vst [vmem:[%s55 + $0x5a0] sm:$0xff] %v416
          %v418 = vld [vmem:[%s54 + $0x5a8] sm:$0xff]
          %419 = vst [vmem:[%s55 + $0x5a8] sm:$0xff] %v418
          %v420 = vld [vmem:[%s54 + $0x5b0] sm:$0xff]
          %421 = vst [vmem:[%s55 + $0x5b0] sm:$0xff] %v420
          %v422 = vld [vmem:[%s54 + $0x5b8] sm:$0xff]
          %423 = vst [vmem:[%s55 + $0x5b8] sm:$0xff] %v422
          %v424 = vld [vmem:[%s54 + $0x5c0] sm:$0xff]
          %425 = vst [vmem:[%s55 + $0x5c0] sm:$0xff] %v424
          %v426 = vld [vmem:[%s54 + $0x5c8] sm:$0xff]
          %427 = vst [vmem:[%s55 + $0x5c8] sm:$0xff] %v426
          %v428 = vld [vmem:[%s54 + $0x5d0] sm:$0xff]
          %429 = vst [vmem:[%s55 + $0x5d0] sm:$0xff] %v428
          %v430 = vld [vmem:[%s54 + $0x5d8] sm:$0xff]
          %431 = vst [vmem:[%s55 + $0x5d8] sm:$0xff] %v430
          %v432 = vld [vmem:[%s54 + $0x5e0] sm:$0xff]
          %433 = vst [vmem:[%s55 + $0x5e0] sm:$0xff] %v432
          %v434 = vld [vmem:[%s54 + $0x5e8] sm:$0xff]
          %435 = vst [vmem:[%s55 + $0x5e8] sm:$0xff] %v434
          %v436 = vld [vmem:[%s54 + $0x5f0] sm:$0xff]
          %437 = vst [vmem:[%s55 + $0x5f0] sm:$0xff] %v436
          %v438 = vld [vmem:[%s54 + $0x5f8] sm:$0xff]
          %439 = vst [vmem:[%s55 + $0x5f8] sm:$0xff] %v438
          %v440 = vld [vmem:[%s54 + $0x600] sm:$0xff]
          %441 = vst [vmem:[%s55 + $0x600] sm:$0xff] %v440
          %v442 = vld [vmem:[%s54 + $0x608] sm:$0xff]
          %443 = vst [vmem:[%s55 + $0x608] sm:$0xff] %v442
          %v444 = vld [vmem:[%s54 + $0x610] sm:$0xff]
          %445 = vst [vmem:[%s55 + $0x610] sm:$0xff] %v444
          %v446 = vld [vmem:[%s54 + $0x618] sm:$0xff]
          %447 = vst [vmem:[%s55 + $0x618] sm:$0xff] %v446
          %v448 = vld [vmem:[%s54 + $0x620] sm:$0xff]
          %449 = vst [vmem:[%s55 + $0x620] sm:$0xff] %v448
          %v450 = vld [vmem:[%s54 + $0x628] sm:$0xff]
          %451 = vst [vmem:[%s55 + $0x628] sm:$0xff] %v450
          %v452 = vld [vmem:[%s54 + $0x630] sm:$0xff]
          %453 = vst [vmem:[%s55 + $0x630] sm:$0xff] %v452
          %v454 = vld [vmem:[%s54 + $0x638] sm:$0xff]
          %455 = vst [vmem:[%s55 + $0x638] sm:$0xff] %v454
        $region45: #{_lenet_forward.1} parent=39 // loop_footer
          %s53 = sadd.s32 1, %s49
        $region46: #{_lenet_forward.1} parent=39 // loop_footer_branch
          %48 = sbr.rel target = $region42
        $region47: #{_lenet_forward.1} parent=39 // loop_exit
          _
      $region40: #{_lenet_forward.1} parent=24 // pred_fallthru
        _
      %p456 = pneg %p44
      // Predicated region
      $region48: #{_lenet_forward.1} parent=24 // pred_check
        _
      $region49: #{_lenet_forward.1} parent=24 // pred_check_branch
        %458 = sbr.rel (%p44) target = $region51
      $region50: #{_lenet_forward.1} parent=24 // pred_region
        %s459 = sand.u32 1600, 7
      $region51: #{_lenet_forward.1} parent=24 // pred_fallthru
        _
    $region25: #{_lenet_forward.1} parent=1 // pred_fallthru
      _
    // Predicated region
    $region26: #{_lenet_forward.1} parent=1 // pred_check
      %p29 = pneg %p25
    $region27: #{_lenet_forward.1} parent=1 // pred_check_branch
      %31 = sbr.rel (%p29) target = $region29
    $region28: #{_lenet_forward.1} parent=1 // pred_region
      %s32 = sshllo.u32 0, 1600
      loop: start=0, step=1, limit=1
      $region30: #{_lenet_forward.1} parent=28 // loop_pre_header
        _
      $region31: #{_lenet_forward.1} parent=28 // loop_header
        %s34 = sphi 0, %s38
        %p35 = scmp.ge.s32.totalorder %s34, 1
        %s39 = sphi %s2, %s2
        %s40 = sphi [#allocation2], [#allocation2]
      $region32: #{_lenet_forward.1} parent=28 // loop_header_branch
        %37 = sbr.rel (%p35) target = $region36
      $region33: #{_lenet_forward.1} parent=28 // loop_body
        %v41 = vld [vmem:[%s39] sm:%s32]
        %42 = vst [vmem:[%s40] sm:%s32] %v41
      $region34: #{_lenet_forward.1} parent=28 // loop_footer
        %s38 = sadd.s32 1, %s34
      $region35: #{_lenet_forward.1} parent=28 // loop_footer_branch
        %33 = sbr.rel target = $region31
      $region36: #{_lenet_forward.1} parent=28 // loop_exit
        _
    $region29: #{_lenet_forward.1} parent=1 // pred_fallthru
      _
    // Predicated region
    $region52: #{_lenet_forward.1} parent=1 // pred_check
      _
    $region53: #{_lenet_forward.1} parent=1 // pred_check_branch
      %462 = sbr.rel (0) target = $region55
    $region54: #{_lenet_forward.1} parent=1 // pred_region
      %463 = vsyncadd [#allocation4], 25600
    $region55: #{_lenet_forward.1} parent=1 // pred_fallthru
      _
    %s464 = scalar_lea.sflag [#allocation4], 1
    %p466 = scmp.lt.u32.totalorder 1600, 8
    %p467 = pneg %p466
    // Predicated region
    $region56: #{_lenet_forward.1} parent=1 // pred_check
      _
    $region57: #{_lenet_forward.1} parent=1 // pred_check_branch
      %469 = sbr.rel (%p466) target = $region59
    $region58: #{_lenet_forward.1} parent=1 // pred_region
      %s484 = sand.u32 1600, 7
      %p485 = scmp.eq.s32.totalorder %s484, 0
      // Predicated region
      $region71: #{_lenet_forward.1} parent=58 // pred_check
        %p486 = pneg %p485
      $region72: #{_lenet_forward.1} parent=58 // pred_check_branch
        %488 = sbr.rel (%p486) target = $region74
      $region73: #{_lenet_forward.1} parent=58 // pred_region
        loop: start=0, step=1, limit=1
        $region75: #{_lenet_forward.1} parent=73 // loop_pre_header
          _
        $region76: #{_lenet_forward.1} parent=73 // loop_header
          %s490 = sphi 0, %s494
          %p491 = scmp.ge.s32.totalorder %s490, 1
          %s495 = sphi %s3, %s3
          %s496 = sphi [#allocation3], [#allocation3]
        $region77: #{_lenet_forward.1} parent=73 // loop_header_branch
          %493 = sbr.rel (%p491) target = $region81
        $region78: #{_lenet_forward.1} parent=73 // loop_body
          %v497 = vld [vmem:[%s495] sm:$0xff]
          %498 = vst [vmem:[%s496] sm:$0xff] %v497
          %v499 = vld [vmem:[%s495 + $0x8] sm:$0xff]
          %500 = vst [vmem:[%s496 + $0x8] sm:$0xff] %v499
          %v501 = vld [vmem:[%s495 + $0x10] sm:$0xff]
          %502 = vst [vmem:[%s496 + $0x10] sm:$0xff] %v501
          %v503 = vld [vmem:[%s495 + $0x18] sm:$0xff]
          %504 = vst [vmem:[%s496 + $0x18] sm:$0xff] %v503
          %v505 = vld [vmem:[%s495 + $0x20] sm:$0xff]
          %506 = vst [vmem:[%s496 + $0x20] sm:$0xff] %v505
          %v507 = vld [vmem:[%s495 + $0x28] sm:$0xff]
          %508 = vst [vmem:[%s496 + $0x28] sm:$0xff] %v507
          %v509 = vld [vmem:[%s495 + $0x30] sm:$0xff]
          %510 = vst [vmem:[%s496 + $0x30] sm:$0xff] %v509
          %v511 = vld [vmem:[%s495 + $0x38] sm:$0xff]
          %512 = vst [vmem:[%s496 + $0x38] sm:$0xff] %v511
          %v513 = vld [vmem:[%s495 + $0x40] sm:$0xff]
          %514 = vst [vmem:[%s496 + $0x40] sm:$0xff] %v513
          %v515 = vld [vmem:[%s495 + $0x48] sm:$0xff]
          %516 = vst [vmem:[%s496 + $0x48] sm:$0xff] %v515
          %v517 = vld [vmem:[%s495 + $0x50] sm:$0xff]
          %518 = vst [vmem:[%s496 + $0x50] sm:$0xff] %v517
          %v519 = vld [vmem:[%s495 + $0x58] sm:$0xff]
          %520 = vst [vmem:[%s496 + $0x58] sm:$0xff] %v519
          %v521 = vld [vmem:[%s495 + $0x60] sm:$0xff]
          %522 = vst [vmem:[%s496 + $0x60] sm:$0xff] %v521
          %v523 = vld [vmem:[%s495 + $0x68] sm:$0xff]
          %524 = vst [vmem:[%s496 + $0x68] sm:$0xff] %v523
          %v525 = vld [vmem:[%s495 + $0x70] sm:$0xff]
          %526 = vst [vmem:[%s496 + $0x70] sm:$0xff] %v525
          %v527 = vld [vmem:[%s495 + $0x78] sm:$0xff]
          %528 = vst [vmem:[%s496 + $0x78] sm:$0xff] %v527
          %v529 = vld [vmem:[%s495 + $0x80] sm:$0xff]
          %530 = vst [vmem:[%s496 + $0x80] sm:$0xff] %v529
          %v531 = vld [vmem:[%s495 + $0x88] sm:$0xff]
          %532 = vst [vmem:[%s496 + $0x88] sm:$0xff] %v531
          %v533 = vld [vmem:[%s495 + $0x90] sm:$0xff]
          %534 = vst [vmem:[%s496 + $0x90] sm:$0xff] %v533
          %v535 = vld [vmem:[%s495 + $0x98] sm:$0xff]
          %536 = vst [vmem:[%s496 + $0x98] sm:$0xff] %v535
          %v537 = vld [vmem:[%s495 + $0xa0] sm:$0xff]
          %538 = vst [vmem:[%s496 + $0xa0] sm:$0xff] %v537
          %v539 = vld [vmem:[%s495 + $0xa8] sm:$0xff]
          %540 = vst [vmem:[%s496 + $0xa8] sm:$0xff] %v539
          %v541 = vld [vmem:[%s495 + $0xb0] sm:$0xff]
          %542 = vst [vmem:[%s496 + $0xb0] sm:$0xff] %v541
          %v543 = vld [vmem:[%s495 + $0xb8] sm:$0xff]
          %544 = vst [vmem:[%s496 + $0xb8] sm:$0xff] %v543
          %v545 = vld [vmem:[%s495 + $0xc0] sm:$0xff]
          %546 = vst [vmem:[%s496 + $0xc0] sm:$0xff] %v545
          %v547 = vld [vmem:[%s495 + $0xc8] sm:$0xff]
          %548 = vst [vmem:[%s496 + $0xc8] sm:$0xff] %v547
          %v549 = vld [vmem:[%s495 + $0xd0] sm:$0xff]
          %550 = vst [vmem:[%s496 + $0xd0] sm:$0xff] %v549
          %v551 = vld [vmem:[%s495 + $0xd8] sm:$0xff]
          %552 = vst [vmem:[%s496 + $0xd8] sm:$0xff] %v551
          %v553 = vld [vmem:[%s495 + $0xe0] sm:$0xff]
          %554 = vst [vmem:[%s496 + $0xe0] sm:$0xff] %v553
          %v555 = vld [vmem:[%s495 + $0xe8] sm:$0xff]
          %556 = vst [vmem:[%s496 + $0xe8] sm:$0xff] %v555
          %v557 = vld [vmem:[%s495 + $0xf0] sm:$0xff]
          %558 = vst [vmem:[%s496 + $0xf0] sm:$0xff] %v557
          %v559 = vld [vmem:[%s495 + $0xf8] sm:$0xff]
          %560 = vst [vmem:[%s496 + $0xf8] sm:$0xff] %v559
          %v561 = vld [vmem:[%s495 + $0x100] sm:$0xff]
          %562 = vst [vmem:[%s496 + $0x100] sm:$0xff] %v561
          %v563 = vld [vmem:[%s495 + $0x108] sm:$0xff]
          %564 = vst [vmem:[%s496 + $0x108] sm:$0xff] %v563
          %v565 = vld [vmem:[%s495 + $0x110] sm:$0xff]
          %566 = vst [vmem:[%s496 + $0x110] sm:$0xff] %v565
          %v567 = vld [vmem:[%s495 + $0x118] sm:$0xff]
          %568 = vst [vmem:[%s496 + $0x118] sm:$0xff] %v567
          %v569 = vld [vmem:[%s495 + $0x120] sm:$0xff]
          %570 = vst [vmem:[%s496 + $0x120] sm:$0xff] %v569
          %v571 = vld [vmem:[%s495 + $0x128] sm:$0xff]
          %572 = vst [vmem:[%s496 + $0x128] sm:$0xff] %v571
          %v573 = vld [vmem:[%s495 + $0x130] sm:$0xff]
          %574 = vst [vmem:[%s496 + $0x130] sm:$0xff] %v573
          %v575 = vld [vmem:[%s495 + $0x138] sm:$0xff]
          %576 = vst [vmem:[%s496 + $0x138] sm:$0xff] %v575
          %v577 = vld [vmem:[%s495 + $0x140] sm:$0xff]
          %578 = vst [vmem:[%s496 + $0x140] sm:$0xff] %v577
          %v579 = vld [vmem:[%s495 + $0x148] sm:$0xff]
          %580 = vst [vmem:[%s496 + $0x148] sm:$0xff] %v579
          %v581 = vld [vmem:[%s495 + $0x150] sm:$0xff]
          %582 = vst [vmem:[%s496 + $0x150] sm:$0xff] %v581
          %v583 = vld [vmem:[%s495 + $0x158] sm:$0xff]
          %584 = vst [vmem:[%s496 + $0x158] sm:$0xff] %v583
          %v585 = vld [vmem:[%s495 + $0x160] sm:$0xff]
          %586 = vst [vmem:[%s496 + $0x160] sm:$0xff] %v585
          %v587 = vld [vmem:[%s495 + $0x168] sm:$0xff]
          %588 = vst [vmem:[%s496 + $0x168] sm:$0xff] %v587
          %v589 = vld [vmem:[%s495 + $0x170] sm:$0xff]
          %590 = vst [vmem:[%s496 + $0x170] sm:$0xff] %v589
          %v591 = vld [vmem:[%s495 + $0x178] sm:$0xff]
          %592 = vst [vmem:[%s496 + $0x178] sm:$0xff] %v591
          %v593 = vld [vmem:[%s495 + $0x180] sm:$0xff]
          %594 = vst [vmem:[%s496 + $0x180] sm:$0xff] %v593
          %v595 = vld [vmem:[%s495 + $0x188] sm:$0xff]
          %596 = vst [vmem:[%s496 + $0x188] sm:$0xff] %v595
          %v597 = vld [vmem:[%s495 + $0x190] sm:$0xff]
          %598 = vst [vmem:[%s496 + $0x190] sm:$0xff] %v597
          %v599 = vld [vmem:[%s495 + $0x198] sm:$0xff]
          %600 = vst [vmem:[%s496 + $0x198] sm:$0xff] %v599
          %v601 = vld [vmem:[%s495 + $0x1a0] sm:$0xff]
          %602 = vst [vmem:[%s496 + $0x1a0] sm:$0xff] %v601
          %v603 = vld [vmem:[%s495 + $0x1a8] sm:$0xff]
          %604 = vst [vmem:[%s496 + $0x1a8] sm:$0xff] %v603
          %v605 = vld [vmem:[%s495 + $0x1b0] sm:$0xff]
          %606 = vst [vmem:[%s496 + $0x1b0] sm:$0xff] %v605
          %v607 = vld [vmem:[%s495 + $0x1b8] sm:$0xff]
          %608 = vst [vmem:[%s496 + $0x1b8] sm:$0xff] %v607
          %v609 = vld [vmem:[%s495 + $0x1c0] sm:$0xff]
          %610 = vst [vmem:[%s496 + $0x1c0] sm:$0xff] %v609
          %v611 = vld [vmem:[%s495 + $0x1c8] sm:$0xff]
          %612 = vst [vmem:[%s496 + $0x1c8] sm:$0xff] %v611
          %v613 = vld [vmem:[%s495 + $0x1d0] sm:$0xff]
          %614 = vst [vmem:[%s496 + $0x1d0] sm:$0xff] %v613
          %v615 = vld [vmem:[%s495 + $0x1d8] sm:$0xff]
          %616 = vst [vmem:[%s496 + $0x1d8] sm:$0xff] %v615
          %v617 = vld [vmem:[%s495 + $0x1e0] sm:$0xff]
          %618 = vst [vmem:[%s496 + $0x1e0] sm:$0xff] %v617
          %v619 = vld [vmem:[%s495 + $0x1e8] sm:$0xff]
          %620 = vst [vmem:[%s496 + $0x1e8] sm:$0xff] %v619
          %v621 = vld [vmem:[%s495 + $0x1f0] sm:$0xff]
          %622 = vst [vmem:[%s496 + $0x1f0] sm:$0xff] %v621
          %v623 = vld [vmem:[%s495 + $0x1f8] sm:$0xff]
          %624 = vst [vmem:[%s496 + $0x1f8] sm:$0xff] %v623
          %v625 = vld [vmem:[%s495 + $0x200] sm:$0xff]
          %626 = vst [vmem:[%s496 + $0x200] sm:$0xff] %v625
          %v627 = vld [vmem:[%s495 + $0x208] sm:$0xff]
          %628 = vst [vmem:[%s496 + $0x208] sm:$0xff] %v627
          %v629 = vld [vmem:[%s495 + $0x210] sm:$0xff]
          %630 = vst [vmem:[%s496 + $0x210] sm:$0xff] %v629
          %v631 = vld [vmem:[%s495 + $0x218] sm:$0xff]
          %632 = vst [vmem:[%s496 + $0x218] sm:$0xff] %v631
          %v633 = vld [vmem:[%s495 + $0x220] sm:$0xff]
          %634 = vst [vmem:[%s496 + $0x220] sm:$0xff] %v633
          %v635 = vld [vmem:[%s495 + $0x228] sm:$0xff]
          %636 = vst [vmem:[%s496 + $0x228] sm:$0xff] %v635
          %v637 = vld [vmem:[%s495 + $0x230] sm:$0xff]
          %638 = vst [vmem:[%s496 + $0x230] sm:$0xff] %v637
          %v639 = vld [vmem:[%s495 + $0x238] sm:$0xff]
          %640 = vst [vmem:[%s496 + $0x238] sm:$0xff] %v639
          %v641 = vld [vmem:[%s495 + $0x240] sm:$0xff]
          %642 = vst [vmem:[%s496 + $0x240] sm:$0xff] %v641
          %v643 = vld [vmem:[%s495 + $0x248] sm:$0xff]
          %644 = vst [vmem:[%s496 + $0x248] sm:$0xff] %v643
          %v645 = vld [vmem:[%s495 + $0x250] sm:$0xff]
          %646 = vst [vmem:[%s496 + $0x250] sm:$0xff] %v645
          %v647 = vld [vmem:[%s495 + $0x258] sm:$0xff]
          %648 = vst [vmem:[%s496 + $0x258] sm:$0xff] %v647
          %v649 = vld [vmem:[%s495 + $0x260] sm:$0xff]
          %650 = vst [vmem:[%s496 + $0x260] sm:$0xff] %v649
          %v651 = vld [vmem:[%s495 + $0x268] sm:$0xff]
          %652 = vst [vmem:[%s496 + $0x268] sm:$0xff] %v651
          %v653 = vld [vmem:[%s495 + $0x270] sm:$0xff]
          %654 = vst [vmem:[%s496 + $0x270] sm:$0xff] %v653
          %v655 = vld [vmem:[%s495 + $0x278] sm:$0xff]
          %656 = vst [vmem:[%s496 + $0x278] sm:$0xff] %v655
          %v657 = vld [vmem:[%s495 + $0x280] sm:$0xff]
          %658 = vst [vmem:[%s496 + $0x280] sm:$0xff] %v657
          %v659 = vld [vmem:[%s495 + $0x288] sm:$0xff]
          %660 = vst [vmem:[%s496 + $0x288] sm:$0xff] %v659
          %v661 = vld [vmem:[%s495 + $0x290] sm:$0xff]
          %662 = vst [vmem:[%s496 + $0x290] sm:$0xff] %v661
          %v663 = vld [vmem:[%s495 + $0x298] sm:$0xff]
          %664 = vst [vmem:[%s496 + $0x298] sm:$0xff] %v663
          %v665 = vld [vmem:[%s495 + $0x2a0] sm:$0xff]
          %666 = vst [vmem:[%s496 + $0x2a0] sm:$0xff] %v665
          %v667 = vld [vmem:[%s495 + $0x2a8] sm:$0xff]
          %668 = vst [vmem:[%s496 + $0x2a8] sm:$0xff] %v667
          %v669 = vld [vmem:[%s495 + $0x2b0] sm:$0xff]
          %670 = vst [vmem:[%s496 + $0x2b0] sm:$0xff] %v669
          %v671 = vld [vmem:[%s495 + $0x2b8] sm:$0xff]
          %672 = vst [vmem:[%s496 + $0x2b8] sm:$0xff] %v671
          %v673 = vld [vmem:[%s495 + $0x2c0] sm:$0xff]
          %674 = vst [vmem:[%s496 + $0x2c0] sm:$0xff] %v673
          %v675 = vld [vmem:[%s495 + $0x2c8] sm:$0xff]
          %676 = vst [vmem:[%s496 + $0x2c8] sm:$0xff] %v675
          %v677 = vld [vmem:[%s495 + $0x2d0] sm:$0xff]
          %678 = vst [vmem:[%s496 + $0x2d0] sm:$0xff] %v677
          %v679 = vld [vmem:[%s495 + $0x2d8] sm:$0xff]
          %680 = vst [vmem:[%s496 + $0x2d8] sm:$0xff] %v679
          %v681 = vld [vmem:[%s495 + $0x2e0] sm:$0xff]
          %682 = vst [vmem:[%s496 + $0x2e0] sm:$0xff] %v681
          %v683 = vld [vmem:[%s495 + $0x2e8] sm:$0xff]
          %684 = vst [vmem:[%s496 + $0x2e8] sm:$0xff] %v683
          %v685 = vld [vmem:[%s495 + $0x2f0] sm:$0xff]
          %686 = vst [vmem:[%s496 + $0x2f0] sm:$0xff] %v685
          %v687 = vld [vmem:[%s495 + $0x2f8] sm:$0xff]
          %688 = vst [vmem:[%s496 + $0x2f8] sm:$0xff] %v687
          %v689 = vld [vmem:[%s495 + $0x300] sm:$0xff]
          %690 = vst [vmem:[%s496 + $0x300] sm:$0xff] %v689
          %v691 = vld [vmem:[%s495 + $0x308] sm:$0xff]
          %692 = vst [vmem:[%s496 + $0x308] sm:$0xff] %v691
          %v693 = vld [vmem:[%s495 + $0x310] sm:$0xff]
          %694 = vst [vmem:[%s496 + $0x310] sm:$0xff] %v693
          %v695 = vld [vmem:[%s495 + $0x318] sm:$0xff]
          %696 = vst [vmem:[%s496 + $0x318] sm:$0xff] %v695
          %v697 = vld [vmem:[%s495 + $0x320] sm:$0xff]
          %698 = vst [vmem:[%s496 + $0x320] sm:$0xff] %v697
          %v699 = vld [vmem:[%s495 + $0x328] sm:$0xff]
          %700 = vst [vmem:[%s496 + $0x328] sm:$0xff] %v699
          %v701 = vld [vmem:[%s495 + $0x330] sm:$0xff]
          %702 = vst [vmem:[%s496 + $0x330] sm:$0xff] %v701
          %v703 = vld [vmem:[%s495 + $0x338] sm:$0xff]
          %704 = vst [vmem:[%s496 + $0x338] sm:$0xff] %v703
          %v705 = vld [vmem:[%s495 + $0x340] sm:$0xff]
          %706 = vst [vmem:[%s496 + $0x340] sm:$0xff] %v705
          %v707 = vld [vmem:[%s495 + $0x348] sm:$0xff]
          %708 = vst [vmem:[%s496 + $0x348] sm:$0xff] %v707
          %v709 = vld [vmem:[%s495 + $0x350] sm:$0xff]
          %710 = vst [vmem:[%s496 + $0x350] sm:$0xff] %v709
          %v711 = vld [vmem:[%s495 + $0x358] sm:$0xff]
          %712 = vst [vmem:[%s496 + $0x358] sm:$0xff] %v711
          %v713 = vld [vmem:[%s495 + $0x360] sm:$0xff]
          %714 = vst [vmem:[%s496 + $0x360] sm:$0xff] %v713
          %v715 = vld [vmem:[%s495 + $0x368] sm:$0xff]
          %716 = vst [vmem:[%s496 + $0x368] sm:$0xff] %v715
          %v717 = vld [vmem:[%s495 + $0x370] sm:$0xff]
          %718 = vst [vmem:[%s496 + $0x370] sm:$0xff] %v717
          %v719 = vld [vmem:[%s495 + $0x378] sm:$0xff]
          %720 = vst [vmem:[%s496 + $0x378] sm:$0xff] %v719
          %v721 = vld [vmem:[%s495 + $0x380] sm:$0xff]
          %722 = vst [vmem:[%s496 + $0x380] sm:$0xff] %v721
          %v723 = vld [vmem:[%s495 + $0x388] sm:$0xff]
          %724 = vst [vmem:[%s496 + $0x388] sm:$0xff] %v723
          %v725 = vld [vmem:[%s495 + $0x390] sm:$0xff]
          %726 = vst [vmem:[%s496 + $0x390] sm:$0xff] %v725
          %v727 = vld [vmem:[%s495 + $0x398] sm:$0xff]
          %728 = vst [vmem:[%s496 + $0x398] sm:$0xff] %v727
          %v729 = vld [vmem:[%s495 + $0x3a0] sm:$0xff]
          %730 = vst [vmem:[%s496 + $0x3a0] sm:$0xff] %v729
          %v731 = vld [vmem:[%s495 + $0x3a8] sm:$0xff]
          %732 = vst [vmem:[%s496 + $0x3a8] sm:$0xff] %v731
          %v733 = vld [vmem:[%s495 + $0x3b0] sm:$0xff]
          %734 = vst [vmem:[%s496 + $0x3b0] sm:$0xff] %v733
          %v735 = vld [vmem:[%s495 + $0x3b8] sm:$0xff]
          %736 = vst [vmem:[%s496 + $0x3b8] sm:$0xff] %v735
          %v737 = vld [vmem:[%s495 + $0x3c0] sm:$0xff]
          %738 = vst [vmem:[%s496 + $0x3c0] sm:$0xff] %v737
          %v739 = vld [vmem:[%s495 + $0x3c8] sm:$0xff]
          %740 = vst [vmem:[%s496 + $0x3c8] sm:$0xff] %v739
          %v741 = vld [vmem:[%s495 + $0x3d0] sm:$0xff]
          %742 = vst [vmem:[%s496 + $0x3d0] sm:$0xff] %v741
          %v743 = vld [vmem:[%s495 + $0x3d8] sm:$0xff]
          %744 = vst [vmem:[%s496 + $0x3d8] sm:$0xff] %v743
          %v745 = vld [vmem:[%s495 + $0x3e0] sm:$0xff]
          %746 = vst [vmem:[%s496 + $0x3e0] sm:$0xff] %v745
          %v747 = vld [vmem:[%s495 + $0x3e8] sm:$0xff]
          %748 = vst [vmem:[%s496 + $0x3e8] sm:$0xff] %v747
          %v749 = vld [vmem:[%s495 + $0x3f0] sm:$0xff]
          %750 = vst [vmem:[%s496 + $0x3f0] sm:$0xff] %v749
          %v751 = vld [vmem:[%s495 + $0x3f8] sm:$0xff]
          %752 = vst [vmem:[%s496 + $0x3f8] sm:$0xff] %v751
          %v753 = vld [vmem:[%s495 + $0x400] sm:$0xff]
          %754 = vst [vmem:[%s496 + $0x400] sm:$0xff] %v753
          %v755 = vld [vmem:[%s495 + $0x408] sm:$0xff]
          %756 = vst [vmem:[%s496 + $0x408] sm:$0xff] %v755
          %v757 = vld [vmem:[%s495 + $0x410] sm:$0xff]
          %758 = vst [vmem:[%s496 + $0x410] sm:$0xff] %v757
          %v759 = vld [vmem:[%s495 + $0x418] sm:$0xff]
          %760 = vst [vmem:[%s496 + $0x418] sm:$0xff] %v759
          %v761 = vld [vmem:[%s495 + $0x420] sm:$0xff]
          %762 = vst [vmem:[%s496 + $0x420] sm:$0xff] %v761
          %v763 = vld [vmem:[%s495 + $0x428] sm:$0xff]
          %764 = vst [vmem:[%s496 + $0x428] sm:$0xff] %v763
          %v765 = vld [vmem:[%s495 + $0x430] sm:$0xff]
          %766 = vst [vmem:[%s496 + $0x430] sm:$0xff] %v765
          %v767 = vld [vmem:[%s495 + $0x438] sm:$0xff]
          %768 = vst [vmem:[%s496 + $0x438] sm:$0xff] %v767
          %v769 = vld [vmem:[%s495 + $0x440] sm:$0xff]
          %770 = vst [vmem:[%s496 + $0x440] sm:$0xff] %v769
          %v771 = vld [vmem:[%s495 + $0x448] sm:$0xff]
          %772 = vst [vmem:[%s496 + $0x448] sm:$0xff] %v771
          %v773 = vld [vmem:[%s495 + $0x450] sm:$0xff]
          %774 = vst [vmem:[%s496 + $0x450] sm:$0xff] %v773
          %v775 = vld [vmem:[%s495 + $0x458] sm:$0xff]
          %776 = vst [vmem:[%s496 + $0x458] sm:$0xff] %v775
          %v777 = vld [vmem:[%s495 + $0x460] sm:$0xff]
          %778 = vst [vmem:[%s496 + $0x460] sm:$0xff] %v777
          %v779 = vld [vmem:[%s495 + $0x468] sm:$0xff]
          %780 = vst [vmem:[%s496 + $0x468] sm:$0xff] %v779
          %v781 = vld [vmem:[%s495 + $0x470] sm:$0xff]
          %782 = vst [vmem:[%s496 + $0x470] sm:$0xff] %v781
          %v783 = vld [vmem:[%s495 + $0x478] sm:$0xff]
          %784 = vst [vmem:[%s496 + $0x478] sm:$0xff] %v783
          %v785 = vld [vmem:[%s495 + $0x480] sm:$0xff]
          %786 = vst [vmem:[%s496 + $0x480] sm:$0xff] %v785
          %v787 = vld [vmem:[%s495 + $0x488] sm:$0xff]
          %788 = vst [vmem:[%s496 + $0x488] sm:$0xff] %v787
          %v789 = vld [vmem:[%s495 + $0x490] sm:$0xff]
          %790 = vst [vmem:[%s496 + $0x490] sm:$0xff] %v789
          %v791 = vld [vmem:[%s495 + $0x498] sm:$0xff]
          %792 = vst [vmem:[%s496 + $0x498] sm:$0xff] %v791
          %v793 = vld [vmem:[%s495 + $0x4a0] sm:$0xff]
          %794 = vst [vmem:[%s496 + $0x4a0] sm:$0xff] %v793
          %v795 = vld [vmem:[%s495 + $0x4a8] sm:$0xff]
          %796 = vst [vmem:[%s496 + $0x4a8] sm:$0xff] %v795
          %v797 = vld [vmem:[%s495 + $0x4b0] sm:$0xff]
          %798 = vst [vmem:[%s496 + $0x4b0] sm:$0xff] %v797
          %v799 = vld [vmem:[%s495 + $0x4b8] sm:$0xff]
          %800 = vst [vmem:[%s496 + $0x4b8] sm:$0xff] %v799
          %v801 = vld [vmem:[%s495 + $0x4c0] sm:$0xff]
          %802 = vst [vmem:[%s496 + $0x4c0] sm:$0xff] %v801
          %v803 = vld [vmem:[%s495 + $0x4c8] sm:$0xff]
          %804 = vst [vmem:[%s496 + $0x4c8] sm:$0xff] %v803
          %v805 = vld [vmem:[%s495 + $0x4d0] sm:$0xff]
          %806 = vst [vmem:[%s496 + $0x4d0] sm:$0xff] %v805
          %v807 = vld [vmem:[%s495 + $0x4d8] sm:$0xff]
          %808 = vst [vmem:[%s496 + $0x4d8] sm:$0xff] %v807
          %v809 = vld [vmem:[%s495 + $0x4e0] sm:$0xff]
          %810 = vst [vmem:[%s496 + $0x4e0] sm:$0xff] %v809
          %v811 = vld [vmem:[%s495 + $0x4e8] sm:$0xff]
          %812 = vst [vmem:[%s496 + $0x4e8] sm:$0xff] %v811
          %v813 = vld [vmem:[%s495 + $0x4f0] sm:$0xff]
          %814 = vst [vmem:[%s496 + $0x4f0] sm:$0xff] %v813
          %v815 = vld [vmem:[%s495 + $0x4f8] sm:$0xff]
          %816 = vst [vmem:[%s496 + $0x4f8] sm:$0xff] %v815
          %v817 = vld [vmem:[%s495 + $0x500] sm:$0xff]
          %818 = vst [vmem:[%s496 + $0x500] sm:$0xff] %v817
          %v819 = vld [vmem:[%s495 + $0x508] sm:$0xff]
          %820 = vst [vmem:[%s496 + $0x508] sm:$0xff] %v819
          %v821 = vld [vmem:[%s495 + $0x510] sm:$0xff]
          %822 = vst [vmem:[%s496 + $0x510] sm:$0xff] %v821
          %v823 = vld [vmem:[%s495 + $0x518] sm:$0xff]
          %824 = vst [vmem:[%s496 + $0x518] sm:$0xff] %v823
          %v825 = vld [vmem:[%s495 + $0x520] sm:$0xff]
          %826 = vst [vmem:[%s496 + $0x520] sm:$0xff] %v825
          %v827 = vld [vmem:[%s495 + $0x528] sm:$0xff]
          %828 = vst [vmem:[%s496 + $0x528] sm:$0xff] %v827
          %v829 = vld [vmem:[%s495 + $0x530] sm:$0xff]
          %830 = vst [vmem:[%s496 + $0x530] sm:$0xff] %v829
          %v831 = vld [vmem:[%s495 + $0x538] sm:$0xff]
          %832 = vst [vmem:[%s496 + $0x538] sm:$0xff] %v831
          %v833 = vld [vmem:[%s495 + $0x540] sm:$0xff]
          %834 = vst [vmem:[%s496 + $0x540] sm:$0xff] %v833
          %v835 = vld [vmem:[%s495 + $0x548] sm:$0xff]
          %836 = vst [vmem:[%s496 + $0x548] sm:$0xff] %v835
          %v837 = vld [vmem:[%s495 + $0x550] sm:$0xff]
          %838 = vst [vmem:[%s496 + $0x550] sm:$0xff] %v837
          %v839 = vld [vmem:[%s495 + $0x558] sm:$0xff]
          %840 = vst [vmem:[%s496 + $0x558] sm:$0xff] %v839
          %v841 = vld [vmem:[%s495 + $0x560] sm:$0xff]
          %842 = vst [vmem:[%s496 + $0x560] sm:$0xff] %v841
          %v843 = vld [vmem:[%s495 + $0x568] sm:$0xff]
          %844 = vst [vmem:[%s496 + $0x568] sm:$0xff] %v843
          %v845 = vld [vmem:[%s495 + $0x570] sm:$0xff]
          %846 = vst [vmem:[%s496 + $0x570] sm:$0xff] %v845
          %v847 = vld [vmem:[%s495 + $0x578] sm:$0xff]
          %848 = vst [vmem:[%s496 + $0x578] sm:$0xff] %v847
          %v849 = vld [vmem:[%s495 + $0x580] sm:$0xff]
          %850 = vst [vmem:[%s496 + $0x580] sm:$0xff] %v849
          %v851 = vld [vmem:[%s495 + $0x588] sm:$0xff]
          %852 = vst [vmem:[%s496 + $0x588] sm:$0xff] %v851
          %v853 = vld [vmem:[%s495 + $0x590] sm:$0xff]
          %854 = vst [vmem:[%s496 + $0x590] sm:$0xff] %v853
          %v855 = vld [vmem:[%s495 + $0x598] sm:$0xff]
          %856 = vst [vmem:[%s496 + $0x598] sm:$0xff] %v855
          %v857 = vld [vmem:[%s495 + $0x5a0] sm:$0xff]
          %858 = vst [vmem:[%s496 + $0x5a0] sm:$0xff] %v857
          %v859 = vld [vmem:[%s495 + $0x5a8] sm:$0xff]
          %860 = vst [vmem:[%s496 + $0x5a8] sm:$0xff] %v859
          %v861 = vld [vmem:[%s495 + $0x5b0] sm:$0xff]
          %862 = vst [vmem:[%s496 + $0x5b0] sm:$0xff] %v861
          %v863 = vld [vmem:[%s495 + $0x5b8] sm:$0xff]
          %864 = vst [vmem:[%s496 + $0x5b8] sm:$0xff] %v863
          %v865 = vld [vmem:[%s495 + $0x5c0] sm:$0xff]
          %866 = vst [vmem:[%s496 + $0x5c0] sm:$0xff] %v865
          %v867 = vld [vmem:[%s495 + $0x5c8] sm:$0xff]
          %868 = vst [vmem:[%s496 + $0x5c8] sm:$0xff] %v867
          %v869 = vld [vmem:[%s495 + $0x5d0] sm:$0xff]
          %870 = vst [vmem:[%s496 + $0x5d0] sm:$0xff] %v869
          %v871 = vld [vmem:[%s495 + $0x5d8] sm:$0xff]
          %872 = vst [vmem:[%s496 + $0x5d8] sm:$0xff] %v871
          %v873 = vld [vmem:[%s495 + $0x5e0] sm:$0xff]
          %874 = vst [vmem:[%s496 + $0x5e0] sm:$0xff] %v873
          %v875 = vld [vmem:[%s495 + $0x5e8] sm:$0xff]
          %876 = vst [vmem:[%s496 + $0x5e8] sm:$0xff] %v875
          %v877 = vld [vmem:[%s495 + $0x5f0] sm:$0xff]
          %878 = vst [vmem:[%s496 + $0x5f0] sm:$0xff] %v877
          %v879 = vld [vmem:[%s495 + $0x5f8] sm:$0xff]
          %880 = vst [vmem:[%s496 + $0x5f8] sm:$0xff] %v879
          %v881 = vld [vmem:[%s495 + $0x600] sm:$0xff]
          %882 = vst [vmem:[%s496 + $0x600] sm:$0xff] %v881
          %v883 = vld [vmem:[%s495 + $0x608] sm:$0xff]
          %884 = vst [vmem:[%s496 + $0x608] sm:$0xff] %v883
          %v885 = vld [vmem:[%s495 + $0x610] sm:$0xff]
          %886 = vst [vmem:[%s496 + $0x610] sm:$0xff] %v885
          %v887 = vld [vmem:[%s495 + $0x618] sm:$0xff]
          %888 = vst [vmem:[%s496 + $0x618] sm:$0xff] %v887
          %v889 = vld [vmem:[%s495 + $0x620] sm:$0xff]
          %890 = vst [vmem:[%s496 + $0x620] sm:$0xff] %v889
          %v891 = vld [vmem:[%s495 + $0x628] sm:$0xff]
          %892 = vst [vmem:[%s496 + $0x628] sm:$0xff] %v891
          %v893 = vld [vmem:[%s495 + $0x630] sm:$0xff]
          %894 = vst [vmem:[%s496 + $0x630] sm:$0xff] %v893
          %v895 = vld [vmem:[%s495 + $0x638] sm:$0xff]
          %896 = vst [vmem:[%s496 + $0x638] sm:$0xff] %v895
        $region79: #{_lenet_forward.1} parent=73 // loop_footer
          %s494 = sadd.s32 1, %s490
        $region80: #{_lenet_forward.1} parent=73 // loop_footer_branch
          %489 = sbr.rel target = $region76
        $region81: #{_lenet_forward.1} parent=73 // loop_exit
          _
      $region74: #{_lenet_forward.1} parent=58 // pred_fallthru
        _
      %p897 = pneg %p485
      // Predicated region
      $region82: #{_lenet_forward.1} parent=58 // pred_check
        _
      $region83: #{_lenet_forward.1} parent=58 // pred_check_branch
        %899 = sbr.rel (%p485) target = $region85
      $region84: #{_lenet_forward.1} parent=58 // pred_region
        %s900 = sand.u32 1600, 7
      $region85: #{_lenet_forward.1} parent=58 // pred_fallthru
        _
    $region59: #{_lenet_forward.1} parent=1 // pred_fallthru
      _
    // Predicated region
    $region60: #{_lenet_forward.1} parent=1 // pred_check
      %p470 = pneg %p466
    $region61: #{_lenet_forward.1} parent=1 // pred_check_branch
      %472 = sbr.rel (%p470) target = $region63
    $region62: #{_lenet_forward.1} parent=1 // pred_region
      %s473 = sshllo.u32 0, 1600
      loop: start=0, step=1, limit=1
      $region64: #{_lenet_forward.1} parent=62 // loop_pre_header
        _
      $region65: #{_lenet_forward.1} parent=62 // loop_header
        %s475 = sphi 0, %s479
        %p476 = scmp.ge.s32.totalorder %s475, 1
        %s480 = sphi %s3, %s3
        %s481 = sphi [#allocation3], [#allocation3]
      $region66: #{_lenet_forward.1} parent=62 // loop_header_branch
        %478 = sbr.rel (%p476) target = $region70
      $region67: #{_lenet_forward.1} parent=62 // loop_body
        %v482 = vld [vmem:[%s480] sm:%s473]
        %483 = vst [vmem:[%s481] sm:%s473] %v482
      $region68: #{_lenet_forward.1} parent=62 // loop_footer
        %s479 = sadd.s32 1, %s475
      $region69: #{_lenet_forward.1} parent=62 // loop_footer_branch
        %474 = sbr.rel target = $region65
      $region70: #{_lenet_forward.1} parent=62 // loop_exit
        _
    $region63: #{_lenet_forward.1} parent=1 // pred_fallthru
      _
    // Predicated region
    $region86: #{_lenet_forward.1} parent=1 // pred_check
      _
    $region87: #{_lenet_forward.1} parent=1 // pred_check_branch
      %903 = sbr.rel (0) target = $region89
    $region88: #{_lenet_forward.1} parent=1 // pred_region
      %904 = vsyncadd %s464, 25600
    $region89: #{_lenet_forward.1} parent=1 // pred_fallthru
      _
    %v905 = vld [vmem:[%s6] sm:$0xff]
    %v906 = vld [vmem:[%s0] sm:$0xf]
    %v907 = vld [vmem:[%s0 + $0x4] sm:$0xf]
    %v908 = vld [vmem:[%s0 + $0x8] sm:$0xf]
    %v909 = vld [vmem:[%s0 + $0xc] sm:$0xf]
    %v910 = vld [vmem:[%s0 + $0x10] sm:$0xf]
    %v911 = vld [vmem:[%s0 + $0x14] sm:$0xf]
    %v912 = vld [vmem:[%s0 + $0x18] sm:$0xf]
    %v913 = vld [vmem:[%s0 + $0x1c] sm:$0xf]
    %v914 = vld [vmem:[%s0 + $0x20] sm:$0xf]
    %v915 = vld [vmem:[%s0 + $0x24] sm:$0xf]
    %v916 = vld [vmem:[%s0 + $0x28] sm:$0xf]
    %v917 = vld [vmem:[%s0 + $0x2c] sm:$0xf]
    %v918 = vld [vmem:[%s0 + $0x30] sm:$0xf]
    %v919 = vld [vmem:[%s0 + $0x34] sm:$0xf]
    %v920 = vld [vmem:[%s0 + $0x38] sm:$0xf]
    %v921 = vld [vmem:[%s0 + $0x3c] sm:$0xf]
    %v922 = vld [vmem:[%s0 + $0x40] sm:$0xf]
    %v923 = vld [vmem:[%s0 + $0x44] sm:$0xf]
    %v924 = vld [vmem:[%s0 + $0x48] sm:$0xf]
    %v925 = vld [vmem:[%s0 + $0x4c] sm:$0xf]
    %v926 = vld [vmem:[%s0 + $0x50] sm:$0xf]
    %v927 = vld [vmem:[%s0 + $0x54] sm:$0xf]
    %v928 = vld [vmem:[%s0 + $0x58] sm:$0xf]
    %v929 = vld [vmem:[%s0 + $0x5c] sm:$0xf]
    %v930 = vld [vmem:[%s0 + $0x60] sm:$0xf]
    %v931 = vld [vmem:[%s0 + $0x64] sm:$0xf]
    %v932 = vld [vmem:[%s0 + $0x68] sm:$0xf]
    %v933 = vld [vmem:[%s0 + $0x6c] sm:$0xf]
    %v934 = vld [vmem:[%s0 + $0x70] sm:$0xf]
    %v935 = vld [vmem:[%s0 + $0x74] sm:$0xf]
    %v936 = vld [vmem:[%s0 + $0x78] sm:$0xf]
    %v937 = vld [vmem:[%s0 + $0x7c] sm:$0xf]
    %v938 = vld [vmem:[%s0 + $0x80] sm:$0xf]
    %v939 = vld [vmem:[%s0 + $0x84] sm:$0xf]
    %v940 = vld [vmem:[%s0 + $0x88] sm:$0xf]
    %v941 = vld [vmem:[%s0 + $0x8c] sm:$0xf]
    %v942 = vld [vmem:[%s0 + $0x90] sm:$0xf]
    %v943 = vld [vmem:[%s0 + $0x94] sm:$0xf]
    %v944 = vld [vmem:[%s0 + $0x98] sm:$0xf]
    %v945 = vld [vmem:[%s0 + $0x9c] sm:$0xf]
    %v946 = vld [vmem:[%s0 + $0xa0] sm:$0xf]
    %v947 = vld [vmem:[%s0 + $0xa4] sm:$0xf]
    %v948 = vld [vmem:[%s0 + $0xa8] sm:$0xf]
    %v949 = vld [vmem:[%s0 + $0xac] sm:$0xf]
    %v950 = vld [vmem:[%s0 + $0xb0] sm:$0xf]
    %v951 = vld [vmem:[%s0 + $0xb4] sm:$0xf]
    %v952 = vld [vmem:[%s0 + $0xb8] sm:$0xf]
    %v953 = vld [vmem:[%s0 + $0xbc] sm:$0xf]
    %v954 = vld [vmem:[%s0 + $0xc0] sm:$0xf]
    %v955 = vld [vmem:[%s0 + $0xc4] sm:$0xf]
    %v956 = vld [vmem:[%s0 + $0xc8] sm:$0xf]
    %v957 = vld [vmem:[%s0 + $0xcc] sm:$0xf]
    %v958 = vld [vmem:[%s0 + $0xd0] sm:$0xf]
    %v959 = vld [vmem:[%s0 + $0xd4] sm:$0xf]
    %v960 = vld [vmem:[%s0 + $0xd8] sm:$0xf]
    %v961 = vld [vmem:[%s0 + $0xdc] sm:$0xf]
    %v962 = vld [vmem:[%s0 + $0xe0] sm:$0xf]
    %v963 = vld [vmem:[%s0 + $0xe4] sm:$0xf]
    %v964 = vld [vmem:[%s0 + $0xe8] sm:$0xf]
    %v965 = vld [vmem:[%s0 + $0xec] sm:$0xf]
    %v966 = vld [vmem:[%s0 + $0xf0] sm:$0xf]
    %v967 = vld [vmem:[%s0 + $0xf4] sm:$0xf]
    %v968 = vld [vmem:[%s0 + $0xf8] sm:$0xf]
    %v969 = vld [vmem:[%s0 + $0xfc] sm:$0xf]
    %v970 = vld [vmem:[%s0 + $0x100] sm:$0xf]
    %v971 = vld [vmem:[%s0 + $0x104] sm:$0xf]
    %v972 = vld [vmem:[%s0 + $0x108] sm:$0xf]
    %v973 = vld [vmem:[%s0 + $0x10c] sm:$0xf]
    %v974 = vld [vmem:[%s0 + $0x110] sm:$0xf]
    %v975 = vld [vmem:[%s0 + $0x114] sm:$0xf]
    %v976 = vld [vmem:[%s0 + $0x118] sm:$0xf]
    %v977 = vld [vmem:[%s0 + $0x11c] sm:$0xf]
    %v978 = vld [vmem:[%s0 + $0x120] sm:$0xf]
    %v979 = vld [vmem:[%s0 + $0x124] sm:$0xf]
    %v980 = vld [vmem:[%s0 + $0x128] sm:$0xf]
    %v981 = vld [vmem:[%s0 + $0x12c] sm:$0xf]
    %v982 = vld [vmem:[%s0 + $0x130] sm:$0xf]
    %v983 = vld [vmem:[%s0 + $0x134] sm:$0xf]
    %v984 = vld [vmem:[%s0 + $0x138] sm:$0xf]
    %v985 = vld [vmem:[%s0 + $0x13c] sm:$0xf]
    %v986 = vld [vmem:[%s0 + $0x140] sm:$0xf]
    %v987 = vld [vmem:[%s0 + $0x144] sm:$0xf]
    %v988 = vld [vmem:[%s0 + $0x148] sm:$0xf]
    %v989 = vld [vmem:[%s0 + $0x14c] sm:$0xf]
    %v990 = vld [vmem:[%s0 + $0x150] sm:$0xf]
    %v991 = vld [vmem:[%s0 + $0x154] sm:$0xf]
    %v992 = vld [vmem:[%s0 + $0x158] sm:$0xf]
    %v993 = vld [vmem:[%s0 + $0x15c] sm:$0xf]
    %v994 = vld [vmem:[%s0 + $0x160] sm:$0xf]
    %v995 = vld [vmem:[%s0 + $0x164] sm:$0xf]
    %v996 = vld [vmem:[%s0 + $0x168] sm:$0xf]
    %v997 = vld [vmem:[%s0 + $0x16c] sm:$0xf]
    %v998 = vld [vmem:[%s0 + $0x170] sm:$0xf]
    %v999 = vld [vmem:[%s0 + $0x174] sm:$0xf]
    %v1000 = vld [vmem:[%s0 + $0x178] sm:$0xf]
    %v1001 = vld [vmem:[%s0 + $0x17c] sm:$0xf]
    %v1002 = vld [vmem:[%s0 + $0x180] sm:$0xf]
    %v1003 = vld [vmem:[%s0 + $0x184] sm:$0xf]
    %v1004 = vld [vmem:[%s0 + $0x188] sm:$0xf]
    %v1005 = vld [vmem:[%s0 + $0x18c] sm:$0xf]
    %v1006 = vld [vmem:[%s0 + $0x190] sm:$0xf]
    %v1007 = vld [vmem:[%s0 + $0x194] sm:$0xf]
    %v1008 = vld [vmem:[%s0 + $0x198] sm:$0xf]
    %v1009 = vld [vmem:[%s0 + $0x19c] sm:$0xf]
    %v1010 = vld [vmem:[%s0 + $0x1a0] sm:$0xf]
    %v1011 = vld [vmem:[%s0 + $0x1a4] sm:$0xf]
    %v1012 = vld [vmem:[%s0 + $0x1a8] sm:$0xf]
    %v1013 = vld [vmem:[%s0 + $0x1ac] sm:$0xf]
    %v1014 = vld [vmem:[%s0 + $0x1b0] sm:$0xf]
    %v1015 = vld [vmem:[%s0 + $0x1b4] sm:$0xf]
    %v1016 = vld [vmem:[%s0 + $0x1b8] sm:$0xf]
    %v1017 = vld [vmem:[%s0 + $0x1bc] sm:$0xf]
    %v1018 = vld [vmem:[%s0 + $0x1c0] sm:$0xf]
    %v1019 = vld [vmem:[%s0 + $0x1c4] sm:$0xf]
    %v1020 = vld [vmem:[%s0 + $0x1c8] sm:$0xf]
    %v1021 = vld [vmem:[%s0 + $0x1cc] sm:$0xf]
    %v1022 = vld [vmem:[%s0 + $0x1d0] sm:$0xf]
    %v1023 = vld [vmem:[%s0 + $0x1d4] sm:$0xf]
    %v1024 = vld [vmem:[%s0 + $0x1d8] sm:$0xf]
    %v1025 = vld [vmem:[%s0 + $0x1dc] sm:$0xf]
    %v1026 = vld [vmem:[%s0 + $0x1e0] sm:$0xf]
    %v1027 = vld [vmem:[%s0 + $0x1e4] sm:$0xf]
    %v1028 = vld [vmem:[%s0 + $0x1e8] sm:$0xf]
    %v1029 = vld [vmem:[%s0 + $0x1ec] sm:$0xf]
    %v1030 = vld [vmem:[%s0 + $0x1f0] sm:$0xf]
    %v1031 = vld [vmem:[%s0 + $0x1f4] sm:$0xf]
    %v1032 = vld [vmem:[%s0 + $0x1f8] sm:$0xf]
    %v1033 = vld [vmem:[%s0 + $0x1fc] sm:$0xf]
    %v1034 = vld [vmem:[%s0 + $0x200] sm:$0xf]
    %v1035 = vld [vmem:[%s0 + $0x204] sm:$0xf]
    %v1036 = vld [vmem:[%s0 + $0x208] sm:$0xf]
    %v1037 = vld [vmem:[%s0 + $0x20c] sm:$0xf]
    %v1038 = vld [vmem:[%s0 + $0x210] sm:$0xf]
    %v1039 = vld [vmem:[%s0 + $0x214] sm:$0xf]
    %v1040 = vld [vmem:[%s0 + $0x218] sm:$0xf]
    %v1041 = vld [vmem:[%s0 + $0x21c] sm:$0xf]
    %v1042 = vld [vmem:[%s0 + $0x220] sm:$0xf]
    %v1043 = vld [vmem:[%s0 + $0x224] sm:$0xf]
    %v1044 = vld [vmem:[%s0 + $0x228] sm:$0xf]
    %v1045 = vld [vmem:[%s0 + $0x22c] sm:$0xf]
    %v1046 = vld [vmem:[%s0 + $0x230] sm:$0xf]
    %v1047 = vld [vmem:[%s0 + $0x234] sm:$0xf]
    %v1048 = vld [vmem:[%s0 + $0x238] sm:$0xf]
    %v1049 = vld [vmem:[%s0 + $0x23c] sm:$0xf]
    %v1050 = vld [vmem:[%s0 + $0x240] sm:$0xf]
    %v1051 = vld [vmem:[%s0 + $0x244] sm:$0xf]
    %v1052 = vld [vmem:[%s0 + $0x248] sm:$0xf]
    %v1053 = vld [vmem:[%s0 + $0x24c] sm:$0xf]
    %v1054 = vld [vmem:[%s0 + $0x250] sm:$0xf]
    %v1055 = vld [vmem:[%s0 + $0x254] sm:$0xf]
    %v1056 = vld [vmem:[%s0 + $0x258] sm:$0xf]
    %v1057 = vld [vmem:[%s0 + $0x25c] sm:$0xf]
    %v1058 = vld [vmem:[%s0 + $0x260] sm:$0xf]
    %v1059 = vld [vmem:[%s0 + $0x264] sm:$0xf]
    %v1060 = vld [vmem:[%s0 + $0x268] sm:$0xf]
    %v1061 = vld [vmem:[%s0 + $0x26c] sm:$0xf]
    %v1062 = vld [vmem:[%s0 + $0x270] sm:$0xf]
    %v1063 = vld [vmem:[%s0 + $0x274] sm:$0xf]
    %v1064 = vld [vmem:[%s0 + $0x278] sm:$0xf]
    %v1065 = vld [vmem:[%s0 + $0x27c] sm:$0xf]
    %v1066 = vld [vmem:[%s0 + $0x280] sm:$0xf]
    %v1067 = vld [vmem:[%s0 + $0x284] sm:$0xf]
    %v1068 = vld [vmem:[%s0 + $0x288] sm:$0xf]
    %v1069 = vld [vmem:[%s0 + $0x28c] sm:$0xf]
    %v1070 = vld [vmem:[%s0 + $0x290] sm:$0xf]
    %v1071 = vld [vmem:[%s0 + $0x294] sm:$0xf]
    %v1072 = vld [vmem:[%s0 + $0x298] sm:$0xf]
    %v1073 = vld [vmem:[%s0 + $0x29c] sm:$0xf]
    %v1074 = vld [vmem:[%s0 + $0x2a0] sm:$0xf]
    %v1075 = vld [vmem:[%s0 + $0x2a4] sm:$0xf]
    %v1076 = vld [vmem:[%s0 + $0x2a8] sm:$0xf]
    %v1077 = vld [vmem:[%s0 + $0x2ac] sm:$0xf]
    %v1078 = vld [vmem:[%s0 + $0x2b0] sm:$0xf]
    %v1079 = vld [vmem:[%s0 + $0x2b4] sm:$0xf]
    %v1080 = vld [vmem:[%s0 + $0x2b8] sm:$0xf]
    %v1081 = vld [vmem:[%s0 + $0x2bc] sm:$0xf]
    %v1082 = vld [vmem:[%s0 + $0x2c0] sm:$0xf]
    %v1083 = vld [vmem:[%s0 + $0x2c4] sm:$0xf]
    %v1084 = vld [vmem:[%s0 + $0x2c8] sm:$0xf]
    %v1085 = vld [vmem:[%s0 + $0x2cc] sm:$0xf]
    %v1086 = vld [vmem:[%s0 + $0x2d0] sm:$0xf]
    %v1087 = vld [vmem:[%s0 + $0x2d4] sm:$0xf]
    %v1088 = vld [vmem:[%s0 + $0x2d8] sm:$0xf]
    %v1089 = vld [vmem:[%s0 + $0x2dc] sm:$0xf]
    %v1090 = vld [vmem:[%s0 + $0x2e0] sm:$0xf]
    %v1091 = vld [vmem:[%s0 + $0x2e4] sm:$0xf]
    %v1092 = vld [vmem:[%s0 + $0x2e8] sm:$0xf]
    %v1093 = vld [vmem:[%s0 + $0x2ec] sm:$0xf]
    %v1094 = vld [vmem:[%s0 + $0x2f0] sm:$0xf]
    %v1095 = vld [vmem:[%s0 + $0x2f4] sm:$0xf]
    %v1096 = vld [vmem:[%s0 + $0x2f8] sm:$0xf]
    %v1097 = vld [vmem:[%s0 + $0x2fc] sm:$0xf]
    %v1098 = vld [vmem:[%s0 + $0x300] sm:$0xf]
    %v1099 = vld [vmem:[%s0 + $0x304] sm:$0xf]
    %v1100 = vld [vmem:[%s0 + $0x308] sm:$0xf]
    %v1101 = vld [vmem:[%s0 + $0x30c] sm:$0xf]
    %v1102 = vld [vmem:[%s0 + $0x310] sm:$0xf]
    %v1103 = vld [vmem:[%s0 + $0x314] sm:$0xf]
    %v1104 = vld [vmem:[%s0 + $0x318] sm:$0xf]
    %v1105 = vld [vmem:[%s0 + $0x31c] sm:$0xf]
    %v1106 = vld [vmem:[%s0 + $0x320] sm:$0xf]
    %v1107 = vld [vmem:[%s0 + $0x324] sm:$0xf]
    %v1108 = vld [vmem:[%s0 + $0x328] sm:$0xf]
    %v1109 = vld [vmem:[%s0 + $0x32c] sm:$0xf]
    %v1110 = vld [vmem:[%s0 + $0x330] sm:$0xf]
    %v1111 = vld [vmem:[%s0 + $0x334] sm:$0xf]
    %v1112 = vld [vmem:[%s0 + $0x338] sm:$0xf]
    %v1113 = vld [vmem:[%s0 + $0x33c] sm:$0xf]
    %v1114 = vld [vmem:[%s0 + $0x340] sm:$0xf]
    %v1115 = vld [vmem:[%s0 + $0x344] sm:$0xf]
    %v1116 = vld [vmem:[%s0 + $0x348] sm:$0xf]
    %v1117 = vld [vmem:[%s0 + $0x34c] sm:$0xf]
    %v1118 = vld [vmem:[%s0 + $0x350] sm:$0xf]
    %v1119 = vld [vmem:[%s0 + $0x354] sm:$0xf]
    %v1120 = vld [vmem:[%s0 + $0x358] sm:$0xf]
    %v1121 = vld [vmem:[%s0 + $0x35c] sm:$0xf]
    %v1122 = vld [vmem:[%s0 + $0x360] sm:$0xf]
    %v1123 = vld [vmem:[%s0 + $0x364] sm:$0xf]
    %v1124 = vld [vmem:[%s0 + $0x368] sm:$0xf]
    %v1125 = vld [vmem:[%s0 + $0x36c] sm:$0xf]
    %v1126 = vld [vmem:[%s0 + $0x370] sm:$0xf]
    %v1127 = vld [vmem:[%s0 + $0x374] sm:$0xf]
    %v1128 = vld [vmem:[%s0 + $0x378] sm:$0xf]
    %v1129 = vld [vmem:[%s0 + $0x37c] sm:$0xf]
    %v1130 = vld [vmem:[%s0 + $0x380] sm:$0xf]
    %v1131 = vld [vmem:[%s0 + $0x384] sm:$0xf]
    %v1132 = vld [vmem:[%s0 + $0x388] sm:$0xf]
    %v1133 = vld [vmem:[%s0 + $0x38c] sm:$0xf]
    %v1134 = vld [vmem:[%s0 + $0x390] sm:$0xf]
    %v1135 = vld [vmem:[%s0 + $0x394] sm:$0xf]
    %v1136 = vld [vmem:[%s0 + $0x398] sm:$0xf]
    %v1137 = vld [vmem:[%s0 + $0x39c] sm:$0xf]
    %v1138 = vld [vmem:[%s1] sm:$0xf]
    %v1139 = vld [vmem:[%s1 + $0x4] sm:$0xf]
    %v1140 = vld [vmem:[%s1 + $0x8] sm:$0xf]
    %v1141 = vld [vmem:[%s1 + $0xc] sm:$0xf]
    %v1374 = vunpack.c.l.b16 %v906
    %v1375 = vunpack.c.l.b16 %v907
    %v1376 = vunpack.c.l.b16 %v908
    %v1377 = vunpack.c.l.b16 %v909
    %v1378 = vunpack.c.l.b16 %v910
    %v1379 = vunpack.c.l.b16 %v911
    %v1380 = vunpack.c.l.b16 %v912
    %v1381 = vunpack.c.l.b16 %v913
    %v1382 = vunpack.c.l.b16 %v914
    %v1383 = vunpack.c.l.b16 %v915
    %v1384 = vunpack.c.l.b16 %v916
    %v1385 = vunpack.c.l.b16 %v917
    %v1386 = vunpack.c.l.b16 %v918
    %v1387 = vunpack.c.l.b16 %v919
    %v1388 = vunpack.c.l.b16 %v920
    %v1389 = vunpack.c.l.b16 %v921
    %v1390 = vunpack.c.l.b16 %v922
    %v1391 = vunpack.c.l.b16 %v923
    %v1392 = vunpack.c.l.b16 %v924
    %v1393 = vunpack.c.l.b16 %v925
    %v1394 = vunpack.c.l.b16 %v926
    %v1395 = vunpack.c.l.b16 %v927
    %v1396 = vunpack.c.l.b16 %v928
    %v1397 = vunpack.c.l.b16 %v929
    %v1398 = vunpack.c.l.b16 %v930
    %v1399 = vunpack.c.l.b16 %v931
    %v1400 = vunpack.c.l.b16 %v932
    %v1401 = vunpack.c.l.b16 %v933
    %v1402 = vunpack.c.l.b16 %v934
    %v1403 = vunpack.c.l.b16 %v935
    %v1404 = vunpack.c.l.b16 %v936
    %v1405 = vunpack.c.l.b16 %v937
    %v1406 = vunpack.c.l.b16 %v938
    %v1407 = vunpack.c.l.b16 %v939
    %v1408 = vunpack.c.l.b16 %v940
    %v1409 = vunpack.c.l.b16 %v941
    %v1410 = vunpack.c.l.b16 %v942
    %v1411 = vunpack.c.l.b16 %v943
    %v1412 = vunpack.c.l.b16 %v944
    %v1413 = vunpack.c.l.b16 %v945
    %v1414 = vunpack.c.l.b16 %v946
    %v1415 = vunpack.c.l.b16 %v947
    %v1416 = vunpack.c.l.b16 %v948
    %v1417 = vunpack.c.l.b16 %v949
    %v1418 = vunpack.c.l.b16 %v950
    %v1419 = vunpack.c.l.b16 %v951
    %v1420 = vunpack.c.l.b16 %v952
    %v1421 = vunpack.c.l.b16 %v953
    %v1422 = vunpack.c.l.b16 %v954
    %v1423 = vunpack.c.l.b16 %v955
    %v1424 = vunpack.c.l.b16 %v956
    %v1425 = vunpack.c.l.b16 %v957
    %v1426 = vunpack.c.l.b16 %v958
    %v1427 = vunpack.c.l.b16 %v959
    %v1428 = vunpack.c.l.b16 %v960
    %v1429 = vunpack.c.l.b16 %v961
    %v1430 = vunpack.c.l.b16 %v962
    %v1431 = vunpack.c.l.b16 %v963
    %v1432 = vunpack.c.l.b16 %v964
    %v1433 = vunpack.c.l.b16 %v965
    %v1434 = vunpack.c.l.b16 %v966
    %v1435 = vunpack.c.l.b16 %v967
    %v1436 = vunpack.c.l.b16 %v968
    %v1437 = vunpack.c.l.b16 %v969
    %v1438 = vunpack.c.l.b16 %v970
    %v1439 = vunpack.c.l.b16 %v971
    %v1440 = vunpack.c.l.b16 %v972
    %v1441 = vunpack.c.l.b16 %v973
    %v1442 = vunpack.c.l.b16 %v974
    %v1443 = vunpack.c.l.b16 %v975
    %v1444 = vunpack.c.l.b16 %v976
    %v1445 = vunpack.c.l.b16 %v977
    %v1446 = vunpack.c.l.b16 %v978
    %v1447 = vunpack.c.l.b16 %v979
    %v1448 = vunpack.c.l.b16 %v980
    %v1449 = vunpack.c.l.b16 %v981
    %v1450 = vunpack.c.l.b16 %v982
    %v1451 = vunpack.c.l.b16 %v983
    %v1452 = vunpack.c.l.b16 %v984
    %v1453 = vunpack.c.l.b16 %v985
    %v1454 = vunpack.c.l.b16 %v986
    %v1455 = vunpack.c.l.b16 %v987
    %v1456 = vunpack.c.l.b16 %v988
    %v1457 = vunpack.c.l.b16 %v989
    %v1458 = vunpack.c.l.b16 %v990
    %v1459 = vunpack.c.l.b16 %v991
    %v1460 = vunpack.c.l.b16 %v992
    %v1461 = vunpack.c.l.b16 %v993
    %v1462 = vunpack.c.l.b16 %v994
    %v1463 = vunpack.c.l.b16 %v995
    %v1464 = vunpack.c.l.b16 %v996
    %v1465 = vunpack.c.l.b16 %v997
    %v1466 = vunpack.c.l.b16 %v998
    %v1467 = vunpack.c.l.b16 %v999
    %v1468 = vunpack.c.l.b16 %v1000
    %v1469 = vunpack.c.l.b16 %v1001
    %v1470 = vunpack.c.l.b16 %v1002
    %v1471 = vunpack.c.l.b16 %v1003
    %v1472 = vunpack.c.l.b16 %v1004
    %v1473 = vunpack.c.l.b16 %v1005
    %v1474 = vunpack.c.l.b16 %v1006
    %v1475 = vunpack.c.l.b16 %v1007
    %v1476 = vunpack.c.l.b16 %v1008
    %v1477 = vunpack.c.l.b16 %v1009
    %v1478 = vunpack.c.l.b16 %v1010
    %v1479 = vunpack.c.l.b16 %v1011
    %v1480 = vunpack.c.l.b16 %v1012
    %v1481 = vunpack.c.l.b16 %v1013
    %v1482 = vunpack.c.l.b16 %v1014
    %v1483 = vunpack.c.l.b16 %v1015
    %v1484 = vunpack.c.l.b16 %v1016
    %v1485 = vunpack.c.l.b16 %v1017
    %v1486 = vunpack.c.l.b16 %v1018
    %v1487 = vunpack.c.l.b16 %v1019
    %v1488 = vunpack.c.l.b16 %v1020
    %v1489 = vunpack.c.l.b16 %v1021
    %v1490 = vunpack.c.l.b16 %v1022
    %v1491 = vunpack.c.l.b16 %v1023
    %v1492 = vunpack.c.l.b16 %v1024
    %v1493 = vunpack.c.l.b16 %v1025
    %v1494 = vunpack.c.l.b16 %v1026
    %v1495 = vunpack.c.l.b16 %v1027
    %v1496 = vunpack.c.l.b16 %v1028
    %v1497 = vunpack.c.l.b16 %v1029
    %v1498 = vunpack.c.l.b16 %v1030
    %v1499 = vunpack.c.l.b16 %v1031
    %v1500 = vunpack.c.l.b16 %v1032
    %v1501 = vunpack.c.l.b16 %v1033
    %v1502 = vunpack.c.l.b16 %v1034
    %v1503 = vunpack.c.l.b16 %v1035
    %v1504 = vunpack.c.l.b16 %v1036
    %v1505 = vunpack.c.l.b16 %v1037
    %v1506 = vunpack.c.l.b16 %v1038
    %v1507 = vunpack.c.l.b16 %v1039
    %v1508 = vunpack.c.l.b16 %v1040
    %v1509 = vunpack.c.l.b16 %v1041
    %v1510 = vunpack.c.l.b16 %v1042
    %v1511 = vunpack.c.l.b16 %v1043
    %v1512 = vunpack.c.l.b16 %v1044
    %v1513 = vunpack.c.l.b16 %v1045
    %v1514 = vunpack.c.l.b16 %v1046
    %v1515 = vunpack.c.l.b16 %v1047
    %v1516 = vunpack.c.l.b16 %v1048
    %v1517 = vunpack.c.l.b16 %v1049
    %v1518 = vunpack.c.l.b16 %v1050
    %v1519 = vunpack.c.l.b16 %v1051
    %v1520 = vunpack.c.l.b16 %v1052
    %v1521 = vunpack.c.l.b16 %v1053
    %v1522 = vunpack.c.l.b16 %v1054
    %v1523 = vunpack.c.l.b16 %v1055
    %v1524 = vunpack.c.l.b16 %v1056
    %v1525 = vunpack.c.l.b16 %v1057
    %v1526 = vunpack.c.l.b16 %v1058
    %v1527 = vunpack.c.l.b16 %v1059
    %v1528 = vunpack.c.l.b16 %v1060
    %v1529 = vunpack.c.l.b16 %v1061
    %v1530 = vunpack.c.l.b16 %v1062
    %v1531 = vunpack.c.l.b16 %v1063
    %v1532 = vunpack.c.l.b16 %v1064
    %v1533 = vunpack.c.l.b16 %v1065
    %v1534 = vunpack.c.l.b16 %v1066
    %v1535 = vunpack.c.l.b16 %v1067
    %v1536 = vunpack.c.l.b16 %v1068
    %v1537 = vunpack.c.l.b16 %v1069
    %v1538 = vunpack.c.l.b16 %v1070
    %v1539 = vunpack.c.l.b16 %v1071
    %v1540 = vunpack.c.l.b16 %v1072
    %v1541 = vunpack.c.l.b16 %v1073
    %v1542 = vunpack.c.l.b16 %v1074
    %v1543 = vunpack.c.l.b16 %v1075
    %v1544 = vunpack.c.l.b16 %v1076
    %v1545 = vunpack.c.l.b16 %v1077
    %v1546 = vunpack.c.l.b16 %v1078
    %v1547 = vunpack.c.l.b16 %v1079
    %v1548 = vunpack.c.l.b16 %v1080
    %v1549 = vunpack.c.l.b16 %v1081
    %v1550 = vunpack.c.l.b16 %v1082
    %v1551 = vunpack.c.l.b16 %v1083
    %v1552 = vunpack.c.l.b16 %v1084
    %v1553 = vunpack.c.l.b16 %v1085
    %v1554 = vunpack.c.l.b16 %v1086
    %v1555 = vunpack.c.l.b16 %v1087
    %v1556 = vunpack.c.l.b16 %v1088
    %v1557 = vunpack.c.l.b16 %v1089
    %v1558 = vunpack.c.l.b16 %v1090
    %v1559 = vunpack.c.l.b16 %v1091
    %v1560 = vunpack.c.l.b16 %v1092
    %v1561 = vunpack.c.l.b16 %v1093
    %v1562 = vunpack.c.l.b16 %v1094
    %v1563 = vunpack.c.l.b16 %v1095
    %v1564 = vunpack.c.l.b16 %v1096
    %v1565 = vunpack.c.l.b16 %v1097
    %v1566 = vunpack.c.l.b16 %v1098
    %v1567 = vunpack.c.l.b16 %v1099
    %v1568 = vunpack.c.l.b16 %v1100
    %v1569 = vunpack.c.l.b16 %v1101
    %v1570 = vunpack.c.l.b16 %v1102
    %v1571 = vunpack.c.l.b16 %v1103
    %v1572 = vunpack.c.l.b16 %v1104
    %v1573 = vunpack.c.l.b16 %v1105
    %v1574 = vunpack.c.l.b16 %v1106
    %v1575 = vunpack.c.l.b16 %v1107
    %v1576 = vunpack.c.l.b16 %v1108
    %v1577 = vunpack.c.l.b16 %v1109
    %v1578 = vunpack.c.l.b16 %v1110
    %v1579 = vunpack.c.l.b16 %v1111
    %v1580 = vunpack.c.l.b16 %v1112
    %v1581 = vunpack.c.l.b16 %v1113
    %v1582 = vunpack.c.l.b16 %v1114
    %v1583 = vunpack.c.l.b16 %v1115
    %v1584 = vunpack.c.l.b16 %v1116
    %v1585 = vunpack.c.l.b16 %v1117
    %v1586 = vunpack.c.l.b16 %v1118
    %v1587 = vunpack.c.l.b16 %v1119
    %v1588 = vunpack.c.l.b16 %v1120
    %v1589 = vunpack.c.l.b16 %v1121
    %v1590 = vunpack.c.l.b16 %v1122
    %v1591 = vunpack.c.l.b16 %v1123
    %v1592 = vunpack.c.l.b16 %v1124
    %v1593 = vunpack.c.l.b16 %v1125
    %v1594 = vunpack.c.l.b16 %v1126
    %v1595 = vunpack.c.l.b16 %v1127
    %v1596 = vunpack.c.l.b16 %v1128
    %v1597 = vunpack.c.l.b16 %v1129
    %v1598 = vunpack.c.l.b16 %v1130
    %v1599 = vunpack.c.l.b16 %v1131
    %v1600 = vunpack.c.l.b16 %v1132
    %v1601 = vunpack.c.l.b16 %v1133
    %v1602 = vunpack.c.l.b16 %v1134
    %v1603 = vunpack.c.l.b16 %v1135
    %v1604 = vunpack.c.l.b16 %v1136
    %v1605 = vunpack.c.l.b16 %v1137
    %v1606 = vpack.c.b16 %v1375, %v1374
    %v1607 = vpack.c.b16 %v1377, %v1376
    %v1608 = vpack.c.b16 %v1379, %v1378
    %v1609 = vpack.c.b16 %v1381, %v1380
    %v1610 = vpack.c.b16 %v1383, %v1382
    %v1611 = vpack.c.b16 %v1385, %v1384
    %v1612 = vpack.c.b16 %v1387, %v1386
    %v1613 = vpack.c.b16 %v1389, %v1388
    %v1614 = vpack.c.b16 %v1391, %v1390
    %v1615 = vpack.c.b16 %v1393, %v1392
    %v1616 = vpack.c.b16 %v1395, %v1394
    %v1617 = vpack.c.b16 %v1397, %v1396
    %v1618 = vpack.c.b16 %v1399, %v1398
    %v1619 = vpack.c.b16 %v1401, %v1400
    %v1620 = vpack.c.b16 %v1403, %v1402
    %v1621 = vpack.c.b16 %v1405, %v1404
    %v1622 = vpack.c.b16 %v1407, %v1406
    %v1623 = vpack.c.b16 %v1409, %v1408
    %v1624 = vpack.c.b16 %v1411, %v1410
    %v1625 = vpack.c.b16 %v1413, %v1412
    %v1626 = vpack.c.b16 %v1415, %v1414
    %v1627 = vpack.c.b16 %v1417, %v1416
    %v1628 = vpack.c.b16 %v1419, %v1418
    %v1629 = vpack.c.b16 %v1421, %v1420
    %v1630 = vpack.c.b16 %v1423, %v1422
    %v1631 = vpack.c.b16 %v1425, %v1424
    %v1632 = vpack.c.b16 %v1427, %v1426
    %v1633 = vpack.c.b16 %v1429, %v1428
    %v1634 = vpack.c.b16 %v1431, %v1430
    %v1635 = vpack.c.b16 %v1433, %v1432
    %v1636 = vpack.c.b16 %v1435, %v1434
    %v1637 = vpack.c.b16 %v1437, %v1436
    %v1638 = vpack.c.b16 %v1439, %v1438
    %v1639 = vpack.c.b16 %v1441, %v1440
    %v1640 = vpack.c.b16 %v1443, %v1442
    %v1641 = vpack.c.b16 %v1445, %v1444
    %v1642 = vpack.c.b16 %v1447, %v1446
    %v1643 = vpack.c.b16 %v1449, %v1448
    %v1644 = vpack.c.b16 %v1451, %v1450
    %v1645 = vpack.c.b16 %v1453, %v1452
    %v1646 = vpack.c.b16 %v1455, %v1454
    %v1647 = vpack.c.b16 %v1457, %v1456
    %v1648 = vpack.c.b16 %v1459, %v1458
    %v1649 = vpack.c.b16 %v1461, %v1460
    %v1650 = vpack.c.b16 %v1463, %v1462
    %v1651 = vpack.c.b16 %v1465, %v1464
    %v1652 = vpack.c.b16 %v1467, %v1466
    %v1653 = vpack.c.b16 %v1469, %v1468
    %v1654 = vpack.c.b16 %v1471, %v1470
    %v1655 = vpack.c.b16 %v1473, %v1472
    %v1656 = vpack.c.b16 %v1475, %v1474
    %v1657 = vpack.c.b16 %v1477, %v1476
    %v1658 = vpack.c.b16 %v1479, %v1478
    %v1659 = vpack.c.b16 %v1481, %v1480
    %v1660 = vpack.c.b16 %v1483, %v1482
    %v1661 = vpack.c.b16 %v1485, %v1484
    %v1662 = vpack.c.b16 %v1487, %v1486
    %v1663 = vpack.c.b16 %v1489, %v1488
    %v1664 = vpack.c.b16 %v1491, %v1490
    %v1665 = vpack.c.b16 %v1493, %v1492
    %v1666 = vpack.c.b16 %v1495, %v1494
    %v1667 = vpack.c.b16 %v1497, %v1496
    %v1668 = vpack.c.b16 %v1499, %v1498
    %v1669 = vpack.c.b16 %v1501, %v1500
    %v1670 = vpack.c.b16 %v1503, %v1502
    %v1671 = vpack.c.b16 %v1505, %v1504
    %v1672 = vpack.c.b16 %v1507, %v1506
    %v1673 = vpack.c.b16 %v1509, %v1508
    %v1674 = vpack.c.b16 %v1511, %v1510
    %v1675 = vpack.c.b16 %v1513, %v1512
    %v1676 = vpack.c.b16 %v1515, %v1514
    %v1677 = vpack.c.b16 %v1517, %v1516
    %v1678 = vpack.c.b16 %v1519, %v1518
    %v1679 = vpack.c.b16 %v1521, %v1520
    %v1680 = vpack.c.b16 %v1523, %v1522
    %v1681 = vpack.c.b16 %v1525, %v1524
    %v1682 = vpack.c.b16 %v1527, %v1526
    %v1683 = vpack.c.b16 %v1529, %v1528
    %v1684 = vpack.c.b16 %v1531, %v1530
    %v1685 = vpack.c.b16 %v1533, %v1532
    %v1686 = vpack.c.b16 %v1535, %v1534
    %v1687 = vpack.c.b16 %v1537, %v1536
    %v1688 = vpack.c.b16 %v1539, %v1538
    %v1689 = vpack.c.b16 %v1541, %v1540
    %v1690 = vpack.c.b16 %v1543, %v1542
    %v1691 = vpack.c.b16 %v1545, %v1544
    %v1692 = vpack.c.b16 %v1547, %v1546
    %v1693 = vpack.c.b16 %v1549, %v1548
    %v1694 = vpack.c.b16 %v1551, %v1550
    %v1695 = vpack.c.b16 %v1553, %v1552
    %v1696 = vpack.c.b16 %v1555, %v1554
    %v1697 = vpack.c.b16 %v1557, %v1556
    %v1698 = vpack.c.b16 %v1559, %v1558
    %v1699 = vpack.c.b16 %v1561, %v1560
    %v1700 = vpack.c.b16 %v1563, %v1562
    %v1701 = vpack.c.b16 %v1565, %v1564
    %v1702 = vpack.c.b16 %v1567, %v1566
    %v1703 = vpack.c.b16 %v1569, %v1568
    %v1704 = vpack.c.b16 %v1571, %v1570
    %v1705 = vpack.c.b16 %v1573, %v1572
    %v1706 = vpack.c.b16 %v1575, %v1574
    %v1707 = vpack.c.b16 %v1577, %v1576
    %v1708 = vpack.c.b16 %v1579, %v1578
    %v1709 = vpack.c.b16 %v1581, %v1580
    %v1710 = vpack.c.b16 %v1583, %v1582
    %v1711 = vpack.c.b16 %v1585, %v1584
    %v1712 = vpack.c.b16 %v1587, %v1586
    %v1713 = vpack.c.b16 %v1589, %v1588
    %v1714 = vpack.c.b16 %v1591, %v1590
    %v1715 = vpack.c.b16 %v1593, %v1592
    %v1716 = vpack.c.b16 %v1595, %v1594
    %v1717 = vpack.c.b16 %v1597, %v1596
    %v1718 = vpack.c.b16 %v1599, %v1598
    %v1719 = vpack.c.b16 %v1601, %v1600
    %v1720 = vpack.c.b16 %v1603, %v1602
    %v1721 = vpack.c.b16 %v1605, %v1604
    %v1726 = vunpack.c.l.b16 %v1138
    %v1727 = vunpack.c.l.b16 %v1139
    %v1728 = vunpack.c.l.b16 %v1140
    %v1729 = vunpack.c.l.b16 %v1141
    %v1730 = vpack.c.b16 %v1727, %v1726
    %v1731 = vpack.c.b16 %v1729, %v1728
    %vm1734 = vcmask 261120
    %v1736 = vsel %vm1734, %v1606, 0
    %v1739 = vsel %vm1734, %v1607, 0
    %v1742 = vsel %vm1734, %v1608, 0
    %v1745 = vsel %vm1734, %v1609, 0
    %v1748 = vsel %vm1734, %v1610, 0
    %v1751 = vsel %vm1734, %v1611, 0
    %v1754 = vsel %vm1734, %v1612, 0
    %v1757 = vsel %vm1734, %v1613, 0
    %v1760 = vsel %vm1734, %v1614, 0
    %v1763 = vsel %vm1734, %v1615, 0
    %v1766 = vsel %vm1734, %v1616, 0
    %v1769 = vsel %vm1734, %v1617, 0
    %v1772 = vsel %vm1734, %v1618, 0
    %v1775 = vsel %vm1734, %v1619, 0
    %v1778 = vsel %vm1734, %v1620, 0
    %v1781 = vsel %vm1734, %v1621, 0
    %v1784 = vsel %vm1734, %v1622, 0
    %v1787 = vsel %vm1734, %v1623, 0
    %v1790 = vsel %vm1734, %v1624, 0
    %v1793 = vsel %vm1734, %v1625, 0
    %v1796 = vsel %vm1734, %v1626, 0
    %v1799 = vsel %vm1734, %v1627, 0
    %v1802 = vsel %vm1734, %v1628, 0
    %v1805 = vsel %vm1734, %v1629, 0
    %v1808 = vsel %vm1734, %v1630, 0
    %v1811 = vsel %vm1734, %v1631, 0
    %v1814 = vsel %vm1734, %v1632, 0
    %v1817 = vsel %vm1734, %v1633, 0
    %v1820 = vsel %vm1734, %v1634, 0
    %v1823 = vsel %vm1734, %v1635, 0
    %v1826 = vsel %vm1734, %v1636, 0
    %v1829 = vsel %vm1734, %v1637, 0
    %v1832 = vsel %vm1734, %v1638, 0
    %v1835 = vsel %vm1734, %v1639, 0
    %v1838 = vsel %vm1734, %v1640, 0
    %v1841 = vsel %vm1734, %v1641, 0
    %v1844 = vsel %vm1734, %v1642, 0
    %v1847 = vsel %vm1734, %v1643, 0
    %v1850 = vsel %vm1734, %v1644, 0
    %v1853 = vsel %vm1734, %v1645, 0
    %v1856 = vsel %vm1734, %v1646, 0
    %v1859 = vsel %vm1734, %v1647, 0
    %v1862 = vsel %vm1734, %v1648, 0
    %v1865 = vsel %vm1734, %v1649, 0
    %v1868 = vsel %vm1734, %v1650, 0
    %v1871 = vsel %vm1734, %v1651, 0
    %v1874 = vsel %vm1734, %v1652, 0
    %v1877 = vsel %vm1734, %v1653, 0
    %v1880 = vsel %vm1734, %v1654, 0
    %v1883 = vsel %vm1734, %v1655, 0
    %v1886 = vsel %vm1734, %v1656, 0
    %v1889 = vsel %vm1734, %v1657, 0
    %v1892 = vsel %vm1734, %v1658, 0
    %v1895 = vsel %vm1734, %v1659, 0
    %v1898 = vsel %vm1734, %v1660, 0
    %v1901 = vsel %vm1734, %v1661, 0
    %v1904 = vsel %vm1734, %v1662, 0
    %v1907 = vsel %vm1734, %v1663, 0
    %v1910 = vsel %vm1734, %v1664, 0
    %v1913 = vsel %vm1734, %v1665, 0
    %v1916 = vsel %vm1734, %v1666, 0
    %v1919 = vsel %vm1734, %v1667, 0
    %v1922 = vsel %vm1734, %v1668, 0
    %v1925 = vsel %vm1734, %v1669, 0
    %v1928 = vsel %vm1734, %v1670, 0
    %v1931 = vsel %vm1734, %v1671, 0
    %v1934 = vsel %vm1734, %v1672, 0
    %v1937 = vsel %vm1734, %v1673, 0
    %v1940 = vsel %vm1734, %v1674, 0
    %v1943 = vsel %vm1734, %v1675, 0
    %v1946 = vsel %vm1734, %v1676, 0
    %v1949 = vsel %vm1734, %v1677, 0
    %v1952 = vsel %vm1734, %v1678, 0
    %v1955 = vsel %vm1734, %v1679, 0
    %v1958 = vsel %vm1734, %v1680, 0
    %v1961 = vsel %vm1734, %v1681, 0
    %v1964 = vsel %vm1734, %v1682, 0
    %v1967 = vsel %vm1734, %v1683, 0
    %v1970 = vsel %vm1734, %v1684, 0
    %v1973 = vsel %vm1734, %v1685, 0
    %v1976 = vsel %vm1734, %v1686, 0
    %v1979 = vsel %vm1734, %v1687, 0
    %v1982 = vsel %vm1734, %v1688, 0
    %v1985 = vsel %vm1734, %v1689, 0
    %v1988 = vsel %vm1734, %v1690, 0
    %v1991 = vsel %vm1734, %v1691, 0
    %v1994 = vsel %vm1734, %v1692, 0
    %v1997 = vsel %vm1734, %v1693, 0
    %v2000 = vsel %vm1734, %v1694, 0
    %v2003 = vsel %vm1734, %v1695, 0
    %v2006 = vsel %vm1734, %v1696, 0
    %v2009 = vsel %vm1734, %v1697, 0
    %v2012 = vsel %vm1734, %v1698, 0
    %v2015 = vsel %vm1734, %v1699, 0
    %v2018 = vsel %vm1734, %v1700, 0
    %v2021 = vsel %vm1734, %v1701, 0
    %v2024 = vsel %vm1734, %v1702, 0
    %v2027 = vsel %vm1734, %v1703, 0
    %v2030 = vsel %vm1734, %v1704, 0
    %v2033 = vsel %vm1734, %v1705, 0
    %v2036 = vsel %vm1734, %v1706, 0
    %v2039 = vsel %vm1734, %v1707, 0
    %v2042 = vsel %vm1734, %v1708, 0
    %v2045 = vsel %vm1734, %v1709, 0
    %v2048 = vsel %vm1734, %v1710, 0
    %v2051 = vsel %vm1734, %v1711, 0
    %v2054 = vsel %vm1734, %v1712, 0
    %v2057 = vsel %vm1734, %v1713, 0
    %v2060 = vsel %vm1734, %v1714, 0
    %v2063 = vsel %vm1734, %v1715, 0
    %v2066 = vsel %vm1734, %v1716, 0
    %v2069 = vsel %vm1734, %v1717, 0
    %v2072 = vsel %vm1734, %v1718, 0
    %v2075 = vsel %vm1734, %v1719, 0
    %v2078 = vsel %vm1734, %v1720, 0
    %v2081 = vsel %vm1734, %v1721, 0
    %2083 = vmatprep.subr.bf16.mxu0 0
    %2084 = vmatpush1.bf16.msra.mxu0 %v1730
    %2085 = vmatprep.subr.bf16.mxu0 0
    %2086 = vmatpush1.bf16.msra.mxu0 %v1731
    %2087 = vmatprep.subr.bf16.mxu0 0
    %2088 = vmatpush1.bf16.msra.mxu0 0
    %2089 = vmatprep.subr.bf16.mxu0 0
    %2090 = vmatpush1.bf16.msra.mxu0 0
    %2091 = vmatprep.subr.bf16.mxu0 0
    %2092 = vmatpush1.bf16.msra.mxu0 0
    %2093 = vmatprep.subr.bf16.mxu0 0
    %2094 = vmatpush1.bf16.msra.mxu0 0
    %2095 = vmatprep.subr.bf16.mxu0 0
    %2096 = vmatpush1.bf16.msra.mxu0 0
    %2097 = vmatprep.subr.bf16.mxu0 0
    %2098 = vmatpush1.bf16.msra.mxu0 0
    %2099 = vmatprep.subr.bf16.mxu0 0
    %2100 = vmatpush1.bf16.msra.mxu0 0
    %2101 = vmatprep.subr.bf16.mxu0 0
    %2102 = vmatpush1.bf16.msra.mxu0 0
    %2103 = vmatprep.subr.bf16.mxu0 0
    %2104 = vmatpush1.bf16.msra.mxu0 0
    %2105 = vmatprep.subr.bf16.mxu0 0
    %2106 = vmatpush1.bf16.msra.mxu0 0
    %2107 = vmatprep.subr.bf16.mxu0 0
    %2108 = vmatpush1.bf16.msra.mxu0 0
    %2109 = vmatprep.subr.bf16.mxu0 0
    %2110 = vmatpush1.bf16.msra.mxu0 0
    %2111 = vmatprep.subr.bf16.mxu0 0
    %2112 = vmatpush1.bf16.msra.mxu0 0
    %2113 = vmatprep.subr.bf16.mxu0 0
    %2114 = vmatpush1.bf16.msra.mxu0 0
    %2115 = vmatprep.mubr.bf16.mxu0 0
    %2116 = vmatmul.mubr.bf16.gmra.mrb[0].mxu0 %v1736
    %v2117 = vpop.f32.mrb[0].mxu0
    %v2118 = vadd.f32 0.0, %v2117
    %v2119 = vpop.f32.mrb[0].mxu0
    %v2120 = vpop.f32.mrb[0].mxu0
    %v2121 = vadd.f32 0.0, %v2120
    %v2122 = vpop.f32.mrb[0].mxu0
    %2123 = vmatprep.mubr.bf16.mxu0 0
    %2124 = vmatmul.mubr.bf16.gmra.mrb[0].mxu0 %v1739
    %v2125 = vpop.f32.mrb[0].mxu0
    %v2126 = vadd.f32 0.0, %v2125
    %v2127 = vpop.f32.mrb[0].mxu0
    %v2128 = vpop.f32.mrb[0].mxu0
    %v2129 = vadd.f32 0.0, %v2128
    %v2130 = vpop.f32.mrb[0].mxu0
    %2131 = vmatprep.mubr.bf16.mxu0 0
    %2132 = vmatmul.mubr.bf16.gmra.mrb[0].mxu0 %v1742
    %v2133 = vpop.f32.mrb[0].mxu0
    %v2134 = vadd.f32 0.0, %v2133
    %v2135 = vpop.f32.mrb[0].mxu0
    %v2136 = vpop.f32.mrb[0].mxu0
    %v2137 = vadd.f32 0.0, %v2136
    %v2138 = vpop.f32.mrb[0].mxu0
    %2139 = vmatprep.mubr.bf16.mxu0 0
    %2140 = vmatmul.mubr.bf16.gmra.mrb[0].mxu0 %v1745
    %v2141 = vpop.f32.mrb[0].mxu0
    %v2142 = vadd.f32 0.0, %v2141
    %v2143 = vpop.f32.mrb[0].mxu0
    %v2144 = vpop.f32.mrb[0].mxu0
    %v2145 = vadd.f32 0.0, %v2144
    %v2146 = vpop.f32.mrb[0].mxu0
    %2147 = vmatprep.mubr.bf16.mxu0 0
    %2148 = vmatmul.mubr.bf16.gmra.mrb[0].mxu0 %v1748
    %v2149 = vpop.f32.mrb[0].mxu0
    %v2150 = vadd.f32 0.0, %v2149
    %v2151 = vpop.f32.mrb[0].mxu0
    %v2152 = vpop.f32.mrb[0].mxu0
    %v2153 = vadd.f32 0.0, %v2152
    %v2154 = vpop.f32.mrb[0].mxu0
    %2155 = vmatprep.mubr.bf16.mxu0 0
    %2156 = vmatmul.mubr.bf16.gmra.mrb[0].mxu0 %v1751
    %v2157 = vpop.f32.mrb[0].mxu0
    %v2158 = vadd.f32 0.0, %v2157
    %v2159 = vpop.f32.mrb[0].mxu0
    %v2160 = vpop.f32.mrb[0].mxu0
    %v2161 = vadd.f32 0.0, %v2160
    %v2162 = vpop.f32.mrb[0].mxu0
    %2163 = vmatprep.mubr.bf16.mxu0 0
    %2164 = vmatmul.mubr.bf16.gmra.mrb[0].mxu0 %v1754
    %v2165 = vpop.f32.mrb[0].mxu0
    %v2166 = vadd.f32 0.0, %v2165
    %v2167 = vpop.f32.mrb[0].mxu0
    %v2168 = vpop.f32.mrb[0].mxu0
    %v2169 = vadd.f32 0.0, %v2168
    %v2170 = vpop.f32.mrb[0].mxu0
    %2171 = vmatprep.mubr.bf16.mxu0 0
    %2172 = vmatmul.mubr.bf16.gmra.mrb[0].mxu0 %v1757
    %v2173 = vpop.f32.mrb[0].mxu0
    %v2174 = vadd.f32 0.0, %v2173
    %v2175 = vpop.f32.mrb[0].mxu0
    %v2176 = vpop.f32.mrb[0].mxu0
    %v2177 = vadd.f32 0.0, %v2176
    %v2178 = vpop.f32.mrb[0].mxu0
    %2179 = vmatprep.mubr.bf16.mxu0 0
    %2180 = vmatmul.mubr.bf16.gmra.mrb[0].mxu0 %v1760
    %v2181 = vpop.f32.mrb[0].mxu0
    %v2182 = vadd.f32 0.0, %v2181
    %v2183 = vpop.f32.mrb[0].mxu0
    %v2184 = vpop.f32.mrb[0].mxu0
    %v2185 = vadd.f32 0.0, %v2184
    %v2186 = vpop.f32.mrb[0].mxu0
    %2187 = vmatprep.mubr.bf16.mxu0 0
    %2188 = vmatmul.mubr.bf16.gmra.mrb[0].mxu0 %v1763
    %v2189 = vpop.f32.mrb[0].mxu0
    %v2190 = vadd.f32 0.0, %v2189
    %v2191 = vpop.f32.mrb[0].mxu0
    %v2192 = vpop.f32.mrb[0].mxu0
    %v2193 = vadd.f32 0.0, %v2192
    %v2194 = vpop.f32.mrb[0].mxu0
    %2195 = vmatprep.mubr.bf16.mxu0 0
    %2196 = vmatmul.mubr.bf16.gmra.mrb[0].mxu0 %v1766
    %v2197 = vpop.f32.mrb[0].mxu0
    %v2198 = vadd.f32 0.0, %v2197
    %v2199 = vpop.f32.mrb[0].mxu0
    %v2200 = vpop.f32.mrb[0].mxu0
    %v2201 = vadd.f32 0.0, %v2200
    %v2202 = vpop.f32.mrb[0].mxu0
    %2203 = vmatprep.mubr.bf16.mxu0 0
    %2204 = vmatmul.mubr.bf16.gmra.mrb[0].mxu0 %v1769
    %v2205 = vpop.f32.mrb[0].mxu0
    %v2206 = vadd.f32 0.0, %v2205
    %v2207 = vpop.f32.mrb[0].mxu0
    %v2208 = vpop.f32.mrb[0].mxu0
    %v2209 = vadd.f32 0.0, %v2208
    %v2210 = vpop.f32.mrb[0].mxu0
    %2211 = vmatprep.mubr.bf16.mxu0 0
    %2212 = vmatmul.mubr.bf16.gmra.mrb[0].mxu0 %v1772
    %v2213 = vpop.f32.mrb[0].mxu0
    %v2214 = vadd.f32 0.0, %v2213
    %v2215 = vpop.f32.mrb[0].mxu0
    %v2216 = vpop.f32.mrb[0].mxu0
    %v2217 = vadd.f32 0.0, %v2216
    %v2218 = vpop.f32.mrb[0].mxu0
    %2219 = vmatprep.mubr.bf16.mxu0 0
    %2220 = vmatmul.mubr.bf16.gmra.mrb[0].mxu0 %v1775
    %v2221 = vpop.f32.mrb[0].mxu0
    %v2222 = vadd.f32 0.0, %v2221
    %v2223 = vpop.f32.mrb[0].mxu0
    %v2224 = vpop.f32.mrb[0].mxu0
    %v2225 = vadd.f32 0.0, %v2224
    %v2226 = vpop.f32.mrb[0].mxu0
    %2227 = vmatprep.mubr.bf16.mxu0 0
    %2228 = vmatmul.mubr.bf16.gmra.mrb[0].mxu0 %v1778
    %v2229 = vpop.f32.mrb[0].mxu0
    %v2230 = vadd.f32 0.0, %v2229
    %v2231 = vpop.f32.mrb[0].mxu0
    %v2232 = vpop.f32.mrb[0].mxu0
    %v2233 = vadd.f32 0.0, %v2232
    %v2234 = vpop.f32.mrb[0].mxu0
    %2235 = vmatprep.mubr.bf16.mxu0 0
    %2236 = vmatmul.mubr.bf16.gmra.mrb[0].mxu0 %v1781
    %v2237 = vpop.f32.mrb[0].mxu0
    %v2238 = vadd.f32 0.0, %v2237
    %v2239 = vpop.f32.mrb[0].mxu0
    %v2240 = vpop.f32.mrb[0].mxu0
    %v2241 = vadd.f32 0.0, %v2240
    %v2242 = vpop.f32.mrb[0].mxu0
    %2243 = vmatprep.mubr.bf16.mxu0 0
    %2244 = vmatmul.mubr.bf16.gmra.mrb[0].mxu0 %v1784
    %v2245 = vpop.f32.mrb[0].mxu0
    %v2246 = vadd.f32 0.0, %v2245
    %v2247 = vpop.f32.mrb[0].mxu0
    %v2248 = vpop.f32.mrb[0].mxu0
    %v2249 = vadd.f32 0.0, %v2248
    %v2250 = vpop.f32.mrb[0].mxu0
    %2251 = vmatprep.mubr.bf16.mxu0 0
    %2252 = vmatmul.mubr.bf16.gmra.mrb[0].mxu0 %v1787
    %v2253 = vpop.f32.mrb[0].mxu0
    %v2254 = vadd.f32 0.0, %v2253
    %v2255 = vpop.f32.mrb[0].mxu0
    %v2256 = vpop.f32.mrb[0].mxu0
    %v2257 = vadd.f32 0.0, %v2256
    %v2258 = vpop.f32.mrb[0].mxu0
    %2259 = vmatprep.mubr.bf16.mxu0 0
    %2260 = vmatmul.mubr.bf16.gmra.mrb[0].mxu0 %v1790
    %v2261 = vpop.f32.mrb[0].mxu0
    %v2262 = vadd.f32 0.0, %v2261
    %v2263 = vpop.f32.mrb[0].mxu0
    %v2264 = vpop.f32.mrb[0].mxu0
    %v2265 = vadd.f32 0.0, %v2264
    %v2266 = vpop.f32.mrb[0].mxu0
    %2267 = vmatprep.mubr.bf16.mxu0 0
    %2268 = vmatmul.mubr.bf16.gmra.mrb[0].mxu0 %v1793
    %v2269 = vpop.f32.mrb[0].mxu0
    %v2270 = vadd.f32 0.0, %v2269
    %v2271 = vpop.f32.mrb[0].mxu0
    %v2272 = vpop.f32.mrb[0].mxu0
    %v2273 = vadd.f32 0.0, %v2272
    %v2274 = vpop.f32.mrb[0].mxu0
    %2275 = vmatprep.mubr.bf16.mxu0 0
    %2276 = vmatmul.mubr.bf16.gmra.mrb[0].mxu0 %v1796
    %v2277 = vpop.f32.mrb[0].mxu0
    %v2278 = vadd.f32 0.0, %v2277
    %v2279 = vpop.f32.mrb[0].mxu0
    %v2280 = vpop.f32.mrb[0].mxu0
    %v2281 = vadd.f32 0.0, %v2280
    %v2282 = vpop.f32.mrb[0].mxu0
    %2283 = vmatprep.mubr.bf16.mxu0 0
    %2284 = vmatmul.mubr.bf16.gmra.mrb[0].mxu0 %v1799
    %v2285 = vpop.f32.mrb[0].mxu0
    %v2286 = vadd.f32 0.0, %v2285
    %v2287 = vpop.f32.mrb[0].mxu0
    %v2288 = vpop.f32.mrb[0].mxu0
    %v2289 = vadd.f32 0.0, %v2288
    %v2290 = vpop.f32.mrb[0].mxu0
    %2291 = vmatprep.mubr.bf16.mxu0 0
    %2292 = vmatmul.mubr.bf16.gmra.mrb[0].mxu0 %v1802
    %v2293 = vpop.f32.mrb[0].mxu0
    %v2294 = vadd.f32 0.0, %v2293
    %v2295 = vpop.f32.mrb[0].mxu0
    %v2296 = vpop.f32.mrb[0].mxu0
    %v2297 = vadd.f32 0.0, %v2296
    %v2298 = vpop.f32.mrb[0].mxu0
    %2299 = vmatprep.mubr.bf16.mxu0 0
    %2300 = vmatmul.mubr.bf16.gmra.mrb[0].mxu0 %v1805
    %v2301 = vpop.f32.mrb[0].mxu0
    %v2302 = vadd.f32 0.0, %v2301
    %v2303 = vpop.f32.mrb[0].mxu0
    %v2304 = vpop.f32.mrb[0].mxu0
    %v2305 = vadd.f32 0.0, %v2304
    %v2306 = vpop.f32.mrb[0].mxu0
    %2307 = vmatprep.mubr.bf16.mxu0 0
    %2308 = vmatmul.mubr.bf16.gmra.mrb[0].mxu0 %v1808
    %v2309 = vpop.f32.mrb[0].mxu0
    %v2310 = vadd.f32 0.0, %v2309
    %v2311 = vpop.f32.mrb[0].mxu0
    %v2312 = vpop.f32.mrb[0].mxu0
    %v2313 = vadd.f32 0.0, %v2312
    %v2314 = vpop.f32.mrb[0].mxu0
    %2315 = vmatprep.mubr.bf16.mxu0 0
    %2316 = vmatmul.mubr.bf16.gmra.mrb[0].mxu0 %v1811
    %v2317 = vpop.f32.mrb[0].mxu0
    %v2318 = vadd.f32 0.0, %v2317
    %v2319 = vpop.f32.mrb[0].mxu0
    %v2320 = vpop.f32.mrb[0].mxu0
    %v2321 = vadd.f32 0.0, %v2320
    %v2322 = vpop.f32.mrb[0].mxu0
    %2323 = vmatprep.mubr.bf16.mxu0 0
    %2324 = vmatmul.mubr.bf16.gmra.mrb[0].mxu0 %v1814
    %v2325 = vpop.f32.mrb[0].mxu0
    %v2326 = vadd.f32 0.0, %v2325
    %v2327 = vpop.f32.mrb[0].mxu0
    %v2328 = vpop.f32.mrb[0].mxu0
    %v2329 = vadd.f32 0.0, %v2328
    %v2330 = vpop.f32.mrb[0].mxu0
    %2331 = vmatprep.mubr.bf16.mxu0 0
    %2332 = vmatmul.mubr.bf16.gmra.mrb[0].mxu0 %v1817
    %v2333 = vpop.f32.mrb[0].mxu0
    %v2334 = vadd.f32 0.0, %v2333
    %v2335 = vpop.f32.mrb[0].mxu0
    %v2336 = vpop.f32.mrb[0].mxu0
    %v2337 = vadd.f32 0.0, %v2336
    %v2338 = vpop.f32.mrb[0].mxu0
    %2339 = vmatprep.mubr.bf16.mxu0 0
    %2340 = vmatmul.mubr.bf16.gmra.mrb[0].mxu0 %v1820
    %v2341 = vpop.f32.mrb[0].mxu0
    %v2342 = vadd.f32 0.0, %v2341
    %v2343 = vpop.f32.mrb[0].mxu0
    %v2344 = vpop.f32.mrb[0].mxu0
    %v2345 = vpop.f32.mrb[0].mxu0
    %2346 = vmatprep.mubr.bf16.mxu0 0
    %2347 = vmatmul.mubr.bf16.gmra.mrb[0].mxu0 %v1823
    %v2348 = vpop.f32.mrb[0].mxu0
    %v2349 = vadd.f32 0.0, %v2348
    %v2350 = vpop.f32.mrb[0].mxu0
    %v2351 = vpop.f32.mrb[0].mxu0
    %v2352 = vadd.f32 0.0, %v2351
    %v2353 = vpop.f32.mrb[0].mxu0
    %2354 = vmatprep.mubr.bf16.mxu0 0
    %2355 = vmatmul.mubr.bf16.gmra.mrb[0].mxu0 %v1826
    %v2356 = vpop.f32.mrb[0].mxu0
    %v2357 = vadd.f32 0.0, %v2356
    %v2358 = vpop.f32.mrb[0].mxu0
    %v2359 = vpop.f32.mrb[0].mxu0
    %v2360 = vadd.f32 0.0, %v2359
    %v2361 = vpop.f32.mrb[0].mxu0
    %2362 = vmatprep.mubr.bf16.mxu0 0
    %2363 = vmatmul.mubr.bf16.gmra.mrb[0].mxu0 %v1829
    %v2364 = vpop.f32.mrb[0].mxu0
    %v2365 = vadd.f32 0.0, %v2364
    %v2366 = vpop.f32.mrb[0].mxu0
    %v2367 = vpop.f32.mrb[0].mxu0
    %v2368 = vadd.f32 0.0, %v2367
    %v2369 = vpop.f32.mrb[0].mxu0
    %2370 = vmatprep.mubr.bf16.mxu0 0
    %2371 = vmatmul.mubr.bf16.gmra.mrb[0].mxu0 %v1832
    %v2372 = vpop.f32.mrb[0].mxu0
    %v2373 = vadd.f32 0.0, %v2372
    %v2374 = vpop.f32.mrb[0].mxu0
    %v2375 = vpop.f32.mrb[0].mxu0
    %v2376 = vadd.f32 0.0, %v2375
    %v2377 = vpop.f32.mrb[0].mxu0
    %2378 = vmatprep.mubr.bf16.mxu0 0
    %2379 = vmatmul.mubr.bf16.gmra.mrb[0].mxu0 %v1835
    %v2380 = vpop.f32.mrb[0].mxu0
    %v2381 = vadd.f32 0.0, %v2380
    %v2382 = vpop.f32.mrb[0].mxu0
    %v2383 = vpop.f32.mrb[0].mxu0
    %v2384 = vadd.f32 0.0, %v2383
    %v2385 = vpop.f32.mrb[0].mxu0
    %2386 = vmatprep.mubr.bf16.mxu0 0
    %2387 = vmatmul.mubr.bf16.gmra.mrb[0].mxu0 %v1838
    %v2388 = vpop.f32.mrb[0].mxu0
    %v2389 = vadd.f32 0.0, %v2388
    %v2390 = vpop.f32.mrb[0].mxu0
    %v2391 = vpop.f32.mrb[0].mxu0
    %v2392 = vadd.f32 0.0, %v2391
    %v2393 = vpop.f32.mrb[0].mxu0
    %2394 = vmatprep.mubr.bf16.mxu0 0
    %2395 = vmatmul.mubr.bf16.gmra.mrb[0].mxu0 %v1841
    %v2396 = vpop.f32.mrb[0].mxu0
    %v2397 = vadd.f32 0.0, %v2396
    %v2398 = vpop.f32.mrb[0].mxu0
    %v2399 = vpop.f32.mrb[0].mxu0
    %v2400 = vadd.f32 0.0, %v2399
    %v2401 = vpop.f32.mrb[0].mxu0
    %2402 = vmatprep.mubr.bf16.mxu0 0
    %2403 = vmatmul.mubr.bf16.gmra.mrb[0].mxu0 %v1844
    %v2404 = vpop.f32.mrb[0].mxu0
    %v2405 = vadd.f32 0.0, %v2404
    %v2406 = vpop.f32.mrb[0].mxu0
    %v2407 = vpop.f32.mrb[0].mxu0
    %v2408 = vadd.f32 0.0, %v2407
    %v2409 = vpop.f32.mrb[0].mxu0
    %2410 = vmatprep.mubr.bf16.mxu0 0
    %2411 = vmatmul.mubr.bf16.gmra.mrb[0].mxu0 %v1847
    %v2412 = vpop.f32.mrb[0].mxu0
    %v2413 = vadd.f32 0.0, %v2412
    %v2414 = vpop.f32.mrb[0].mxu0
    %v2415 = vpop.f32.mrb[0].mxu0
    %v2416 = vadd.f32 0.0, %v2415
    %v2417 = vpop.f32.mrb[0].mxu0
    %2418 = vmatprep.mubr.bf16.mxu0 0
    %2419 = vmatmul.mubr.bf16.gmra.mrb[0].mxu0 %v1850
    %v2420 = vpop.f32.mrb[0].mxu0
    %v2421 = vadd.f32 0.0, %v2420
    %v2422 = vpop.f32.mrb[0].mxu0
    %v2423 = vpop.f32.mrb[0].mxu0
    %v2424 = vadd.f32 0.0, %v2423
    %v2425 = vpop.f32.mrb[0].mxu0
    %2426 = vmatprep.mubr.bf16.mxu0 0
    %2427 = vmatmul.mubr.bf16.gmra.mrb[0].mxu0 %v1853
    %v2428 = vpop.f32.mrb[0].mxu0
    %v2429 = vadd.f32 0.0, %v2428
    %v2430 = vpop.f32.mrb[0].mxu0
    %v2431 = vpop.f32.mrb[0].mxu0
    %v2432 = vadd.f32 0.0, %v2431
    %v2433 = vpop.f32.mrb[0].mxu0
    %2434 = vmatprep.mubr.bf16.mxu0 0
    %2435 = vmatmul.mubr.bf16.gmra.mrb[0].mxu0 %v1856
    %v2436 = vpop.f32.mrb[0].mxu0
    %v2437 = vadd.f32 0.0, %v2436
    %v2438 = vpop.f32.mrb[0].mxu0
    %v2439 = vpop.f32.mrb[0].mxu0
    %v2440 = vadd.f32 0.0, %v2439
    %v2441 = vpop.f32.mrb[0].mxu0
    %2442 = vmatprep.mubr.bf16.mxu0 0
    %2443 = vmatmul.mubr.bf16.gmra.mrb[0].mxu0 %v1859
    %v2444 = vpop.f32.mrb[0].mxu0
    %v2445 = vadd.f32 0.0, %v2444
    %v2446 = vpop.f32.mrb[0].mxu0
    %v2447 = vpop.f32.mrb[0].mxu0
    %v2448 = vadd.f32 0.0, %v2447
    %v2449 = vpop.f32.mrb[0].mxu0
    %2450 = vmatprep.mubr.bf16.mxu0 0
    %2451 = vmatmul.mubr.bf16.gmra.mrb[0].mxu0 %v1862
    %v2452 = vpop.f32.mrb[0].mxu0
    %v2453 = vadd.f32 0.0, %v2452
    %v2454 = vpop.f32.mrb[0].mxu0
    %v2455 = vpop.f32.mrb[0].mxu0
    %v2456 = vadd.f32 0.0, %v2455
    %v2457 = vpop.f32.mrb[0].mxu0
    %2458 = vmatprep.mubr.bf16.mxu0 0
    %2459 = vmatmul.mubr.bf16.gmra.mrb[0].mxu0 %v1865
    %v2460 = vpop.f32.mrb[0].mxu0
    %v2461 = vadd.f32 0.0, %v2460
    %v2462 = vpop.f32.mrb[0].mxu0
    %v2463 = vpop.f32.mrb[0].mxu0
    %v2464 = vadd.f32 0.0, %v2463
    %v2465 = vpop.f32.mrb[0].mxu0
    %2466 = vmatprep.mubr.bf16.mxu0 0
    %2467 = vmatmul.mubr.bf16.gmra.mrb[0].mxu0 %v1868
    %v2468 = vpop.f32.mrb[0].mxu0
    %v2469 = vadd.f32 0.0, %v2468
    %v2470 = vpop.f32.mrb[0].mxu0
    %v2471 = vpop.f32.mrb[0].mxu0
    %v2472 = vadd.f32 0.0, %v2471
    %v2473 = vpop.f32.mrb[0].mxu0
    %2474 = vmatprep.mubr.bf16.mxu0 0
    %2475 = vmatmul.mubr.bf16.gmra.mrb[0].mxu0 %v1871
    %v2476 = vpop.f32.mrb[0].mxu0
    %v2477 = vadd.f32 0.0, %v2476
    %v2478 = vpop.f32.mrb[0].mxu0
    %v2479 = vpop.f32.mrb[0].mxu0
    %v2480 = vadd.f32 0.0, %v2479
    %v2481 = vpop.f32.mrb[0].mxu0
    %2482 = vmatprep.mubr.bf16.mxu0 0
    %2483 = vmatmul.mubr.bf16.gmra.mrb[0].mxu0 %v1874
    %v2484 = vpop.f32.mrb[0].mxu0
    %v2485 = vadd.f32 0.0, %v2484
    %v2486 = vpop.f32.mrb[0].mxu0
    %v2487 = vpop.f32.mrb[0].mxu0
    %v2488 = vadd.f32 0.0, %v2487
    %v2489 = vpop.f32.mrb[0].mxu0
    %2490 = vmatprep.mubr.bf16.mxu0 0
    %2491 = vmatmul.mubr.bf16.gmra.mrb[0].mxu0 %v1877
    %v2492 = vpop.f32.mrb[0].mxu0
    %v2493 = vadd.f32 0.0, %v2492
    %v2494 = vpop.f32.mrb[0].mxu0
    %v2495 = vpop.f32.mrb[0].mxu0
    %v2496 = vadd.f32 0.0, %v2495
    %v2497 = vpop.f32.mrb[0].mxu0
    %2498 = vmatprep.mubr.bf16.mxu0 0
    %2499 = vmatmul.mubr.bf16.gmra.mrb[0].mxu0 %v1880
    %v2500 = vpop.f32.mrb[0].mxu0
    %v2501 = vadd.f32 0.0, %v2500
    %v2502 = vpop.f32.mrb[0].mxu0
    %v2503 = vpop.f32.mrb[0].mxu0
    %v2504 = vadd.f32 0.0, %v2503
    %v2505 = vpop.f32.mrb[0].mxu0
    %2506 = vmatprep.mubr.bf16.mxu0 0
    %2507 = vmatmul.mubr.bf16.gmra.mrb[0].mxu0 %v1883
    %v2508 = vpop.f32.mrb[0].mxu0
    %v2509 = vadd.f32 0.0, %v2508
    %v2510 = vpop.f32.mrb[0].mxu0
    %v2511 = vpop.f32.mrb[0].mxu0
    %v2512 = vadd.f32 0.0, %v2511
    %v2513 = vpop.f32.mrb[0].mxu0
    %2514 = vmatprep.mubr.bf16.mxu0 0
    %2515 = vmatmul.mubr.bf16.gmra.mrb[0].mxu0 %v1886
    %v2516 = vpop.f32.mrb[0].mxu0
    %v2517 = vadd.f32 0.0, %v2516
    %v2518 = vpop.f32.mrb[0].mxu0
    %v2519 = vpop.f32.mrb[0].mxu0
    %v2520 = vadd.f32 0.0, %v2519
    %v2521 = vpop.f32.mrb[0].mxu0
    %2522 = vmatprep.mubr.bf16.mxu0 0
    %2523 = vmatmul.mubr.bf16.gmra.mrb[0].mxu0 %v1889
    %v2524 = vpop.f32.mrb[0].mxu0
    %v2525 = vadd.f32 0.0, %v2524
    %v2526 = vpop.f32.mrb[0].mxu0
    %v2527 = vpop.f32.mrb[0].mxu0
    %v2528 = vadd.f32 0.0, %v2527
    %v2529 = vpop.f32.mrb[0].mxu0
    %2530 = vmatprep.mubr.bf16.mxu0 0
    %2531 = vmatmul.mubr.bf16.gmra.mrb[0].mxu0 %v1892
    %v2532 = vpop.f32.mrb[0].mxu0
    %v2533 = vadd.f32 0.0, %v2532
    %v2534 = vpop.f32.mrb[0].mxu0
    %v2535 = vpop.f32.mrb[0].mxu0
    %v2536 = vadd.f32 0.0, %v2535
    %v2537 = vpop.f32.mrb[0].mxu0
    %2538 = vmatprep.mubr.bf16.mxu0 0
    %2539 = vmatmul.mubr.bf16.gmra.mrb[0].mxu0 %v1895
    %v2540 = vpop.f32.mrb[0].mxu0
    %v2541 = vadd.f32 0.0, %v2540
    %v2542 = vpop.f32.mrb[0].mxu0
    %v2543 = vpop.f32.mrb[0].mxu0
    %v2544 = vadd.f32 0.0, %v2543
    %v2545 = vpop.f32.mrb[0].mxu0
    %2546 = vmatprep.mubr.bf16.mxu0 0
    %2547 = vmatmul.mubr.bf16.gmra.mrb[0].mxu0 %v1898
    %v2548 = vpop.f32.mrb[0].mxu0
    %v2549 = vadd.f32 0.0, %v2548
    %v2550 = vpop.f32.mrb[0].mxu0
    %v2551 = vpop.f32.mrb[0].mxu0
    %v2552 = vadd.f32 0.0, %v2551
    %v2553 = vpop.f32.mrb[0].mxu0
    %2554 = vmatprep.mubr.bf16.mxu0 0
    %2555 = vmatmul.mubr.bf16.gmra.mrb[0].mxu0 %v1901
    %v2556 = vpop.f32.mrb[0].mxu0
    %v2557 = vadd.f32 0.0, %v2556
    %v2558 = vpop.f32.mrb[0].mxu0
    %v2559 = vpop.f32.mrb[0].mxu0
    %v2560 = vadd.f32 0.0, %v2559
    %v2561 = vpop.f32.mrb[0].mxu0
    %2562 = vmatprep.mubr.bf16.mxu0 0
    %2563 = vmatmul.mubr.bf16.gmra.mrb[0].mxu0 %v1904
    %v2564 = vpop.f32.mrb[0].mxu0
    %v2565 = vadd.f32 0.0, %v2564
    %v2566 = vpop.f32.mrb[0].mxu0
    %v2567 = vpop.f32.mrb[0].mxu0
    %v2568 = vadd.f32 0.0, %v2567
    %v2569 = vpop.f32.mrb[0].mxu0
    %2570 = vmatprep.mubr.bf16.mxu0 0
    %2571 = vmatmul.mubr.bf16.gmra.mrb[0].mxu0 %v1907
    %v2572 = vpop.f32.mrb[0].mxu0
    %v2573 = vadd.f32 0.0, %v2572
    %v2574 = vpop.f32.mrb[0].mxu0
    %v2575 = vpop.f32.mrb[0].mxu0
    %v2576 = vpop.f32.mrb[0].mxu0
    %2577 = vmatprep.mubr.bf16.mxu0 0
    %2578 = vmatmul.mubr.bf16.gmra.mrb[0].mxu0 %v1910
    %v2579 = vpop.f32.mrb[0].mxu0
    %v2580 = vadd.f32 0.0, %v2579
    %v2581 = vpop.f32.mrb[0].mxu0
    %v2582 = vpop.f32.mrb[0].mxu0
    %v2583 = vadd.f32 0.0, %v2582
    %v2584 = vpop.f32.mrb[0].mxu0
    %2585 = vmatprep.mubr.bf16.mxu0 0
    %2586 = vmatmul.mubr.bf16.gmra.mrb[0].mxu0 %v1913
    %v2587 = vpop.f32.mrb[0].mxu0
    %v2588 = vadd.f32 0.0, %v2587
    %v2589 = vpop.f32.mrb[0].mxu0
    %v2590 = vpop.f32.mrb[0].mxu0
    %v2591 = vadd.f32 0.0, %v2590
    %v2592 = vpop.f32.mrb[0].mxu0
    %2593 = vmatprep.mubr.bf16.mxu0 0
    %2594 = vmatmul.mubr.bf16.gmra.mrb[0].mxu0 %v1916
    %v2595 = vpop.f32.mrb[0].mxu0
    %v2596 = vadd.f32 0.0, %v2595
    %v2597 = vpop.f32.mrb[0].mxu0
    %v2598 = vpop.f32.mrb[0].mxu0
    %v2599 = vadd.f32 0.0, %v2598
    %v2600 = vpop.f32.mrb[0].mxu0
    %2601 = vmatprep.mubr.bf16.mxu0 0
    %2602 = vmatmul.mubr.bf16.gmra.mrb[0].mxu0 %v1919
    %v2603 = vpop.f32.mrb[0].mxu0
    %v2604 = vadd.f32 0.0, %v2603
    %v2605 = vpop.f32.mrb[0].mxu0
    %v2606 = vpop.f32.mrb[0].mxu0
    %v2607 = vadd.f32 0.0, %v2606
    %v2608 = vpop.f32.mrb[0].mxu0
    %2609 = vmatprep.mubr.bf16.mxu0 0
    %2610 = vmatmul.mubr.bf16.gmra.mrb[0].mxu0 %v1922
    %v2611 = vpop.f32.mrb[0].mxu0
    %v2612 = vadd.f32 0.0, %v2611
    %v2613 = vpop.f32.mrb[0].mxu0
    %v2614 = vpop.f32.mrb[0].mxu0
    %v2615 = vadd.f32 0.0, %v2614
    %v2616 = vpop.f32.mrb[0].mxu0
    %2617 = vmatprep.mubr.bf16.mxu0 0
    %2618 = vmatmul.mubr.bf16.gmra.mrb[0].mxu0 %v1925
    %v2619 = vpop.f32.mrb[0].mxu0
    %v2620 = vadd.f32 0.0, %v2619
    %v2621 = vpop.f32.mrb[0].mxu0
    %v2622 = vpop.f32.mrb[0].mxu0
    %v2623 = vadd.f32 0.0, %v2622
    %v2624 = vpop.f32.mrb[0].mxu0
    %2625 = vmatprep.mubr.bf16.mxu0 0
    %2626 = vmatmul.mubr.bf16.gmra.mrb[0].mxu0 %v1928
    %v2627 = vpop.f32.mrb[0].mxu0
    %v2628 = vadd.f32 0.0, %v2627
    %v2629 = vpop.f32.mrb[0].mxu0
    %v2630 = vpop.f32.mrb[0].mxu0
    %v2631 = vadd.f32 0.0, %v2630
    %v2632 = vpop.f32.mrb[0].mxu0
    %2633 = vmatprep.mubr.bf16.mxu0 0
    %2634 = vmatmul.mubr.bf16.gmra.mrb[0].mxu0 %v1931
    %v2635 = vpop.f32.mrb[0].mxu0
    %v2636 = vadd.f32 0.0, %v2635
    %v2637 = vpop.f32.mrb[0].mxu0
    %v2638 = vpop.f32.mrb[0].mxu0
    %v2639 = vadd.f32 0.0, %v2638
    %v2640 = vpop.f32.mrb[0].mxu0
    %2641 = vmatprep.mubr.bf16.mxu0 0
    %2642 = vmatmul.mubr.bf16.gmra.mrb[0].mxu0 %v1934
    %v2643 = vpop.f32.mrb[0].mxu0
    %v2644 = vadd.f32 0.0, %v2643
    %v2645 = vpop.f32.mrb[0].mxu0
    %v2646 = vpop.f32.mrb[0].mxu0
    %v2647 = vadd.f32 0.0, %v2646
    %v2648 = vpop.f32.mrb[0].mxu0
    %2649 = vmatprep.mubr.bf16.mxu0 0
    %2650 = vmatmul.mubr.bf16.gmra.mrb[0].mxu0 %v1937
    %v2651 = vpop.f32.mrb[0].mxu0
    %v2652 = vadd.f32 0.0, %v2651
    %v2653 = vpop.f32.mrb[0].mxu0
    %v2654 = vpop.f32.mrb[0].mxu0
    %v2655 = vadd.f32 0.0, %v2654
    %v2656 = vpop.f32.mrb[0].mxu0
    %2657 = vmatprep.mubr.bf16.mxu0 0
    %2658 = vmatmul.mubr.bf16.gmra.mrb[0].mxu0 %v1940
    %v2659 = vpop.f32.mrb[0].mxu0
    %v2660 = vadd.f32 0.0, %v2659
    %v2661 = vpop.f32.mrb[0].mxu0
    %v2662 = vpop.f32.mrb[0].mxu0
    %v2663 = vadd.f32 0.0, %v2662
    %v2664 = vpop.f32.mrb[0].mxu0
    %2665 = vmatprep.mubr.bf16.mxu0 0
    %2666 = vmatmul.mubr.bf16.gmra.mrb[0].mxu0 %v1943
    %v2667 = vpop.f32.mrb[0].mxu0
    %v2668 = vadd.f32 0.0, %v2667
    %v2669 = vpop.f32.mrb[0].mxu0
    %v2670 = vpop.f32.mrb[0].mxu0
    %v2671 = vadd.f32 0.0, %v2670
    %v2672 = vpop.f32.mrb[0].mxu0
    %2673 = vmatprep.mubr.bf16.mxu0 0
    %2674 = vmatmul.mubr.bf16.gmra.mrb[0].mxu0 %v1946
    %v2675 = vpop.f32.mrb[0].mxu0
    %v2676 = vadd.f32 0.0, %v2675
    %v2677 = vpop.f32.mrb[0].mxu0
    %v2678 = vpop.f32.mrb[0].mxu0
    %v2679 = vadd.f32 0.0, %v2678
    %v2680 = vpop.f32.mrb[0].mxu0
    %2681 = vmatprep.mubr.bf16.mxu0 0
    %2682 = vmatmul.mubr.bf16.gmra.mrb[0].mxu0 %v1949
    %v2683 = vpop.f32.mrb[0].mxu0
    %v2684 = vadd.f32 0.0, %v2683
    %v2685 = vpop.f32.mrb[0].mxu0
    %v2686 = vpop.f32.mrb[0].mxu0
    %v2687 = vadd.f32 0.0, %v2686
    %v2688 = vpop.f32.mrb[0].mxu0
    %2689 = vmatprep.mubr.bf16.mxu0 0
    %2690 = vmatmul.mubr.bf16.gmra.mrb[0].mxu0 %v1952
    %v2691 = vpop.f32.mrb[0].mxu0
    %v2692 = vadd.f32 0.0, %v2691
    %v2693 = vpop.f32.mrb[0].mxu0
    %v2694 = vpop.f32.mrb[0].mxu0
    %v2695 = vadd.f32 0.0, %v2694
    %v2696 = vpop.f32.mrb[0].mxu0
    %2697 = vmatprep.mubr.bf16.mxu0 0
    %2698 = vmatmul.mubr.bf16.gmra.mrb[0].mxu0 %v1955
    %v2699 = vpop.f32.mrb[0].mxu0
    %v2700 = vadd.f32 0.0, %v2699
    %v2701 = vpop.f32.mrb[0].mxu0
    %v2702 = vpop.f32.mrb[0].mxu0
    %v2703 = vadd.f32 0.0, %v2702
    %v2704 = vpop.f32.mrb[0].mxu0
    %2705 = vmatprep.mubr.bf16.mxu0 0
    %2706 = vmatmul.mubr.bf16.gmra.mrb[0].mxu0 %v1958
    %v2707 = vpop.f32.mrb[0].mxu0
    %v2708 = vadd.f32 0.0, %v2707
    %v2709 = vpop.f32.mrb[0].mxu0
    %v2710 = vpop.f32.mrb[0].mxu0
    %v2711 = vadd.f32 0.0, %v2710
    %v2712 = vpop.f32.mrb[0].mxu0
    %2713 = vmatprep.mubr.bf16.mxu0 0
    %2714 = vmatmul.mubr.bf16.gmra.mrb[0].mxu0 %v1961
    %v2715 = vpop.f32.mrb[0].mxu0
    %v2716 = vadd.f32 0.0, %v2715
    %v2717 = vpop.f32.mrb[0].mxu0
    %v2718 = vpop.f32.mrb[0].mxu0
    %v2719 = vadd.f32 0.0, %v2718
    %v2720 = vpop.f32.mrb[0].mxu0
    %2721 = vmatprep.mubr.bf16.mxu0 0
    %2722 = vmatmul.mubr.bf16.gmra.mrb[0].mxu0 %v1964
    %v2723 = vpop.f32.mrb[0].mxu0
    %v2724 = vadd.f32 0.0, %v2723
    %v2725 = vpop.f32.mrb[0].mxu0
    %v2726 = vpop.f32.mrb[0].mxu0
    %v2727 = vadd.f32 0.0, %v2726
    %v2728 = vpop.f32.mrb[0].mxu0
    %2729 = vmatprep.mubr.bf16.mxu0 0
    %2730 = vmatmul.mubr.bf16.gmra.mrb[0].mxu0 %v1967
    %v2731 = vpop.f32.mrb[0].mxu0
    %v2732 = vadd.f32 0.0, %v2731
    %v2733 = vpop.f32.mrb[0].mxu0
    %v2734 = vpop.f32.mrb[0].mxu0
    %v2735 = vadd.f32 0.0, %v2734
    %v2736 = vpop.f32.mrb[0].mxu0
    %2737 = vmatprep.mubr.bf16.mxu0 0
    %2738 = vmatmul.mubr.bf16.gmra.mrb[0].mxu0 %v1970
    %v2739 = vpop.f32.mrb[0].mxu0
    %v2740 = vadd.f32 0.0, %v2739
    %v2741 = vpop.f32.mrb[0].mxu0
    %v2742 = vpop.f32.mrb[0].mxu0
    %v2743 = vadd.f32 0.0, %v2742
    %v2744 = vpop.f32.mrb[0].mxu0
    %2745 = vmatprep.mubr.bf16.mxu0 0
    %2746 = vmatmul.mubr.bf16.gmra.mrb[0].mxu0 %v1973
    %v2747 = vpop.f32.mrb[0].mxu0
    %v2748 = vadd.f32 0.0, %v2747
    %v2749 = vpop.f32.mrb[0].mxu0
    %v2750 = vpop.f32.mrb[0].mxu0
    %v2751 = vadd.f32 0.0, %v2750
    %v2752 = vpop.f32.mrb[0].mxu0
    %2753 = vmatprep.mubr.bf16.mxu0 0
    %2754 = vmatmul.mubr.bf16.gmra.mrb[0].mxu0 %v1976
    %v2755 = vpop.f32.mrb[0].mxu0
    %v2756 = vadd.f32 0.0, %v2755
    %v2757 = vpop.f32.mrb[0].mxu0
    %v2758 = vpop.f32.mrb[0].mxu0
    %v2759 = vadd.f32 0.0, %v2758
    %v2760 = vpop.f32.mrb[0].mxu0
    %2761 = vmatprep.mubr.bf16.mxu0 0
    %2762 = vmatmul.mubr.bf16.gmra.mrb[0].mxu0 %v1979
    %v2763 = vpop.f32.mrb[0].mxu0
    %v2764 = vadd.f32 0.0, %v2763
    %v2765 = vpop.f32.mrb[0].mxu0
    %v2766 = vpop.f32.mrb[0].mxu0
    %v2767 = vadd.f32 0.0, %v2766
    %v2768 = vpop.f32.mrb[0].mxu0
    %2769 = vmatprep.mubr.bf16.mxu0 0
    %2770 = vmatmul.mubr.bf16.gmra.mrb[0].mxu0 %v1982
    %v2771 = vpop.f32.mrb[0].mxu0
    %v2772 = vadd.f32 0.0, %v2771
    %v2773 = vpop.f32.mrb[0].mxu0
    %v2774 = vpop.f32.mrb[0].mxu0
    %v2775 = vadd.f32 0.0, %v2774
    %v2776 = vpop.f32.mrb[0].mxu0
    %2777 = vmatprep.mubr.bf16.mxu0 0
    %2778 = vmatmul.mubr.bf16.gmra.mrb[0].mxu0 %v1985
    %v2779 = vpop.f32.mrb[0].mxu0
    %v2780 = vadd.f32 0.0, %v2779
    %v2781 = vpop.f32.mrb[0].mxu0
    %v2782 = vpop.f32.mrb[0].mxu0
    %v2783 = vadd.f32 0.0, %v2782
    %v2784 = vpop.f32.mrb[0].mxu0
    %2785 = vmatprep.mubr.bf16.mxu0 0
    %2786 = vmatmul.mubr.bf16.gmra.mrb[0].mxu0 %v1988
    %v2787 = vpop.f32.mrb[0].mxu0
    %v2788 = vadd.f32 0.0, %v2787
    %v2789 = vpop.f32.mrb[0].mxu0
    %v2790 = vpop.f32.mrb[0].mxu0
    %v2791 = vadd.f32 0.0, %v2790
    %v2792 = vpop.f32.mrb[0].mxu0
    %2793 = vmatprep.mubr.bf16.mxu0 0
    %2794 = vmatmul.mubr.bf16.gmra.mrb[0].mxu0 %v1991
    %v2795 = vpop.f32.mrb[0].mxu0
    %v2796 = vadd.f32 0.0, %v2795
    %v2797 = vpop.f32.mrb[0].mxu0
    %v2798 = vpop.f32.mrb[0].mxu0
    %v2799 = vadd.f32 0.0, %v2798
    %v2800 = vpop.f32.mrb[0].mxu0
    %2801 = vmatprep.mubr.bf16.mxu0 0
    %2802 = vmatmul.mubr.bf16.gmra.mrb[0].mxu0 %v1994
    %v2803 = vpop.f32.mrb[0].mxu0
    %v2804 = vadd.f32 0.0, %v2803
    %v2805 = vpop.f32.mrb[0].mxu0
    %v2806 = vpop.f32.mrb[0].mxu0
    %v2807 = vpop.f32.mrb[0].mxu0
    %2808 = vmatprep.mubr.bf16.mxu0 0
    %2809 = vmatmul.mubr.bf16.gmra.mrb[0].mxu0 %v1997
    %v2810 = vpop.f32.mrb[0].mxu0
    %v2811 = vadd.f32 0.0, %v2810
    %v2812 = vpop.f32.mrb[0].mxu0
    %v2813 = vpop.f32.mrb[0].mxu0
    %v2814 = vadd.f32 0.0, %v2813
    %v2815 = vpop.f32.mrb[0].mxu0
    %2816 = vmatprep.mubr.bf16.mxu0 0
    %2817 = vmatmul.mubr.bf16.gmra.mrb[0].mxu0 %v2000
    %v2818 = vpop.f32.mrb[0].mxu0
    %v2819 = vadd.f32 0.0, %v2818
    %v2820 = vpop.f32.mrb[0].mxu0
    %v2821 = vpop.f32.mrb[0].mxu0
    %v2822 = vadd.f32 0.0, %v2821
    %v2823 = vpop.f32.mrb[0].mxu0
    %2824 = vmatprep.mubr.bf16.mxu0 0
    %2825 = vmatmul.mubr.bf16.gmra.mrb[0].mxu0 %v2003
    %v2826 = vpop.f32.mrb[0].mxu0
    %v2827 = vadd.f32 0.0, %v2826
    %v2828 = vpop.f32.mrb[0].mxu0
    %v2829 = vpop.f32.mrb[0].mxu0
    %v2830 = vadd.f32 0.0, %v2829
    %v2831 = vpop.f32.mrb[0].mxu0
    %2832 = vmatprep.mubr.bf16.mxu0 0
    %2833 = vmatmul.mubr.bf16.gmra.mrb[0].mxu0 %v2006
    %v2834 = vpop.f32.mrb[0].mxu0
    %v2835 = vadd.f32 0.0, %v2834
    %v2836 = vpop.f32.mrb[0].mxu0
    %v2837 = vpop.f32.mrb[0].mxu0
    %v2838 = vadd.f32 0.0, %v2837
    %v2839 = vpop.f32.mrb[0].mxu0
    %2840 = vmatprep.mubr.bf16.mxu0 0
    %2841 = vmatmul.mubr.bf16.gmra.mrb[0].mxu0 %v2009
    %v2842 = vpop.f32.mrb[0].mxu0
    %v2843 = vadd.f32 0.0, %v2842
    %v2844 = vpop.f32.mrb[0].mxu0
    %v2845 = vpop.f32.mrb[0].mxu0
    %v2846 = vadd.f32 0.0, %v2845
    %v2847 = vpop.f32.mrb[0].mxu0
    %2848 = vmatprep.mubr.bf16.mxu0 0
    %2849 = vmatmul.mubr.bf16.gmra.mrb[0].mxu0 %v2012
    %v2850 = vpop.f32.mrb[0].mxu0
    %v2851 = vadd.f32 0.0, %v2850
    %v2852 = vpop.f32.mrb[0].mxu0
    %v2853 = vpop.f32.mrb[0].mxu0
    %v2854 = vadd.f32 0.0, %v2853
    %v2855 = vpop.f32.mrb[0].mxu0
    %2856 = vmatprep.mubr.bf16.mxu0 0
    %2857 = vmatmul.mubr.bf16.gmra.mrb[0].mxu0 %v2015
    %v2858 = vpop.f32.mrb[0].mxu0
    %v2859 = vadd.f32 0.0, %v2858
    %v2860 = vpop.f32.mrb[0].mxu0
    %v2861 = vpop.f32.mrb[0].mxu0
    %v2862 = vadd.f32 0.0, %v2861
    %v2863 = vpop.f32.mrb[0].mxu0
    %2864 = vmatprep.mubr.bf16.mxu0 0
    %2865 = vmatmul.mubr.bf16.gmra.mrb[0].mxu0 %v2018
    %v2866 = vpop.f32.mrb[0].mxu0
    %v2867 = vadd.f32 0.0, %v2866
    %v2868 = vpop.f32.mrb[0].mxu0
    %v2869 = vpop.f32.mrb[0].mxu0
    %v2870 = vadd.f32 0.0, %v2869
    %v2871 = vpop.f32.mrb[0].mxu0
    %2872 = vmatprep.mubr.bf16.mxu0 0
    %2873 = vmatmul.mubr.bf16.gmra.mrb[0].mxu0 %v2021
    %v2874 = vpop.f32.mrb[0].mxu0
    %v2875 = vadd.f32 0.0, %v2874
    %v2876 = vpop.f32.mrb[0].mxu0
    %v2877 = vpop.f32.mrb[0].mxu0
    %v2878 = vadd.f32 0.0, %v2877
    %v2879 = vpop.f32.mrb[0].mxu0
    %2880 = vmatprep.mubr.bf16.mxu0 0
    %2881 = vmatmul.mubr.bf16.gmra.mrb[0].mxu0 %v2024
    %v2882 = vpop.f32.mrb[0].mxu0
    %v2883 = vadd.f32 0.0, %v2882
    %v2884 = vpop.f32.mrb[0].mxu0
    %v2885 = vpop.f32.mrb[0].mxu0
    %v2886 = vadd.f32 0.0, %v2885
    %v2887 = vpop.f32.mrb[0].mxu0
    %2888 = vmatprep.mubr.bf16.mxu0 0
    %2889 = vmatmul.mubr.bf16.gmra.mrb[0].mxu0 %v2027
    %v2890 = vpop.f32.mrb[0].mxu0
    %v2891 = vadd.f32 0.0, %v2890
    %v2892 = vpop.f32.mrb[0].mxu0
    %v2893 = vpop.f32.mrb[0].mxu0
    %v2894 = vadd.f32 0.0, %v2893
    %v2895 = vpop.f32.mrb[0].mxu0
    %2896 = vmatprep.mubr.bf16.mxu0 0
    %2897 = vmatmul.mubr.bf16.gmra.mrb[0].mxu0 %v2030
    %v2898 = vpop.f32.mrb[0].mxu0
    %v2899 = vadd.f32 0.0, %v2898
    %v2900 = vpop.f32.mrb[0].mxu0
    %v2901 = vpop.f32.mrb[0].mxu0
    %v2902 = vadd.f32 0.0, %v2901
    %v2903 = vpop.f32.mrb[0].mxu0
    %2904 = vmatprep.mubr.bf16.mxu0 0
    %2905 = vmatmul.mubr.bf16.gmra.mrb[0].mxu0 %v2033
    %v2906 = vpop.f32.mrb[0].mxu0
    %v2907 = vadd.f32 0.0, %v2906
    %v2908 = vpop.f32.mrb[0].mxu0
    %v2909 = vpop.f32.mrb[0].mxu0
    %v2910 = vadd.f32 0.0, %v2909
    %v2911 = vpop.f32.mrb[0].mxu0
    %2912 = vmatprep.mubr.bf16.mxu0 0
    %2913 = vmatmul.mubr.bf16.gmra.mrb[0].mxu0 %v2036
    %v2914 = vpop.f32.mrb[0].mxu0
    %v2915 = vadd.f32 0.0, %v2914
    %v2916 = vpop.f32.mrb[0].mxu0
    %v2917 = vpop.f32.mrb[0].mxu0
    %v2918 = vadd.f32 0.0, %v2917
    %v2919 = vpop.f32.mrb[0].mxu0
    %2920 = vmatprep.mubr.bf16.mxu0 0
    %2921 = vmatmul.mubr.bf16.gmra.mrb[0].mxu0 %v2039
    %v2922 = vpop.f32.mrb[0].mxu0
    %v2923 = vadd.f32 0.0, %v2922
    %v2924 = vpop.f32.mrb[0].mxu0
    %v2925 = vpop.f32.mrb[0].mxu0
    %v2926 = vadd.f32 0.0, %v2925
    %v2927 = vpop.f32.mrb[0].mxu0
    %2928 = vmatprep.mubr.bf16.mxu0 0
    %2929 = vmatmul.mubr.bf16.gmra.mrb[0].mxu0 %v2042
    %v2930 = vpop.f32.mrb[0].mxu0
    %v2931 = vadd.f32 0.0, %v2930
    %v2932 = vpop.f32.mrb[0].mxu0
    %v2933 = vpop.f32.mrb[0].mxu0
    %v2934 = vadd.f32 0.0, %v2933
    %v2935 = vpop.f32.mrb[0].mxu0
    %2936 = vmatprep.mubr.bf16.mxu0 0
    %2937 = vmatmul.mubr.bf16.gmra.mrb[0].mxu0 %v2045
    %v2938 = vpop.f32.mrb[0].mxu0
    %v2939 = vadd.f32 0.0, %v2938
    %v2940 = vpop.f32.mrb[0].mxu0
    %v2941 = vpop.f32.mrb[0].mxu0
    %v2942 = vadd.f32 0.0, %v2941
    %v2943 = vpop.f32.mrb[0].mxu0
    %2944 = vmatprep.mubr.bf16.mxu0 0
    %2945 = vmatmul.mubr.bf16.gmra.mrb[0].mxu0 %v2048
    %v2946 = vpop.f32.mrb[0].mxu0
    %v2947 = vadd.f32 0.0, %v2946
    %v2948 = vpop.f32.mrb[0].mxu0
    %v2949 = vpop.f32.mrb[0].mxu0
    %v2950 = vadd.f32 0.0, %v2949
    %v2951 = vpop.f32.mrb[0].mxu0
    %2952 = vmatprep.mubr.bf16.mxu0 0
    %2953 = vmatmul.mubr.bf16.gmra.mrb[0].mxu0 %v2051
    %v2954 = vpop.f32.mrb[0].mxu0
    %v2955 = vadd.f32 0.0, %v2954
    %v2956 = vpop.f32.mrb[0].mxu0
    %v2957 = vpop.f32.mrb[0].mxu0
    %v2958 = vadd.f32 0.0, %v2957
    %v2959 = vpop.f32.mrb[0].mxu0
    %2960 = vmatprep.mubr.bf16.mxu0 0
    %2961 = vmatmul.mubr.bf16.gmra.mrb[0].mxu0 %v2054
    %v2962 = vpop.f32.mrb[0].mxu0
    %v2963 = vadd.f32 0.0, %v2962
    %v2964 = vpop.f32.mrb[0].mxu0
    %v2965 = vpop.f32.mrb[0].mxu0
    %v2966 = vadd.f32 0.0, %v2965
    %v2967 = vpop.f32.mrb[0].mxu0
    %2968 = vmatprep.mubr.bf16.mxu0 0
    %2969 = vmatmul.mubr.bf16.gmra.mrb[0].mxu0 %v2057
    %v2970 = vpop.f32.mrb[0].mxu0
    %v2971 = vadd.f32 0.0, %v2970
    %v2972 = vpop.f32.mrb[0].mxu0
    %v2973 = vpop.f32.mrb[0].mxu0
    %v2974 = vadd.f32 0.0, %v2973
    %v2975 = vpop.f32.mrb[0].mxu0
    %2976 = vmatprep.mubr.bf16.mxu0 0
    %2977 = vmatmul.mubr.bf16.gmra.mrb[0].mxu0 %v2060
    %v2978 = vpop.f32.mrb[0].mxu0
    %v2979 = vadd.f32 0.0, %v2978
    %v2980 = vpop.f32.mrb[0].mxu0
    %v2981 = vpop.f32.mrb[0].mxu0
    %v2982 = vadd.f32 0.0, %v2981
    %v2983 = vpop.f32.mrb[0].mxu0
    %2984 = vmatprep.mubr.bf16.mxu0 0
    %2985 = vmatmul.mubr.bf16.gmra.mrb[0].mxu0 %v2063
    %v2986 = vpop.f32.mrb[0].mxu0
    %v2987 = vadd.f32 0.0, %v2986
    %v2988 = vpop.f32.mrb[0].mxu0
    %v2989 = vpop.f32.mrb[0].mxu0
    %v2990 = vadd.f32 0.0, %v2989
    %v2991 = vpop.f32.mrb[0].mxu0
    %2992 = vmatprep.mubr.bf16.mxu0 0
    %2993 = vmatmul.mubr.bf16.gmra.mrb[0].mxu0 %v2066
    %v2994 = vpop.f32.mrb[0].mxu0
    %v2995 = vadd.f32 0.0, %v2994
    %v2996 = vpop.f32.mrb[0].mxu0
    %v2997 = vpop.f32.mrb[0].mxu0
    %v2998 = vadd.f32 0.0, %v2997
    %v2999 = vpop.f32.mrb[0].mxu0
    %3000 = vmatprep.mubr.bf16.mxu0 0
    %3001 = vmatmul.mubr.bf16.gmra.mrb[0].mxu0 %v2069
    %v3002 = vpop.f32.mrb[0].mxu0
    %v3003 = vadd.f32 0.0, %v3002
    %v3004 = vpop.f32.mrb[0].mxu0
    %v3005 = vpop.f32.mrb[0].mxu0
    %v3006 = vadd.f32 0.0, %v3005
    %v3007 = vpop.f32.mrb[0].mxu0
    %3008 = vmatprep.mubr.bf16.mxu0 0
    %3009 = vmatmul.mubr.bf16.gmra.mrb[0].mxu0 %v2072
    %v3010 = vpop.f32.mrb[0].mxu0
    %v3011 = vadd.f32 0.0, %v3010
    %v3012 = vpop.f32.mrb[0].mxu0
    %v3013 = vpop.f32.mrb[0].mxu0
    %v3014 = vadd.f32 0.0, %v3013
    %v3015 = vpop.f32.mrb[0].mxu0
    %3016 = vmatprep.mubr.bf16.mxu0 0
    %3017 = vmatmul.mubr.bf16.gmra.mrb[0].mxu0 %v2075
    %v3018 = vpop.f32.mrb[0].mxu0
    %v3019 = vadd.f32 0.0, %v3018
    %v3020 = vpop.f32.mrb[0].mxu0
    %v3021 = vpop.f32.mrb[0].mxu0
    %v3022 = vadd.f32 0.0, %v3021
    %v3023 = vpop.f32.mrb[0].mxu0
    %3024 = vmatprep.mubr.bf16.mxu0 0
    %3025 = vmatmul.mubr.bf16.gmra.mrb[0].mxu0 %v2078
    %v3026 = vpop.f32.mrb[0].mxu0
    %v3027 = vadd.f32 0.0, %v3026
    %v3028 = vpop.f32.mrb[0].mxu0
    %v3029 = vpop.f32.mrb[0].mxu0
    %v3030 = vadd.f32 0.0, %v3029
    %v3031 = vpop.f32.mrb[0].mxu0
    %3032 = vmatprep.mubr.bf16.mxu0 0
    %3033 = vmatmul.mubr.bf16.gmra.mrb[0].mxu0 %v2081
    %v3034 = vpop.f32.mrb[0].mxu0
    %v3035 = vadd.f32 0.0, %v3034
    %v3036 = vpop.f32.mrb[0].mxu0
    %v3037 = vpop.f32.mrb[0].mxu0
    %v3038 = vpop.f32.mrb[0].mxu0
    %3039 = vdwg.mxu0
    %v3040 = vmax.f32 %v2118, %v2349
    %v3041 = vmax.f32 %v2121, %v2352
    %v3042 = vmax.f32 %v2126, %v2357
    %v3043 = vmax.f32 %v2129, %v2360
    %v3044 = vmax.f32 %v2134, %v2365
    %v3045 = vmax.f32 %v2137, %v2368
    %v3046 = vmax.f32 %v2142, %v2373
    %v3047 = vmax.f32 %v2145, %v2376
    %v3048 = vmax.f32 %v2150, %v2381
    %v3049 = vmax.f32 %v2153, %v2384
    %v3050 = vmax.f32 %v2158, %v2389
    %v3051 = vmax.f32 %v2161, %v2392
    %v3052 = vmax.f32 %v2166, %v2397
    %v3053 = vmax.f32 %v2169, %v2400
    %v3054 = vmax.f32 %v2174, %v2405
    %v3055 = vmax.f32 %v2177, %v2408
    %v3056 = vmax.f32 %v2182, %v2413
    %v3057 = vmax.f32 %v2185, %v2416
    %v3058 = vmax.f32 %v2190, %v2421
    %v3059 = vmax.f32 %v2193, %v2424
    %v3060 = vmax.f32 %v2198, %v2429
    %v3061 = vmax.f32 %v2201, %v2432
    %v3062 = vmax.f32 %v2206, %v2437
    %v3063 = vmax.f32 %v2209, %v2440
    %v3064 = vmax.f32 %v2214, %v2445
    %v3065 = vmax.f32 %v2217, %v2448
    %v3066 = vmax.f32 %v2222, %v2453
    %v3067 = vmax.f32 %v2225, %v2456
    %v3068 = vmax.f32 %v2230, %v2461
    %v3069 = vmax.f32 %v2233, %v2464
    %v3070 = vmax.f32 %v2238, %v2469
    %v3071 = vmax.f32 %v2241, %v2472
    %v3072 = vmax.f32 %v2246, %v2477
    %v3073 = vmax.f32 %v2249, %v2480
    %v3074 = vmax.f32 %v2254, %v2485
    %v3075 = vmax.f32 %v2257, %v2488
    %v3076 = vmax.f32 %v2262, %v2493
    %v3077 = vmax.f32 %v2265, %v2496
    %v3078 = vmax.f32 %v2270, %v2501
    %v3079 = vmax.f32 %v2273, %v2504
    %v3080 = vmax.f32 %v2278, %v2509
    %v3081 = vmax.f32 %v2281, %v2512
    %v3082 = vmax.f32 %v2286, %v2517
    %v3083 = vmax.f32 %v2289, %v2520
    %v3084 = vmax.f32 %v2294, %v2525
    %v3085 = vmax.f32 %v2297, %v2528
    %v3086 = vmax.f32 %v2302, %v2533
    %v3087 = vmax.f32 %v2305, %v2536
    %v3088 = vmax.f32 %v2310, %v2541
    %v3089 = vmax.f32 %v2313, %v2544
    %v3090 = vmax.f32 %v2318, %v2549
    %v3091 = vmax.f32 %v2321, %v2552
    %v3092 = vmax.f32 %v2326, %v2557
    %v3093 = vmax.f32 %v2329, %v2560
    %v3094 = vmax.f32 %v2334, %v2565
    %v3095 = vmax.f32 %v2337, %v2568
    %v3096 = vmax.f32 %v2342, %v2573
    %v3097 = vmax.f32 %v2580, %v2811
    %v3098 = vmax.f32 %v2583, %v2814
    %v3099 = vmax.f32 %v2588, %v2819
    %v3100 = vmax.f32 %v2591, %v2822
    %v3101 = vmax.f32 %v2596, %v2827
    %v3102 = vmax.f32 %v2599, %v2830
    %v3103 = vmax.f32 %v2604, %v2835
    %v3104 = vmax.f32 %v2607, %v2838
    %v3105 = vmax.f32 %v2612, %v2843
    %v3106 = vmax.f32 %v2615, %v2846
    %v3107 = vmax.f32 %v2620, %v2851
    %v3108 = vmax.f32 %v2623, %v2854
    %v3109 = vmax.f32 %v2628, %v2859
    %v3110 = vmax.f32 %v2631, %v2862
    %v3111 = vmax.f32 %v2636, %v2867
    %v3112 = vmax.f32 %v2639, %v2870
    %v3113 = vmax.f32 %v2644, %v2875
    %v3114 = vmax.f32 %v2647, %v2878
    %v3115 = vmax.f32 %v2652, %v2883
    %v3116 = vmax.f32 %v2655, %v2886
    %v3117 = vmax.f32 %v2660, %v2891
    %v3118 = vmax.f32 %v2663, %v2894
    %v3119 = vmax.f32 %v2668, %v2899
    %v3120 = vmax.f32 %v2671, %v2902
    %v3121 = vmax.f32 %v2676, %v2907
    %v3122 = vmax.f32 %v2679, %v2910
    %v3123 = vmax.f32 %v2684, %v2915
    %v3124 = vmax.f32 %v2687, %v2918
    %v3125 = vmax.f32 %v2692, %v2923
    %v3126 = vmax.f32 %v2695, %v2926
    %v3127 = vmax.f32 %v2700, %v2931
    %v3128 = vmax.f32 %v2703, %v2934
    %v3129 = vmax.f32 %v2708, %v2939
    %v3130 = vmax.f32 %v2711, %v2942
    %v3131 = vmax.f32 %v2716, %v2947
    %v3132 = vmax.f32 %v2719, %v2950
    %v3133 = vmax.f32 %v2724, %v2955
    %v3134 = vmax.f32 %v2727, %v2958
    %v3135 = vmax.f32 %v2732, %v2963
    %v3136 = vmax.f32 %v2735, %v2966
    %v3137 = vmax.f32 %v2740, %v2971
    %v3138 = vmax.f32 %v2743, %v2974
    %v3139 = vmax.f32 %v2748, %v2979
    %v3140 = vmax.f32 %v2751, %v2982
    %v3141 = vmax.f32 %v2756, %v2987
    %v3142 = vmax.f32 %v2759, %v2990
    %v3143 = vmax.f32 %v2764, %v2995
    %v3144 = vmax.f32 %v2767, %v2998
    %v3145 = vmax.f32 %v2772, %v3003
    %v3146 = vmax.f32 %v2775, %v3006
    %v3147 = vmax.f32 %v2780, %v3011
    %v3148 = vmax.f32 %v2783, %v3014
    %v3149 = vmax.f32 %v2788, %v3019
    %v3150 = vmax.f32 %v2791, %v3022
    %v3151 = vmax.f32 %v2796, %v3027
    %v3152 = vmax.f32 %v2799, %v3030
    %v3153 = vmax.f32 %v2804, %v3035
    %v3154 = vmax.f32 %v3040, %v3097
    %v3155 = vmax.f32 %v3041, %v3098
    %v3156 = vmax.f32 %v3042, %v3099
    %v3157 = vmax.f32 %v3043, %v3100
    %v3158 = vmax.f32 %v3044, %v3101
    %v3159 = vmax.f32 %v3045, %v3102
    %v3160 = vmax.f32 %v3046, %v3103
    %v3161 = vmax.f32 %v3047, %v3104
    %v3162 = vmax.f32 %v3048, %v3105
    %v3163 = vmax.f32 %v3049, %v3106
    %v3164 = vmax.f32 %v3050, %v3107
    %v3165 = vmax.f32 %v3051, %v3108
    %v3166 = vmax.f32 %v3052, %v3109
    %v3167 = vmax.f32 %v3053, %v3110
    %v3168 = vmax.f32 %v3054, %v3111
    %v3169 = vmax.f32 %v3055, %v3112
    %v3170 = vmax.f32 %v3056, %v3113
    %v3171 = vmax.f32 %v3057, %v3114
    %v3172 = vmax.f32 %v3058, %v3115
    %v3173 = vmax.f32 %v3059, %v3116
    %v3174 = vmax.f32 %v3060, %v3117
    %v3175 = vmax.f32 %v3061, %v3118
    %v3176 = vmax.f32 %v3062, %v3119
    %v3177 = vmax.f32 %v3063, %v3120
    %v3178 = vmax.f32 %v3064, %v3121
    %v3179 = vmax.f32 %v3065, %v3122
    %v3180 = vmax.f32 %v3066, %v3123
    %v3181 = vmax.f32 %v3067, %v3124
    %v3182 = vmax.f32 %v3068, %v3125
    %v3183 = vmax.f32 %v3069, %v3126
    %v3184 = vmax.f32 %v3070, %v3127
    %v3185 = vmax.f32 %v3071, %v3128
    %v3186 = vmax.f32 %v3072, %v3129
    %v3187 = vmax.f32 %v3073, %v3130
    %v3188 = vmax.f32 %v3074, %v3131
    %v3189 = vmax.f32 %v3075, %v3132
    %v3190 = vmax.f32 %v3076, %v3133
    %v3191 = vmax.f32 %v3077, %v3134
    %v3192 = vmax.f32 %v3078, %v3135
    %v3193 = vmax.f32 %v3079, %v3136
    %v3194 = vmax.f32 %v3080, %v3137
    %v3195 = vmax.f32 %v3081, %v3138
    %v3196 = vmax.f32 %v3082, %v3139
    %v3197 = vmax.f32 %v3083, %v3140
    %v3198 = vmax.f32 %v3084, %v3141
    %v3199 = vmax.f32 %v3085, %v3142
    %v3200 = vmax.f32 %v3086, %v3143
    %v3201 = vmax.f32 %v3087, %v3144
    %v3202 = vmax.f32 %v3088, %v3145
    %v3203 = vmax.f32 %v3089, %v3146
    %v3204 = vmax.f32 %v3090, %v3147
    %v3205 = vmax.f32 %v3091, %v3148
    %v3206 = vmax.f32 %v3092, %v3149
    %v3207 = vmax.f32 %v3093, %v3150
    %v3208 = vmax.f32 %v3094, %v3151
    %v3209 = vmax.f32 %v3095, %v3152
    %v3210 = vmax.f32 %v3096, %v3153
    %v3211 = vlaneseq
    %v3212 = vshrl.u32 %v3211, 7
    %v3213 = vsub.s32 0, %v3212
    %v3214 = vrot.slane %v905, %v3213
    %v3215 = vadd.f32 %v3154, %v3214
    %v3216 = vadd.f32 %v3155, %v3214
    %v3217 = vadd.f32 %v3156, %v3214
    %v3218 = vadd.f32 %v3157, %v3214
    %v3219 = vadd.f32 %v3158, %v3214
    %v3220 = vadd.f32 %v3159, %v3214
    %v3221 = vadd.f32 %v3160, %v3214
    %v3222 = vadd.f32 %v3161, %v3214
    %v3223 = vadd.f32 %v3162, %v3214
    %v3224 = vadd.f32 %v3163, %v3214
    %v3225 = vadd.f32 %v3164, %v3214
    %v3226 = vadd.f32 %v3165, %v3214
    %v3227 = vadd.f32 %v3166, %v3214
    %v3228 = vadd.f32 %v3167, %v3214
    %v3229 = vadd.f32 %v3168, %v3214
    %v3230 = vadd.f32 %v3169, %v3214
    %v3231 = vadd.f32 %v3170, %v3214
    %v3232 = vadd.f32 %v3171, %v3214
    %v3233 = vadd.f32 %v3172, %v3214
    %v3234 = vadd.f32 %v3173, %v3214
    %v3235 = vadd.f32 %v3174, %v3214
    %v3236 = vadd.f32 %v3175, %v3214
    %v3237 = vadd.f32 %v3176, %v3214
    %v3238 = vadd.f32 %v3177, %v3214
    %v3239 = vadd.f32 %v3178, %v3214
    %v3240 = vadd.f32 %v3179, %v3214
    %v3241 = vadd.f32 %v3180, %v3214
    %v3242 = vadd.f32 %v3181, %v3214
    %v3243 = vadd.f32 %v3182, %v3214
    %v3244 = vadd.f32 %v3183, %v3214
    %v3245 = vadd.f32 %v3184, %v3214
    %v3246 = vadd.f32 %v3185, %v3214
    %v3247 = vadd.f32 %v3186, %v3214
    %v3248 = vadd.f32 %v3187, %v3214
    %v3249 = vadd.f32 %v3188, %v3214
    %v3250 = vadd.f32 %v3189, %v3214
    %v3251 = vadd.f32 %v3190, %v3214
    %v3252 = vadd.f32 %v3191, %v3214
    %v3253 = vadd.f32 %v3192, %v3214
    %v3254 = vadd.f32 %v3193, %v3214
    %v3255 = vadd.f32 %v3194, %v3214
    %v3256 = vadd.f32 %v3195, %v3214
    %v3257 = vadd.f32 %v3196, %v3214
    %v3258 = vadd.f32 %v3197, %v3214
    %v3259 = vadd.f32 %v3198, %v3214
    %v3260 = vadd.f32 %v3199, %v3214
    %v3261 = vadd.f32 %v3200, %v3214
    %v3262 = vadd.f32 %v3201, %v3214
    %v3263 = vadd.f32 %v3202, %v3214
    %v3264 = vadd.f32 %v3203, %v3214
    %v3265 = vadd.f32 %v3204, %v3214
    %v3266 = vadd.f32 %v3205, %v3214
    %v3267 = vadd.f32 %v3206, %v3214
    %v3268 = vadd.f32 %v3207, %v3214
    %v3269 = vadd.f32 %v3208, %v3214
    %v3270 = vadd.f32 %v3209, %v3214
    %v3271 = vadd.f32 %v3210, %v3214
    %v3272 = vmax.f32 %v3215, 0.0
    %v3273 = vmax.f32 %v3216, 0.0
    %v3274 = vmax.f32 %v3217, 0.0
    %v3275 = vmax.f32 %v3218, 0.0
    %v3276 = vmax.f32 %v3219, 0.0
    %v3277 = vmax.f32 %v3220, 0.0
    %v3278 = vmax.f32 %v3221, 0.0
    %v3279 = vmax.f32 %v3222, 0.0
    %v3280 = vmax.f32 %v3223, 0.0
    %v3281 = vmax.f32 %v3224, 0.0
    %v3282 = vmax.f32 %v3225, 0.0
    %v3283 = vmax.f32 %v3226, 0.0
    %v3284 = vmax.f32 %v3227, 0.0
    %v3285 = vmax.f32 %v3228, 0.0
    %v3286 = vmax.f32 %v3229, 0.0
    %v3287 = vmax.f32 %v3230, 0.0
    %v3288 = vmax.f32 %v3231, 0.0
    %v3289 = vmax.f32 %v3232, 0.0
    %v3290 = vmax.f32 %v3233, 0.0
    %v3291 = vmax.f32 %v3234, 0.0
    %v3292 = vmax.f32 %v3235, 0.0
    %v3293 = vmax.f32 %v3236, 0.0
    %v3294 = vmax.f32 %v3237, 0.0
    %v3295 = vmax.f32 %v3238, 0.0
    %v3296 = vmax.f32 %v3239, 0.0
    %v3297 = vmax.f32 %v3240, 0.0
    %v3298 = vmax.f32 %v3241, 0.0
    %v3299 = vmax.f32 %v3242, 0.0
    %v3300 = vmax.f32 %v3243, 0.0
    %v3301 = vmax.f32 %v3244, 0.0
    %v3302 = vmax.f32 %v3245, 0.0
    %v3303 = vmax.f32 %v3246, 0.0
    %v3304 = vmax.f32 %v3247, 0.0
    %v3305 = vmax.f32 %v3248, 0.0
    %v3306 = vmax.f32 %v3249, 0.0
    %v3307 = vmax.f32 %v3250, 0.0
    %v3308 = vmax.f32 %v3251, 0.0
    %v3309 = vmax.f32 %v3252, 0.0
    %v3310 = vmax.f32 %v3253, 0.0
    %v3311 = vmax.f32 %v3254, 0.0
    %v3312 = vmax.f32 %v3255, 0.0
    %v3313 = vmax.f32 %v3256, 0.0
    %v3314 = vmax.f32 %v3257, 0.0
    %v3315 = vmax.f32 %v3258, 0.0
    %v3316 = vmax.f32 %v3259, 0.0
    %v3317 = vmax.f32 %v3260, 0.0
    %v3318 = vmax.f32 %v3261, 0.0
    %v3319 = vmax.f32 %v3262, 0.0
    %v3320 = vmax.f32 %v3263, 0.0
    %v3321 = vmax.f32 %v3264, 0.0
    %v3322 = vmax.f32 %v3265, 0.0
    %v3323 = vmax.f32 %v3266, 0.0
    %v3324 = vmax.f32 %v3267, 0.0
    %v3325 = vmax.f32 %v3268, 0.0
    %v3326 = vmax.f32 %v3269, 0.0
    %v3327 = vmax.f32 %v3270, 0.0
    %v3328 = vmax.f32 %v3271, 0.0
    %v3329 = vpack.c.bf16 %v3273, %v3272
    %v3330 = vpack.c.bf16 %v3275, %v3274
    %v3331 = vpack.c.bf16 %v3277, %v3276
    %v3332 = vpack.c.bf16 %v3279, %v3278
    %v3333 = vpack.c.bf16 %v3281, %v3280
    %v3334 = vpack.c.bf16 %v3283, %v3282
    %v3335 = vpack.c.bf16 %v3285, %v3284
    %v3336 = vpack.c.bf16 %v3287, %v3286
    %v3337 = vpack.c.bf16 %v3289, %v3288
    %v3338 = vpack.c.bf16 %v3291, %v3290
    %v3339 = vpack.c.bf16 %v3293, %v3292
    %v3340 = vpack.c.bf16 %v3295, %v3294
    %v3341 = vpack.c.bf16 %v3297, %v3296
    %v3342 = vpack.c.bf16 %v3299, %v3298
    %v3343 = vpack.c.bf16 %v3301, %v3300
    %v3344 = vpack.c.bf16 %v3303, %v3302
    %v3345 = vpack.c.bf16 %v3305, %v3304
    %v3346 = vpack.c.bf16 %v3307, %v3306
    %v3347 = vpack.c.bf16 %v3309, %v3308
    %v3348 = vpack.c.bf16 %v3311, %v3310
    %v3349 = vpack.c.bf16 %v3313, %v3312
    %v3350 = vpack.c.bf16 %v3315, %v3314
    %v3351 = vpack.c.bf16 %v3317, %v3316
    %v3352 = vpack.c.bf16 %v3319, %v3318
    %v3353 = vpack.c.bf16 %v3321, %v3320
    %v3354 = vpack.c.bf16 %v3323, %v3322
    %v3355 = vpack.c.bf16 %v3325, %v3324
    %v3356 = vpack.c.bf16 %v3327, %v3326
    %v3357 = vpack.c.bf16 %v3328, %v3328
    %vm3358 = vsmask.f32 7424
    %v3360 = vshrl.u32 %v3329, 16
    %v3362 = vshll.u32 %v3329, 16
    %v3364 = vrot.slane %v3362, 1
    %v3365 = vor.u32 %v3360, %v3364
    %v3367 = vshll.u32 %v3330, 16
    %v3369 = vrot.slane %v3367, 1
    %v3370 = vsel %vm3358, %v3365, %v3369
    %v3371 = vshrl.u32 %v3330, 16
    %v3373 = vor.u32 %v3371, %v3369
    %v3375 = vshll.u32 %v3331, 16
    %v3377 = vrot.slane %v3375, 1
    %v3378 = vsel %vm3358, %v3373, %v3377
    %v3379 = vshrl.u32 %v3331, 16
    %v3381 = vor.u32 %v3379, %v3377
    %v3383 = vshll.u32 %v3332, 16
    %v3385 = vrot.slane %v3383, 1
    %v3386 = vsel %vm3358, %v3381, %v3385
    %v3387 = vshrl.u32 %v3332, 16
    %v3389 = vor.u32 %v3387, %v3385
    %v3391 = vshll.u32 %v3333, 16
    %v3393 = vrot.slane %v3391, 1
    %v3394 = vsel %vm3358, %v3389, %v3393
    %v3395 = vshrl.u32 %v3333, 16
    %v3397 = vor.u32 %v3395, %v3393
    %v3399 = vshll.u32 %v3334, 16
    %v3401 = vrot.slane %v3399, 1
    %v3402 = vsel %vm3358, %v3397, %v3401
    %v3403 = vshrl.u32 %v3334, 16
    %v3405 = vor.u32 %v3403, %v3401
    %v3407 = vshll.u32 %v3335, 16
    %v3409 = vrot.slane %v3407, 1
    %v3410 = vsel %vm3358, %v3405, %v3409
    %v3411 = vshrl.u32 %v3335, 16
    %v3413 = vor.u32 %v3411, %v3409
    %v3415 = vshll.u32 %v3336, 16
    %v3417 = vrot.slane %v3415, 1
    %v3418 = vsel %vm3358, %v3413, %v3417
    %v3419 = vshrl.u32 %v3336, 16
    %v3421 = vor.u32 %v3419, %v3417
    %v3423 = vshll.u32 %v3337, 16
    %v3425 = vrot.slane %v3423, 1
    %v3426 = vsel %vm3358, %v3421, %v3425
    %v3427 = vshrl.u32 %v3337, 16
    %v3429 = vor.u32 %v3427, %v3425
    %v3431 = vshll.u32 %v3338, 16
    %v3433 = vrot.slane %v3431, 1
    %v3434 = vsel %vm3358, %v3429, %v3433
    %v3435 = vshrl.u32 %v3338, 16
    %v3437 = vor.u32 %v3435, %v3433
    %v3439 = vshll.u32 %v3339, 16
    %v3441 = vrot.slane %v3439, 1
    %v3442 = vsel %vm3358, %v3437, %v3441
    %v3443 = vshrl.u32 %v3339, 16
    %v3445 = vor.u32 %v3443, %v3441
    %v3447 = vshll.u32 %v3340, 16
    %v3449 = vrot.slane %v3447, 1
    %v3450 = vsel %vm3358, %v3445, %v3449
    %v3451 = vshrl.u32 %v3340, 16
    %v3453 = vor.u32 %v3451, %v3449
    %v3455 = vshll.u32 %v3341, 16
    %v3457 = vrot.slane %v3455, 1
    %v3458 = vsel %vm3358, %v3453, %v3457
    %v3459 = vshrl.u32 %v3341, 16
    %v3461 = vor.u32 %v3459, %v3457
    %v3463 = vshll.u32 %v3342, 16
    %v3465 = vrot.slane %v3463, 1
    %v3466 = vsel %vm3358, %v3461, %v3465
    %v3467 = vshrl.u32 %v3342, 16
    %v3469 = vor.u32 %v3467, %v3465
    %v3471 = vshll.u32 %v3343, 16
    %v3473 = vrot.slane %v3471, 1
    %v3474 = vsel %vm3358, %v3469, %v3473
    %v3475 = vshrl.u32 %v3343, 16
    %v3477 = vor.u32 %v3475, %v3473
    %v3479 = vshll.u32 %v3344, 16
    %v3481 = vrot.slane %v3479, 1
    %v3482 = vsel %vm3358, %v3477, %v3481
    %v3483 = vshrl.u32 %v3344, 16
    %v3485 = vor.u32 %v3483, %v3481
    %v3487 = vshll.u32 %v3345, 16
    %v3489 = vrot.slane %v3487, 1
    %v3490 = vsel %vm3358, %v3485, %v3489
    %v3491 = vshrl.u32 %v3345, 16
    %v3493 = vor.u32 %v3491, %v3489
    %v3495 = vshll.u32 %v3346, 16
    %v3497 = vrot.slane %v3495, 1
    %v3498 = vsel %vm3358, %v3493, %v3497
    %v3499 = vshrl.u32 %v3346, 16
    %v3501 = vor.u32 %v3499, %v3497
    %v3503 = vshll.u32 %v3347, 16
    %v3505 = vrot.slane %v3503, 1
    %v3506 = vsel %vm3358, %v3501, %v3505
    %v3507 = vshrl.u32 %v3347, 16
    %v3509 = vor.u32 %v3507, %v3505
    %v3511 = vshll.u32 %v3348, 16
    %v3513 = vrot.slane %v3511, 1
    %v3514 = vsel %vm3358, %v3509, %v3513
    %v3515 = vshrl.u32 %v3348, 16
    %v3517 = vor.u32 %v3515, %v3513
    %v3519 = vshll.u32 %v3349, 16
    %v3521 = vrot.slane %v3519, 1
    %v3522 = vsel %vm3358, %v3517, %v3521
    %vm3564 = vcmask 1046528
    %v3565 = vrot.slane %v3329, 1
    %v3566 = vrot.slane %v3330, 1
    %v3567 = vsel %vm3564, %v3565, %v3566
    %v3568 = vrot.slane %v3331, 1
    %v3569 = vsel %vm3564, %v3566, %v3568
    %v3570 = vrot.slane %v3332, 1
    %v3571 = vsel %vm3564, %v3568, %v3570
    %v3572 = vrot.slane %v3333, 1
    %v3573 = vsel %vm3564, %v3570, %v3572
    %v3574 = vrot.slane %v3334, 1
    %v3575 = vsel %vm3564, %v3572, %v3574
    %v3576 = vrot.slane %v3335, 1
    %v3577 = vsel %vm3564, %v3574, %v3576
    %v3578 = vrot.slane %v3336, 1
    %v3579 = vsel %vm3564, %v3576, %v3578
    %v3580 = vrot.slane %v3337, 1
    %v3581 = vsel %vm3564, %v3578, %v3580
    %v3582 = vrot.slane %v3338, 1
    %v3583 = vsel %vm3564, %v3580, %v3582
    %v3584 = vrot.slane %v3339, 1
    %v3585 = vsel %vm3564, %v3582, %v3584
    %v3586 = vrot.slane %v3340, 1
    %v3587 = vsel %vm3564, %v3584, %v3586
    %v3588 = vrot.slane %v3341, 1
    %v3589 = vsel %vm3564, %v3586, %v3588
    %v3590 = vrot.slane %v3342, 1
    %v3591 = vsel %vm3564, %v3588, %v3590
    %v3592 = vrot.slane %v3343, 1
    %v3593 = vsel %vm3564, %v3590, %v3592
    %v3594 = vrot.slane %v3344, 1
    %v3595 = vsel %vm3564, %v3592, %v3594
    %v3596 = vrot.slane %v3345, 1
    %v3597 = vsel %vm3564, %v3594, %v3596
    %v3598 = vrot.slane %v3346, 1
    %v3599 = vsel %vm3564, %v3596, %v3598
    %v3600 = vrot.slane %v3347, 1
    %v3601 = vsel %vm3564, %v3598, %v3600
    %v3602 = vrot.slane %v3348, 1
    %v3603 = vsel %vm3564, %v3600, %v3602
    %v3604 = vrot.slane %v3349, 1
    %v3605 = vsel %vm3564, %v3602, %v3604
    %vm3626 = vsmask.f32 6400
    %v3627 = vrot.slane %v3360, 1
    %v3628 = vrot.slane %v3362, 2
    %v3629 = vor.u32 %v3627, %v3628
    %v3630 = vrot.slane %v3371, 1
    %v3631 = vrot.slane %v3367, 2
    %v3632 = vor.u32 %v3630, %v3631
    %v3633 = vsel %vm3626, %v3629, %v3632
    %v3634 = vrot.slane %v3379, 1
    %v3635 = vrot.slane %v3375, 2
    %v3636 = vor.u32 %v3634, %v3635
    %v3637 = vsel %vm3626, %v3632, %v3636
    %v3638 = vrot.slane %v3387, 1
    %v3639 = vrot.slane %v3383, 2
    %v3640 = vor.u32 %v3638, %v3639
    %v3641 = vsel %vm3626, %v3636, %v3640
    %v3642 = vrot.slane %v3395, 1
    %v3643 = vrot.slane %v3391, 2
    %v3644 = vor.u32 %v3642, %v3643
    %v3645 = vsel %vm3626, %v3640, %v3644
    %v3646 = vrot.slane %v3403, 1
    %v3647 = vrot.slane %v3399, 2
    %v3648 = vor.u32 %v3646, %v3647
    %v3649 = vsel %vm3626, %v3644, %v3648
    %v3650 = vrot.slane %v3411, 1
    %v3651 = vrot.slane %v3407, 2
    %v3652 = vor.u32 %v3650, %v3651
    %v3653 = vsel %vm3626, %v3648, %v3652
    %v3654 = vrot.slane %v3419, 1
    %v3655 = vrot.slane %v3415, 2
    %v3656 = vor.u32 %v3654, %v3655
    %v3657 = vsel %vm3626, %v3652, %v3656
    %v3658 = vrot.slane %v3427, 1
    %v3659 = vrot.slane %v3423, 2
    %v3660 = vor.u32 %v3658, %v3659
    %v3661 = vsel %vm3626, %v3656, %v3660
    %v3662 = vrot.slane %v3435, 1
    %v3663 = vrot.slane %v3431, 2
    %v3664 = vor.u32 %v3662, %v3663
    %v3665 = vsel %vm3626, %v3660, %v3664
    %v3666 = vrot.slane %v3443, 1
    %v3667 = vrot.slane %v3439, 2
    %v3668 = vor.u32 %v3666, %v3667
    %v3669 = vsel %vm3626, %v3664, %v3668
    %v3670 = vrot.slane %v3451, 1
    %v3671 = vrot.slane %v3447, 2
    %v3672 = vor.u32 %v3670, %v3671
    %v3673 = vsel %vm3626, %v3668, %v3672
    %v3674 = vrot.slane %v3459, 1
    %v3675 = vrot.slane %v3455, 2
    %v3676 = vor.u32 %v3674, %v3675
    %v3677 = vsel %vm3626, %v3672, %v3676
    %v3678 = vrot.slane %v3467, 1
    %v3679 = vrot.slane %v3463, 2
    %v3680 = vor.u32 %v3678, %v3679
    %v3681 = vsel %vm3626, %v3676, %v3680
    %v3682 = vrot.slane %v3475, 1
    %v3683 = vrot.slane %v3471, 2
    %v3684 = vor.u32 %v3682, %v3683
    %v3685 = vsel %vm3626, %v3680, %v3684
    %v3686 = vrot.slane %v3483, 1
    %v3687 = vrot.slane %v3479, 2
    %v3688 = vor.u32 %v3686, %v3687
    %v3689 = vsel %vm3626, %v3684, %v3688
    %v3690 = vrot.slane %v3491, 1
    %v3691 = vrot.slane %v3487, 2
    %v3692 = vor.u32 %v3690, %v3691
    %v3693 = vsel %vm3626, %v3688, %v3692
    %v3694 = vrot.slane %v3499, 1
    %v3695 = vrot.slane %v3495, 2
    %v3696 = vor.u32 %v3694, %v3695
    %v3697 = vsel %vm3626, %v3692, %v3696
    %v3698 = vrot.slane %v3507, 1
    %v3699 = vrot.slane %v3503, 2
    %v3700 = vor.u32 %v3698, %v3699
    %v3701 = vsel %vm3626, %v3696, %v3700
    %v3702 = vrot.slane %v3515, 1
    %v3703 = vrot.slane %v3511, 2
    %v3704 = vor.u32 %v3702, %v3703
    %v3705 = vsel %vm3626, %v3700, %v3704
    %v3706 = vshrl.u32 %v3349, 16
    %v3708 = vrot.slane %v3706, 1
    %v3709 = vrot.slane %v3519, 2
    %v3710 = vor.u32 %v3708, %v3709
    %v3711 = vsel %vm3626, %v3704, %v3710
    %vm3732 = vcmask 1045504
    %v3733 = vrot.slane %v3329, 2
    %v3734 = vrot.slane %v3330, 2
    %v3735 = vsel %vm3732, %v3733, %v3734
    %v3736 = vrot.slane %v3331, 2
    %v3737 = vsel %vm3732, %v3734, %v3736
    %v3738 = vrot.slane %v3332, 2
    %v3739 = vsel %vm3732, %v3736, %v3738
    %v3740 = vrot.slane %v3333, 2
    %v3741 = vsel %vm3732, %v3738, %v3740
    %v3742 = vrot.slane %v3334, 2
    %v3743 = vsel %vm3732, %v3740, %v3742
    %v3744 = vrot.slane %v3335, 2
    %v3745 = vsel %vm3732, %v3742, %v3744
    %v3746 = vrot.slane %v3336, 2
    %v3747 = vsel %vm3732, %v3744, %v3746
    %v3748 = vrot.slane %v3337, 2
    %v3749 = vsel %vm3732, %v3746, %v3748
    %v3750 = vrot.slane %v3338, 2
    %v3751 = vsel %vm3732, %v3748, %v3750
    %v3752 = vrot.slane %v3339, 2
    %v3753 = vsel %vm3732, %v3750, %v3752
    %v3754 = vrot.slane %v3340, 2
    %v3755 = vsel %vm3732, %v3752, %v3754
    %v3756 = vrot.slane %v3341, 2
    %v3757 = vsel %vm3732, %v3754, %v3756
    %v3758 = vrot.slane %v3342, 2
    %v3759 = vsel %vm3732, %v3756, %v3758
    %v3760 = vrot.slane %v3343, 2
    %v3761 = vsel %vm3732, %v3758, %v3760
    %v3762 = vrot.slane %v3344, 2
    %v3763 = vsel %vm3732, %v3760, %v3762
    %v3764 = vrot.slane %v3345, 2
    %v3765 = vsel %vm3732, %v3762, %v3764
    %v3766 = vrot.slane %v3346, 2
    %v3767 = vsel %vm3732, %v3764, %v3766
    %v3768 = vrot.slane %v3347, 2
    %v3769 = vsel %vm3732, %v3766, %v3768
    %v3770 = vrot.slane %v3348, 2
    %v3771 = vsel %vm3732, %v3768, %v3770
    %v3772 = vrot.slane %v3349, 2
    %v3773 = vsel %vm3732, %v3770, %v3772
    %v3794 = vor.u32 %v3706, %v3521
    %v3796 = vshll.u32 %v3350, 16
    %v3798 = vrot.slane %v3796, 1
    %v3799 = vsel %vm3358, %v3794, %v3798
    %v3800 = vshrl.u32 %v3350, 16
    %v3802 = vor.u32 %v3800, %v3798
    %v3804 = vshll.u32 %v3351, 16
    %v3806 = vrot.slane %v3804, 1
    %v3807 = vsel %vm3358, %v3802, %v3806
    %v3812 = vrot.slane %v3350, 1
    %v3813 = vsel %vm3564, %v3604, %v3812
    %v3814 = vrot.slane %v3351, 1
    %v3815 = vsel %vm3564, %v3812, %v3814
    %v3818 = vrot.slane %v3800, 1
    %v3819 = vrot.slane %v3796, 2
    %v3820 = vor.u32 %v3818, %v3819
    %v3821 = vsel %vm3626, %v3710, %v3820
    %v3822 = vshrl.u32 %v3351, 16
    %v3824 = vrot.slane %v3822, 1
    %v3825 = vrot.slane %v3804, 2
    %v3826 = vor.u32 %v3824, %v3825
    %v3827 = vsel %vm3626, %v3820, %v3826
    %v3830 = vrot.slane %v3350, 2
    %v3831 = vsel %vm3732, %v3772, %v3830
    %v3832 = vrot.slane %v3351, 2
    %v3833 = vsel %vm3732, %v3830, %v3832
    %v3836 = vor.u32 %v3822, %v3806
    %v3838 = vshll.u32 %v3352, 16
    %v3840 = vrot.slane %v3838, 1
    %v3841 = vsel %vm3358, %v3836, %v3840
    %v3842 = vshrl.u32 %v3352, 16
    %v3844 = vor.u32 %v3842, %v3840
    %v3846 = vshll.u32 %v3353, 16
    %v3848 = vrot.slane %v3846, 1
    %v3849 = vsel %vm3358, %v3844, %v3848
    %v3854 = vrot.slane %v3352, 1
    %v3855 = vsel %vm3564, %v3814, %v3854
    %v3856 = vrot.slane %v3353, 1
    %v3857 = vsel %vm3564, %v3854, %v3856
    %v3860 = vrot.slane %v3842, 1
    %v3861 = vrot.slane %v3838, 2
    %v3862 = vor.u32 %v3860, %v3861
    %v3863 = vsel %vm3626, %v3826, %v3862
    %v3864 = vshrl.u32 %v3353, 16
    %v3866 = vrot.slane %v3864, 1
    %v3867 = vrot.slane %v3846, 2
    %v3868 = vor.u32 %v3866, %v3867
    %v3869 = vsel %vm3626, %v3862, %v3868
    %v3872 = vrot.slane %v3352, 2
    %v3873 = vsel %vm3732, %v3832, %v3872
    %v3874 = vrot.slane %v3353, 2
    %v3875 = vsel %vm3732, %v3872, %v3874
    %v3878 = vor.u32 %v3864, %v3848
    %v3880 = vshll.u32 %v3354, 16
    %v3882 = vrot.slane %v3880, 1
    %v3883 = vsel %vm3358, %v3878, %v3882
    %v3884 = vshrl.u32 %v3354, 16
    %v3886 = vor.u32 %v3884, %v3882
    %v3888 = vshll.u32 %v3355, 16
    %v3890 = vrot.slane %v3888, 1
    %v3891 = vsel %vm3358, %v3886, %v3890
    %v3892 = vshrl.u32 %v3355, 16
    %v3896 = vrot.slane %v3354, 1
    %v3897 = vsel %vm3564, %v3856, %v3896
    %v3898 = vrot.slane %v3355, 1
    %v3899 = vsel %vm3564, %v3896, %v3898
    %v3900 = vrot.slane %v3884, 1
    %v3901 = vrot.slane %v3880, 2
    %v3902 = vor.u32 %v3900, %v3901
    %v3903 = vsel %vm3626, %v3868, %v3902
    %v3904 = vrot.slane %v3892, 1
    %v3905 = vrot.slane %v3888, 2
    %v3906 = vor.u32 %v3904, %v3905
    %v3907 = vsel %vm3626, %v3902, %v3906
    %vm3908 = vsmask.f32 256
    %v3909 = vrot.slane %v3427, 7
    %v3910 = vor.u32 %v3909, %v3423
    %v3911 = vrot.slane %v3435, 7
    %v3912 = vor.u32 %v3911, %v3431
    %v3913 = vsel %vm3908, %v3909, %v3912
    %v3914 = vrot.slane %v3443, 7
    %v3915 = vor.u32 %v3914, %v3439
    %v3916 = vsel %vm3908, %v3911, %v3915
    %v3917 = vrot.slane %v3451, 7
    %v3918 = vor.u32 %v3917, %v3447
    %v3919 = vsel %vm3908, %v3914, %v3918
    %v3920 = vrot.slane %v3459, 7
    %v3921 = vor.u32 %v3920, %v3455
    %v3922 = vsel %vm3908, %v3917, %v3921
    %v3923 = vrot.slane %v3467, 7
    %v3924 = vor.u32 %v3923, %v3463
    %v3925 = vsel %vm3908, %v3920, %v3924
    %v3926 = vrot.slane %v3475, 7
    %v3927 = vor.u32 %v3926, %v3471
    %v3928 = vsel %vm3908, %v3923, %v3927
    %v3929 = vrot.slane %v3483, 7
    %v3930 = vor.u32 %v3929, %v3479
    %v3931 = vsel %vm3908, %v3926, %v3930
    %v3932 = vrot.slane %v3491, 7
    %v3933 = vor.u32 %v3932, %v3487
    %v3934 = vsel %vm3908, %v3929, %v3933
    %v3935 = vrot.slane %v3499, 7
    %v3936 = vor.u32 %v3935, %v3495
    %v3937 = vsel %vm3908, %v3932, %v3936
    %v3938 = vrot.slane %v3507, 7
    %v3939 = vor.u32 %v3938, %v3503
    %v3940 = vsel %vm3908, %v3935, %v3939
    %v3941 = vrot.slane %v3515, 7
    %v3942 = vor.u32 %v3941, %v3511
    %v3943 = vsel %vm3908, %v3938, %v3942
    %v3944 = vrot.slane %v3706, 7
    %v3945 = vor.u32 %v3944, %v3519
    %v3946 = vsel %vm3908, %v3941, %v3945
    %v3947 = vrot.slane %v3800, 7
    %v3948 = vor.u32 %v3947, %v3796
    %v3949 = vsel %vm3908, %v3944, %v3948
    %v3950 = vrot.slane %v3822, 7
    %v3951 = vor.u32 %v3950, %v3804
    %v3952 = vsel %vm3908, %v3947, %v3951
    %v3953 = vrot.slane %v3842, 7
    %v3954 = vor.u32 %v3953, %v3838
    %v3955 = vsel %vm3908, %v3950, %v3954
    %v3956 = vrot.slane %v3864, 7
    %v3957 = vor.u32 %v3956, %v3846
    %v3958 = vsel %vm3908, %v3953, %v3957
    %v3959 = vrot.slane %v3884, 7
    %v3960 = vor.u32 %v3959, %v3880
    %v3961 = vsel %vm3908, %v3956, %v3960
    %v3962 = vrot.slane %v3892, 7
    %v3963 = vor.u32 %v3962, %v3888
    %v3964 = vsel %vm3908, %v3959, %v3963
    %v3966 = vshrl.u32 %v3356, 16
    %v3968 = vrot.slane %v3966, 7
    %v3969 = vshll.u32 %v3356, 16
    %v3971 = vor.u32 %v3968, %v3969
    %v3972 = vsel %vm3908, %v3962, %v3971
    %v3973 = vor.u32 %v3892, %v3890
    %v3974 = vrot.slane %v3969, 1
    %v3975 = vsel %vm3358, %v3973, %v3974
    %v3976 = vor.u32 %v3966, %v3974
    %v3978 = vshll.u32 %v3357, 16
    %v3980 = vrot.slane %v3978, 1
    %v3981 = vsel %vm3358, %v3976, %v3980
    %v3982 = vshrl.u32 %v3357, 16
    %v3986 = vrot.slane %v3356, 1
    %v3987 = vsel %vm3564, %v3898, %v3986
    %v3988 = vrot.slane %v3357, 1
    %v3989 = vsel %vm3564, %v3986, %v3988
    %v3990 = vrot.slane %v3966, 1
    %v3991 = vrot.slane %v3969, 2
    %v3992 = vor.u32 %v3990, %v3991
    %v3993 = vsel %vm3626, %v3906, %v3992
    %v3994 = vrot.slane %v3982, 1
    %v3995 = vrot.slane %v3978, 2
    %v3996 = vor.u32 %v3994, %v3995
    %v3997 = vsel %vm3626, %v3992, %v3996
    %v3999 = vshrl.u32 %v3418, 16
    %v4001 = vshll.u32 %v3418, 16
    %v4003 = vrot.slane %v4001, 1
    %v4004 = vor.u32 %v3999, %v4003
    %v4006 = vshll.u32 %v3426, 16
    %v4008 = vrot.slane %v4006, 1
    %v4009 = vsel %vm3358, %v4004, %v4008
    %v4011 = vshrl.u32 %v3579, 16
    %v4013 = vshll.u32 %v3579, 16
    %v4015 = vrot.slane %v4013, 1
    %v4016 = vor.u32 %v4011, %v4015
    %v4018 = vshll.u32 %v3581, 16
    %v4020 = vrot.slane %v4018, 1
    %v4021 = vsel %vm3358, %v4016, %v4020
    %v4023 = vshrl.u32 %v3657, 16
    %v4025 = vshll.u32 %v3657, 16
    %v4027 = vrot.slane %v4025, 1
    %v4028 = vor.u32 %v4023, %v4027
    %v4030 = vshll.u32 %v3661, 16
    %v4032 = vrot.slane %v4030, 1
    %v4033 = vsel %vm3358, %v4028, %v4032
    %v4035 = vshrl.u32 %v3910, 16
    %v4037 = vshll.u32 %v3910, 16
    %v4039 = vrot.slane %v4037, 1
    %v4040 = vor.u32 %v4035, %v4039
    %v4042 = vshll.u32 %v3913, 16
    %v4044 = vrot.slane %v4042, 1
    %v4045 = vsel %vm3358, %v4040, %v4044
    %v4047 = vshrl.u32 %v3434, 16
    %v4049 = vshll.u32 %v3434, 16
    %v4051 = vrot.slane %v4049, 1
    %v4052 = vor.u32 %v4047, %v4051
    %v4054 = vshll.u32 %v3442, 16
    %v4056 = vrot.slane %v4054, 1
    %v4057 = vsel %vm3358, %v4052, %v4056
    %v4059 = vshrl.u32 %v3583, 16
    %v4061 = vshll.u32 %v3583, 16
    %v4063 = vrot.slane %v4061, 1
    %v4064 = vor.u32 %v4059, %v4063
    %v4066 = vshll.u32 %v3585, 16
    %v4068 = vrot.slane %v4066, 1
    %v4069 = vsel %vm3358, %v4064, %v4068
    %v4071 = vshrl.u32 %v3665, 16
    %v4073 = vshll.u32 %v3665, 16
    %v4075 = vrot.slane %v4073, 1
    %v4076 = vor.u32 %v4071, %v4075
    %v4078 = vshll.u32 %v3669, 16
    %v4080 = vrot.slane %v4078, 1
    %v4081 = vsel %vm3358, %v4076, %v4080
    %v4082 = vshrl.u32 %v3426, 16
    %v4084 = vor.u32 %v4082, %v4008
    %v4085 = vsel %vm3358, %v4084, %v4051
    %v4086 = vshrl.u32 %v3581, 16
    %v4088 = vor.u32 %v4086, %v4020
    %v4089 = vsel %vm3358, %v4088, %v4063
    %v4090 = vshrl.u32 %v3661, 16
    %v4092 = vor.u32 %v4090, %v4032
    %v4093 = vsel %vm3358, %v4092, %v4075
    %v4094 = vshrl.u32 %v3913, 16
    %v4096 = vor.u32 %v4094, %v4044
    %v4098 = vshll.u32 %v3916, 16
    %v4100 = vrot.slane %v4098, 1
    %v4101 = vsel %vm3358, %v4096, %v4100
    %v4102 = vshrl.u32 %v3442, 16
    %v4104 = vor.u32 %v4102, %v4056
    %v4106 = vshll.u32 %v3450, 16
    %v4108 = vrot.slane %v4106, 1
    %v4109 = vsel %vm3358, %v4104, %v4108
    %v4110 = vshrl.u32 %v3585, 16
    %v4112 = vor.u32 %v4110, %v4068
    %v4114 = vshll.u32 %v3587, 16
    %v4116 = vrot.slane %v4114, 1
    %v4117 = vsel %vm3358, %v4112, %v4116
    %v4118 = vshrl.u32 %v3669, 16
    %v4120 = vor.u32 %v4118, %v4080
    %v4122 = vshll.u32 %v3673, 16
    %v4124 = vrot.slane %v4122, 1
    %v4125 = vsel %vm3358, %v4120, %v4124
    %v4126 = vshrl.u32 %v3916, 16
    %v4128 = vor.u32 %v4126, %v4100
    %v4130 = vshll.u32 %v3919, 16
    %v4132 = vrot.slane %v4130, 1
    %v4133 = vsel %vm3358, %v4128, %v4132
    %v4134 = vshrl.u32 %v3450, 16
    %v4136 = vor.u32 %v4134, %v4108
    %v4138 = vshll.u32 %v3458, 16
    %v4140 = vrot.slane %v4138, 1
    %v4141 = vsel %vm3358, %v4136, %v4140
    %v4142 = vshrl.u32 %v3587, 16
    %v4144 = vor.u32 %v4142, %v4116
    %v4146 = vshll.u32 %v3589, 16
    %v4148 = vrot.slane %v4146, 1
    %v4149 = vsel %vm3358, %v4144, %v4148
    %v4150 = vshrl.u32 %v3673, 16
    %v4152 = vor.u32 %v4150, %v4124
    %v4154 = vshll.u32 %v3677, 16
    %v4156 = vrot.slane %v4154, 1
    %v4157 = vsel %vm3358, %v4152, %v4156
    %v4158 = vshrl.u32 %v3919, 16
    %v4160 = vor.u32 %v4158, %v4132
    %v4162 = vshll.u32 %v3922, 16
    %v4164 = vrot.slane %v4162, 1
    %v4165 = vsel %vm3358, %v4160, %v4164
    %v4166 = vshrl.u32 %v3458, 16
    %v4168 = vor.u32 %v4166, %v4140
    %v4170 = vshll.u32 %v3466, 16
    %v4172 = vrot.slane %v4170, 1
    %v4173 = vsel %vm3358, %v4168, %v4172
    %v4174 = vshrl.u32 %v3589, 16
    %v4176 = vor.u32 %v4174, %v4148
    %v4178 = vshll.u32 %v3591, 16
    %v4180 = vrot.slane %v4178, 1
    %v4181 = vsel %vm3358, %v4176, %v4180
    %v4182 = vshrl.u32 %v3677, 16
    %v4184 = vor.u32 %v4182, %v4156
    %v4186 = vshll.u32 %v3681, 16
    %v4188 = vrot.slane %v4186, 1
    %v4189 = vsel %vm3358, %v4184, %v4188
    %v4190 = vshrl.u32 %v3922, 16
    %v4192 = vor.u32 %v4190, %v4164
    %v4194 = vshll.u32 %v3925, 16
    %v4196 = vrot.slane %v4194, 1
    %v4197 = vsel %vm3358, %v4192, %v4196
    %v4198 = vshrl.u32 %v3466, 16
    %v4200 = vor.u32 %v4198, %v4172
    %v4202 = vshll.u32 %v3474, 16
    %v4204 = vrot.slane %v4202, 1
    %v4205 = vsel %vm3358, %v4200, %v4204
    %v4206 = vshrl.u32 %v3591, 16
    %v4208 = vor.u32 %v4206, %v4180
    %v4210 = vshll.u32 %v3593, 16
    %v4212 = vrot.slane %v4210, 1
    %v4213 = vsel %vm3358, %v4208, %v4212
    %v4214 = vshrl.u32 %v3681, 16
    %v4216 = vor.u32 %v4214, %v4188
    %v4218 = vshll.u32 %v3685, 16
    %v4220 = vrot.slane %v4218, 1
    %v4221 = vsel %vm3358, %v4216, %v4220
    %v4222 = vshrl.u32 %v3925, 16
    %v4224 = vor.u32 %v4222, %v4196
    %v4226 = vshll.u32 %v3928, 16
    %v4228 = vrot.slane %v4226, 1
    %v4229 = vsel %vm3358, %v4224, %v4228
    %v4230 = vshrl.u32 %v3474, 16
    %v4232 = vor.u32 %v4230, %v4204
    %v4234 = vshll.u32 %v3482, 16
    %v4236 = vrot.slane %v4234, 1
    %v4237 = vsel %vm3358, %v4232, %v4236
    %v4238 = vshrl.u32 %v3593, 16
    %v4240 = vor.u32 %v4238, %v4212
    %v4242 = vshll.u32 %v3595, 16
    %v4244 = vrot.slane %v4242, 1
    %v4245 = vsel %vm3358, %v4240, %v4244
    %v4246 = vshrl.u32 %v3685, 16
    %v4248 = vor.u32 %v4246, %v4220
    %v4250 = vshll.u32 %v3689, 16
    %v4252 = vrot.slane %v4250, 1
    %v4253 = vsel %vm3358, %v4248, %v4252
    %v4254 = vshrl.u32 %v3928, 16
    %v4256 = vor.u32 %v4254, %v4228
    %v4258 = vshll.u32 %v3931, 16
    %v4260 = vrot.slane %v4258, 1
    %v4261 = vsel %vm3358, %v4256, %v4260
    %v4262 = vshrl.u32 %v3482, 16
    %v4264 = vor.u32 %v4262, %v4236
    %v4266 = vshll.u32 %v3490, 16
    %v4268 = vrot.slane %v4266, 1
    %v4269 = vsel %vm3358, %v4264, %v4268
    %v4270 = vshrl.u32 %v3595, 16
    %v4272 = vor.u32 %v4270, %v4244
    %v4274 = vshll.u32 %v3597, 16
    %v4276 = vrot.slane %v4274, 1
    %v4277 = vsel %vm3358, %v4272, %v4276
    %v4278 = vshrl.u32 %v3689, 16
    %v4280 = vor.u32 %v4278, %v4252
    %v4282 = vshll.u32 %v3693, 16
    %v4284 = vrot.slane %v4282, 1
    %v4285 = vsel %vm3358, %v4280, %v4284
    %v4286 = vshrl.u32 %v3931, 16
    %v4288 = vor.u32 %v4286, %v4260
    %v4290 = vshll.u32 %v3934, 16
    %v4292 = vrot.slane %v4290, 1
    %v4293 = vsel %vm3358, %v4288, %v4292
    %v4294 = vshrl.u32 %v3490, 16
    %v4296 = vor.u32 %v4294, %v4268
    %v4298 = vshll.u32 %v3498, 16
    %v4300 = vrot.slane %v4298, 1
    %v4301 = vsel %vm3358, %v4296, %v4300
    %v4302 = vshrl.u32 %v3597, 16
    %v4304 = vor.u32 %v4302, %v4276
    %v4306 = vshll.u32 %v3599, 16
    %v4308 = vrot.slane %v4306, 1
    %v4309 = vsel %vm3358, %v4304, %v4308
    %v4310 = vshrl.u32 %v3693, 16
    %v4312 = vor.u32 %v4310, %v4284
    %v4314 = vshll.u32 %v3697, 16
    %v4316 = vrot.slane %v4314, 1
    %v4317 = vsel %vm3358, %v4312, %v4316
    %v4318 = vshrl.u32 %v3934, 16
    %v4320 = vor.u32 %v4318, %v4292
    %v4322 = vshll.u32 %v3937, 16
    %v4324 = vrot.slane %v4322, 1
    %v4325 = vsel %vm3358, %v4320, %v4324
    %v4326 = vshrl.u32 %v3498, 16
    %v4328 = vor.u32 %v4326, %v4300
    %v4330 = vshll.u32 %v3506, 16
    %v4332 = vrot.slane %v4330, 1
    %v4333 = vsel %vm3358, %v4328, %v4332
    %v4334 = vshrl.u32 %v3599, 16
    %v4336 = vor.u32 %v4334, %v4308
    %v4338 = vshll.u32 %v3601, 16
    %v4340 = vrot.slane %v4338, 1
    %v4341 = vsel %vm3358, %v4336, %v4340
    %v4342 = vshrl.u32 %v3697, 16
    %v4344 = vor.u32 %v4342, %v4316
    %v4346 = vshll.u32 %v3701, 16
    %v4348 = vrot.slane %v4346, 1
    %v4349 = vsel %vm3358, %v4344, %v4348
    %v4350 = vshrl.u32 %v3937, 16
    %v4352 = vor.u32 %v4350, %v4324
    %v4354 = vshll.u32 %v3940, 16
    %v4356 = vrot.slane %v4354, 1
    %v4357 = vsel %vm3358, %v4352, %v4356
    %v4358 = vshrl.u32 %v3506, 16
    %v4360 = vor.u32 %v4358, %v4332
    %v4362 = vshll.u32 %v3514, 16
    %v4364 = vrot.slane %v4362, 1
    %v4365 = vsel %vm3358, %v4360, %v4364
    %v4366 = vshrl.u32 %v3601, 16
    %v4368 = vor.u32 %v4366, %v4340
    %v4370 = vshll.u32 %v3603, 16
    %v4372 = vrot.slane %v4370, 1
    %v4373 = vsel %vm3358, %v4368, %v4372
    %v4374 = vshrl.u32 %v3701, 16
    %v4376 = vor.u32 %v4374, %v4348
    %v4378 = vshll.u32 %v3705, 16
    %v4380 = vrot.slane %v4378, 1
    %v4381 = vsel %vm3358, %v4376, %v4380
    %v4382 = vshrl.u32 %v3940, 16
    %v4384 = vor.u32 %v4382, %v4356
    %v4386 = vshll.u32 %v3943, 16
    %v4388 = vrot.slane %v4386, 1
    %v4389 = vsel %vm3358, %v4384, %v4388
    %v4390 = vshrl.u32 %v3514, 16
    %v4392 = vor.u32 %v4390, %v4364
    %v4394 = vshll.u32 %v3522, 16
    %v4396 = vrot.slane %v4394, 1
    %v4397 = vsel %vm3358, %v4392, %v4396
    %v4398 = vshrl.u32 %v3603, 16
    %v4400 = vor.u32 %v4398, %v4372
    %v4402 = vshll.u32 %v3605, 16
    %v4404 = vrot.slane %v4402, 1
    %v4405 = vsel %vm3358, %v4400, %v4404
    %v4406 = vshrl.u32 %v3705, 16
    %v4408 = vor.u32 %v4406, %v4380
    %v4410 = vshll.u32 %v3711, 16
    %v4412 = vrot.slane %v4410, 1
    %v4413 = vsel %vm3358, %v4408, %v4412
    %v4414 = vshrl.u32 %v3943, 16
    %v4416 = vor.u32 %v4414, %v4388
    %v4418 = vshll.u32 %v3946, 16
    %v4420 = vrot.slane %v4418, 1
    %v4421 = vsel %vm3358, %v4416, %v4420
    %v4422 = vshrl.u32 %v3522, 16
    %v4424 = vor.u32 %v4422, %v4396
    %v4426 = vshll.u32 %v3799, 16
    %v4428 = vrot.slane %v4426, 1
    %v4429 = vsel %vm3358, %v4424, %v4428
    %v4430 = vshrl.u32 %v3605, 16
    %v4432 = vor.u32 %v4430, %v4404
    %v4434 = vshll.u32 %v3813, 16
    %v4436 = vrot.slane %v4434, 1
    %v4437 = vsel %vm3358, %v4432, %v4436
    %v4438 = vshrl.u32 %v3711, 16
    %v4440 = vor.u32 %v4438, %v4412
    %v4442 = vshll.u32 %v3821, 16
    %v4444 = vrot.slane %v4442, 1
    %v4445 = vsel %vm3358, %v4440, %v4444
    %v4446 = vshrl.u32 %v3946, 16
    %v4448 = vor.u32 %v4446, %v4420
    %v4450 = vshll.u32 %v3949, 16
    %v4452 = vrot.slane %v4450, 1
    %v4453 = vsel %vm3358, %v4448, %v4452
    %v4454 = vshrl.u32 %v3799, 16
    %v4456 = vor.u32 %v4454, %v4428
    %v4458 = vshll.u32 %v3807, 16
    %v4460 = vrot.slane %v4458, 1
    %v4461 = vsel %vm3358, %v4456, %v4460
    %v4462 = vshrl.u32 %v3813, 16
    %v4464 = vor.u32 %v4462, %v4436
    %v4466 = vshll.u32 %v3815, 16
    %v4468 = vrot.slane %v4466, 1
    %v4469 = vsel %vm3358, %v4464, %v4468
    %v4470 = vshrl.u32 %v3821, 16
    %v4472 = vor.u32 %v4470, %v4444
    %v4474 = vshll.u32 %v3827, 16
    %v4476 = vrot.slane %v4474, 1
    %v4477 = vsel %vm3358, %v4472, %v4476
    %v4478 = vshrl.u32 %v3949, 16
    %v4480 = vor.u32 %v4478, %v4452
    %v4482 = vshll.u32 %v3952, 16
    %v4484 = vrot.slane %v4482, 1
    %v4485 = vsel %vm3358, %v4480, %v4484
    %v4486 = vshrl.u32 %v3807, 16
    %v4488 = vor.u32 %v4486, %v4460
    %v4490 = vshll.u32 %v3841, 16
    %v4492 = vrot.slane %v4490, 1
    %v4493 = vsel %vm3358, %v4488, %v4492
    %v4494 = vshrl.u32 %v3815, 16
    %v4496 = vor.u32 %v4494, %v4468
    %v4498 = vshll.u32 %v3855, 16
    %v4500 = vrot.slane %v4498, 1
    %v4501 = vsel %vm3358, %v4496, %v4500
    %v4502 = vshrl.u32 %v3827, 16
    %v4504 = vor.u32 %v4502, %v4476
    %v4506 = vshll.u32 %v3863, 16
    %v4508 = vrot.slane %v4506, 1
    %v4509 = vsel %vm3358, %v4504, %v4508
    %v4510 = vshrl.u32 %v3952, 16
    %v4512 = vor.u32 %v4510, %v4484
    %v4514 = vshll.u32 %v3955, 16
    %v4516 = vrot.slane %v4514, 1
    %v4517 = vsel %vm3358, %v4512, %v4516
    %v4518 = vshrl.u32 %v3841, 16
    %v4520 = vor.u32 %v4518, %v4492
    %v4522 = vshll.u32 %v3849, 16
    %v4524 = vrot.slane %v4522, 1
    %v4525 = vsel %vm3358, %v4520, %v4524
    %v4526 = vshrl.u32 %v3855, 16
    %v4528 = vor.u32 %v4526, %v4500
    %v4530 = vshll.u32 %v3857, 16
    %v4532 = vrot.slane %v4530, 1
    %v4533 = vsel %vm3358, %v4528, %v4532
    %v4534 = vshrl.u32 %v3863, 16
    %v4536 = vor.u32 %v4534, %v4508
    %v4538 = vshll.u32 %v3869, 16
    %v4540 = vrot.slane %v4538, 1
    %v4541 = vsel %vm3358, %v4536, %v4540
    %v4542 = vshrl.u32 %v3955, 16
    %v4544 = vor.u32 %v4542, %v4516
    %v4546 = vshll.u32 %v3958, 16
    %v4548 = vrot.slane %v4546, 1
    %v4549 = vsel %vm3358, %v4544, %v4548
    %v4550 = vshrl.u32 %v3849, 16
    %v4552 = vor.u32 %v4550, %v4524
    %v4554 = vshll.u32 %v3883, 16
    %v4556 = vrot.slane %v4554, 1
    %v4557 = vsel %vm3358, %v4552, %v4556
    %v4558 = vshrl.u32 %v3857, 16
    %v4560 = vor.u32 %v4558, %v4532
    %v4562 = vshll.u32 %v3897, 16
    %v4564 = vrot.slane %v4562, 1
    %v4565 = vsel %vm3358, %v4560, %v4564
    %v4566 = vshrl.u32 %v3869, 16
    %v4568 = vor.u32 %v4566, %v4540
    %v4570 = vshll.u32 %v3903, 16
    %v4572 = vrot.slane %v4570, 1
    %v4573 = vsel %vm3358, %v4568, %v4572
    %v4574 = vshrl.u32 %v3958, 16
    %v4576 = vor.u32 %v4574, %v4548
    %v4578 = vshll.u32 %v3961, 16
    %v4580 = vrot.slane %v4578, 1
    %v4581 = vsel %vm3358, %v4576, %v4580
    %v4582 = vshrl.u32 %v3883, 16
    %v4584 = vor.u32 %v4582, %v4556
    %v4586 = vshll.u32 %v3891, 16
    %v4588 = vrot.slane %v4586, 1
    %v4589 = vsel %vm3358, %v4584, %v4588
    %v4590 = vshrl.u32 %v3897, 16
    %v4592 = vor.u32 %v4590, %v4564
    %v4594 = vshll.u32 %v3899, 16
    %v4596 = vrot.slane %v4594, 1
    %v4597 = vsel %vm3358, %v4592, %v4596
    %v4598 = vshrl.u32 %v3903, 16
    %v4600 = vor.u32 %v4598, %v4572
    %v4602 = vshll.u32 %v3907, 16
    %v4604 = vrot.slane %v4602, 1
    %v4605 = vsel %vm3358, %v4600, %v4604
    %v4606 = vshrl.u32 %v3961, 16
    %v4608 = vor.u32 %v4606, %v4580
    %v4610 = vshll.u32 %v3964, 16
    %v4612 = vrot.slane %v4610, 1
    %v4613 = vsel %vm3358, %v4608, %v4612
    %v4614 = vshrl.u32 %v3891, 16
    %v4616 = vor.u32 %v4614, %v4588
    %v4618 = vshll.u32 %v3975, 16
    %v4620 = vrot.slane %v4618, 1
    %v4621 = vsel %vm3358, %v4616, %v4620
    %v4622 = vshrl.u32 %v3899, 16
    %v4624 = vor.u32 %v4622, %v4596
    %v4626 = vshll.u32 %v3987, 16
    %v4628 = vrot.slane %v4626, 1
    %v4629 = vsel %vm3358, %v4624, %v4628
    %v4630 = vshrl.u32 %v3907, 16
    %v4632 = vor.u32 %v4630, %v4604
    %v4634 = vshll.u32 %v3993, 16
    %v4636 = vrot.slane %v4634, 1
    %v4637 = vsel %vm3358, %v4632, %v4636
    %v4638 = vshrl.u32 %v3964, 16
    %v4640 = vor.u32 %v4638, %v4612
    %v4642 = vshll.u32 %v3972, 16
    %v4644 = vrot.slane %v4642, 1
    %v4645 = vsel %vm3358, %v4640, %v4644
    %v4646 = vshrl.u32 %v3975, 16
    %v4648 = vor.u32 %v4646, %v4620
    %v4650 = vshll.u32 %v3981, 16
    %v4652 = vrot.slane %v4650, 1
    %v4653 = vsel %vm3358, %v4648, %v4652
    %v4654 = vshrl.u32 %v3987, 16
    %v4656 = vor.u32 %v4654, %v4628
    %v4658 = vshll.u32 %v3989, 16
    %v4660 = vrot.slane %v4658, 1
    %v4661 = vsel %vm3358, %v4656, %v4660
    %v4662 = vshrl.u32 %v3993, 16
    %v4664 = vor.u32 %v4662, %v4636
    %v4666 = vshll.u32 %v3997, 16
    %v4668 = vrot.slane %v4666, 1
    %v4669 = vsel %vm3358, %v4664, %v4668
    %v4671 = vshll.u32 %v3892, 16
    %v4673 = vrot.slane %v4671, 1
    %v4674 = vsel %vm3358, %v4616, %v4673
    %v4676 = vshll.u32 %v3898, 16
    %v4678 = vrot.slane %v4676, 1
    %v4679 = vsel %vm3358, %v4624, %v4678
    %v4681 = vshll.u32 %v3904, 16
    %v4683 = vrot.slane %v4681, 1
    %v4684 = vsel %vm3358, %v4632, %v4683
    %v4685 = vshrl.u32 %v3972, 16
    %v4687 = vor.u32 %v4685, %v4644
    %v4689 = vshll.u32 %v3968, 16
    %v4691 = vrot.slane %v4689, 1
    %v4692 = vsel %vm3358, %v4687, %v4691
    %v4693 = vshrl.u32 %v3981, 16
    %v4695 = vor.u32 %v4693, %v4652
    %v4697 = vshll.u32 %v3982, 16
    %v4699 = vrot.slane %v4697, 1
    %v4700 = vsel %vm3358, %v4695, %v4699
    %v4701 = vshrl.u32 %v3989, 16
    %v4703 = vor.u32 %v4701, %v4660
    %v4705 = vshll.u32 %v3988, 16
    %v4707 = vrot.slane %v4705, 1
    %v4708 = vsel %vm3358, %v4703, %v4707
    %v4709 = vshrl.u32 %v3997, 16
    %v4711 = vor.u32 %v4709, %v4668
    %v4713 = vshll.u32 %v3994, 16
    %v4715 = vrot.slane %v4713, 1
    %v4716 = vsel %vm3358, %v4711, %v4715
    %s4810 = smul.u32 4, 400
    %s4811 = smul.u32 %s4810, 1
    %s4812 = sshll.u32 %s4811, 4
    %4813 = dma.done [#allocation4], %s4812
    %v4814 = vld [vmem:[#allocation2] sm:$0xff]
    %v4815 = vld [vmem:[#allocation2 + $0x8] sm:$0xff]
    %v4816 = vld [vmem:[#allocation2 + $0x10] sm:$0xff]
    %v4817 = vld [vmem:[#allocation2 + $0x18] sm:$0xff]
    %v4818 = vld [vmem:[#allocation2 + $0x20] sm:$0xff]
    %v4819 = vld [vmem:[#allocation2 + $0x28] sm:$0xff]
    %v4820 = vld [vmem:[#allocation2 + $0x30] sm:$0xff]
    %v4821 = vld [vmem:[#allocation2 + $0x38] sm:$0xff]
    %v4822 = vld [vmem:[#allocation2 + $0x40] sm:$0xff]
    %v4823 = vld [vmem:[#allocation2 + $0x48] sm:$0xff]
    %v4824 = vld [vmem:[#allocation2 + $0x50] sm:$0xff]
    %v4825 = vld [vmem:[#allocation2 + $0x58] sm:$0xff]
    %v4826 = vld [vmem:[#allocation2 + $0x60] sm:$0xff]
    %v4827 = vld [vmem:[#allocation2 + $0x68] sm:$0xff]
    %v4828 = vld [vmem:[#allocation2 + $0x70] sm:$0xff]
    %v4829 = vld [vmem:[#allocation2 + $0x78] sm:$0xff]
    %v4830 = vld [vmem:[#allocation2 + $0x80] sm:$0xff]
    %v4831 = vld [vmem:[#allocation2 + $0x88] sm:$0xff]
    %v4832 = vld [vmem:[#allocation2 + $0x90] sm:$0xff]
    %v4833 = vld [vmem:[#allocation2 + $0x98] sm:$0xff]
    %v4834 = vld [vmem:[#allocation2 + $0xa0] sm:$0xff]
    %v4835 = vld [vmem:[#allocation2 + $0xa8] sm:$0xff]
    %v4836 = vld [vmem:[#allocation2 + $0xb0] sm:$0xff]
    %v4837 = vld [vmem:[#allocation2 + $0xb8] sm:$0xff]
    %v4838 = vld [vmem:[#allocation2 + $0xc0] sm:$0xff]
    %v4839 = vld [vmem:[#allocation2 + $0xc8] sm:$0xff]
    %v4840 = vld [vmem:[#allocation2 + $0xd0] sm:$0xff]
    %v4841 = vld [vmem:[#allocation2 + $0xd8] sm:$0xff]
    %v4842 = vld [vmem:[#allocation2 + $0xe0] sm:$0xff]
    %v4843 = vld [vmem:[#allocation2 + $0xe8] sm:$0xff]
    %v4844 = vld [vmem:[#allocation2 + $0xf0] sm:$0xff]
    %v4845 = vld [vmem:[#allocation2 + $0xf8] sm:$0xff]
    %v4846 = vld [vmem:[#allocation2 + $0x100] sm:$0xff]
    %v4847 = vld [vmem:[#allocation2 + $0x108] sm:$0xff]
    %v4848 = vld [vmem:[#allocation2 + $0x110] sm:$0xff]
    %v4849 = vld [vmem:[#allocation2 + $0x118] sm:$0xff]
    %v4850 = vld [vmem:[#allocation2 + $0x120] sm:$0xff]
    %v4851 = vld [vmem:[#allocation2 + $0x128] sm:$0xff]
    %v4852 = vld [vmem:[#allocation2 + $0x130] sm:$0xff]
    %v4853 = vld [vmem:[#allocation2 + $0x138] sm:$0xff]
    %v4854 = vld [vmem:[#allocation2 + $0x140] sm:$0xff]
    %v4855 = vld [vmem:[#allocation2 + $0x148] sm:$0xff]
    %v4856 = vld [vmem:[#allocation2 + $0x150] sm:$0xff]
    %v4857 = vld [vmem:[#allocation2 + $0x158] sm:$0xff]
    %v4858 = vld [vmem:[#allocation2 + $0x160] sm:$0xff]
    %v4859 = vld [vmem:[#allocation2 + $0x168] sm:$0xff]
    %v4860 = vld [vmem:[#allocation2 + $0x170] sm:$0xff]
    %v4861 = vld [vmem:[#allocation2 + $0x178] sm:$0xff]
    %v4862 = vld [vmem:[#allocation2 + $0x180] sm:$0xff]
    %v4863 = vld [vmem:[#allocation2 + $0x188] sm:$0xff]
    %v4864 = vld [vmem:[#allocation2 + $0x190] sm:$0xff]
    %v4865 = vld [vmem:[#allocation2 + $0x198] sm:$0xff]
    %v4866 = vld [vmem:[#allocation2 + $0x1a0] sm:$0xff]
    %v4867 = vld [vmem:[#allocation2 + $0x1a8] sm:$0xff]
    %v4868 = vld [vmem:[#allocation2 + $0x1b0] sm:$0xff]
    %v4869 = vld [vmem:[#allocation2 + $0x1b8] sm:$0xff]
    %v4870 = vld [vmem:[#allocation2 + $0x1c0] sm:$0xff]
    %v4871 = vld [vmem:[#allocation2 + $0x1c8] sm:$0xff]
    %v4872 = vld [vmem:[#allocation2 + $0x1d0] sm:$0xff]
    %v4873 = vld [vmem:[#allocation2 + $0x1d8] sm:$0xff]
    %v4874 = vld [vmem:[#allocation2 + $0x1e0] sm:$0xff]
    %v4875 = vld [vmem:[#allocation2 + $0x1e8] sm:$0xff]
    %v4876 = vld [vmem:[#allocation2 + $0x1f0] sm:$0xff]
    %v4877 = vld [vmem:[#allocation2 + $0x1f8] sm:$0xff]
    %v4878 = vld [vmem:[#allocation2 + $0x200] sm:$0xff]
    %v4879 = vld [vmem:[#allocation2 + $0x208] sm:$0xff]
    %v4880 = vld [vmem:[#allocation2 + $0x210] sm:$0xff]
    %v4881 = vld [vmem:[#allocation2 + $0x218] sm:$0xff]
    %v4882 = vld [vmem:[#allocation2 + $0x220] sm:$0xff]
    %v4883 = vld [vmem:[#allocation2 + $0x228] sm:$0xff]
    %v4884 = vld [vmem:[#allocation2 + $0x230] sm:$0xff]
    %v4885 = vld [vmem:[#allocation2 + $0x238] sm:$0xff]
    %v4886 = vld [vmem:[#allocation2 + $0x240] sm:$0xff]
    %v4887 = vld [vmem:[#allocation2 + $0x248] sm:$0xff]
    %v4888 = vld [vmem:[#allocation2 + $0x250] sm:$0xff]
    %v4889 = vld [vmem:[#allocation2 + $0x258] sm:$0xff]
    %v4890 = vld [vmem:[#allocation2 + $0x260] sm:$0xff]
    %v4891 = vld [vmem:[#allocation2 + $0x268] sm:$0xff]
    %v4892 = vld [vmem:[#allocation2 + $0x270] sm:$0xff]
    %v4893 = vld [vmem:[#allocation2 + $0x278] sm:$0xff]
    %v4894 = vld [vmem:[#allocation2 + $0x280] sm:$0xff]
    %v4895 = vld [vmem:[#allocation2 + $0x288] sm:$0xff]
    %v4896 = vld [vmem:[#allocation2 + $0x290] sm:$0xff]
    %v4897 = vld [vmem:[#allocation2 + $0x298] sm:$0xff]
    %v4898 = vld [vmem:[#allocation2 + $0x2a0] sm:$0xff]
    %v4899 = vld [vmem:[#allocation2 + $0x2a8] sm:$0xff]
    %v4900 = vld [vmem:[#allocation2 + $0x2b0] sm:$0xff]
    %v4901 = vld [vmem:[#allocation2 + $0x2b8] sm:$0xff]
    %v4902 = vld [vmem:[#allocation2 + $0x2c0] sm:$0xff]
    %v4903 = vld [vmem:[#allocation2 + $0x2c8] sm:$0xff]
    %v4904 = vld [vmem:[#allocation2 + $0x2d0] sm:$0xff]
    %v4905 = vld [vmem:[#allocation2 + $0x2d8] sm:$0xff]
    %v4906 = vld [vmem:[#allocation2 + $0x2e0] sm:$0xff]
    %v4907 = vld [vmem:[#allocation2 + $0x2e8] sm:$0xff]
    %v4908 = vld [vmem:[#allocation2 + $0x2f0] sm:$0xff]
    %v4909 = vld [vmem:[#allocation2 + $0x2f8] sm:$0xff]
    %v4910 = vld [vmem:[#allocation2 + $0x300] sm:$0xff]
    %v4911 = vld [vmem:[#allocation2 + $0x308] sm:$0xff]
    %v4912 = vld [vmem:[#allocation2 + $0x310] sm:$0xff]
    %v4913 = vld [vmem:[#allocation2 + $0x318] sm:$0xff]
    %v4914 = vld [vmem:[#allocation2 + $0x320] sm:$0xff]
    %v4915 = vld [vmem:[#allocation2 + $0x328] sm:$0xff]
    %v4916 = vld [vmem:[#allocation2 + $0x330] sm:$0xff]
    %v4917 = vld [vmem:[#allocation2 + $0x338] sm:$0xff]
    %v4918 = vld [vmem:[#allocation2 + $0x340] sm:$0xff]
    %v4919 = vld [vmem:[#allocation2 + $0x348] sm:$0xff]
    %v4920 = vld [vmem:[#allocation2 + $0x350] sm:$0xff]
    %v4921 = vld [vmem:[#allocation2 + $0x358] sm:$0xff]
    %v4922 = vld [vmem:[#allocation2 + $0x360] sm:$0xff]
    %v4923 = vld [vmem:[#allocation2 + $0x368] sm:$0xff]
    %v4924 = vld [vmem:[#allocation2 + $0x370] sm:$0xff]
    %v4925 = vld [vmem:[#allocation2 + $0x378] sm:$0xff]
    %v4926 = vld [vmem:[#allocation2 + $0x380] sm:$0xff]
    %v4927 = vld [vmem:[#allocation2 + $0x388] sm:$0xff]
    %v4928 = vld [vmem:[#allocation2 + $0x390] sm:$0xff]
    %v4929 = vld [vmem:[#allocation2 + $0x398] sm:$0xff]
    %v4930 = vld [vmem:[#allocation2 + $0x3a0] sm:$0xff]
    %v4931 = vld [vmem:[#allocation2 + $0x3a8] sm:$0xff]
    %v4932 = vld [vmem:[#allocation2 + $0x3b0] sm:$0xff]
    %v4933 = vld [vmem:[#allocation2 + $0x3b8] sm:$0xff]
    %v4934 = vld [vmem:[#allocation2 + $0x3c0] sm:$0xff]
    %v4935 = vld [vmem:[#allocation2 + $0x3c8] sm:$0xff]
    %v4936 = vld [vmem:[#allocation2 + $0x3d0] sm:$0xff]
    %v4937 = vld [vmem:[#allocation2 + $0x3d8] sm:$0xff]
    %v4938 = vld [vmem:[#allocation2 + $0x3e0] sm:$0xff]
    %v4939 = vld [vmem:[#allocation2 + $0x3e8] sm:$0xff]
    %v4940 = vld [vmem:[#allocation2 + $0x3f0] sm:$0xff]
    %v4941 = vld [vmem:[#allocation2 + $0x3f8] sm:$0xff]
    %v4942 = vld [vmem:[#allocation2 + $0x400] sm:$0xff]
    %v4943 = vld [vmem:[#allocation2 + $0x408] sm:$0xff]
    %v4944 = vld [vmem:[#allocation2 + $0x410] sm:$0xff]
    %v4945 = vld [vmem:[#allocation2 + $0x418] sm:$0xff]
    %v4946 = vld [vmem:[#allocation2 + $0x420] sm:$0xff]
    %v4947 = vld [vmem:[#allocation2 + $0x428] sm:$0xff]
    %v4948 = vld [vmem:[#allocation2 + $0x430] sm:$0xff]
    %v4949 = vld [vmem:[#allocation2 + $0x438] sm:$0xff]
    %v4950 = vld [vmem:[#allocation2 + $0x440] sm:$0xff]
    %v4951 = vld [vmem:[#allocation2 + $0x448] sm:$0xff]
    %v4952 = vld [vmem:[#allocation2 + $0x450] sm:$0xff]
    %v4953 = vld [vmem:[#allocation2 + $0x458] sm:$0xff]
    %v4954 = vld [vmem:[#allocation2 + $0x460] sm:$0xff]
    %v4955 = vld [vmem:[#allocation2 + $0x468] sm:$0xff]
    %v4956 = vld [vmem:[#allocation2 + $0x470] sm:$0xff]
    %v4957 = vld [vmem:[#allocation2 + $0x478] sm:$0xff]
    %v4958 = vld [vmem:[#allocation2 + $0x480] sm:$0xff]
    %v4959 = vld [vmem:[#allocation2 + $0x488] sm:$0xff]
    %v4960 = vld [vmem:[#allocation2 + $0x490] sm:$0xff]
    %v4961 = vld [vmem:[#allocation2 + $0x498] sm:$0xff]
    %v4962 = vld [vmem:[#allocation2 + $0x4a0] sm:$0xff]
    %v4963 = vld [vmem:[#allocation2 + $0x4a8] sm:$0xff]
    %v4964 = vld [vmem:[#allocation2 + $0x4b0] sm:$0xff]
    %v4965 = vld [vmem:[#allocation2 + $0x4b8] sm:$0xff]
    %v4966 = vld [vmem:[#allocation2 + $0x4c0] sm:$0xff]
    %v4967 = vld [vmem:[#allocation2 + $0x4c8] sm:$0xff]
    %v4968 = vld [vmem:[#allocation2 + $0x4d0] sm:$0xff]
    %v4969 = vld [vmem:[#allocation2 + $0x4d8] sm:$0xff]
    %v4970 = vld [vmem:[#allocation2 + $0x4e0] sm:$0xff]
    %v4971 = vld [vmem:[#allocation2 + $0x4e8] sm:$0xff]
    %v4972 = vld [vmem:[#allocation2 + $0x4f0] sm:$0xff]
    %v4973 = vld [vmem:[#allocation2 + $0x4f8] sm:$0xff]
    %v4974 = vld [vmem:[#allocation2 + $0x500] sm:$0xff]
    %v4975 = vld [vmem:[#allocation2 + $0x508] sm:$0xff]
    %v4976 = vld [vmem:[#allocation2 + $0x510] sm:$0xff]
    %v4977 = vld [vmem:[#allocation2 + $0x518] sm:$0xff]
    %v4978 = vld [vmem:[#allocation2 + $0x520] sm:$0xff]
    %v4979 = vld [vmem:[#allocation2 + $0x528] sm:$0xff]
    %v4980 = vld [vmem:[#allocation2 + $0x530] sm:$0xff]
    %v4981 = vld [vmem:[#allocation2 + $0x538] sm:$0xff]
    %v4982 = vld [vmem:[#allocation2 + $0x540] sm:$0xff]
    %v4983 = vld [vmem:[#allocation2 + $0x548] sm:$0xff]
    %v4984 = vld [vmem:[#allocation2 + $0x550] sm:$0xff]
    %v4985 = vld [vmem:[#allocation2 + $0x558] sm:$0xff]
    %v4986 = vld [vmem:[#allocation2 + $0x560] sm:$0xff]
    %v4987 = vld [vmem:[#allocation2 + $0x568] sm:$0xff]
    %v4988 = vld [vmem:[#allocation2 + $0x570] sm:$0xff]
    %v4989 = vld [vmem:[#allocation2 + $0x578] sm:$0xff]
    %v4990 = vld [vmem:[#allocation2 + $0x580] sm:$0xff]
    %v4991 = vld [vmem:[#allocation2 + $0x588] sm:$0xff]
    %v4992 = vld [vmem:[#allocation2 + $0x590] sm:$0xff]
    %v4993 = vld [vmem:[#allocation2 + $0x598] sm:$0xff]
    %v4994 = vld [vmem:[#allocation2 + $0x5a0] sm:$0xff]
    %v4995 = vld [vmem:[#allocation2 + $0x5a8] sm:$0xff]
    %v4996 = vld [vmem:[#allocation2 + $0x5b0] sm:$0xff]
    %v4997 = vld [vmem:[#allocation2 + $0x5b8] sm:$0xff]
    %v4998 = vld [vmem:[#allocation2 + $0x5c0] sm:$0xff]
    %v4999 = vld [vmem:[#allocation2 + $0x5c8] sm:$0xff]
    %v5000 = vld [vmem:[#allocation2 + $0x5d0] sm:$0xff]
    %v5001 = vld [vmem:[#allocation2 + $0x5d8] sm:$0xff]
    %v5002 = vld [vmem:[#allocation2 + $0x5e0] sm:$0xff]
    %v5003 = vld [vmem:[#allocation2 + $0x5e8] sm:$0xff]
    %v5004 = vld [vmem:[#allocation2 + $0x5f0] sm:$0xff]
    %v5005 = vld [vmem:[#allocation2 + $0x5f8] sm:$0xff]
    %v5006 = vld [vmem:[#allocation2 + $0x600] sm:$0xff]
    %v5007 = vld [vmem:[#allocation2 + $0x608] sm:$0xff]
    %v5008 = vld [vmem:[#allocation2 + $0x610] sm:$0xff]
    %v5009 = vld [vmem:[#allocation2 + $0x618] sm:$0xff]
    %v5010 = vld [vmem:[#allocation2 + $0x620] sm:$0xff]
    %v5011 = vld [vmem:[#allocation2 + $0x628] sm:$0xff]
    %v5012 = vld [vmem:[#allocation2 + $0x630] sm:$0xff]
    %v5013 = vld [vmem:[#allocation2 + $0x638] sm:$0xff]
    %v5014 = vlaneseq
    %v5015 = vshrl.u32 %v5014, 7
    %v5016 = vsub.s32 1, %v5015
    %v5017 = vrot.slane %v905, %v5016
    %5018 = vmatprep.subr.bf16.mxu0 0
    %5019 = vmatpush1.bf16.msra.mxu0 %v4814
    %5020 = vmatprep.subr.bf16.mxu0 0
    %5021 = vmatpush1.bf16.msra.mxu0 %v4815
    %5022 = vmatprep.subr.bf16.mxu0 0
    %5023 = vmatpush1.bf16.msra.mxu0 %v4816
    %5024 = vmatprep.subr.bf16.mxu0 0
    %5025 = vmatpush1.bf16.msra.mxu0 %v4817
    %5026 = vmatprep.subr.bf16.mxu0 0
    %5027 = vmatpush1.bf16.msra.mxu0 %v4818
    %5028 = vmatprep.subr.bf16.mxu0 0
    %5029 = vmatpush1.bf16.msra.mxu0 %v4819
    %5030 = vmatprep.subr.bf16.mxu0 0
    %5031 = vmatpush1.bf16.msra.mxu0 %v4820
    %5032 = vmatprep.subr.bf16.mxu0 0
    %5033 = vmatpush1.bf16.msra.mxu0 %v4821
    %5034 = vmatprep.subr.bf16.mxu0 0
    %5035 = vmatpush1.bf16.msra.mxu0 %v4822
    %5036 = vmatprep.subr.bf16.mxu0 0
    %5037 = vmatpush1.bf16.msra.mxu0 %v4823
    %5038 = vmatprep.subr.bf16.mxu0 0
    %5039 = vmatpush1.bf16.msra.mxu0 %v4824
    %5040 = vmatprep.subr.bf16.mxu0 0
    %5041 = vmatpush1.bf16.msra.mxu0 %v4825
    %5042 = vmatprep.subr.bf16.mxu0 0
    %5043 = vmatpush1.bf16.msra.mxu0 %v4826
    %5044 = vmatprep.subr.bf16.mxu0 0
    %5045 = vmatpush1.bf16.msra.mxu0 %v4827
    %5046 = vmatprep.subr.bf16.mxu0 0
    %5047 = vmatpush1.bf16.msra.mxu0 %v4828
    %5048 = vmatprep.subr.bf16.mxu0 0
    %5049 = vmatpush1.bf16.msra.mxu0 %v4829
    %5050 = vmatprep.mubr.bf16.mxu0 %v3370
    %5051 = vmatmul.mubr.bf16.gmra.mrb[0].mxu0 %v3329
    %v5052 = vpop.f32.mrb[0].mxu0
    %v5053 = vadd.f32 %v5017, %v5052
    %v5054 = vpop.f32.mrb[0].mxu0
    %v5055 = vpop.f32.mrb[0].mxu0
    %v5056 = vadd.f32 %v5017, %v5055
    %v5057 = vpop.f32.mrb[0].mxu0
    %5058 = vmatprep.mubr.bf16.mxu0 %v3378
    %5059 = vmatmul.mubr.bf16.gmra.mrb[0].mxu0 %v3330
    %v5060 = vpop.f32.mrb[0].mxu0
    %v5061 = vadd.f32 %v5017, %v5060
    %v5062 = vpop.f32.mrb[0].mxu0
    %v5063 = vpop.f32.mrb[0].mxu0
    %v5064 = vadd.f32 %v5017, %v5063
    %v5065 = vpop.f32.mrb[0].mxu0
    %5066 = vmatprep.mubr.bf16.mxu0 %v3386
    %5067 = vmatmul.mubr.bf16.gmra.mrb[0].mxu0 %v3331
    %v5068 = vpop.f32.mrb[0].mxu0
    %v5069 = vadd.f32 %v5017, %v5068
    %v5070 = vpop.f32.mrb[0].mxu0
    %v5071 = vpop.f32.mrb[0].mxu0
    %v5072 = vadd.f32 %v5017, %v5071
    %v5073 = vpop.f32.mrb[0].mxu0
    %5074 = vmatprep.mubr.bf16.mxu0 %v3394
    %5075 = vmatmul.mubr.bf16.gmra.mrb[0].mxu0 %v3332
    %v5076 = vpop.f32.mrb[0].mxu0
    %v5077 = vadd.f32 %v5017, %v5076
    %v5078 = vpop.f32.mrb[0].mxu0
    %v5079 = vpop.f32.mrb[0].mxu0
    %v5080 = vadd.f32 %v5017, %v5079
    %v5081 = vpop.f32.mrb[0].mxu0
    %5082 = vmatprep.mubr.bf16.mxu0 %v3402
    %5083 = vmatmul.mubr.bf16.gmra.mrb[0].mxu0 %v3333
    %v5084 = vpop.f32.mrb[0].mxu0
    %v5085 = vadd.f32 %v5017, %v5084
    %v5086 = vpop.f32.mrb[0].mxu0
    %v5087 = vpop.f32.mrb[0].mxu0
    %v5088 = vadd.f32 %v5017, %v5087
    %v5089 = vpop.f32.mrb[0].mxu0
    %5090 = vmatprep.mubr.bf16.mxu0 %v3410
    %5091 = vmatmul.mubr.bf16.gmra.mrb[0].mxu0 %v3334
    %v5092 = vpop.f32.mrb[0].mxu0
    %v5093 = vadd.f32 %v5017, %v5092
    %v5094 = vpop.f32.mrb[0].mxu0
    %v5095 = vpop.f32.mrb[0].mxu0
    %v5096 = vadd.f32 %v5017, %v5095
    %v5097 = vpop.f32.mrb[0].mxu0
    %5098 = vmatprep.mubr.bf16.mxu0 %v3418
    %5099 = vmatmul.mubr.bf16.gmra.mrb[0].mxu0 %v3335
    %v5100 = vpop.f32.mrb[0].mxu0
    %v5101 = vadd.f32 %v5017, %v5100
    %v5102 = vpop.f32.mrb[0].mxu0
    %v5103 = vpop.f32.mrb[0].mxu0
    %v5104 = vadd.f32 %v5017, %v5103
    %v5105 = vpop.f32.mrb[0].mxu0
    %5106 = vmatprep.mubr.bf16.mxu0 %v3426
    %5107 = vmatmul.mubr.bf16.gmra.mrb[0].mxu0 %v3336
    %v5108 = vpop.f32.mrb[0].mxu0
    %v5109 = vadd.f32 %v5017, %v5108
    %v5110 = vpop.f32.mrb[0].mxu0
    %v5111 = vpop.f32.mrb[0].mxu0
    %v5112 = vadd.f32 %v5017, %v5111
    %v5113 = vpop.f32.mrb[0].mxu0
    %5114 = vmatprep.mubr.bf16.mxu0 %v3434
    %5115 = vmatmul.mubr.bf16.gmra.mrb[0].mxu0 %v3337
    %v5116 = vpop.f32.mrb[0].mxu0
    %v5117 = vadd.f32 %v5017, %v5116
    %v5118 = vpop.f32.mrb[0].mxu0
    %v5119 = vpop.f32.mrb[0].mxu0
    %v5120 = vadd.f32 %v5017, %v5119
    %v5121 = vpop.f32.mrb[0].mxu0
    %5122 = vmatprep.mubr.bf16.mxu0 %v3442
    %5123 = vmatmul.mubr.bf16.gmra.mrb[0].mxu0 %v3338
    %v5124 = vpop.f32.mrb[0].mxu0
    %v5125 = vadd.f32 %v5017, %v5124
    %v5126 = vpop.f32.mrb[0].mxu0
    %v5127 = vpop.f32.mrb[0].mxu0
    %v5128 = vadd.f32 %v5017, %v5127
    %v5129 = vpop.f32.mrb[0].mxu0
    %5130 = vmatprep.mubr.bf16.mxu0 %v3450
    %5131 = vmatmul.mubr.bf16.gmra.mrb[0].mxu0 %v3339
    %v5132 = vpop.f32.mrb[0].mxu0
    %v5133 = vadd.f32 %v5017, %v5132
    %v5134 = vpop.f32.mrb[0].mxu0
    %v5135 = vpop.f32.mrb[0].mxu0
    %v5136 = vadd.f32 %v5017, %v5135
    %v5137 = vpop.f32.mrb[0].mxu0
    %5138 = vmatprep.mubr.bf16.mxu0 %v3458
    %5139 = vmatmul.mubr.bf16.gmra.mrb[0].mxu0 %v3340
    %v5140 = vpop.f32.mrb[0].mxu0
    %v5141 = vadd.f32 %v5017, %v5140
    %v5142 = vpop.f32.mrb[0].mxu0
    %v5143 = vpop.f32.mrb[0].mxu0
    %v5144 = vadd.f32 %v5017, %v5143
    %v5145 = vpop.f32.mrb[0].mxu0
    %5146 = vmatprep.mubr.bf16.mxu0 %v3466
    %5147 = vmatmul.mubr.bf16.gmra.mrb[0].mxu0 %v3341
    %v5148 = vpop.f32.mrb[0].mxu0
    %v5149 = vadd.f32 %v5017, %v5148
    %v5150 = vpop.f32.mrb[0].mxu0
    %v5151 = vpop.f32.mrb[0].mxu0
    %v5152 = vadd.f32 %v5017, %v5151
    %v5153 = vpop.f32.mrb[0].mxu0
    %5154 = vmatprep.mubr.bf16.mxu0 %v3474
    %5155 = vmatmul.mubr.bf16.gmra.mrb[0].mxu0 %v3342
    %v5156 = vpop.f32.mrb[0].mxu0
    %v5157 = vadd.f32 %v5017, %v5156
    %v5158 = vpop.f32.mrb[0].mxu0
    %v5159 = vpop.f32.mrb[0].mxu0
    %v5160 = vadd.f32 %v5017, %v5159
    %v5161 = vpop.f32.mrb[0].mxu0
    %5162 = vmatprep.mubr.bf16.mxu0 %v3482
    %5163 = vmatmul.mubr.bf16.gmra.mrb[0].mxu0 %v3343
    %v5164 = vpop.f32.mrb[0].mxu0
    %v5165 = vadd.f32 %v5017, %v5164
    %v5166 = vpop.f32.mrb[0].mxu0
    %v5167 = vpop.f32.mrb[0].mxu0
    %v5168 = vadd.f32 %v5017, %v5167
    %v5169 = vpop.f32.mrb[0].mxu0
    %5170 = vmatprep.mubr.bf16.mxu0 %v3490
    %5171 = vmatmul.mubr.bf16.gmra.mrb[0].mxu0 %v3344
    %v5172 = vpop.f32.mrb[0].mxu0
    %v5173 = vadd.f32 %v5017, %v5172
    %v5174 = vpop.f32.mrb[0].mxu0
    %v5175 = vpop.f32.mrb[0].mxu0
    %v5176 = vadd.f32 %v5017, %v5175
    %v5177 = vpop.f32.mrb[0].mxu0
    %5178 = vmatprep.mubr.bf16.mxu0 %v3498
    %5179 = vmatmul.mubr.bf16.gmra.mrb[0].mxu0 %v3345
    %v5180 = vpop.f32.mrb[0].mxu0
    %v5181 = vadd.f32 %v5017, %v5180
    %v5182 = vpop.f32.mrb[0].mxu0
    %v5183 = vpop.f32.mrb[0].mxu0
    %v5184 = vadd.f32 %v5017, %v5183
    %v5185 = vpop.f32.mrb[0].mxu0
    %5186 = vmatprep.mubr.bf16.mxu0 %v3506
    %5187 = vmatmul.mubr.bf16.gmra.mrb[0].mxu0 %v3346
    %v5188 = vpop.f32.mrb[0].mxu0
    %v5189 = vadd.f32 %v5017, %v5188
    %v5190 = vpop.f32.mrb[0].mxu0
    %v5191 = vpop.f32.mrb[0].mxu0
    %v5192 = vadd.f32 %v5017, %v5191
    %v5193 = vpop.f32.mrb[0].mxu0
    %5194 = vmatprep.mubr.bf16.mxu0 %v3514
    %5195 = vmatmul.mubr.bf16.gmra.mrb[0].mxu0 %v3347
    %v5196 = vpop.f32.mrb[0].mxu0
    %v5197 = vadd.f32 %v5017, %v5196
    %v5198 = vpop.f32.mrb[0].mxu0
    %v5199 = vpop.f32.mrb[0].mxu0
    %v5200 = vadd.f32 %v5017, %v5199
    %v5201 = vpop.f32.mrb[0].mxu0
    %5202 = vmatprep.mubr.bf16.mxu0 %v3522
    %5203 = vmatmul.mubr.bf16.gmra.mrb[0].mxu0 %v3348
    %v5204 = vpop.f32.mrb[0].mxu0
    %v5205 = vadd.f32 %v5017, %v5204
    %v5206 = vpop.f32.mrb[0].mxu0
    %v5207 = vpop.f32.mrb[0].mxu0
    %v5208 = vadd.f32 %v5017, %v5207
    %v5209 = vpop.f32.mrb[0].mxu0
    %5210 = vdwg.mxu0
    %5211 = vmatprep.subr.bf16.mxu0 0
    %5212 = vmatpush1.bf16.msra.mxu0 %v4830
    %5213 = vmatprep.subr.bf16.mxu0 0
    %5214 = vmatpush1.bf16.msra.mxu0 %v4831
    %5215 = vmatprep.subr.bf16.mxu0 0
    %5216 = vmatpush1.bf16.msra.mxu0 %v4832
    %5217 = vmatprep.subr.bf16.mxu0 0
    %5218 = vmatpush1.bf16.msra.mxu0 %v4833
    %5219 = vmatprep.subr.bf16.mxu0 0
    %5220 = vmatpush1.bf16.msra.mxu0 %v4834
    %5221 = vmatprep.subr.bf16.mxu0 0
    %5222 = vmatpush1.bf16.msra.mxu0 %v4835
    %5223 = vmatprep.subr.bf16.mxu0 0
    %5224 = vmatpush1.bf16.msra.mxu0 %v4836
    %5225 = vmatprep.subr.bf16.mxu0 0
    %5226 = vmatpush1.bf16.msra.mxu0 %v4837
    %5227 = vmatprep.subr.bf16.mxu0 0
    %5228 = vmatpush1.bf16.msra.mxu0 %v4838
    %5229 = vmatprep.subr.bf16.mxu0 0
    %5230 = vmatpush1.bf16.msra.mxu0 %v4839
    %5231 = vmatprep.subr.bf16.mxu0 0
    %5232 = vmatpush1.bf16.msra.mxu0 %v4840
    %5233 = vmatprep.subr.bf16.mxu0 0
    %5234 = vmatpush1.bf16.msra.mxu0 %v4841
    %5235 = vmatprep.subr.bf16.mxu0 0
    %5236 = vmatpush1.bf16.msra.mxu0 %v4842
    %5237 = vmatprep.subr.bf16.mxu0 0
    %5238 = vmatpush1.bf16.msra.mxu0 %v4843
    %5239 = vmatprep.subr.bf16.mxu0 0
    %5240 = vmatpush1.bf16.msra.mxu0 %v4844
    %5241 = vmatprep.subr.bf16.mxu0 0
    %5242 = vmatpush1.bf16.msra.mxu0 %v4845
    %5243 = vmatprep.mubr.bf16.mxu0 %v3633
    %5244 = vmatmul.mubr.bf16.gmra.mrb[0].mxu0 %v3567
    %v5245 = vpop.f32.mrb[0].mxu0
    %v5246 = vadd.f32 %v5053, %v5245
    %v5247 = vpop.f32.mrb[0].mxu0
    %v5248 = vpop.f32.mrb[0].mxu0
    %v5249 = vadd.f32 %v5056, %v5248
    %v5250 = vpop.f32.mrb[0].mxu0
    %5251 = vmatprep.mubr.bf16.mxu0 %v3637
    %5252 = vmatmul.mubr.bf16.gmra.mrb[0].mxu0 %v3569
    %v5253 = vpop.f32.mrb[0].mxu0
    %v5254 = vadd.f32 %v5061, %v5253
    %v5255 = vpop.f32.mrb[0].mxu0
    %v5256 = vpop.f32.mrb[0].mxu0
    %v5257 = vadd.f32 %v5064, %v5256
    %v5258 = vpop.f32.mrb[0].mxu0
    %5259 = vmatprep.mubr.bf16.mxu0 %v3641
    %5260 = vmatmul.mubr.bf16.gmra.mrb[0].mxu0 %v3571
    %v5261 = vpop.f32.mrb[0].mxu0
    %v5262 = vadd.f32 %v5069, %v5261
    %v5263 = vpop.f32.mrb[0].mxu0
    %v5264 = vpop.f32.mrb[0].mxu0
    %v5265 = vadd.f32 %v5072, %v5264
    %v5266 = vpop.f32.mrb[0].mxu0
    %5267 = vmatprep.mubr.bf16.mxu0 %v3645
    %5268 = vmatmul.mubr.bf16.gmra.mrb[0].mxu0 %v3573
    %v5269 = vpop.f32.mrb[0].mxu0
    %v5270 = vadd.f32 %v5077, %v5269
    %v5271 = vpop.f32.mrb[0].mxu0
    %v5272 = vpop.f32.mrb[0].mxu0
    %v5273 = vadd.f32 %v5080, %v5272
    %v5274 = vpop.f32.mrb[0].mxu0
    %5275 = vmatprep.mubr.bf16.mxu0 %v3649
    %5276 = vmatmul.mubr.bf16.gmra.mrb[0].mxu0 %v3575
    %v5277 = vpop.f32.mrb[0].mxu0
    %v5278 = vadd.f32 %v5085, %v5277
    %v5279 = vpop.f32.mrb[0].mxu0
    %v5280 = vpop.f32.mrb[0].mxu0
    %v5281 = vadd.f32 %v5088, %v5280
    %v5282 = vpop.f32.mrb[0].mxu0
    %5283 = vmatprep.mubr.bf16.mxu0 %v3653
    %5284 = vmatmul.mubr.bf16.gmra.mrb[0].mxu0 %v3577
    %v5285 = vpop.f32.mrb[0].mxu0
    %v5286 = vadd.f32 %v5093, %v5285
    %v5287 = vpop.f32.mrb[0].mxu0
    %v5288 = vpop.f32.mrb[0].mxu0
    %v5289 = vadd.f32 %v5096, %v5288
    %v5290 = vpop.f32.mrb[0].mxu0
    %5291 = vmatprep.mubr.bf16.mxu0 %v3657
    %5292 = vmatmul.mubr.bf16.gmra.mrb[0].mxu0 %v3579
    %v5293 = vpop.f32.mrb[0].mxu0
    %v5294 = vadd.f32 %v5101, %v5293
    %v5295 = vpop.f32.mrb[0].mxu0
    %v5296 = vpop.f32.mrb[0].mxu0
    %v5297 = vadd.f32 %v5104, %v5296
    %v5298 = vpop.f32.mrb[0].mxu0
    %5299 = vmatprep.mubr.bf16.mxu0 %v3661
    %5300 = vmatmul.mubr.bf16.gmra.mrb[0].mxu0 %v3581
    %v5301 = vpop.f32.mrb[0].mxu0
    %v5302 = vadd.f32 %v5109, %v5301
    %v5303 = vpop.f32.mrb[0].mxu0
    %v5304 = vpop.f32.mrb[0].mxu0
    %v5305 = vadd.f32 %v5112, %v5304
    %v5306 = vpop.f32.mrb[0].mxu0
    %5307 = vmatprep.mubr.bf16.mxu0 %v3665
    %5308 = vmatmul.mubr.bf16.gmra.mrb[0].mxu0 %v3583
    %v5309 = vpop.f32.mrb[0].mxu0
    %v5310 = vadd.f32 %v5117, %v5309
    %v5311 = vpop.f32.mrb[0].mxu0
    %v5312 = vpop.f32.mrb[0].mxu0
    %v5313 = vadd.f32 %v5120, %v5312
    %v5314 = vpop.f32.mrb[0].mxu0
    %5315 = vmatprep.mubr.bf16.mxu0 %v3669
    %5316 = vmatmul.mubr.bf16.gmra.mrb[0].mxu0 %v3585
    %v5317 = vpop.f32.mrb[0].mxu0
    %v5318 = vadd.f32 %v5125, %v5317
    %v5319 = vpop.f32.mrb[0].mxu0
    %v5320 = vpop.f32.mrb[0].mxu0
    %v5321 = vadd.f32 %v5128, %v5320
    %v5322 = vpop.f32.mrb[0].mxu0
    %5323 = vmatprep.mubr.bf16.mxu0 %v3673
    %5324 = vmatmul.mubr.bf16.gmra.mrb[0].mxu0 %v3587
    %v5325 = vpop.f32.mrb[0].mxu0
    %v5326 = vadd.f32 %v5133, %v5325
    %v5327 = vpop.f32.mrb[0].mxu0
    %v5328 = vpop.f32.mrb[0].mxu0
    %v5329 = vadd.f32 %v5136, %v5328
    %v5330 = vpop.f32.mrb[0].mxu0
    %5331 = vmatprep.mubr.bf16.mxu0 %v3677
    %5332 = vmatmul.mubr.bf16.gmra.mrb[0].mxu0 %v3589
    %v5333 = vpop.f32.mrb[0].mxu0
    %v5334 = vadd.f32 %v5141, %v5333
    %v5335 = vpop.f32.mrb[0].mxu0
    %v5336 = vpop.f32.mrb[0].mxu0
    %v5337 = vadd.f32 %v5144, %v5336
    %v5338 = vpop.f32.mrb[0].mxu0
    %5339 = vmatprep.mubr.bf16.mxu0 %v3681
    %5340 = vmatmul.mubr.bf16.gmra.mrb[0].mxu0 %v3591
    %v5341 = vpop.f32.mrb[0].mxu0
    %v5342 = vadd.f32 %v5149, %v5341
    %v5343 = vpop.f32.mrb[0].mxu0
    %v5344 = vpop.f32.mrb[0].mxu0
    %v5345 = vadd.f32 %v5152, %v5344
    %v5346 = vpop.f32.mrb[0].mxu0
    %5347 = vmatprep.mubr.bf16.mxu0 %v3685
    %5348 = vmatmul.mubr.bf16.gmra.mrb[0].mxu0 %v3593
    %v5349 = vpop.f32.mrb[0].mxu0
    %v5350 = vadd.f32 %v5157, %v5349
    %v5351 = vpop.f32.mrb[0].mxu0
    %v5352 = vpop.f32.mrb[0].mxu0
    %v5353 = vadd.f32 %v5160, %v5352
    %v5354 = vpop.f32.mrb[0].mxu0
    %5355 = vmatprep.mubr.bf16.mxu0 %v3689
    %5356 = vmatmul.mubr.bf16.gmra.mrb[0].mxu0 %v3595
    %v5357 = vpop.f32.mrb[0].mxu0
    %v5358 = vadd.f32 %v5165, %v5357
    %v5359 = vpop.f32.mrb[0].mxu0
    %v5360 = vpop.f32.mrb[0].mxu0
    %v5361 = vadd.f32 %v5168, %v5360
    %v5362 = vpop.f32.mrb[0].mxu0
    %5363 = vmatprep.mubr.bf16.mxu0 %v3693
    %5364 = vmatmul.mubr.bf16.gmra.mrb[0].mxu0 %v3597
    %v5365 = vpop.f32.mrb[0].mxu0
    %v5366 = vadd.f32 %v5173, %v5365
    %v5367 = vpop.f32.mrb[0].mxu0
    %v5368 = vpop.f32.mrb[0].mxu0
    %v5369 = vadd.f32 %v5176, %v5368
    %v5370 = vpop.f32.mrb[0].mxu0
    %5371 = vmatprep.mubr.bf16.mxu0 %v3697
    %5372 = vmatmul.mubr.bf16.gmra.mrb[0].mxu0 %v3599
    %v5373 = vpop.f32.mrb[0].mxu0
    %v5374 = vadd.f32 %v5181, %v5373
    %v5375 = vpop.f32.mrb[0].mxu0
    %v5376 = vpop.f32.mrb[0].mxu0
    %v5377 = vadd.f32 %v5184, %v5376
    %v5378 = vpop.f32.mrb[0].mxu0
    %5379 = vmatprep.mubr.bf16.mxu0 %v3701
    %5380 = vmatmul.mubr.bf16.gmra.mrb[0].mxu0 %v3601
    %v5381 = vpop.f32.mrb[0].mxu0
    %v5382 = vadd.f32 %v5189, %v5381
    %v5383 = vpop.f32.mrb[0].mxu0
    %v5384 = vpop.f32.mrb[0].mxu0
    %v5385 = vadd.f32 %v5192, %v5384
    %v5386 = vpop.f32.mrb[0].mxu0
    %5387 = vmatprep.mubr.bf16.mxu0 %v3705
    %5388 = vmatmul.mubr.bf16.gmra.mrb[0].mxu0 %v3603
    %v5389 = vpop.f32.mrb[0].mxu0
    %v5390 = vadd.f32 %v5197, %v5389
    %v5391 = vpop.f32.mrb[0].mxu0
    %v5392 = vpop.f32.mrb[0].mxu0
    %v5393 = vadd.f32 %v5200, %v5392
    %v5394 = vpop.f32.mrb[0].mxu0
    %5395 = vmatprep.mubr.bf16.mxu0 %v3711
    %5396 = vmatmul.mubr.bf16.gmra.mrb[0].mxu0 %v3605
    %v5397 = vpop.f32.mrb[0].mxu0
    %v5398 = vadd.f32 %v5205, %v5397
    %v5399 = vpop.f32.mrb[0].mxu0
    %v5400 = vpop.f32.mrb[0].mxu0
    %v5401 = vadd.f32 %v5208, %v5400
    %v5402 = vpop.f32.mrb[0].mxu0
    %5403 = vdwg.mxu0
    %5404 = vmatprep.subr.bf16.mxu0 0
    %5405 = vmatpush1.bf16.msra.mxu0 %v4846
    %5406 = vmatprep.subr.bf16.mxu0 0
    %5407 = vmatpush1.bf16.msra.mxu0 %v4847
    %5408 = vmatprep.subr.bf16.mxu0 0
    %5409 = vmatpush1.bf16.msra.mxu0 %v4848
    %5410 = vmatprep.subr.bf16.mxu0 0
    %5411 = vmatpush1.bf16.msra.mxu0 %v4849
    %5412 = vmatprep.subr.bf16.mxu0 0
    %5413 = vmatpush1.bf16.msra.mxu0 %v4850
    %5414 = vmatprep.subr.bf16.mxu0 0
    %5415 = vmatpush1.bf16.msra.mxu0 %v4851
    %5416 = vmatprep.subr.bf16.mxu0 0
    %5417 = vmatpush1.bf16.msra.mxu0 %v4852
    %5418 = vmatprep.subr.bf16.mxu0 0
    %5419 = vmatpush1.bf16.msra.mxu0 %v4853
    %5420 = vmatprep.subr.bf16.mxu0 0
    %5421 = vmatpush1.bf16.msra.mxu0 %v4854
    %5422 = vmatprep.subr.bf16.mxu0 0
    %5423 = vmatpush1.bf16.msra.mxu0 %v4855
    %5424 = vmatprep.subr.bf16.mxu0 0
    %5425 = vmatpush1.bf16.msra.mxu0 %v4856
    %5426 = vmatprep.subr.bf16.mxu0 0
    %5427 = vmatpush1.bf16.msra.mxu0 %v4857
    %5428 = vmatprep.subr.bf16.mxu0 0
    %5429 = vmatpush1.bf16.msra.mxu0 %v4858
    %5430 = vmatprep.subr.bf16.mxu0 0
    %5431 = vmatpush1.bf16.msra.mxu0 %v4859
    %5432 = vmatprep.subr.bf16.mxu0 0
    %5433 = vmatpush1.bf16.msra.mxu0 %v4860
    %5434 = vmatprep.subr.bf16.mxu0 0
    %5435 = vmatpush1.bf16.msra.mxu0 %v4861
    %5436 = vmatprep.mubr.bf16.mxu0 %v3331
    %5437 = vmatmul.mubr.bf16.gmra.mrb[0].mxu0 %v3735
    %v5438 = vpop.f32.mrb[0].mxu0
    %v5439 = vadd.f32 %v5246, %v5438
    %v5440 = vpop.f32.mrb[0].mxu0
    %v5441 = vpop.f32.mrb[0].mxu0
    %v5442 = vadd.f32 %v5249, %v5441
    %v5443 = vpop.f32.mrb[0].mxu0
    %5444 = vmatprep.mubr.bf16.mxu0 %v3332
    %5445 = vmatmul.mubr.bf16.gmra.mrb[0].mxu0 %v3737
    %v5446 = vpop.f32.mrb[0].mxu0
    %v5447 = vadd.f32 %v5254, %v5446
    %v5448 = vpop.f32.mrb[0].mxu0
    %v5449 = vpop.f32.mrb[0].mxu0
    %v5450 = vadd.f32 %v5257, %v5449
    %v5451 = vpop.f32.mrb[0].mxu0
    %5452 = vmatprep.mubr.bf16.mxu0 %v3333
    %5453 = vmatmul.mubr.bf16.gmra.mrb[0].mxu0 %v3739
    %v5454 = vpop.f32.mrb[0].mxu0
    %v5455 = vadd.f32 %v5262, %v5454
    %v5456 = vpop.f32.mrb[0].mxu0
    %v5457 = vpop.f32.mrb[0].mxu0
    %v5458 = vadd.f32 %v5265, %v5457
    %v5459 = vpop.f32.mrb[0].mxu0
    %5460 = vmatprep.mubr.bf16.mxu0 %v3334
    %5461 = vmatmul.mubr.bf16.gmra.mrb[0].mxu0 %v3741
    %v5462 = vpop.f32.mrb[0].mxu0
    %v5463 = vadd.f32 %v5270, %v5462
    %v5464 = vpop.f32.mrb[0].mxu0
    %v5465 = vpop.f32.mrb[0].mxu0
    %v5466 = vadd.f32 %v5273, %v5465
    %v5467 = vpop.f32.mrb[0].mxu0
    %5468 = vmatprep.mubr.bf16.mxu0 %v3335
    %5469 = vmatmul.mubr.bf16.gmra.mrb[0].mxu0 %v3743
    %v5470 = vpop.f32.mrb[0].mxu0
    %v5471 = vadd.f32 %v5278, %v5470
    %v5472 = vpop.f32.mrb[0].mxu0
    %v5473 = vpop.f32.mrb[0].mxu0
    %v5474 = vadd.f32 %v5281, %v5473
    %v5475 = vpop.f32.mrb[0].mxu0
    %5476 = vmatprep.mubr.bf16.mxu0 %v3336
    %5477 = vmatmul.mubr.bf16.gmra.mrb[0].mxu0 %v3745
    %v5478 = vpop.f32.mrb[0].mxu0
    %v5479 = vadd.f32 %v5286, %v5478
    %v5480 = vpop.f32.mrb[0].mxu0
    %v5481 = vpop.f32.mrb[0].mxu0
    %v5482 = vadd.f32 %v5289, %v5481
    %v5483 = vpop.f32.mrb[0].mxu0
    %5484 = vmatprep.mubr.bf16.mxu0 %v3337
    %5485 = vmatmul.mubr.bf16.gmra.mrb[0].mxu0 %v3747
    %v5486 = vpop.f32.mrb[0].mxu0
    %v5487 = vadd.f32 %v5294, %v5486
    %v5488 = vpop.f32.mrb[0].mxu0
    %v5489 = vpop.f32.mrb[0].mxu0
    %v5490 = vadd.f32 %v5297, %v5489
    %v5491 = vpop.f32.mrb[0].mxu0
    %5492 = vmatprep.mubr.bf16.mxu0 %v3338
    %5493 = vmatmul.mubr.bf16.gmra.mrb[0].mxu0 %v3749
    %v5494 = vpop.f32.mrb[0].mxu0
    %v5495 = vadd.f32 %v5302, %v5494
    %v5496 = vpop.f32.mrb[0].mxu0
    %v5497 = vpop.f32.mrb[0].mxu0
    %v5498 = vadd.f32 %v5305, %v5497
    %v5499 = vpop.f32.mrb[0].mxu0
    %5500 = vmatprep.mubr.bf16.mxu0 %v3339
    %5501 = vmatmul.mubr.bf16.gmra.mrb[0].mxu0 %v3751
    %v5502 = vpop.f32.mrb[0].mxu0
    %v5503 = vadd.f32 %v5310, %v5502
    %v5504 = vpop.f32.mrb[0].mxu0
    %v5505 = vpop.f32.mrb[0].mxu0
    %v5506 = vadd.f32 %v5313, %v5505
    %v5507 = vpop.f32.mrb[0].mxu0
    %5508 = vmatprep.mubr.bf16.mxu0 %v3340
    %5509 = vmatmul.mubr.bf16.gmra.mrb[0].mxu0 %v3753
    %v5510 = vpop.f32.mrb[0].mxu0
    %v5511 = vadd.f32 %v5318, %v5510
    %v5512 = vpop.f32.mrb[0].mxu0
    %v5513 = vpop.f32.mrb[0].mxu0
    %v5514 = vadd.f32 %v5321, %v5513
    %v5515 = vpop.f32.mrb[0].mxu0
    %5516 = vmatprep.mubr.bf16.mxu0 %v3341
    %5517 = vmatmul.mubr.bf16.gmra.mrb[0].mxu0 %v3755
    %v5518 = vpop.f32.mrb[0].mxu0
    %v5519 = vadd.f32 %v5326, %v5518
    %v5520 = vpop.f32.mrb[0].mxu0
    %v5521 = vpop.f32.mrb[0].mxu0
    %v5522 = vadd.f32 %v5329, %v5521
    %v5523 = vpop.f32.mrb[0].mxu0
    %5524 = vmatprep.mubr.bf16.mxu0 %v3342
    %5525 = vmatmul.mubr.bf16.gmra.mrb[0].mxu0 %v3757
    %v5526 = vpop.f32.mrb[0].mxu0
    %v5527 = vadd.f32 %v5334, %v5526
    %v5528 = vpop.f32.mrb[0].mxu0
    %v5529 = vpop.f32.mrb[0].mxu0
    %v5530 = vadd.f32 %v5337, %v5529
    %v5531 = vpop.f32.mrb[0].mxu0
    %5532 = vmatprep.mubr.bf16.mxu0 %v3343
    %5533 = vmatmul.mubr.bf16.gmra.mrb[0].mxu0 %v3759
    %v5534 = vpop.f32.mrb[0].mxu0
    %v5535 = vadd.f32 %v5342, %v5534
    %v5536 = vpop.f32.mrb[0].mxu0
    %v5537 = vpop.f32.mrb[0].mxu0
    %v5538 = vadd.f32 %v5345, %v5537
    %v5539 = vpop.f32.mrb[0].mxu0
    %5540 = vmatprep.mubr.bf16.mxu0 %v3344
    %5541 = vmatmul.mubr.bf16.gmra.mrb[0].mxu0 %v3761
    %v5542 = vpop.f32.mrb[0].mxu0
    %v5543 = vadd.f32 %v5350, %v5542
    %v5544 = vpop.f32.mrb[0].mxu0
    %v5545 = vpop.f32.mrb[0].mxu0
    %v5546 = vadd.f32 %v5353, %v5545
    %v5547 = vpop.f32.mrb[0].mxu0
    %5548 = vmatprep.mubr.bf16.mxu0 %v3345
    %5549 = vmatmul.mubr.bf16.gmra.mrb[0].mxu0 %v3763
    %v5550 = vpop.f32.mrb[0].mxu0
    %v5551 = vadd.f32 %v5358, %v5550
    %v5552 = vpop.f32.mrb[0].mxu0
    %v5553 = vpop.f32.mrb[0].mxu0
    %v5554 = vadd.f32 %v5361, %v5553
    %v5555 = vpop.f32.mrb[0].mxu0
    %5556 = vmatprep.mubr.bf16.mxu0 %v3346
    %5557 = vmatmul.mubr.bf16.gmra.mrb[0].mxu0 %v3765
    %v5558 = vpop.f32.mrb[0].mxu0
    %v5559 = vadd.f32 %v5366, %v5558
    %v5560 = vpop.f32.mrb[0].mxu0
    %v5561 = vpop.f32.mrb[0].mxu0
    %v5562 = vadd.f32 %v5369, %v5561
    %v5563 = vpop.f32.mrb[0].mxu0
    %5564 = vmatprep.mubr.bf16.mxu0 %v3347
    %5565 = vmatmul.mubr.bf16.gmra.mrb[0].mxu0 %v3767
    %v5566 = vpop.f32.mrb[0].mxu0
    %v5567 = vadd.f32 %v5374, %v5566
    %v5568 = vpop.f32.mrb[0].mxu0
    %v5569 = vpop.f32.mrb[0].mxu0
    %v5570 = vadd.f32 %v5377, %v5569
    %v5571 = vpop.f32.mrb[0].mxu0
    %5572 = vmatprep.mubr.bf16.mxu0 %v3348
    %5573 = vmatmul.mubr.bf16.gmra.mrb[0].mxu0 %v3769
    %v5574 = vpop.f32.mrb[0].mxu0
    %v5575 = vadd.f32 %v5382, %v5574
    %v5576 = vpop.f32.mrb[0].mxu0
    %v5577 = vpop.f32.mrb[0].mxu0
    %v5578 = vadd.f32 %v5385, %v5577
    %v5579 = vpop.f32.mrb[0].mxu0
    %5580 = vmatprep.mubr.bf16.mxu0 %v3349
    %5581 = vmatmul.mubr.bf16.gmra.mrb[0].mxu0 %v3771
    %v5582 = vpop.f32.mrb[0].mxu0
    %v5583 = vadd.f32 %v5390, %v5582
    %v5584 = vpop.f32.mrb[0].mxu0
    %v5585 = vpop.f32.mrb[0].mxu0
    %v5586 = vadd.f32 %v5393, %v5585
    %v5587 = vpop.f32.mrb[0].mxu0
    %5588 = vmatprep.mubr.bf16.mxu0 %v3350
    %5589 = vmatmul.mubr.bf16.gmra.mrb[0].mxu0 %v3773
    %v5590 = vpop.f32.mrb[0].mxu0
    %v5591 = vadd.f32 %v5398, %v5590
    %v5592 = vpop.f32.mrb[0].mxu0
    %v5593 = vpop.f32.mrb[0].mxu0
    %v5594 = vadd.f32 %v5401, %v5593
    %v5595 = vpop.f32.mrb[0].mxu0
    %5596 = vdwg.mxu0
    %5597 = vmatprep.subr.bf16.mxu0 0
    %5598 = vmatpush1.bf16.msra.mxu0 %v4862
    %5599 = vmatprep.subr.bf16.mxu0 0
    %5600 = vmatpush1.bf16.msra.mxu0 %v4863
    %5601 = vmatprep.subr.bf16.mxu0 0
    %5602 = vmatpush1.bf16.msra.mxu0 %v4864
    %5603 = vmatprep.subr.bf16.mxu0 0
    %5604 = vmatpush1.bf16.msra.mxu0 %v4865
    %5605 = vmatprep.subr.bf16.mxu0 0
    %5606 = vmatpush1.bf16.msra.mxu0 %v4866
    %5607 = vmatprep.subr.bf16.mxu0 0
    %5608 = vmatpush1.bf16.msra.mxu0 %v4867
    %5609 = vmatprep.subr.bf16.mxu0 0
    %5610 = vmatpush1.bf16.msra.mxu0 %v4868
    %5611 = vmatprep.subr.bf16.mxu0 0
    %5612 = vmatpush1.bf16.msra.mxu0 %v4869
    %5613 = vmatprep.subr.bf16.mxu0 0
    %5614 = vmatpush1.bf16.msra.mxu0 %v4870
    %5615 = vmatprep.subr.bf16.mxu0 0
    %5616 = vmatpush1.bf16.msra.mxu0 %v4871
    %5617 = vmatprep.subr.bf16.mxu0 0
    %5618 = vmatpush1.bf16.msra.mxu0 %v4872
    %5619 = vmatprep.subr.bf16.mxu0 0
    %5620 = vmatpush1.bf16.msra.mxu0 %v4873
    %5621 = vmatprep.subr.bf16.mxu0 0
    %5622 = vmatpush1.bf16.msra.mxu0 %v4874
    %5623 = vmatprep.subr.bf16.mxu0 0
    %5624 = vmatpush1.bf16.msra.mxu0 %v4875
    %5625 = vmatprep.subr.bf16.mxu0 0
    %5626 = vmatpush1.bf16.msra.mxu0 %v4876
    %5627 = vmatprep.subr.bf16.mxu0 0
    %5628 = vmatpush1.bf16.msra.mxu0 %v4877
    %5629 = vmatprep.mubr.bf16.mxu0 %v3571
    %5630 = vmatmul.mubr.bf16.gmra.mrb[0].mxu0 %v3386
    %v5631 = vpop.f32.mrb[0].mxu0
    %v5632 = vadd.f32 %v5439, %v5631
    %v5633 = vpop.f32.mrb[0].mxu0
    %v5634 = vpop.f32.mrb[0].mxu0
    %v5635 = vadd.f32 %v5442, %v5634
    %v5636 = vpop.f32.mrb[0].mxu0
    %5637 = vmatprep.mubr.bf16.mxu0 %v3573
    %5638 = vmatmul.mubr.bf16.gmra.mrb[0].mxu0 %v3394
    %v5639 = vpop.f32.mrb[0].mxu0
    %v5640 = vadd.f32 %v5447, %v5639
    %v5641 = vpop.f32.mrb[0].mxu0
    %v5642 = vpop.f32.mrb[0].mxu0
    %v5643 = vadd.f32 %v5450, %v5642
    %v5644 = vpop.f32.mrb[0].mxu0
    %5645 = vmatprep.mubr.bf16.mxu0 %v3575
    %5646 = vmatmul.mubr.bf16.gmra.mrb[0].mxu0 %v3402
    %v5647 = vpop.f32.mrb[0].mxu0
    %v5648 = vadd.f32 %v5455, %v5647
    %v5649 = vpop.f32.mrb[0].mxu0
    %v5650 = vpop.f32.mrb[0].mxu0
    %v5651 = vadd.f32 %v5458, %v5650
    %v5652 = vpop.f32.mrb[0].mxu0
    %5653 = vmatprep.mubr.bf16.mxu0 %v3577
    %5654 = vmatmul.mubr.bf16.gmra.mrb[0].mxu0 %v3410
    %v5655 = vpop.f32.mrb[0].mxu0
    %v5656 = vadd.f32 %v5463, %v5655
    %v5657 = vpop.f32.mrb[0].mxu0
    %v5658 = vpop.f32.mrb[0].mxu0
    %v5659 = vadd.f32 %v5466, %v5658
    %v5660 = vpop.f32.mrb[0].mxu0
    %5661 = vmatprep.mubr.bf16.mxu0 %v3579
    %5662 = vmatmul.mubr.bf16.gmra.mrb[0].mxu0 %v3418
    %v5663 = vpop.f32.mrb[0].mxu0
    %v5664 = vadd.f32 %v5471, %v5663
    %v5665 = vpop.f32.mrb[0].mxu0
    %v5666 = vpop.f32.mrb[0].mxu0
    %v5667 = vadd.f32 %v5474, %v5666
    %v5668 = vpop.f32.mrb[0].mxu0
    %5669 = vmatprep.mubr.bf16.mxu0 %v3581
    %5670 = vmatmul.mubr.bf16.gmra.mrb[0].mxu0 %v3426
    %v5671 = vpop.f32.mrb[0].mxu0
    %v5672 = vadd.f32 %v5479, %v5671
    %v5673 = vpop.f32.mrb[0].mxu0
    %v5674 = vpop.f32.mrb[0].mxu0
    %v5675 = vadd.f32 %v5482, %v5674
    %v5676 = vpop.f32.mrb[0].mxu0
    %5677 = vmatprep.mubr.bf16.mxu0 %v3583
    %5678 = vmatmul.mubr.bf16.gmra.mrb[0].mxu0 %v3434
    %v5679 = vpop.f32.mrb[0].mxu0
    %v5680 = vadd.f32 %v5487, %v5679
    %v5681 = vpop.f32.mrb[0].mxu0
    %v5682 = vpop.f32.mrb[0].mxu0
    %v5683 = vadd.f32 %v5490, %v5682
    %v5684 = vpop.f32.mrb[0].mxu0
    %5685 = vmatprep.mubr.bf16.mxu0 %v3585
    %5686 = vmatmul.mubr.bf16.gmra.mrb[0].mxu0 %v3442
    %v5687 = vpop.f32.mrb[0].mxu0
    %v5688 = vadd.f32 %v5495, %v5687
    %v5689 = vpop.f32.mrb[0].mxu0
    %v5690 = vpop.f32.mrb[0].mxu0
    %v5691 = vadd.f32 %v5498, %v5690
    %v5692 = vpop.f32.mrb[0].mxu0
    %5693 = vmatprep.mubr.bf16.mxu0 %v3587
    %5694 = vmatmul.mubr.bf16.gmra.mrb[0].mxu0 %v3450
    %v5695 = vpop.f32.mrb[0].mxu0
    %v5696 = vadd.f32 %v5503, %v5695
    %v5697 = vpop.f32.mrb[0].mxu0
    %v5698 = vpop.f32.mrb[0].mxu0
    %v5699 = vadd.f32 %v5506, %v5698
    %v5700 = vpop.f32.mrb[0].mxu0
    %5701 = vmatprep.mubr.bf16.mxu0 %v3589
    %5702 = vmatmul.mubr.bf16.gmra.mrb[0].mxu0 %v3458
    %v5703 = vpop.f32.mrb[0].mxu0
    %v5704 = vadd.f32 %v5511, %v5703
    %v5705 = vpop.f32.mrb[0].mxu0
    %v5706 = vpop.f32.mrb[0].mxu0
    %v5707 = vadd.f32 %v5514, %v5706
    %v5708 = vpop.f32.mrb[0].mxu0
    %5709 = vmatprep.mubr.bf16.mxu0 %v3591
    %5710 = vmatmul.mubr.bf16.gmra.mrb[0].mxu0 %v3466
    %v5711 = vpop.f32.mrb[0].mxu0
    %v5712 = vadd.f32 %v5519, %v5711
    %v5713 = vpop.f32.mrb[0].mxu0
    %v5714 = vpop.f32.mrb[0].mxu0
    %v5715 = vadd.f32 %v5522, %v5714
    %v5716 = vpop.f32.mrb[0].mxu0
    %5717 = vmatprep.mubr.bf16.mxu0 %v3593
    %5718 = vmatmul.mubr.bf16.gmra.mrb[0].mxu0 %v3474
    %v5719 = vpop.f32.mrb[0].mxu0
    %v5720 = vadd.f32 %v5527, %v5719
    %v5721 = vpop.f32.mrb[0].mxu0
    %v5722 = vpop.f32.mrb[0].mxu0
    %v5723 = vadd.f32 %v5530, %v5722
    %v5724 = vpop.f32.mrb[0].mxu0
    %5725 = vmatprep.mubr.bf16.mxu0 %v3595
    %5726 = vmatmul.mubr.bf16.gmra.mrb[0].mxu0 %v3482
    %v5727 = vpop.f32.mrb[0].mxu0
    %v5728 = vadd.f32 %v5535, %v5727
    %v5729 = vpop.f32.mrb[0].mxu0
    %v5730 = vpop.f32.mrb[0].mxu0
    %v5731 = vadd.f32 %v5538, %v5730
    %v5732 = vpop.f32.mrb[0].mxu0
    %5733 = vmatprep.mubr.bf16.mxu0 %v3597
    %5734 = vmatmul.mubr.bf16.gmra.mrb[0].mxu0 %v3490
    %v5735 = vpop.f32.mrb[0].mxu0
    %v5736 = vadd.f32 %v5543, %v5735
    %v5737 = vpop.f32.mrb[0].mxu0
    %v5738 = vpop.f32.mrb[0].mxu0
    %v5739 = vadd.f32 %v5546, %v5738
    %v5740 = vpop.f32.mrb[0].mxu0
    %5741 = vmatprep.mubr.bf16.mxu0 %v3599
    %5742 = vmatmul.mubr.bf16.gmra.mrb[0].mxu0 %v3498
    %v5743 = vpop.f32.mrb[0].mxu0
    %v5744 = vadd.f32 %v5551, %v5743
    %v5745 = vpop.f32.mrb[0].mxu0
    %v5746 = vpop.f32.mrb[0].mxu0
    %v5747 = vadd.f32 %v5554, %v5746
    %v5748 = vpop.f32.mrb[0].mxu0
    %5749 = vmatprep.mubr.bf16.mxu0 %v3601
    %5750 = vmatmul.mubr.bf16.gmra.mrb[0].mxu0 %v3506
    %v5751 = vpop.f32.mrb[0].mxu0
    %v5752 = vadd.f32 %v5559, %v5751
    %v5753 = vpop.f32.mrb[0].mxu0
    %v5754 = vpop.f32.mrb[0].mxu0
    %v5755 = vadd.f32 %v5562, %v5754
    %v5756 = vpop.f32.mrb[0].mxu0
    %5757 = vmatprep.mubr.bf16.mxu0 %v3603
    %5758 = vmatmul.mubr.bf16.gmra.mrb[0].mxu0 %v3514
    %v5759 = vpop.f32.mrb[0].mxu0
    %v5760 = vadd.f32 %v5567, %v5759
    %v5761 = vpop.f32.mrb[0].mxu0
    %v5762 = vpop.f32.mrb[0].mxu0
    %v5763 = vadd.f32 %v5570, %v5762
    %v5764 = vpop.f32.mrb[0].mxu0
    %5765 = vmatprep.mubr.bf16.mxu0 %v3605
    %5766 = vmatmul.mubr.bf16.gmra.mrb[0].mxu0 %v3522
    %v5767 = vpop.f32.mrb[0].mxu0
    %v5768 = vadd.f32 %v5575, %v5767
    %v5769 = vpop.f32.mrb[0].mxu0
    %v5770 = vpop.f32.mrb[0].mxu0
    %v5771 = vadd.f32 %v5578, %v5770
    %v5772 = vpop.f32.mrb[0].mxu0
    %5773 = vmatprep.mubr.bf16.mxu0 %v3813
    %5774 = vmatmul.mubr.bf16.gmra.mrb[0].mxu0 %v3799
    %v5775 = vpop.f32.mrb[0].mxu0
    %v5776 = vadd.f32 %v5583, %v5775
    %v5777 = vpop.f32.mrb[0].mxu0
    %v5778 = vpop.f32.mrb[0].mxu0
    %v5779 = vadd.f32 %v5586, %v5778
    %v5780 = vpop.f32.mrb[0].mxu0
    %5781 = vmatprep.mubr.bf16.mxu0 %v3815
    %5782 = vmatmul.mubr.bf16.gmra.mrb[0].mxu0 %v3807
    %v5783 = vpop.f32.mrb[0].mxu0
    %v5784 = vadd.f32 %v5591, %v5783
    %v5785 = vpop.f32.mrb[0].mxu0
    %v5786 = vpop.f32.mrb[0].mxu0
    %v5787 = vadd.f32 %v5594, %v5786
    %v5788 = vpop.f32.mrb[0].mxu0
    %5789 = vdwg.mxu0
    %5790 = vmatprep.subr.bf16.mxu0 0
    %5791 = vmatpush1.bf16.msra.mxu0 %v4878
    %5792 = vmatprep.subr.bf16.mxu0 0
    %5793 = vmatpush1.bf16.msra.mxu0 %v4879
    %5794 = vmatprep.subr.bf16.mxu0 0
    %5795 = vmatpush1.bf16.msra.mxu0 %v4880
    %5796 = vmatprep.subr.bf16.mxu0 0
    %5797 = vmatpush1.bf16.msra.mxu0 %v4881
    %5798 = vmatprep.subr.bf16.mxu0 0
    %5799 = vmatpush1.bf16.msra.mxu0 %v4882
    %5800 = vmatprep.subr.bf16.mxu0 0
    %5801 = vmatpush1.bf16.msra.mxu0 %v4883
    %5802 = vmatprep.subr.bf16.mxu0 0
    %5803 = vmatpush1.bf16.msra.mxu0 %v4884
    %5804 = vmatprep.subr.bf16.mxu0 0
    %5805 = vmatpush1.bf16.msra.mxu0 %v4885
    %5806 = vmatprep.subr.bf16.mxu0 0
    %5807 = vmatpush1.bf16.msra.mxu0 %v4886
    %5808 = vmatprep.subr.bf16.mxu0 0
    %5809 = vmatpush1.bf16.msra.mxu0 %v4887
    %5810 = vmatprep.subr.bf16.mxu0 0
    %5811 = vmatpush1.bf16.msra.mxu0 %v4888
    %5812 = vmatprep.subr.bf16.mxu0 0
    %5813 = vmatpush1.bf16.msra.mxu0 %v4889
    %5814 = vmatprep.subr.bf16.mxu0 0
    %5815 = vmatpush1.bf16.msra.mxu0 %v4890
    %5816 = vmatprep.subr.bf16.mxu0 0
    %5817 = vmatpush1.bf16.msra.mxu0 %v4891
    %5818 = vmatprep.subr.bf16.mxu0 0
    %5819 = vmatpush1.bf16.msra.mxu0 %v4892
    %5820 = vmatprep.subr.bf16.mxu0 0
    %5821 = vmatpush1.bf16.msra.mxu0 %v4893
    %5822 = vmatprep.mubr.bf16.mxu0 %v3739
    %5823 = vmatmul.mubr.bf16.gmra.mrb[0].mxu0 %v3641
    %v5824 = vpop.f32.mrb[0].mxu0
    %v5825 = vadd.f32 %v5632, %v5824
    %v5826 = vpop.f32.mrb[0].mxu0
    %v5827 = vpop.f32.mrb[0].mxu0
    %v5828 = vadd.f32 %v5635, %v5827
    %v5829 = vpop.f32.mrb[0].mxu0
    %5830 = vmatprep.mubr.bf16.mxu0 %v3741
    %5831 = vmatmul.mubr.bf16.gmra.mrb[0].mxu0 %v3645
    %v5832 = vpop.f32.mrb[0].mxu0
    %v5833 = vadd.f32 %v5640, %v5832
    %v5834 = vpop.f32.mrb[0].mxu0
    %v5835 = vpop.f32.mrb[0].mxu0
    %v5836 = vadd.f32 %v5643, %v5835
    %v5837 = vpop.f32.mrb[0].mxu0
    %5838 = vmatprep.mubr.bf16.mxu0 %v3743
    %5839 = vmatmul.mubr.bf16.gmra.mrb[0].mxu0 %v3649
    %v5840 = vpop.f32.mrb[0].mxu0
    %v5841 = vadd.f32 %v5648, %v5840
    %v5842 = vpop.f32.mrb[0].mxu0
    %v5843 = vpop.f32.mrb[0].mxu0
    %v5844 = vadd.f32 %v5651, %v5843
    %v5845 = vpop.f32.mrb[0].mxu0
    %5846 = vmatprep.mubr.bf16.mxu0 %v3745
    %5847 = vmatmul.mubr.bf16.gmra.mrb[0].mxu0 %v3653
    %v5848 = vpop.f32.mrb[0].mxu0
    %v5849 = vadd.f32 %v5656, %v5848
    %v5850 = vpop.f32.mrb[0].mxu0
    %v5851 = vpop.f32.mrb[0].mxu0
    %v5852 = vadd.f32 %v5659, %v5851
    %v5853 = vpop.f32.mrb[0].mxu0
    %5854 = vmatprep.mubr.bf16.mxu0 %v3747
    %5855 = vmatmul.mubr.bf16.gmra.mrb[0].mxu0 %v3657
    %v5856 = vpop.f32.mrb[0].mxu0
    %v5857 = vadd.f32 %v5664, %v5856
    %v5858 = vpop.f32.mrb[0].mxu0
    %v5859 = vpop.f32.mrb[0].mxu0
    %v5860 = vadd.f32 %v5667, %v5859
    %v5861 = vpop.f32.mrb[0].mxu0
    %5862 = vmatprep.mubr.bf16.mxu0 %v3749
    %5863 = vmatmul.mubr.bf16.gmra.mrb[0].mxu0 %v3661
    %v5864 = vpop.f32.mrb[0].mxu0
    %v5865 = vadd.f32 %v5672, %v5864
    %v5866 = vpop.f32.mrb[0].mxu0
    %v5867 = vpop.f32.mrb[0].mxu0
    %v5868 = vadd.f32 %v5675, %v5867
    %v5869 = vpop.f32.mrb[0].mxu0
    %5870 = vmatprep.mubr.bf16.mxu0 %v3751
    %5871 = vmatmul.mubr.bf16.gmra.mrb[0].mxu0 %v3665
    %v5872 = vpop.f32.mrb[0].mxu0
    %v5873 = vadd.f32 %v5680, %v5872
    %v5874 = vpop.f32.mrb[0].mxu0
    %v5875 = vpop.f32.mrb[0].mxu0
    %v5876 = vadd.f32 %v5683, %v5875
    %v5877 = vpop.f32.mrb[0].mxu0
    %5878 = vmatprep.mubr.bf16.mxu0 %v3753
    %5879 = vmatmul.mubr.bf16.gmra.mrb[0].mxu0 %v3669
    %v5880 = vpop.f32.mrb[0].mxu0
    %v5881 = vadd.f32 %v5688, %v5880
    %v5882 = vpop.f32.mrb[0].mxu0
    %v5883 = vpop.f32.mrb[0].mxu0
    %v5884 = vadd.f32 %v5691, %v5883
    %v5885 = vpop.f32.mrb[0].mxu0
    %5886 = vmatprep.mubr.bf16.mxu0 %v3755
    %5887 = vmatmul.mubr.bf16.gmra.mrb[0].mxu0 %v3673
    %v5888 = vpop.f32.mrb[0].mxu0
    %v5889 = vadd.f32 %v5696, %v5888
    %v5890 = vpop.f32.mrb[0].mxu0
    %v5891 = vpop.f32.mrb[0].mxu0
    %v5892 = vadd.f32 %v5699, %v5891
    %v5893 = vpop.f32.mrb[0].mxu0
    %5894 = vmatprep.mubr.bf16.mxu0 %v3757
    %5895 = vmatmul.mubr.bf16.gmra.mrb[0].mxu0 %v3677
    %v5896 = vpop.f32.mrb[0].mxu0
    %v5897 = vadd.f32 %v5704, %v5896
    %v5898 = vpop.f32.mrb[0].mxu0
    %v5899 = vpop.f32.mrb[0].mxu0
    %v5900 = vadd.f32 %v5707, %v5899
    %v5901 = vpop.f32.mrb[0].mxu0
    %5902 = vmatprep.mubr.bf16.mxu0 %v3759
    %5903 = vmatmul.mubr.bf16.gmra.mrb[0].mxu0 %v3681
    %v5904 = vpop.f32.mrb[0].mxu0
    %v5905 = vadd.f32 %v5712, %v5904
    %v5906 = vpop.f32.mrb[0].mxu0
    %v5907 = vpop.f32.mrb[0].mxu0
    %v5908 = vadd.f32 %v5715, %v5907
    %v5909 = vpop.f32.mrb[0].mxu0
    %5910 = vmatprep.mubr.bf16.mxu0 %v3761
    %5911 = vmatmul.mubr.bf16.gmra.mrb[0].mxu0 %v3685
    %v5912 = vpop.f32.mrb[0].mxu0
    %v5913 = vadd.f32 %v5720, %v5912
    %v5914 = vpop.f32.mrb[0].mxu0
    %v5915 = vpop.f32.mrb[0].mxu0
    %v5916 = vadd.f32 %v5723, %v5915
    %v5917 = vpop.f32.mrb[0].mxu0
    %5918 = vmatprep.mubr.bf16.mxu0 %v3763
    %5919 = vmatmul.mubr.bf16.gmra.mrb[0].mxu0 %v3689
    %v5920 = vpop.f32.mrb[0].mxu0
    %v5921 = vadd.f32 %v5728, %v5920
    %v5922 = vpop.f32.mrb[0].mxu0
    %v5923 = vpop.f32.mrb[0].mxu0
    %v5924 = vadd.f32 %v5731, %v5923
    %v5925 = vpop.f32.mrb[0].mxu0
    %5926 = vmatprep.mubr.bf16.mxu0 %v3765
    %5927 = vmatmul.mubr.bf16.gmra.mrb[0].mxu0 %v3693
    %v5928 = vpop.f32.mrb[0].mxu0
    %v5929 = vadd.f32 %v5736, %v5928
    %v5930 = vpop.f32.mrb[0].mxu0
    %v5931 = vpop.f32.mrb[0].mxu0
    %v5932 = vadd.f32 %v5739, %v5931
    %v5933 = vpop.f32.mrb[0].mxu0
    %5934 = vmatprep.mubr.bf16.mxu0 %v3767
    %5935 = vmatmul.mubr.bf16.gmra.mrb[0].mxu0 %v3697
    %v5936 = vpop.f32.mrb[0].mxu0
    %v5937 = vadd.f32 %v5744, %v5936
    %v5938 = vpop.f32.mrb[0].mxu0
    %v5939 = vpop.f32.mrb[0].mxu0
    %v5940 = vadd.f32 %v5747, %v5939
    %v5941 = vpop.f32.mrb[0].mxu0
    %5942 = vmatprep.mubr.bf16.mxu0 %v3769
    %5943 = vmatmul.mubr.bf16.gmra.mrb[0].mxu0 %v3701
    %v5944 = vpop.f32.mrb[0].mxu0
    %v5945 = vadd.f32 %v5752, %v5944
    %v5946 = vpop.f32.mrb[0].mxu0
    %v5947 = vpop.f32.mrb[0].mxu0
    %v5948 = vadd.f32 %v5755, %v5947
    %v5949 = vpop.f32.mrb[0].mxu0
    %5950 = vmatprep.mubr.bf16.mxu0 %v3771
    %5951 = vmatmul.mubr.bf16.gmra.mrb[0].mxu0 %v3705
    %v5952 = vpop.f32.mrb[0].mxu0
    %v5953 = vadd.f32 %v5760, %v5952
    %v5954 = vpop.f32.mrb[0].mxu0
    %v5955 = vpop.f32.mrb[0].mxu0
    %v5956 = vadd.f32 %v5763, %v5955
    %v5957 = vpop.f32.mrb[0].mxu0
    %5958 = vmatprep.mubr.bf16.mxu0 %v3773
    %5959 = vmatmul.mubr.bf16.gmra.mrb[0].mxu0 %v3711
    %v5960 = vpop.f32.mrb[0].mxu0
    %v5961 = vadd.f32 %v5768, %v5960
    %v5962 = vpop.f32.mrb[0].mxu0
    %v5963 = vpop.f32.mrb[0].mxu0
    %v5964 = vadd.f32 %v5771, %v5963
    %v5965 = vpop.f32.mrb[0].mxu0
    %5966 = vmatprep.mubr.bf16.mxu0 %v3831
    %5967 = vmatmul.mubr.bf16.gmra.mrb[0].mxu0 %v3821
    %v5968 = vpop.f32.mrb[0].mxu0
    %v5969 = vadd.f32 %v5776, %v5968
    %v5970 = vpop.f32.mrb[0].mxu0
    %v5971 = vpop.f32.mrb[0].mxu0
    %v5972 = vadd.f32 %v5779, %v5971
    %v5973 = vpop.f32.mrb[0].mxu0
    %5974 = vmatprep.mubr.bf16.mxu0 %v3833
    %5975 = vmatmul.mubr.bf16.gmra.mrb[0].mxu0 %v3827
    %v5976 = vpop.f32.mrb[0].mxu0
    %v5977 = vadd.f32 %v5784, %v5976
    %v5978 = vpop.f32.mrb[0].mxu0
    %v5979 = vpop.f32.mrb[0].mxu0
    %v5980 = vadd.f32 %v5787, %v5979
    %v5981 = vpop.f32.mrb[0].mxu0
    %5982 = vdwg.mxu0
    %5983 = vmatprep.subr.bf16.mxu0 0
    %5984 = vmatpush1.bf16.msra.mxu0 %v4894
    %5985 = vmatprep.subr.bf16.mxu0 0
    %5986 = vmatpush1.bf16.msra.mxu0 %v4895
    %5987 = vmatprep.subr.bf16.mxu0 0
    %5988 = vmatpush1.bf16.msra.mxu0 %v4896
    %5989 = vmatprep.subr.bf16.mxu0 0
    %5990 = vmatpush1.bf16.msra.mxu0 %v4897
    %5991 = vmatprep.subr.bf16.mxu0 0
    %5992 = vmatpush1.bf16.msra.mxu0 %v4898
    %5993 = vmatprep.subr.bf16.mxu0 0
    %5994 = vmatpush1.bf16.msra.mxu0 %v4899
    %5995 = vmatprep.subr.bf16.mxu0 0
    %5996 = vmatpush1.bf16.msra.mxu0 %v4900
    %5997 = vmatprep.subr.bf16.mxu0 0
    %5998 = vmatpush1.bf16.msra.mxu0 %v4901
    %5999 = vmatprep.subr.bf16.mxu0 0
    %6000 = vmatpush1.bf16.msra.mxu0 %v4902
    %6001 = vmatprep.subr.bf16.mxu0 0
    %6002 = vmatpush1.bf16.msra.mxu0 %v4903
    %6003 = vmatprep.subr.bf16.mxu0 0
    %6004 = vmatpush1.bf16.msra.mxu0 %v4904
    %6005 = vmatprep.subr.bf16.mxu0 0
    %6006 = vmatpush1.bf16.msra.mxu0 %v4905
    %6007 = vmatprep.subr.bf16.mxu0 0
    %6008 = vmatpush1.bf16.msra.mxu0 %v4906
    %6009 = vmatprep.subr.bf16.mxu0 0
    %6010 = vmatpush1.bf16.msra.mxu0 %v4907
    %6011 = vmatprep.subr.bf16.mxu0 0
    %6012 = vmatpush1.bf16.msra.mxu0 %v4908
    %6013 = vmatprep.subr.bf16.mxu0 0
    %6014 = vmatpush1.bf16.msra.mxu0 %v4909
    %6015 = vmatprep.mubr.bf16.mxu0 %v3402
    %6016 = vmatmul.mubr.bf16.gmra.mrb[0].mxu0 %v3333
    %v6017 = vpop.f32.mrb[0].mxu0
    %v6018 = vadd.f32 %v5825, %v6017
    %v6019 = vpop.f32.mrb[0].mxu0
    %v6020 = vpop.f32.mrb[0].mxu0
    %v6021 = vadd.f32 %v5828, %v6020
    %v6022 = vpop.f32.mrb[0].mxu0
    %6023 = vmatprep.mubr.bf16.mxu0 %v3410
    %6024 = vmatmul.mubr.bf16.gmra.mrb[0].mxu0 %v3334
    %v6025 = vpop.f32.mrb[0].mxu0
    %v6026 = vadd.f32 %v5833, %v6025
    %v6027 = vpop.f32.mrb[0].mxu0
    %v6028 = vpop.f32.mrb[0].mxu0
    %v6029 = vadd.f32 %v5836, %v6028
    %v6030 = vpop.f32.mrb[0].mxu0
    %6031 = vmatprep.mubr.bf16.mxu0 %v3418
    %6032 = vmatmul.mubr.bf16.gmra.mrb[0].mxu0 %v3335
    %v6033 = vpop.f32.mrb[0].mxu0
    %v6034 = vadd.f32 %v5841, %v6033
    %v6035 = vpop.f32.mrb[0].mxu0
    %v6036 = vpop.f32.mrb[0].mxu0
    %v6037 = vadd.f32 %v5844, %v6036
    %v6038 = vpop.f32.mrb[0].mxu0
    %6039 = vmatprep.mubr.bf16.mxu0 %v3426
    %6040 = vmatmul.mubr.bf16.gmra.mrb[0].mxu0 %v3336
    %v6041 = vpop.f32.mrb[0].mxu0
    %v6042 = vadd.f32 %v5849, %v6041
    %v6043 = vpop.f32.mrb[0].mxu0
    %v6044 = vpop.f32.mrb[0].mxu0
    %v6045 = vadd.f32 %v5852, %v6044
    %v6046 = vpop.f32.mrb[0].mxu0
    %6047 = vmatprep.mubr.bf16.mxu0 %v3434
    %6048 = vmatmul.mubr.bf16.gmra.mrb[0].mxu0 %v3337
    %v6049 = vpop.f32.mrb[0].mxu0
    %v6050 = vadd.f32 %v5857, %v6049
    %v6051 = vpop.f32.mrb[0].mxu0
    %v6052 = vpop.f32.mrb[0].mxu0
    %v6053 = vadd.f32 %v5860, %v6052
    %v6054 = vpop.f32.mrb[0].mxu0
    %6055 = vmatprep.mubr.bf16.mxu0 %v3442
    %6056 = vmatmul.mubr.bf16.gmra.mrb[0].mxu0 %v3338
    %v6057 = vpop.f32.mrb[0].mxu0
    %v6058 = vadd.f32 %v5865, %v6057
    %v6059 = vpop.f32.mrb[0].mxu0
    %v6060 = vpop.f32.mrb[0].mxu0
    %v6061 = vadd.f32 %v5868, %v6060
    %v6062 = vpop.f32.mrb[0].mxu0
    %6063 = vmatprep.mubr.bf16.mxu0 %v3450
    %6064 = vmatmul.mubr.bf16.gmra.mrb[0].mxu0 %v3339
    %v6065 = vpop.f32.mrb[0].mxu0
    %v6066 = vadd.f32 %v5873, %v6065
    %v6067 = vpop.f32.mrb[0].mxu0
    %v6068 = vpop.f32.mrb[0].mxu0
    %v6069 = vadd.f32 %v5876, %v6068
    %v6070 = vpop.f32.mrb[0].mxu0
    %6071 = vmatprep.mubr.bf16.mxu0 %v3458
    %6072 = vmatmul.mubr.bf16.gmra.mrb[0].mxu0 %v3340
    %v6073 = vpop.f32.mrb[0].mxu0
    %v6074 = vadd.f32 %v5881, %v6073
    %v6075 = vpop.f32.mrb[0].mxu0
    %v6076 = vpop.f32.mrb[0].mxu0
    %v6077 = vadd.f32 %v5884, %v6076
    %v6078 = vpop.f32.mrb[0].mxu0
    %6079 = vmatprep.mubr.bf16.mxu0 %v3466
    %6080 = vmatmul.mubr.bf16.gmra.mrb[0].mxu0 %v3341
    %v6081 = vpop.f32.mrb[0].mxu0
    %v6082 = vadd.f32 %v5889, %v6081
    %v6083 = vpop.f32.mrb[0].mxu0
    %v6084 = vpop.f32.mrb[0].mxu0
    %v6085 = vadd.f32 %v5892, %v6084
    %v6086 = vpop.f32.mrb[0].mxu0
    %6087 = vmatprep.mubr.bf16.mxu0 %v3474
    %6088 = vmatmul.mubr.bf16.gmra.mrb[0].mxu0 %v3342
    %v6089 = vpop.f32.mrb[0].mxu0
    %v6090 = vadd.f32 %v5897, %v6089
    %v6091 = vpop.f32.mrb[0].mxu0
    %v6092 = vpop.f32.mrb[0].mxu0
    %v6093 = vadd.f32 %v5900, %v6092
    %v6094 = vpop.f32.mrb[0].mxu0
    %6095 = vmatprep.mubr.bf16.mxu0 %v3482
    %6096 = vmatmul.mubr.bf16.gmra.mrb[0].mxu0 %v3343
    %v6097 = vpop.f32.mrb[0].mxu0
    %v6098 = vadd.f32 %v5905, %v6097
    %v6099 = vpop.f32.mrb[0].mxu0
    %v6100 = vpop.f32.mrb[0].mxu0
    %v6101 = vadd.f32 %v5908, %v6100
    %v6102 = vpop.f32.mrb[0].mxu0
    %6103 = vmatprep.mubr.bf16.mxu0 %v3490
    %6104 = vmatmul.mubr.bf16.gmra.mrb[0].mxu0 %v3344
    %v6105 = vpop.f32.mrb[0].mxu0
    %v6106 = vadd.f32 %v5913, %v6105
    %v6107 = vpop.f32.mrb[0].mxu0
    %v6108 = vpop.f32.mrb[0].mxu0
    %v6109 = vadd.f32 %v5916, %v6108
    %v6110 = vpop.f32.mrb[0].mxu0
    %6111 = vmatprep.mubr.bf16.mxu0 %v3498
    %6112 = vmatmul.mubr.bf16.gmra.mrb[0].mxu0 %v3345
    %v6113 = vpop.f32.mrb[0].mxu0
    %v6114 = vadd.f32 %v5921, %v6113
    %v6115 = vpop.f32.mrb[0].mxu0
    %v6116 = vpop.f32.mrb[0].mxu0
    %v6117 = vadd.f32 %v5924, %v6116
    %v6118 = vpop.f32.mrb[0].mxu0
    %6119 = vmatprep.mubr.bf16.mxu0 %v3506
    %6120 = vmatmul.mubr.bf16.gmra.mrb[0].mxu0 %v3346
    %v6121 = vpop.f32.mrb[0].mxu0
    %v6122 = vadd.f32 %v5929, %v6121
    %v6123 = vpop.f32.mrb[0].mxu0
    %v6124 = vpop.f32.mrb[0].mxu0
    %v6125 = vadd.f32 %v5932, %v6124
    %v6126 = vpop.f32.mrb[0].mxu0
    %6127 = vmatprep.mubr.bf16.mxu0 %v3514
    %6128 = vmatmul.mubr.bf16.gmra.mrb[0].mxu0 %v3347
    %v6129 = vpop.f32.mrb[0].mxu0
    %v6130 = vadd.f32 %v5937, %v6129
    %v6131 = vpop.f32.mrb[0].mxu0
    %v6132 = vpop.f32.mrb[0].mxu0
    %v6133 = vadd.f32 %v5940, %v6132
    %v6134 = vpop.f32.mrb[0].mxu0
    %6135 = vmatprep.mubr.bf16.mxu0 %v3522
    %6136 = vmatmul.mubr.bf16.gmra.mrb[0].mxu0 %v3348
    %v6137 = vpop.f32.mrb[0].mxu0
    %v6138 = vadd.f32 %v5945, %v6137
    %v6139 = vpop.f32.mrb[0].mxu0
    %v6140 = vpop.f32.mrb[0].mxu0
    %v6141 = vadd.f32 %v5948, %v6140
    %v6142 = vpop.f32.mrb[0].mxu0
    %6143 = vmatprep.mubr.bf16.mxu0 %v3799
    %6144 = vmatmul.mubr.bf16.gmra.mrb[0].mxu0 %v3349
    %v6145 = vpop.f32.mrb[0].mxu0
    %v6146 = vadd.f32 %v5953, %v6145
    %v6147 = vpop.f32.mrb[0].mxu0
    %v6148 = vpop.f32.mrb[0].mxu0
    %v6149 = vadd.f32 %v5956, %v6148
    %v6150 = vpop.f32.mrb[0].mxu0
    %6151 = vmatprep.mubr.bf16.mxu0 %v3807
    %6152 = vmatmul.mubr.bf16.gmra.mrb[0].mxu0 %v3350
    %v6153 = vpop.f32.mrb[0].mxu0
    %v6154 = vadd.f32 %v5961, %v6153
    %v6155 = vpop.f32.mrb[0].mxu0
    %v6156 = vpop.f32.mrb[0].mxu0
    %v6157 = vadd.f32 %v5964, %v6156
    %v6158 = vpop.f32.mrb[0].mxu0
    %6159 = vmatprep.mubr.bf16.mxu0 %v3841
    %6160 = vmatmul.mubr.bf16.gmra.mrb[0].mxu0 %v3351
    %v6161 = vpop.f32.mrb[0].mxu0
    %v6162 = vadd.f32 %v5969, %v6161
    %v6163 = vpop.f32.mrb[0].mxu0
    %v6164 = vpop.f32.mrb[0].mxu0
    %v6165 = vadd.f32 %v5972, %v6164
    %v6166 = vpop.f32.mrb[0].mxu0
    %6167 = vmatprep.mubr.bf16.mxu0 %v3849
    %6168 = vmatmul.mubr.bf16.gmra.mrb[0].mxu0 %v3352
    %v6169 = vpop.f32.mrb[0].mxu0
    %v6170 = vadd.f32 %v5977, %v6169
    %v6171 = vpop.f32.mrb[0].mxu0
    %v6172 = vpop.f32.mrb[0].mxu0
    %v6173 = vadd.f32 %v5980, %v6172
    %v6174 = vpop.f32.mrb[0].mxu0
    %6175 = vdwg.mxu0
    %6176 = vmatprep.subr.bf16.mxu0 0
    %6177 = vmatpush1.bf16.msra.mxu0 %v4910
    %6178 = vmatprep.subr.bf16.mxu0 0
    %6179 = vmatpush1.bf16.msra.mxu0 %v4911
    %6180 = vmatprep.subr.bf16.mxu0 0
    %6181 = vmatpush1.bf16.msra.mxu0 %v4912
    %6182 = vmatprep.subr.bf16.mxu0 0
    %6183 = vmatpush1.bf16.msra.mxu0 %v4913
    %6184 = vmatprep.subr.bf16.mxu0 0
    %6185 = vmatpush1.bf16.msra.mxu0 %v4914
    %6186 = vmatprep.subr.bf16.mxu0 0
    %6187 = vmatpush1.bf16.msra.mxu0 %v4915
    %6188 = vmatprep.subr.bf16.mxu0 0
    %6189 = vmatpush1.bf16.msra.mxu0 %v4916
    %6190 = vmatprep.subr.bf16.mxu0 0
    %6191 = vmatpush1.bf16.msra.mxu0 %v4917
    %6192 = vmatprep.subr.bf16.mxu0 0
    %6193 = vmatpush1.bf16.msra.mxu0 %v4918
    %6194 = vmatprep.subr.bf16.mxu0 0
    %6195 = vmatpush1.bf16.msra.mxu0 %v4919
    %6196 = vmatprep.subr.bf16.mxu0 0
    %6197 = vmatpush1.bf16.msra.mxu0 %v4920
    %6198 = vmatprep.subr.bf16.mxu0 0
    %6199 = vmatpush1.bf16.msra.mxu0 %v4921
    %6200 = vmatprep.subr.bf16.mxu0 0
    %6201 = vmatpush1.bf16.msra.mxu0 %v4922
    %6202 = vmatprep.subr.bf16.mxu0 0
    %6203 = vmatpush1.bf16.msra.mxu0 %v4923
    %6204 = vmatprep.subr.bf16.mxu0 0
    %6205 = vmatpush1.bf16.msra.mxu0 %v4924
    %6206 = vmatprep.subr.bf16.mxu0 0
    %6207 = vmatpush1.bf16.msra.mxu0 %v4925
    %6208 = vmatprep.mubr.bf16.mxu0 %v3649
    %6209 = vmatmul.mubr.bf16.gmra.mrb[0].mxu0 %v3575
    %v6210 = vpop.f32.mrb[0].mxu0
    %v6211 = vadd.f32 %v6018, %v6210
    %v6212 = vpop.f32.mrb[0].mxu0
    %v6213 = vpop.f32.mrb[0].mxu0
    %v6214 = vadd.f32 %v6021, %v6213
    %v6215 = vpop.f32.mrb[0].mxu0
    %6216 = vmatprep.mubr.bf16.mxu0 %v3653
    %6217 = vmatmul.mubr.bf16.gmra.mrb[0].mxu0 %v3577
    %v6218 = vpop.f32.mrb[0].mxu0
    %v6219 = vadd.f32 %v6026, %v6218
    %v6220 = vpop.f32.mrb[0].mxu0
    %v6221 = vpop.f32.mrb[0].mxu0
    %v6222 = vadd.f32 %v6029, %v6221
    %v6223 = vpop.f32.mrb[0].mxu0
    %6224 = vmatprep.mubr.bf16.mxu0 %v3657
    %6225 = vmatmul.mubr.bf16.gmra.mrb[0].mxu0 %v3579
    %v6226 = vpop.f32.mrb[0].mxu0
    %v6227 = vadd.f32 %v6034, %v6226
    %v6228 = vpop.f32.mrb[0].mxu0
    %v6229 = vpop.f32.mrb[0].mxu0
    %v6230 = vadd.f32 %v6037, %v6229
    %v6231 = vpop.f32.mrb[0].mxu0
    %6232 = vmatprep.mubr.bf16.mxu0 %v3661
    %6233 = vmatmul.mubr.bf16.gmra.mrb[0].mxu0 %v3581
    %v6234 = vpop.f32.mrb[0].mxu0
    %v6235 = vadd.f32 %v6042, %v6234
    %v6236 = vpop.f32.mrb[0].mxu0
    %v6237 = vpop.f32.mrb[0].mxu0
    %v6238 = vadd.f32 %v6045, %v6237
    %v6239 = vpop.f32.mrb[0].mxu0
    %6240 = vmatprep.mubr.bf16.mxu0 %v3665
    %6241 = vmatmul.mubr.bf16.gmra.mrb[0].mxu0 %v3583
    %v6242 = vpop.f32.mrb[0].mxu0
    %v6243 = vadd.f32 %v6050, %v6242
    %v6244 = vpop.f32.mrb[0].mxu0
    %v6245 = vpop.f32.mrb[0].mxu0
    %v6246 = vadd.f32 %v6053, %v6245
    %v6247 = vpop.f32.mrb[0].mxu0
    %6248 = vmatprep.mubr.bf16.mxu0 %v3669
    %6249 = vmatmul.mubr.bf16.gmra.mrb[0].mxu0 %v3585
    %v6250 = vpop.f32.mrb[0].mxu0
    %v6251 = vadd.f32 %v6058, %v6250
    %v6252 = vpop.f32.mrb[0].mxu0
    %v6253 = vpop.f32.mrb[0].mxu0
    %v6254 = vadd.f32 %v6061, %v6253
    %v6255 = vpop.f32.mrb[0].mxu0
    %6256 = vmatprep.mubr.bf16.mxu0 %v3673
    %6257 = vmatmul.mubr.bf16.gmra.mrb[0].mxu0 %v3587
    %v6258 = vpop.f32.mrb[0].mxu0
    %v6259 = vadd.f32 %v6066, %v6258
    %v6260 = vpop.f32.mrb[0].mxu0
    %v6261 = vpop.f32.mrb[0].mxu0
    %v6262 = vadd.f32 %v6069, %v6261
    %v6263 = vpop.f32.mrb[0].mxu0
    %6264 = vmatprep.mubr.bf16.mxu0 %v3677
    %6265 = vmatmul.mubr.bf16.gmra.mrb[0].mxu0 %v3589
    %v6266 = vpop.f32.mrb[0].mxu0
    %v6267 = vadd.f32 %v6074, %v6266
    %v6268 = vpop.f32.mrb[0].mxu0
    %v6269 = vpop.f32.mrb[0].mxu0
    %v6270 = vadd.f32 %v6077, %v6269
    %v6271 = vpop.f32.mrb[0].mxu0
    %6272 = vmatprep.mubr.bf16.mxu0 %v3681
    %6273 = vmatmul.mubr.bf16.gmra.mrb[0].mxu0 %v3591
    %v6274 = vpop.f32.mrb[0].mxu0
    %v6275 = vadd.f32 %v6082, %v6274
    %v6276 = vpop.f32.mrb[0].mxu0
    %v6277 = vpop.f32.mrb[0].mxu0
    %v6278 = vadd.f32 %v6085, %v6277
    %v6279 = vpop.f32.mrb[0].mxu0
    %6280 = vmatprep.mubr.bf16.mxu0 %v3685
    %6281 = vmatmul.mubr.bf16.gmra.mrb[0].mxu0 %v3593
    %v6282 = vpop.f32.mrb[0].mxu0
    %v6283 = vadd.f32 %v6090, %v6282
    %v6284 = vpop.f32.mrb[0].mxu0
    %v6285 = vpop.f32.mrb[0].mxu0
    %v6286 = vadd.f32 %v6093, %v6285
    %v6287 = vpop.f32.mrb[0].mxu0
    %6288 = vmatprep.mubr.bf16.mxu0 %v3689
    %6289 = vmatmul.mubr.bf16.gmra.mrb[0].mxu0 %v3595
    %v6290 = vpop.f32.mrb[0].mxu0
    %v6291 = vadd.f32 %v6098, %v6290
    %v6292 = vpop.f32.mrb[0].mxu0
    %v6293 = vpop.f32.mrb[0].mxu0
    %v6294 = vadd.f32 %v6101, %v6293
    %v6295 = vpop.f32.mrb[0].mxu0
    %6296 = vmatprep.mubr.bf16.mxu0 %v3693
    %6297 = vmatmul.mubr.bf16.gmra.mrb[0].mxu0 %v3597
    %v6298 = vpop.f32.mrb[0].mxu0
    %v6299 = vadd.f32 %v6106, %v6298
    %v6300 = vpop.f32.mrb[0].mxu0
    %v6301 = vpop.f32.mrb[0].mxu0
    %v6302 = vadd.f32 %v6109, %v6301
    %v6303 = vpop.f32.mrb[0].mxu0
    %6304 = vmatprep.mubr.bf16.mxu0 %v3697
    %6305 = vmatmul.mubr.bf16.gmra.mrb[0].mxu0 %v3599
    %v6306 = vpop.f32.mrb[0].mxu0
    %v6307 = vadd.f32 %v6114, %v6306
    %v6308 = vpop.f32.mrb[0].mxu0
    %v6309 = vpop.f32.mrb[0].mxu0
    %v6310 = vadd.f32 %v6117, %v6309
    %v6311 = vpop.f32.mrb[0].mxu0
    %6312 = vmatprep.mubr.bf16.mxu0 %v3701
    %6313 = vmatmul.mubr.bf16.gmra.mrb[0].mxu0 %v3601
    %v6314 = vpop.f32.mrb[0].mxu0
    %v6315 = vadd.f32 %v6122, %v6314
    %v6316 = vpop.f32.mrb[0].mxu0
    %v6317 = vpop.f32.mrb[0].mxu0
    %v6318 = vadd.f32 %v6125, %v6317
    %v6319 = vpop.f32.mrb[0].mxu0
    %6320 = vmatprep.mubr.bf16.mxu0 %v3705
    %6321 = vmatmul.mubr.bf16.gmra.mrb[0].mxu0 %v3603
    %v6322 = vpop.f32.mrb[0].mxu0
    %v6323 = vadd.f32 %v6130, %v6322
    %v6324 = vpop.f32.mrb[0].mxu0
    %v6325 = vpop.f32.mrb[0].mxu0
    %v6326 = vadd.f32 %v6133, %v6325
    %v6327 = vpop.f32.mrb[0].mxu0
    %6328 = vmatprep.mubr.bf16.mxu0 %v3711
    %6329 = vmatmul.mubr.bf16.gmra.mrb[0].mxu0 %v3605
    %v6330 = vpop.f32.mrb[0].mxu0
    %v6331 = vadd.f32 %v6138, %v6330
    %v6332 = vpop.f32.mrb[0].mxu0
    %v6333 = vpop.f32.mrb[0].mxu0
    %v6334 = vadd.f32 %v6141, %v6333
    %v6335 = vpop.f32.mrb[0].mxu0
    %6336 = vmatprep.mubr.bf16.mxu0 %v3821
    %6337 = vmatmul.mubr.bf16.gmra.mrb[0].mxu0 %v3813
    %v6338 = vpop.f32.mrb[0].mxu0
    %v6339 = vadd.f32 %v6146, %v6338
    %v6340 = vpop.f32.mrb[0].mxu0
    %v6341 = vpop.f32.mrb[0].mxu0
    %v6342 = vadd.f32 %v6149, %v6341
    %v6343 = vpop.f32.mrb[0].mxu0
    %6344 = vmatprep.mubr.bf16.mxu0 %v3827
    %6345 = vmatmul.mubr.bf16.gmra.mrb[0].mxu0 %v3815
    %v6346 = vpop.f32.mrb[0].mxu0
    %v6347 = vadd.f32 %v6154, %v6346
    %v6348 = vpop.f32.mrb[0].mxu0
    %v6349 = vpop.f32.mrb[0].mxu0
    %v6350 = vadd.f32 %v6157, %v6349
    %v6351 = vpop.f32.mrb[0].mxu0
    %6352 = vmatprep.mubr.bf16.mxu0 %v3863
    %6353 = vmatmul.mubr.bf16.gmra.mrb[0].mxu0 %v3855
    %v6354 = vpop.f32.mrb[0].mxu0
    %v6355 = vadd.f32 %v6162, %v6354
    %v6356 = vpop.f32.mrb[0].mxu0
    %v6357 = vpop.f32.mrb[0].mxu0
    %v6358 = vadd.f32 %v6165, %v6357
    %v6359 = vpop.f32.mrb[0].mxu0
    %6360 = vmatprep.mubr.bf16.mxu0 %v3869
    %6361 = vmatmul.mubr.bf16.gmra.mrb[0].mxu0 %v3857
    %v6362 = vpop.f32.mrb[0].mxu0
    %v6363 = vadd.f32 %v6170, %v6362
    %v6364 = vpop.f32.mrb[0].mxu0
    %v6365 = vpop.f32.mrb[0].mxu0
    %v6366 = vadd.f32 %v6173, %v6365
    %v6367 = vpop.f32.mrb[0].mxu0
    %6368 = vdwg.mxu0
    %6369 = vmatprep.subr.bf16.mxu0 0
    %6370 = vmatpush1.bf16.msra.mxu0 %v4926
    %6371 = vmatprep.subr.bf16.mxu0 0
    %6372 = vmatpush1.bf16.msra.mxu0 %v4927
    %6373 = vmatprep.subr.bf16.mxu0 0
    %6374 = vmatpush1.bf16.msra.mxu0 %v4928
    %6375 = vmatprep.subr.bf16.mxu0 0
    %6376 = vmatpush1.bf16.msra.mxu0 %v4929
    %6377 = vmatprep.subr.bf16.mxu0 0
    %6378 = vmatpush1.bf16.msra.mxu0 %v4930
    %6379 = vmatprep.subr.bf16.mxu0 0
    %6380 = vmatpush1.bf16.msra.mxu0 %v4931
    %6381 = vmatprep.subr.bf16.mxu0 0
    %6382 = vmatpush1.bf16.msra.mxu0 %v4932
    %6383 = vmatprep.subr.bf16.mxu0 0
    %6384 = vmatpush1.bf16.msra.mxu0 %v4933
    %6385 = vmatprep.subr.bf16.mxu0 0
    %6386 = vmatpush1.bf16.msra.mxu0 %v4934
    %6387 = vmatprep.subr.bf16.mxu0 0
    %6388 = vmatpush1.bf16.msra.mxu0 %v4935
    %6389 = vmatprep.subr.bf16.mxu0 0
    %6390 = vmatpush1.bf16.msra.mxu0 %v4936
    %6391 = vmatprep.subr.bf16.mxu0 0
    %6392 = vmatpush1.bf16.msra.mxu0 %v4937
    %6393 = vmatprep.subr.bf16.mxu0 0
    %6394 = vmatpush1.bf16.msra.mxu0 %v4938
    %6395 = vmatprep.subr.bf16.mxu0 0
    %6396 = vmatpush1.bf16.msra.mxu0 %v4939
    %6397 = vmatprep.subr.bf16.mxu0 0
    %6398 = vmatpush1.bf16.msra.mxu0 %v4940
    %6399 = vmatprep.subr.bf16.mxu0 0
    %6400 = vmatpush1.bf16.msra.mxu0 %v4941
    %6401 = vmatprep.mubr.bf16.mxu0 %v3335
    %6402 = vmatmul.mubr.bf16.gmra.mrb[0].mxu0 %v3743
    %v6403 = vpop.f32.mrb[0].mxu0
    %v6404 = vadd.f32 %v6211, %v6403
    %v6405 = vpop.f32.mrb[0].mxu0
    %v6406 = vpop.f32.mrb[0].mxu0
    %v6407 = vadd.f32 %v6214, %v6406
    %v6408 = vpop.f32.mrb[0].mxu0
    %6409 = vmatprep.mubr.bf16.mxu0 %v3336
    %6410 = vmatmul.mubr.bf16.gmra.mrb[0].mxu0 %v3745
    %v6411 = vpop.f32.mrb[0].mxu0
    %v6412 = vadd.f32 %v6219, %v6411
    %v6413 = vpop.f32.mrb[0].mxu0
    %v6414 = vpop.f32.mrb[0].mxu0
    %v6415 = vadd.f32 %v6222, %v6414
    %v6416 = vpop.f32.mrb[0].mxu0
    %6417 = vmatprep.mubr.bf16.mxu0 %v3337
    %6418 = vmatmul.mubr.bf16.gmra.mrb[0].mxu0 %v3747
    %v6419 = vpop.f32.mrb[0].mxu0
    %v6420 = vadd.f32 %v6227, %v6419
    %v6421 = vpop.f32.mrb[0].mxu0
    %v6422 = vpop.f32.mrb[0].mxu0
    %v6423 = vadd.f32 %v6230, %v6422
    %v6424 = vpop.f32.mrb[0].mxu0
    %6425 = vmatprep.mubr.bf16.mxu0 %v3338
    %6426 = vmatmul.mubr.bf16.gmra.mrb[0].mxu0 %v3749
    %v6427 = vpop.f32.mrb[0].mxu0
    %v6428 = vadd.f32 %v6235, %v6427
    %v6429 = vpop.f32.mrb[0].mxu0
    %v6430 = vpop.f32.mrb[0].mxu0
    %v6431 = vadd.f32 %v6238, %v6430
    %v6432 = vpop.f32.mrb[0].mxu0
    %6433 = vmatprep.mubr.bf16.mxu0 %v3339
    %6434 = vmatmul.mubr.bf16.gmra.mrb[0].mxu0 %v3751
    %v6435 = vpop.f32.mrb[0].mxu0
    %v6436 = vadd.f32 %v6243, %v6435
    %v6437 = vpop.f32.mrb[0].mxu0
    %v6438 = vpop.f32.mrb[0].mxu0
    %v6439 = vadd.f32 %v6246, %v6438
    %v6440 = vpop.f32.mrb[0].mxu0
    %6441 = vmatprep.mubr.bf16.mxu0 %v3340
    %6442 = vmatmul.mubr.bf16.gmra.mrb[0].mxu0 %v3753
    %v6443 = vpop.f32.mrb[0].mxu0
    %v6444 = vadd.f32 %v6251, %v6443
    %v6445 = vpop.f32.mrb[0].mxu0
    %v6446 = vpop.f32.mrb[0].mxu0
    %v6447 = vadd.f32 %v6254, %v6446
    %v6448 = vpop.f32.mrb[0].mxu0
    %6449 = vmatprep.mubr.bf16.mxu0 %v3341
    %6450 = vmatmul.mubr.bf16.gmra.mrb[0].mxu0 %v3755
    %v6451 = vpop.f32.mrb[0].mxu0
    %v6452 = vadd.f32 %v6259, %v6451
    %v6453 = vpop.f32.mrb[0].mxu0
    %v6454 = vpop.f32.mrb[0].mxu0
    %v6455 = vadd.f32 %v6262, %v6454
    %v6456 = vpop.f32.mrb[0].mxu0
    %6457 = vmatprep.mubr.bf16.mxu0 %v3342
    %6458 = vmatmul.mubr.bf16.gmra.mrb[0].mxu0 %v3757
    %v6459 = vpop.f32.mrb[0].mxu0
    %v6460 = vadd.f32 %v6267, %v6459
    %v6461 = vpop.f32.mrb[0].mxu0
    %v6462 = vpop.f32.mrb[0].mxu0
    %v6463 = vadd.f32 %v6270, %v6462
    %v6464 = vpop.f32.mrb[0].mxu0
    %6465 = vmatprep.mubr.bf16.mxu0 %v3343
    %6466 = vmatmul.mubr.bf16.gmra.mrb[0].mxu0 %v3759
    %v6467 = vpop.f32.mrb[0].mxu0
    %v6468 = vadd.f32 %v6275, %v6467
    %v6469 = vpop.f32.mrb[0].mxu0
    %v6470 = vpop.f32.mrb[0].mxu0
    %v6471 = vadd.f32 %v6278, %v6470
    %v6472 = vpop.f32.mrb[0].mxu0
    %6473 = vmatprep.mubr.bf16.mxu0 %v3344
    %6474 = vmatmul.mubr.bf16.gmra.mrb[0].mxu0 %v3761
    %v6475 = vpop.f32.mrb[0].mxu0
    %v6476 = vadd.f32 %v6283, %v6475
    %v6477 = vpop.f32.mrb[0].mxu0
    %v6478 = vpop.f32.mrb[0].mxu0
    %v6479 = vadd.f32 %v6286, %v6478
    %v6480 = vpop.f32.mrb[0].mxu0
    %6481 = vmatprep.mubr.bf16.mxu0 %v3345
    %6482 = vmatmul.mubr.bf16.gmra.mrb[0].mxu0 %v3763
    %v6483 = vpop.f32.mrb[0].mxu0
    %v6484 = vadd.f32 %v6291, %v6483
    %v6485 = vpop.f32.mrb[0].mxu0
    %v6486 = vpop.f32.mrb[0].mxu0
    %v6487 = vadd.f32 %v6294, %v6486
    %v6488 = vpop.f32.mrb[0].mxu0
    %6489 = vmatprep.mubr.bf16.mxu0 %v3346
    %6490 = vmatmul.mubr.bf16.gmra.mrb[0].mxu0 %v3765
    %v6491 = vpop.f32.mrb[0].mxu0
    %v6492 = vadd.f32 %v6299, %v6491
    %v6493 = vpop.f32.mrb[0].mxu0
    %v6494 = vpop.f32.mrb[0].mxu0
    %v6495 = vadd.f32 %v6302, %v6494
    %v6496 = vpop.f32.mrb[0].mxu0
    %6497 = vmatprep.mubr.bf16.mxu0 %v3347
    %6498 = vmatmul.mubr.bf16.gmra.mrb[0].mxu0 %v3767
    %v6499 = vpop.f32.mrb[0].mxu0
    %v6500 = vadd.f32 %v6307, %v6499
    %v6501 = vpop.f32.mrb[0].mxu0
    %v6502 = vpop.f32.mrb[0].mxu0
    %v6503 = vadd.f32 %v6310, %v6502
    %v6504 = vpop.f32.mrb[0].mxu0
    %6505 = vmatprep.mubr.bf16.mxu0 %v3348
    %6506 = vmatmul.mubr.bf16.gmra.mrb[0].mxu0 %v3769
    %v6507 = vpop.f32.mrb[0].mxu0
    %v6508 = vadd.f32 %v6315, %v6507
    %v6509 = vpop.f32.mrb[0].mxu0
    %v6510 = vpop.f32.mrb[0].mxu0
    %v6511 = vadd.f32 %v6318, %v6510
    %v6512 = vpop.f32.mrb[0].mxu0
    %6513 = vmatprep.mubr.bf16.mxu0 %v3349
    %6514 = vmatmul.mubr.bf16.gmra.mrb[0].mxu0 %v3771
    %v6515 = vpop.f32.mrb[0].mxu0
    %v6516 = vadd.f32 %v6323, %v6515
    %v6517 = vpop.f32.mrb[0].mxu0
    %v6518 = vpop.f32.mrb[0].mxu0
    %v6519 = vadd.f32 %v6326, %v6518
    %v6520 = vpop.f32.mrb[0].mxu0
    %6521 = vmatprep.mubr.bf16.mxu0 %v3350
    %6522 = vmatmul.mubr.bf16.gmra.mrb[0].mxu0 %v3773
    %v6523 = vpop.f32.mrb[0].mxu0
    %v6524 = vadd.f32 %v6331, %v6523
    %v6525 = vpop.f32.mrb[0].mxu0
    %v6526 = vpop.f32.mrb[0].mxu0
    %v6527 = vadd.f32 %v6334, %v6526
    %v6528 = vpop.f32.mrb[0].mxu0
    %6529 = vmatprep.mubr.bf16.mxu0 %v3351
    %6530 = vmatmul.mubr.bf16.gmra.mrb[0].mxu0 %v3831
    %v6531 = vpop.f32.mrb[0].mxu0
    %v6532 = vadd.f32 %v6339, %v6531
    %v6533 = vpop.f32.mrb[0].mxu0
    %v6534 = vpop.f32.mrb[0].mxu0
    %v6535 = vadd.f32 %v6342, %v6534
    %v6536 = vpop.f32.mrb[0].mxu0
    %6537 = vmatprep.mubr.bf16.mxu0 %v3352
    %6538 = vmatmul.mubr.bf16.gmra.mrb[0].mxu0 %v3833
    %v6539 = vpop.f32.mrb[0].mxu0
    %v6540 = vadd.f32 %v6347, %v6539
    %v6541 = vpop.f32.mrb[0].mxu0
    %v6542 = vpop.f32.mrb[0].mxu0
    %v6543 = vadd.f32 %v6350, %v6542
    %v6544 = vpop.f32.mrb[0].mxu0
    %6545 = vmatprep.mubr.bf16.mxu0 %v3353
    %6546 = vmatmul.mubr.bf16.gmra.mrb[0].mxu0 %v3873
    %v6547 = vpop.f32.mrb[0].mxu0
    %v6548 = vadd.f32 %v6355, %v6547
    %v6549 = vpop.f32.mrb[0].mxu0
    %v6550 = vpop.f32.mrb[0].mxu0
    %v6551 = vadd.f32 %v6358, %v6550
    %v6552 = vpop.f32.mrb[0].mxu0
    %6553 = vmatprep.mubr.bf16.mxu0 %v3354
    %6554 = vmatmul.mubr.bf16.gmra.mrb[0].mxu0 %v3875
    %v6555 = vpop.f32.mrb[0].mxu0
    %v6556 = vadd.f32 %v6363, %v6555
    %v6557 = vpop.f32.mrb[0].mxu0
    %v6558 = vpop.f32.mrb[0].mxu0
    %v6559 = vadd.f32 %v6366, %v6558
    %v6560 = vpop.f32.mrb[0].mxu0
    %6561 = vdwg.mxu0
    %6562 = vmatprep.subr.bf16.mxu0 0
    %6563 = vmatpush1.bf16.msra.mxu0 %v4942
    %6564 = vmatprep.subr.bf16.mxu0 0
    %6565 = vmatpush1.bf16.msra.mxu0 %v4943
    %6566 = vmatprep.subr.bf16.mxu0 0
    %6567 = vmatpush1.bf16.msra.mxu0 %v4944
    %6568 = vmatprep.subr.bf16.mxu0 0
    %6569 = vmatpush1.bf16.msra.mxu0 %v4945
    %6570 = vmatprep.subr.bf16.mxu0 0
    %6571 = vmatpush1.bf16.msra.mxu0 %v4946
    %6572 = vmatprep.subr.bf16.mxu0 0
    %6573 = vmatpush1.bf16.msra.mxu0 %v4947
    %6574 = vmatprep.subr.bf16.mxu0 0
    %6575 = vmatpush1.bf16.msra.mxu0 %v4948
    %6576 = vmatprep.subr.bf16.mxu0 0
    %6577 = vmatpush1.bf16.msra.mxu0 %v4949
    %6578 = vmatprep.subr.bf16.mxu0 0
    %6579 = vmatpush1.bf16.msra.mxu0 %v4950
    %6580 = vmatprep.subr.bf16.mxu0 0
    %6581 = vmatpush1.bf16.msra.mxu0 %v4951
    %6582 = vmatprep.subr.bf16.mxu0 0
    %6583 = vmatpush1.bf16.msra.mxu0 %v4952
    %6584 = vmatprep.subr.bf16.mxu0 0
    %6585 = vmatpush1.bf16.msra.mxu0 %v4953
    %6586 = vmatprep.subr.bf16.mxu0 0
    %6587 = vmatpush1.bf16.msra.mxu0 %v4954
    %6588 = vmatprep.subr.bf16.mxu0 0
    %6589 = vmatpush1.bf16.msra.mxu0 %v4955
    %6590 = vmatprep.subr.bf16.mxu0 0
    %6591 = vmatpush1.bf16.msra.mxu0 %v4956
    %6592 = vmatprep.subr.bf16.mxu0 0
    %6593 = vmatpush1.bf16.msra.mxu0 %v4957
    %6594 = vmatprep.mubr.bf16.mxu0 %v4009
    %6595 = vmatmul.mubr.bf16.gmra.mrb[0].mxu0 %v3418
    %v6596 = vpop.f32.mrb[0].mxu0
    %v6597 = vadd.f32 %v6404, %v6596
    %v6598 = vpop.f32.mrb[0].mxu0
    %v6599 = vpop.f32.mrb[0].mxu0
    %v6600 = vadd.f32 %v6407, %v6599
    %v6601 = vpop.f32.mrb[0].mxu0
    %6602 = vmatprep.mubr.bf16.mxu0 %v4085
    %6603 = vmatmul.mubr.bf16.gmra.mrb[0].mxu0 %v3426
    %v6604 = vpop.f32.mrb[0].mxu0
    %v6605 = vadd.f32 %v6412, %v6604
    %v6606 = vpop.f32.mrb[0].mxu0
    %v6607 = vpop.f32.mrb[0].mxu0
    %v6608 = vadd.f32 %v6415, %v6607
    %v6609 = vpop.f32.mrb[0].mxu0
    %6610 = vmatprep.mubr.bf16.mxu0 %v4057
    %6611 = vmatmul.mubr.bf16.gmra.mrb[0].mxu0 %v3434
    %v6612 = vpop.f32.mrb[0].mxu0
    %v6613 = vadd.f32 %v6420, %v6612
    %v6614 = vpop.f32.mrb[0].mxu0
    %v6615 = vpop.f32.mrb[0].mxu0
    %v6616 = vadd.f32 %v6423, %v6615
    %v6617 = vpop.f32.mrb[0].mxu0
    %6618 = vmatprep.mubr.bf16.mxu0 %v4109
    %6619 = vmatmul.mubr.bf16.gmra.mrb[0].mxu0 %v3442
    %v6620 = vpop.f32.mrb[0].mxu0
    %v6621 = vadd.f32 %v6428, %v6620
    %v6622 = vpop.f32.mrb[0].mxu0
    %v6623 = vpop.f32.mrb[0].mxu0
    %v6624 = vadd.f32 %v6431, %v6623
    %v6625 = vpop.f32.mrb[0].mxu0
    %6626 = vmatprep.mubr.bf16.mxu0 %v4141
    %6627 = vmatmul.mubr.bf16.gmra.mrb[0].mxu0 %v3450
    %v6628 = vpop.f32.mrb[0].mxu0
    %v6629 = vadd.f32 %v6436, %v6628
    %v6630 = vpop.f32.mrb[0].mxu0
    %v6631 = vpop.f32.mrb[0].mxu0
    %v6632 = vadd.f32 %v6439, %v6631
    %v6633 = vpop.f32.mrb[0].mxu0
    %6634 = vmatprep.mubr.bf16.mxu0 %v4173
    %6635 = vmatmul.mubr.bf16.gmra.mrb[0].mxu0 %v3458
    %v6636 = vpop.f32.mrb[0].mxu0
    %v6637 = vadd.f32 %v6444, %v6636
    %v6638 = vpop.f32.mrb[0].mxu0
    %v6639 = vpop.f32.mrb[0].mxu0
    %v6640 = vadd.f32 %v6447, %v6639
    %v6641 = vpop.f32.mrb[0].mxu0
    %6642 = vmatprep.mubr.bf16.mxu0 %v4205
    %6643 = vmatmul.mubr.bf16.gmra.mrb[0].mxu0 %v3466
    %v6644 = vpop.f32.mrb[0].mxu0
    %v6645 = vadd.f32 %v6452, %v6644
    %v6646 = vpop.f32.mrb[0].mxu0
    %v6647 = vpop.f32.mrb[0].mxu0
    %v6648 = vadd.f32 %v6455, %v6647
    %v6649 = vpop.f32.mrb[0].mxu0
    %6650 = vmatprep.mubr.bf16.mxu0 %v4237
    %6651 = vmatmul.mubr.bf16.gmra.mrb[0].mxu0 %v3474
    %v6652 = vpop.f32.mrb[0].mxu0
    %v6653 = vadd.f32 %v6460, %v6652
    %v6654 = vpop.f32.mrb[0].mxu0
    %v6655 = vpop.f32.mrb[0].mxu0
    %v6656 = vadd.f32 %v6463, %v6655
    %v6657 = vpop.f32.mrb[0].mxu0
    %6658 = vmatprep.mubr.bf16.mxu0 %v4269
    %6659 = vmatmul.mubr.bf16.gmra.mrb[0].mxu0 %v3482
    %v6660 = vpop.f32.mrb[0].mxu0
    %v6661 = vadd.f32 %v6468, %v6660
    %v6662 = vpop.f32.mrb[0].mxu0
    %v6663 = vpop.f32.mrb[0].mxu0
    %v6664 = vadd.f32 %v6471, %v6663
    %v6665 = vpop.f32.mrb[0].mxu0
    %6666 = vmatprep.mubr.bf16.mxu0 %v4301
    %6667 = vmatmul.mubr.bf16.gmra.mrb[0].mxu0 %v3490
    %v6668 = vpop.f32.mrb[0].mxu0
    %v6669 = vadd.f32 %v6476, %v6668
    %v6670 = vpop.f32.mrb[0].mxu0
    %v6671 = vpop.f32.mrb[0].mxu0
    %v6672 = vadd.f32 %v6479, %v6671
    %v6673 = vpop.f32.mrb[0].mxu0
    %6674 = vmatprep.mubr.bf16.mxu0 %v4333
    %6675 = vmatmul.mubr.bf16.gmra.mrb[0].mxu0 %v3498
    %v6676 = vpop.f32.mrb[0].mxu0
    %v6677 = vadd.f32 %v6484, %v6676
    %v6678 = vpop.f32.mrb[0].mxu0
    %v6679 = vpop.f32.mrb[0].mxu0
    %v6680 = vadd.f32 %v6487, %v6679
    %v6681 = vpop.f32.mrb[0].mxu0
    %6682 = vmatprep.mubr.bf16.mxu0 %v4365
    %6683 = vmatmul.mubr.bf16.gmra.mrb[0].mxu0 %v3506
    %v6684 = vpop.f32.mrb[0].mxu0
    %v6685 = vadd.f32 %v6492, %v6684
    %v6686 = vpop.f32.mrb[0].mxu0
    %v6687 = vpop.f32.mrb[0].mxu0
    %v6688 = vadd.f32 %v6495, %v6687
    %v6689 = vpop.f32.mrb[0].mxu0
    %6690 = vmatprep.mubr.bf16.mxu0 %v4397
    %6691 = vmatmul.mubr.bf16.gmra.mrb[0].mxu0 %v3514
    %v6692 = vpop.f32.mrb[0].mxu0
    %v6693 = vadd.f32 %v6500, %v6692
    %v6694 = vpop.f32.mrb[0].mxu0
    %v6695 = vpop.f32.mrb[0].mxu0
    %v6696 = vadd.f32 %v6503, %v6695
    %v6697 = vpop.f32.mrb[0].mxu0
    %6698 = vmatprep.mubr.bf16.mxu0 %v4429
    %6699 = vmatmul.mubr.bf16.gmra.mrb[0].mxu0 %v3522
    %v6700 = vpop.f32.mrb[0].mxu0
    %v6701 = vadd.f32 %v6508, %v6700
    %v6702 = vpop.f32.mrb[0].mxu0
    %v6703 = vpop.f32.mrb[0].mxu0
    %v6704 = vadd.f32 %v6511, %v6703
    %v6705 = vpop.f32.mrb[0].mxu0
    %6706 = vmatprep.mubr.bf16.mxu0 %v4461
    %6707 = vmatmul.mubr.bf16.gmra.mrb[0].mxu0 %v3799
    %v6708 = vpop.f32.mrb[0].mxu0
    %v6709 = vadd.f32 %v6516, %v6708
    %v6710 = vpop.f32.mrb[0].mxu0
    %v6711 = vpop.f32.mrb[0].mxu0
    %v6712 = vadd.f32 %v6519, %v6711
    %v6713 = vpop.f32.mrb[0].mxu0
    %6714 = vmatprep.mubr.bf16.mxu0 %v4493
    %6715 = vmatmul.mubr.bf16.gmra.mrb[0].mxu0 %v3807
    %v6716 = vpop.f32.mrb[0].mxu0
    %v6717 = vadd.f32 %v6524, %v6716
    %v6718 = vpop.f32.mrb[0].mxu0
    %v6719 = vpop.f32.mrb[0].mxu0
    %v6720 = vadd.f32 %v6527, %v6719
    %v6721 = vpop.f32.mrb[0].mxu0
    %6722 = vmatprep.mubr.bf16.mxu0 %v4525
    %6723 = vmatmul.mubr.bf16.gmra.mrb[0].mxu0 %v3841
    %v6724 = vpop.f32.mrb[0].mxu0
    %v6725 = vadd.f32 %v6532, %v6724
    %v6726 = vpop.f32.mrb[0].mxu0
    %v6727 = vpop.f32.mrb[0].mxu0
    %v6728 = vadd.f32 %v6535, %v6727
    %v6729 = vpop.f32.mrb[0].mxu0
    %6730 = vmatprep.mubr.bf16.mxu0 %v4557
    %6731 = vmatmul.mubr.bf16.gmra.mrb[0].mxu0 %v3849
    %v6732 = vpop.f32.mrb[0].mxu0
    %v6733 = vadd.f32 %v6540, %v6732
    %v6734 = vpop.f32.mrb[0].mxu0
    %v6735 = vpop.f32.mrb[0].mxu0
    %v6736 = vadd.f32 %v6543, %v6735
    %v6737 = vpop.f32.mrb[0].mxu0
    %6738 = vmatprep.mubr.bf16.mxu0 %v4589
    %6739 = vmatmul.mubr.bf16.gmra.mrb[0].mxu0 %v3883
    %v6740 = vpop.f32.mrb[0].mxu0
    %v6741 = vadd.f32 %v6548, %v6740
    %v6742 = vpop.f32.mrb[0].mxu0
    %v6743 = vpop.f32.mrb[0].mxu0
    %v6744 = vadd.f32 %v6551, %v6743
    %v6745 = vpop.f32.mrb[0].mxu0
    %6746 = vmatprep.mubr.bf16.mxu0 %v4674
    %6747 = vmatmul.mubr.bf16.gmra.mrb[0].mxu0 %v3891
    %v6748 = vpop.f32.mrb[0].mxu0
    %v6749 = vadd.f32 %v6556, %v6748
    %v6750 = vpop.f32.mrb[0].mxu0
    %v6751 = vpop.f32.mrb[0].mxu0
    %v6752 = vadd.f32 %v6559, %v6751
    %v6753 = vpop.f32.mrb[0].mxu0
    %6754 = vdwg.mxu0
    %6755 = vmatprep.subr.bf16.mxu0 0
    %6756 = vmatpush1.bf16.msra.mxu0 %v4958
    %6757 = vmatprep.subr.bf16.mxu0 0
    %6758 = vmatpush1.bf16.msra.mxu0 %v4959
    %6759 = vmatprep.subr.bf16.mxu0 0
    %6760 = vmatpush1.bf16.msra.mxu0 %v4960
    %6761 = vmatprep.subr.bf16.mxu0 0
    %6762 = vmatpush1.bf16.msra.mxu0 %v4961
    %6763 = vmatprep.subr.bf16.mxu0 0
    %6764 = vmatpush1.bf16.msra.mxu0 %v4962
    %6765 = vmatprep.subr.bf16.mxu0 0
    %6766 = vmatpush1.bf16.msra.mxu0 %v4963
    %6767 = vmatprep.subr.bf16.mxu0 0
    %6768 = vmatpush1.bf16.msra.mxu0 %v4964
    %6769 = vmatprep.subr.bf16.mxu0 0
    %6770 = vmatpush1.bf16.msra.mxu0 %v4965
    %6771 = vmatprep.subr.bf16.mxu0 0
    %6772 = vmatpush1.bf16.msra.mxu0 %v4966
    %6773 = vmatprep.subr.bf16.mxu0 0
    %6774 = vmatpush1.bf16.msra.mxu0 %v4967
    %6775 = vmatprep.subr.bf16.mxu0 0
    %6776 = vmatpush1.bf16.msra.mxu0 %v4968
    %6777 = vmatprep.subr.bf16.mxu0 0
    %6778 = vmatpush1.bf16.msra.mxu0 %v4969
    %6779 = vmatprep.subr.bf16.mxu0 0
    %6780 = vmatpush1.bf16.msra.mxu0 %v4970
    %6781 = vmatprep.subr.bf16.mxu0 0
    %6782 = vmatpush1.bf16.msra.mxu0 %v4971
    %6783 = vmatprep.subr.bf16.mxu0 0
    %6784 = vmatpush1.bf16.msra.mxu0 %v4972
    %6785 = vmatprep.subr.bf16.mxu0 0
    %6786 = vmatpush1.bf16.msra.mxu0 %v4973
    %6787 = vmatprep.mubr.bf16.mxu0 %v4033
    %6788 = vmatmul.mubr.bf16.gmra.mrb[0].mxu0 %v4021
    %v6789 = vpop.f32.mrb[0].mxu0
    %v6790 = vadd.f32 %v6597, %v6789
    %v6791 = vpop.f32.mrb[0].mxu0
    %v6792 = vpop.f32.mrb[0].mxu0
    %v6793 = vadd.f32 %v6600, %v6792
    %v6794 = vpop.f32.mrb[0].mxu0
    %6795 = vmatprep.mubr.bf16.mxu0 %v4093
    %6796 = vmatmul.mubr.bf16.gmra.mrb[0].mxu0 %v4089
    %v6797 = vpop.f32.mrb[0].mxu0
    %v6798 = vadd.f32 %v6605, %v6797
    %v6799 = vpop.f32.mrb[0].mxu0
    %v6800 = vpop.f32.mrb[0].mxu0
    %v6801 = vadd.f32 %v6608, %v6800
    %v6802 = vpop.f32.mrb[0].mxu0
    %6803 = vmatprep.mubr.bf16.mxu0 %v4081
    %6804 = vmatmul.mubr.bf16.gmra.mrb[0].mxu0 %v4069
    %v6805 = vpop.f32.mrb[0].mxu0
    %v6806 = vadd.f32 %v6613, %v6805
    %v6807 = vpop.f32.mrb[0].mxu0
    %v6808 = vpop.f32.mrb[0].mxu0
    %v6809 = vadd.f32 %v6616, %v6808
    %v6810 = vpop.f32.mrb[0].mxu0
    %6811 = vmatprep.mubr.bf16.mxu0 %v4125
    %6812 = vmatmul.mubr.bf16.gmra.mrb[0].mxu0 %v4117
    %v6813 = vpop.f32.mrb[0].mxu0
    %v6814 = vadd.f32 %v6621, %v6813
    %v6815 = vpop.f32.mrb[0].mxu0
    %v6816 = vpop.f32.mrb[0].mxu0
    %v6817 = vadd.f32 %v6624, %v6816
    %v6818 = vpop.f32.mrb[0].mxu0
    %6819 = vmatprep.mubr.bf16.mxu0 %v4157
    %6820 = vmatmul.mubr.bf16.gmra.mrb[0].mxu0 %v4149
    %v6821 = vpop.f32.mrb[0].mxu0
    %v6822 = vadd.f32 %v6629, %v6821
    %v6823 = vpop.f32.mrb[0].mxu0
    %v6824 = vpop.f32.mrb[0].mxu0
    %v6825 = vadd.f32 %v6632, %v6824
    %v6826 = vpop.f32.mrb[0].mxu0
    %6827 = vmatprep.mubr.bf16.mxu0 %v4189
    %6828 = vmatmul.mubr.bf16.gmra.mrb[0].mxu0 %v4181
    %v6829 = vpop.f32.mrb[0].mxu0
    %v6830 = vadd.f32 %v6637, %v6829
    %v6831 = vpop.f32.mrb[0].mxu0
    %v6832 = vpop.f32.mrb[0].mxu0
    %v6833 = vadd.f32 %v6640, %v6832
    %v6834 = vpop.f32.mrb[0].mxu0
    %6835 = vmatprep.mubr.bf16.mxu0 %v4221
    %6836 = vmatmul.mubr.bf16.gmra.mrb[0].mxu0 %v4213
    %v6837 = vpop.f32.mrb[0].mxu0
    %v6838 = vadd.f32 %v6645, %v6837
    %v6839 = vpop.f32.mrb[0].mxu0
    %v6840 = vpop.f32.mrb[0].mxu0
    %v6841 = vadd.f32 %v6648, %v6840
    %v6842 = vpop.f32.mrb[0].mxu0
    %6843 = vmatprep.mubr.bf16.mxu0 %v4253
    %6844 = vmatmul.mubr.bf16.gmra.mrb[0].mxu0 %v4245
    %v6845 = vpop.f32.mrb[0].mxu0
    %v6846 = vadd.f32 %v6653, %v6845
    %v6847 = vpop.f32.mrb[0].mxu0
    %v6848 = vpop.f32.mrb[0].mxu0
    %v6849 = vadd.f32 %v6656, %v6848
    %v6850 = vpop.f32.mrb[0].mxu0
    %6851 = vmatprep.mubr.bf16.mxu0 %v4285
    %6852 = vmatmul.mubr.bf16.gmra.mrb[0].mxu0 %v4277
    %v6853 = vpop.f32.mrb[0].mxu0
    %v6854 = vadd.f32 %v6661, %v6853
    %v6855 = vpop.f32.mrb[0].mxu0
    %v6856 = vpop.f32.mrb[0].mxu0
    %v6857 = vadd.f32 %v6664, %v6856
    %v6858 = vpop.f32.mrb[0].mxu0
    %6859 = vmatprep.mubr.bf16.mxu0 %v4317
    %6860 = vmatmul.mubr.bf16.gmra.mrb[0].mxu0 %v4309
    %v6861 = vpop.f32.mrb[0].mxu0
    %v6862 = vadd.f32 %v6669, %v6861
    %v6863 = vpop.f32.mrb[0].mxu0
    %v6864 = vpop.f32.mrb[0].mxu0
    %v6865 = vadd.f32 %v6672, %v6864
    %v6866 = vpop.f32.mrb[0].mxu0
    %6867 = vmatprep.mubr.bf16.mxu0 %v4349
    %6868 = vmatmul.mubr.bf16.gmra.mrb[0].mxu0 %v4341
    %v6869 = vpop.f32.mrb[0].mxu0
    %v6870 = vadd.f32 %v6677, %v6869
    %v6871 = vpop.f32.mrb[0].mxu0
    %v6872 = vpop.f32.mrb[0].mxu0
    %v6873 = vadd.f32 %v6680, %v6872
    %v6874 = vpop.f32.mrb[0].mxu0
    %6875 = vmatprep.mubr.bf16.mxu0 %v4381
    %6876 = vmatmul.mubr.bf16.gmra.mrb[0].mxu0 %v4373
    %v6877 = vpop.f32.mrb[0].mxu0
    %v6878 = vadd.f32 %v6685, %v6877
    %v6879 = vpop.f32.mrb[0].mxu0
    %v6880 = vpop.f32.mrb[0].mxu0
    %v6881 = vadd.f32 %v6688, %v6880
    %v6882 = vpop.f32.mrb[0].mxu0
    %6883 = vmatprep.mubr.bf16.mxu0 %v4413
    %6884 = vmatmul.mubr.bf16.gmra.mrb[0].mxu0 %v4405
    %v6885 = vpop.f32.mrb[0].mxu0
    %v6886 = vadd.f32 %v6693, %v6885
    %v6887 = vpop.f32.mrb[0].mxu0
    %v6888 = vpop.f32.mrb[0].mxu0
    %v6889 = vadd.f32 %v6696, %v6888
    %v6890 = vpop.f32.mrb[0].mxu0
    %6891 = vmatprep.mubr.bf16.mxu0 %v4445
    %6892 = vmatmul.mubr.bf16.gmra.mrb[0].mxu0 %v4437
    %v6893 = vpop.f32.mrb[0].mxu0
    %v6894 = vadd.f32 %v6701, %v6893
    %v6895 = vpop.f32.mrb[0].mxu0
    %v6896 = vpop.f32.mrb[0].mxu0
    %v6897 = vadd.f32 %v6704, %v6896
    %v6898 = vpop.f32.mrb[0].mxu0
    %6899 = vmatprep.mubr.bf16.mxu0 %v4477
    %6900 = vmatmul.mubr.bf16.gmra.mrb[0].mxu0 %v4469
    %v6901 = vpop.f32.mrb[0].mxu0
    %v6902 = vadd.f32 %v6709, %v6901
    %v6903 = vpop.f32.mrb[0].mxu0
    %v6904 = vpop.f32.mrb[0].mxu0
    %v6905 = vadd.f32 %v6712, %v6904
    %v6906 = vpop.f32.mrb[0].mxu0
    %6907 = vmatprep.mubr.bf16.mxu0 %v4509
    %6908 = vmatmul.mubr.bf16.gmra.mrb[0].mxu0 %v4501
    %v6909 = vpop.f32.mrb[0].mxu0
    %v6910 = vadd.f32 %v6717, %v6909
    %v6911 = vpop.f32.mrb[0].mxu0
    %v6912 = vpop.f32.mrb[0].mxu0
    %v6913 = vadd.f32 %v6720, %v6912
    %v6914 = vpop.f32.mrb[0].mxu0
    %6915 = vmatprep.mubr.bf16.mxu0 %v4541
    %6916 = vmatmul.mubr.bf16.gmra.mrb[0].mxu0 %v4533
    %v6917 = vpop.f32.mrb[0].mxu0
    %v6918 = vadd.f32 %v6725, %v6917
    %v6919 = vpop.f32.mrb[0].mxu0
    %v6920 = vpop.f32.mrb[0].mxu0
    %v6921 = vadd.f32 %v6728, %v6920
    %v6922 = vpop.f32.mrb[0].mxu0
    %6923 = vmatprep.mubr.bf16.mxu0 %v4573
    %6924 = vmatmul.mubr.bf16.gmra.mrb[0].mxu0 %v4565
    %v6925 = vpop.f32.mrb[0].mxu0
    %v6926 = vadd.f32 %v6733, %v6925
    %v6927 = vpop.f32.mrb[0].mxu0
    %v6928 = vpop.f32.mrb[0].mxu0
    %v6929 = vadd.f32 %v6736, %v6928
    %v6930 = vpop.f32.mrb[0].mxu0
    %6931 = vmatprep.mubr.bf16.mxu0 %v4605
    %6932 = vmatmul.mubr.bf16.gmra.mrb[0].mxu0 %v4597
    %v6933 = vpop.f32.mrb[0].mxu0
    %v6934 = vadd.f32 %v6741, %v6933
    %v6935 = vpop.f32.mrb[0].mxu0
    %v6936 = vpop.f32.mrb[0].mxu0
    %v6937 = vadd.f32 %v6744, %v6936
    %v6938 = vpop.f32.mrb[0].mxu0
    %6939 = vmatprep.mubr.bf16.mxu0 %v4684
    %6940 = vmatmul.mubr.bf16.gmra.mrb[0].mxu0 %v4679
    %v6941 = vpop.f32.mrb[0].mxu0
    %v6942 = vadd.f32 %v6749, %v6941
    %v6943 = vpop.f32.mrb[0].mxu0
    %v6944 = vpop.f32.mrb[0].mxu0
    %v6945 = vadd.f32 %v6752, %v6944
    %v6946 = vpop.f32.mrb[0].mxu0
    %6947 = vdwg.mxu0
    %6948 = vmatprep.subr.bf16.mxu0 0
    %6949 = vmatpush1.bf16.msra.mxu0 %v4974
    %6950 = vmatprep.subr.bf16.mxu0 0
    %6951 = vmatpush1.bf16.msra.mxu0 %v4975
    %6952 = vmatprep.subr.bf16.mxu0 0
    %6953 = vmatpush1.bf16.msra.mxu0 %v4976
    %6954 = vmatprep.subr.bf16.mxu0 0
    %6955 = vmatpush1.bf16.msra.mxu0 %v4977
    %6956 = vmatprep.subr.bf16.mxu0 0
    %6957 = vmatpush1.bf16.msra.mxu0 %v4978
    %6958 = vmatprep.subr.bf16.mxu0 0
    %6959 = vmatpush1.bf16.msra.mxu0 %v4979
    %6960 = vmatprep.subr.bf16.mxu0 0
    %6961 = vmatpush1.bf16.msra.mxu0 %v4980
    %6962 = vmatprep.subr.bf16.mxu0 0
    %6963 = vmatpush1.bf16.msra.mxu0 %v4981
    %6964 = vmatprep.subr.bf16.mxu0 0
    %6965 = vmatpush1.bf16.msra.mxu0 %v4982
    %6966 = vmatprep.subr.bf16.mxu0 0
    %6967 = vmatpush1.bf16.msra.mxu0 %v4983
    %6968 = vmatprep.subr.bf16.mxu0 0
    %6969 = vmatpush1.bf16.msra.mxu0 %v4984
    %6970 = vmatprep.subr.bf16.mxu0 0
    %6971 = vmatpush1.bf16.msra.mxu0 %v4985
    %6972 = vmatprep.subr.bf16.mxu0 0
    %6973 = vmatpush1.bf16.msra.mxu0 %v4986
    %6974 = vmatprep.subr.bf16.mxu0 0
    %6975 = vmatpush1.bf16.msra.mxu0 %v4987
    %6976 = vmatprep.subr.bf16.mxu0 0
    %6977 = vmatpush1.bf16.msra.mxu0 %v4988
    %6978 = vmatprep.subr.bf16.mxu0 0
    %6979 = vmatpush1.bf16.msra.mxu0 %v4989
    %6980 = vmatprep.mubr.bf16.mxu0 %v3434
    %6981 = vmatmul.mubr.bf16.gmra.mrb[0].mxu0 %v4045
    %v6982 = vpop.f32.mrb[0].mxu0
    %v6983 = vadd.f32 %v6790, %v6982
    %v6984 = vpop.f32.mrb[0].mxu0
    %v6985 = vpop.f32.mrb[0].mxu0
    %v6986 = vadd.f32 %v6793, %v6985
    %v6987 = vpop.f32.mrb[0].mxu0
    %6988 = vmatprep.mubr.bf16.mxu0 %v3442
    %6989 = vmatmul.mubr.bf16.gmra.mrb[0].mxu0 %v4101
    %v6990 = vpop.f32.mrb[0].mxu0
    %v6991 = vadd.f32 %v6798, %v6990
    %v6992 = vpop.f32.mrb[0].mxu0
    %v6993 = vpop.f32.mrb[0].mxu0
    %v6994 = vadd.f32 %v6801, %v6993
    %v6995 = vpop.f32.mrb[0].mxu0
    %6996 = vmatprep.mubr.bf16.mxu0 %v3450
    %6997 = vmatmul.mubr.bf16.gmra.mrb[0].mxu0 %v4133
    %v6998 = vpop.f32.mrb[0].mxu0
    %v6999 = vadd.f32 %v6806, %v6998
    %v7000 = vpop.f32.mrb[0].mxu0
    %v7001 = vpop.f32.mrb[0].mxu0
    %v7002 = vadd.f32 %v6809, %v7001
    %v7003 = vpop.f32.mrb[0].mxu0
    %7004 = vmatprep.mubr.bf16.mxu0 %v3458
    %7005 = vmatmul.mubr.bf16.gmra.mrb[0].mxu0 %v4165
    %v7006 = vpop.f32.mrb[0].mxu0
    %v7007 = vadd.f32 %v6814, %v7006
    %v7008 = vpop.f32.mrb[0].mxu0
    %v7009 = vpop.f32.mrb[0].mxu0
    %v7010 = vadd.f32 %v6817, %v7009
    %v7011 = vpop.f32.mrb[0].mxu0
    %7012 = vmatprep.mubr.bf16.mxu0 %v3466
    %7013 = vmatmul.mubr.bf16.gmra.mrb[0].mxu0 %v4197
    %v7014 = vpop.f32.mrb[0].mxu0
    %v7015 = vadd.f32 %v6822, %v7014
    %v7016 = vpop.f32.mrb[0].mxu0
    %v7017 = vpop.f32.mrb[0].mxu0
    %v7018 = vadd.f32 %v6825, %v7017
    %v7019 = vpop.f32.mrb[0].mxu0
    %7020 = vmatprep.mubr.bf16.mxu0 %v3474
    %7021 = vmatmul.mubr.bf16.gmra.mrb[0].mxu0 %v4229
    %v7022 = vpop.f32.mrb[0].mxu0
    %v7023 = vadd.f32 %v6830, %v7022
    %v7024 = vpop.f32.mrb[0].mxu0
    %v7025 = vpop.f32.mrb[0].mxu0
    %v7026 = vadd.f32 %v6833, %v7025
    %v7027 = vpop.f32.mrb[0].mxu0
    %7028 = vmatprep.mubr.bf16.mxu0 %v3482
    %7029 = vmatmul.mubr.bf16.gmra.mrb[0].mxu0 %v4261
    %v7030 = vpop.f32.mrb[0].mxu0
    %v7031 = vadd.f32 %v6838, %v7030
    %v7032 = vpop.f32.mrb[0].mxu0
    %v7033 = vpop.f32.mrb[0].mxu0
    %v7034 = vadd.f32 %v6841, %v7033
    %v7035 = vpop.f32.mrb[0].mxu0
    %7036 = vmatprep.mubr.bf16.mxu0 %v3490
    %7037 = vmatmul.mubr.bf16.gmra.mrb[0].mxu0 %v4293
    %v7038 = vpop.f32.mrb[0].mxu0
    %v7039 = vadd.f32 %v6846, %v7038
    %v7040 = vpop.f32.mrb[0].mxu0
    %v7041 = vpop.f32.mrb[0].mxu0
    %v7042 = vadd.f32 %v6849, %v7041
    %v7043 = vpop.f32.mrb[0].mxu0
    %7044 = vmatprep.mubr.bf16.mxu0 %v3498
    %7045 = vmatmul.mubr.bf16.gmra.mrb[0].mxu0 %v4325
    %v7046 = vpop.f32.mrb[0].mxu0
    %v7047 = vadd.f32 %v6854, %v7046
    %v7048 = vpop.f32.mrb[0].mxu0
    %v7049 = vpop.f32.mrb[0].mxu0
    %v7050 = vadd.f32 %v6857, %v7049
    %v7051 = vpop.f32.mrb[0].mxu0
    %7052 = vmatprep.mubr.bf16.mxu0 %v3506
    %7053 = vmatmul.mubr.bf16.gmra.mrb[0].mxu0 %v4357
    %v7054 = vpop.f32.mrb[0].mxu0
    %v7055 = vadd.f32 %v6862, %v7054
    %v7056 = vpop.f32.mrb[0].mxu0
    %v7057 = vpop.f32.mrb[0].mxu0
    %v7058 = vadd.f32 %v6865, %v7057
    %v7059 = vpop.f32.mrb[0].mxu0
    %7060 = vmatprep.mubr.bf16.mxu0 %v3514
    %7061 = vmatmul.mubr.bf16.gmra.mrb[0].mxu0 %v4389
    %v7062 = vpop.f32.mrb[0].mxu0
    %v7063 = vadd.f32 %v6870, %v7062
    %v7064 = vpop.f32.mrb[0].mxu0
    %v7065 = vpop.f32.mrb[0].mxu0
    %v7066 = vadd.f32 %v6873, %v7065
    %v7067 = vpop.f32.mrb[0].mxu0
    %7068 = vmatprep.mubr.bf16.mxu0 %v3522
    %7069 = vmatmul.mubr.bf16.gmra.mrb[0].mxu0 %v4421
    %v7070 = vpop.f32.mrb[0].mxu0
    %v7071 = vadd.f32 %v6878, %v7070
    %v7072 = vpop.f32.mrb[0].mxu0
    %v7073 = vpop.f32.mrb[0].mxu0
    %v7074 = vadd.f32 %v6881, %v7073
    %v7075 = vpop.f32.mrb[0].mxu0
    %7076 = vmatprep.mubr.bf16.mxu0 %v3799
    %7077 = vmatmul.mubr.bf16.gmra.mrb[0].mxu0 %v4453
    %v7078 = vpop.f32.mrb[0].mxu0
    %v7079 = vadd.f32 %v6886, %v7078
    %v7080 = vpop.f32.mrb[0].mxu0
    %v7081 = vpop.f32.mrb[0].mxu0
    %v7082 = vadd.f32 %v6889, %v7081
    %v7083 = vpop.f32.mrb[0].mxu0
    %7084 = vmatprep.mubr.bf16.mxu0 %v3807
    %7085 = vmatmul.mubr.bf16.gmra.mrb[0].mxu0 %v4485
    %v7086 = vpop.f32.mrb[0].mxu0
    %v7087 = vadd.f32 %v6894, %v7086
    %v7088 = vpop.f32.mrb[0].mxu0
    %v7089 = vpop.f32.mrb[0].mxu0
    %v7090 = vadd.f32 %v6897, %v7089
    %v7091 = vpop.f32.mrb[0].mxu0
    %7092 = vmatprep.mubr.bf16.mxu0 %v3841
    %7093 = vmatmul.mubr.bf16.gmra.mrb[0].mxu0 %v4517
    %v7094 = vpop.f32.mrb[0].mxu0
    %v7095 = vadd.f32 %v6902, %v7094
    %v7096 = vpop.f32.mrb[0].mxu0
    %v7097 = vpop.f32.mrb[0].mxu0
    %v7098 = vadd.f32 %v6905, %v7097
    %v7099 = vpop.f32.mrb[0].mxu0
    %7100 = vmatprep.mubr.bf16.mxu0 %v3849
    %7101 = vmatmul.mubr.bf16.gmra.mrb[0].mxu0 %v4549
    %v7102 = vpop.f32.mrb[0].mxu0
    %v7103 = vadd.f32 %v6910, %v7102
    %v7104 = vpop.f32.mrb[0].mxu0
    %v7105 = vpop.f32.mrb[0].mxu0
    %v7106 = vadd.f32 %v6913, %v7105
    %v7107 = vpop.f32.mrb[0].mxu0
    %7108 = vmatprep.mubr.bf16.mxu0 %v3883
    %7109 = vmatmul.mubr.bf16.gmra.mrb[0].mxu0 %v4581
    %v7110 = vpop.f32.mrb[0].mxu0
    %v7111 = vadd.f32 %v6918, %v7110
    %v7112 = vpop.f32.mrb[0].mxu0
    %v7113 = vpop.f32.mrb[0].mxu0
    %v7114 = vadd.f32 %v6921, %v7113
    %v7115 = vpop.f32.mrb[0].mxu0
    %7116 = vmatprep.mubr.bf16.mxu0 %v3891
    %7117 = vmatmul.mubr.bf16.gmra.mrb[0].mxu0 %v4613
    %v7118 = vpop.f32.mrb[0].mxu0
    %v7119 = vadd.f32 %v6926, %v7118
    %v7120 = vpop.f32.mrb[0].mxu0
    %v7121 = vpop.f32.mrb[0].mxu0
    %v7122 = vadd.f32 %v6929, %v7121
    %v7123 = vpop.f32.mrb[0].mxu0
    %7124 = vmatprep.mubr.bf16.mxu0 %v3975
    %7125 = vmatmul.mubr.bf16.gmra.mrb[0].mxu0 %v4645
    %v7126 = vpop.f32.mrb[0].mxu0
    %v7127 = vadd.f32 %v6934, %v7126
    %v7128 = vpop.f32.mrb[0].mxu0
    %v7129 = vpop.f32.mrb[0].mxu0
    %v7130 = vadd.f32 %v6937, %v7129
    %v7131 = vpop.f32.mrb[0].mxu0
    %7132 = vmatprep.mubr.bf16.mxu0 %v3981
    %7133 = vmatmul.mubr.bf16.gmra.mrb[0].mxu0 %v4692
    %v7134 = vpop.f32.mrb[0].mxu0
    %v7135 = vadd.f32 %v6942, %v7134
    %v7136 = vpop.f32.mrb[0].mxu0
    %v7137 = vpop.f32.mrb[0].mxu0
    %v7138 = vadd.f32 %v6945, %v7137
    %v7139 = vpop.f32.mrb[0].mxu0
    %7140 = vdwg.mxu0
    %7141 = vmatprep.subr.bf16.mxu0 0
    %7142 = vmatpush1.bf16.msra.mxu0 %v4990
    %7143 = vmatprep.subr.bf16.mxu0 0
    %7144 = vmatpush1.bf16.msra.mxu0 %v4991
    %7145 = vmatprep.subr.bf16.mxu0 0
    %7146 = vmatpush1.bf16.msra.mxu0 %v4992
    %7147 = vmatprep.subr.bf16.mxu0 0
    %7148 = vmatpush1.bf16.msra.mxu0 %v4993
    %7149 = vmatprep.subr.bf16.mxu0 0
    %7150 = vmatpush1.bf16.msra.mxu0 %v4994
    %7151 = vmatprep.subr.bf16.mxu0 0
    %7152 = vmatpush1.bf16.msra.mxu0 %v4995
    %7153 = vmatprep.subr.bf16.mxu0 0
    %7154 = vmatpush1.bf16.msra.mxu0 %v4996
    %7155 = vmatprep.subr.bf16.mxu0 0
    %7156 = vmatpush1.bf16.msra.mxu0 %v4997
    %7157 = vmatprep.subr.bf16.mxu0 0
    %7158 = vmatpush1.bf16.msra.mxu0 %v4998
    %7159 = vmatprep.subr.bf16.mxu0 0
    %7160 = vmatpush1.bf16.msra.mxu0 %v4999
    %7161 = vmatprep.subr.bf16.mxu0 0
    %7162 = vmatpush1.bf16.msra.mxu0 %v5000
    %7163 = vmatprep.subr.bf16.mxu0 0
    %7164 = vmatpush1.bf16.msra.mxu0 %v5001
    %7165 = vmatprep.subr.bf16.mxu0 0
    %7166 = vmatpush1.bf16.msra.mxu0 %v5002
    %7167 = vmatprep.subr.bf16.mxu0 0
    %7168 = vmatpush1.bf16.msra.mxu0 %v5003
    %7169 = vmatprep.subr.bf16.mxu0 0
    %7170 = vmatpush1.bf16.msra.mxu0 %v5004
    %7171 = vmatprep.subr.bf16.mxu0 0
    %7172 = vmatpush1.bf16.msra.mxu0 %v5005
    %7173 = vmatprep.mubr.bf16.mxu0 %v4069
    %7174 = vmatmul.mubr.bf16.gmra.mrb[0].mxu0 %v4057
    %v7175 = vpop.f32.mrb[0].mxu0
    %v7176 = vadd.f32 %v6983, %v7175
    %v7177 = vpop.f32.mrb[0].mxu0
    %v7178 = vpop.f32.mrb[0].mxu0
    %v7179 = vadd.f32 %v6986, %v7178
    %v7180 = vpop.f32.mrb[0].mxu0
    %7181 = vmatprep.mubr.bf16.mxu0 %v4117
    %7182 = vmatmul.mubr.bf16.gmra.mrb[0].mxu0 %v4109
    %v7183 = vpop.f32.mrb[0].mxu0
    %v7184 = vadd.f32 %v6991, %v7183
    %v7185 = vpop.f32.mrb[0].mxu0
    %v7186 = vpop.f32.mrb[0].mxu0
    %v7187 = vadd.f32 %v6994, %v7186
    %v7188 = vpop.f32.mrb[0].mxu0
    %7189 = vmatprep.mubr.bf16.mxu0 %v4149
    %7190 = vmatmul.mubr.bf16.gmra.mrb[0].mxu0 %v4141
    %v7191 = vpop.f32.mrb[0].mxu0
    %v7192 = vadd.f32 %v6999, %v7191
    %v7193 = vpop.f32.mrb[0].mxu0
    %v7194 = vpop.f32.mrb[0].mxu0
    %v7195 = vadd.f32 %v7002, %v7194
    %v7196 = vpop.f32.mrb[0].mxu0
    %7197 = vmatprep.mubr.bf16.mxu0 %v4181
    %7198 = vmatmul.mubr.bf16.gmra.mrb[0].mxu0 %v4173
    %v7199 = vpop.f32.mrb[0].mxu0
    %v7200 = vadd.f32 %v7007, %v7199
    %v7201 = vpop.f32.mrb[0].mxu0
    %v7202 = vpop.f32.mrb[0].mxu0
    %v7203 = vadd.f32 %v7010, %v7202
    %v7204 = vpop.f32.mrb[0].mxu0
    %7205 = vmatprep.mubr.bf16.mxu0 %v4213
    %7206 = vmatmul.mubr.bf16.gmra.mrb[0].mxu0 %v4205
    %v7207 = vpop.f32.mrb[0].mxu0
    %v7208 = vadd.f32 %v7015, %v7207
    %v7209 = vpop.f32.mrb[0].mxu0
    %v7210 = vpop.f32.mrb[0].mxu0
    %v7211 = vadd.f32 %v7018, %v7210
    %v7212 = vpop.f32.mrb[0].mxu0
    %7213 = vmatprep.mubr.bf16.mxu0 %v4245
    %7214 = vmatmul.mubr.bf16.gmra.mrb[0].mxu0 %v4237
    %v7215 = vpop.f32.mrb[0].mxu0
    %v7216 = vadd.f32 %v7023, %v7215
    %v7217 = vpop.f32.mrb[0].mxu0
    %v7218 = vpop.f32.mrb[0].mxu0
    %v7219 = vadd.f32 %v7026, %v7218
    %v7220 = vpop.f32.mrb[0].mxu0
    %7221 = vmatprep.mubr.bf16.mxu0 %v4277
    %7222 = vmatmul.mubr.bf16.gmra.mrb[0].mxu0 %v4269
    %v7223 = vpop.f32.mrb[0].mxu0
    %v7224 = vadd.f32 %v7031, %v7223
    %v7225 = vpop.f32.mrb[0].mxu0
    %v7226 = vpop.f32.mrb[0].mxu0
    %v7227 = vadd.f32 %v7034, %v7226
    %v7228 = vpop.f32.mrb[0].mxu0
    %7229 = vmatprep.mubr.bf16.mxu0 %v4309
    %7230 = vmatmul.mubr.bf16.gmra.mrb[0].mxu0 %v4301
    %v7231 = vpop.f32.mrb[0].mxu0
    %v7232 = vadd.f32 %v7039, %v7231
    %v7233 = vpop.f32.mrb[0].mxu0
    %v7234 = vpop.f32.mrb[0].mxu0
    %v7235 = vadd.f32 %v7042, %v7234
    %v7236 = vpop.f32.mrb[0].mxu0
    %7237 = vmatprep.mubr.bf16.mxu0 %v4341
    %7238 = vmatmul.mubr.bf16.gmra.mrb[0].mxu0 %v4333
    %v7239 = vpop.f32.mrb[0].mxu0
    %v7240 = vadd.f32 %v7047, %v7239
    %v7241 = vpop.f32.mrb[0].mxu0
    %v7242 = vpop.f32.mrb[0].mxu0
    %v7243 = vadd.f32 %v7050, %v7242
    %v7244 = vpop.f32.mrb[0].mxu0
    %7245 = vmatprep.mubr.bf16.mxu0 %v4373
    %7246 = vmatmul.mubr.bf16.gmra.mrb[0].mxu0 %v4365
    %v7247 = vpop.f32.mrb[0].mxu0
    %v7248 = vadd.f32 %v7055, %v7247
    %v7249 = vpop.f32.mrb[0].mxu0
    %v7250 = vpop.f32.mrb[0].mxu0
    %v7251 = vadd.f32 %v7058, %v7250
    %v7252 = vpop.f32.mrb[0].mxu0
    %7253 = vmatprep.mubr.bf16.mxu0 %v4405
    %7254 = vmatmul.mubr.bf16.gmra.mrb[0].mxu0 %v4397
    %v7255 = vpop.f32.mrb[0].mxu0
    %v7256 = vadd.f32 %v7063, %v7255
    %v7257 = vpop.f32.mrb[0].mxu0
    %v7258 = vpop.f32.mrb[0].mxu0
    %v7259 = vadd.f32 %v7066, %v7258
    %v7260 = vpop.f32.mrb[0].mxu0
    %7261 = vmatprep.mubr.bf16.mxu0 %v4437
    %7262 = vmatmul.mubr.bf16.gmra.mrb[0].mxu0 %v4429
    %v7263 = vpop.f32.mrb[0].mxu0
    %v7264 = vadd.f32 %v7071, %v7263
    %v7265 = vpop.f32.mrb[0].mxu0
    %v7266 = vpop.f32.mrb[0].mxu0
    %v7267 = vadd.f32 %v7074, %v7266
    %v7268 = vpop.f32.mrb[0].mxu0
    %7269 = vmatprep.mubr.bf16.mxu0 %v4469
    %7270 = vmatmul.mubr.bf16.gmra.mrb[0].mxu0 %v4461
    %v7271 = vpop.f32.mrb[0].mxu0
    %v7272 = vadd.f32 %v7079, %v7271
    %v7273 = vpop.f32.mrb[0].mxu0
    %v7274 = vpop.f32.mrb[0].mxu0
    %v7275 = vadd.f32 %v7082, %v7274
    %v7276 = vpop.f32.mrb[0].mxu0
    %7277 = vmatprep.mubr.bf16.mxu0 %v4501
    %7278 = vmatmul.mubr.bf16.gmra.mrb[0].mxu0 %v4493
    %v7279 = vpop.f32.mrb[0].mxu0
    %v7280 = vadd.f32 %v7087, %v7279
    %v7281 = vpop.f32.mrb[0].mxu0
    %v7282 = vpop.f32.mrb[0].mxu0
    %v7283 = vadd.f32 %v7090, %v7282
    %v7284 = vpop.f32.mrb[0].mxu0
    %7285 = vmatprep.mubr.bf16.mxu0 %v4533
    %7286 = vmatmul.mubr.bf16.gmra.mrb[0].mxu0 %v4525
    %v7287 = vpop.f32.mrb[0].mxu0
    %v7288 = vadd.f32 %v7095, %v7287
    %v7289 = vpop.f32.mrb[0].mxu0
    %v7290 = vpop.f32.mrb[0].mxu0
    %v7291 = vadd.f32 %v7098, %v7290
    %v7292 = vpop.f32.mrb[0].mxu0
    %7293 = vmatprep.mubr.bf16.mxu0 %v4565
    %7294 = vmatmul.mubr.bf16.gmra.mrb[0].mxu0 %v4557
    %v7295 = vpop.f32.mrb[0].mxu0
    %v7296 = vadd.f32 %v7103, %v7295
    %v7297 = vpop.f32.mrb[0].mxu0
    %v7298 = vpop.f32.mrb[0].mxu0
    %v7299 = vadd.f32 %v7106, %v7298
    %v7300 = vpop.f32.mrb[0].mxu0
    %7301 = vmatprep.mubr.bf16.mxu0 %v4597
    %7302 = vmatmul.mubr.bf16.gmra.mrb[0].mxu0 %v4589
    %v7303 = vpop.f32.mrb[0].mxu0
    %v7304 = vadd.f32 %v7111, %v7303
    %v7305 = vpop.f32.mrb[0].mxu0
    %v7306 = vpop.f32.mrb[0].mxu0
    %v7307 = vadd.f32 %v7114, %v7306
    %v7308 = vpop.f32.mrb[0].mxu0
    %7309 = vmatprep.mubr.bf16.mxu0 %v4629
    %7310 = vmatmul.mubr.bf16.gmra.mrb[0].mxu0 %v4621
    %v7311 = vpop.f32.mrb[0].mxu0
    %v7312 = vadd.f32 %v7119, %v7311
    %v7313 = vpop.f32.mrb[0].mxu0
    %v7314 = vpop.f32.mrb[0].mxu0
    %v7315 = vadd.f32 %v7122, %v7314
    %v7316 = vpop.f32.mrb[0].mxu0
    %7317 = vmatprep.mubr.bf16.mxu0 %v4661
    %7318 = vmatmul.mubr.bf16.gmra.mrb[0].mxu0 %v4653
    %v7319 = vpop.f32.mrb[0].mxu0
    %v7320 = vadd.f32 %v7127, %v7319
    %v7321 = vpop.f32.mrb[0].mxu0
    %v7322 = vpop.f32.mrb[0].mxu0
    %v7323 = vadd.f32 %v7130, %v7322
    %v7324 = vpop.f32.mrb[0].mxu0
    %7325 = vmatprep.mubr.bf16.mxu0 %v4708
    %7326 = vmatmul.mubr.bf16.gmra.mrb[0].mxu0 %v4700
    %v7327 = vpop.f32.mrb[0].mxu0
    %v7328 = vadd.f32 %v7135, %v7327
    %v7329 = vpop.f32.mrb[0].mxu0
    %v7330 = vpop.f32.mrb[0].mxu0
    %v7331 = vadd.f32 %v7138, %v7330
    %v7332 = vpop.f32.mrb[0].mxu0
    %7333 = vdwg.mxu0
    %7334 = vmatprep.subr.bf16.mxu0 0
    %7335 = vmatpush1.bf16.msra.mxu0 %v5006
    %7336 = vmatprep.subr.bf16.mxu0 0
    %7337 = vmatpush1.bf16.msra.mxu0 %v5007
    %7338 = vmatprep.subr.bf16.mxu0 0
    %7339 = vmatpush1.bf16.msra.mxu0 %v5008
    %7340 = vmatprep.subr.bf16.mxu0 0
    %7341 = vmatpush1.bf16.msra.mxu0 %v5009
    %7342 = vmatprep.subr.bf16.mxu0 0
    %7343 = vmatpush1.bf16.msra.mxu0 %v5010
    %7344 = vmatprep.subr.bf16.mxu0 0
    %7345 = vmatpush1.bf16.msra.mxu0 %v5011
    %7346 = vmatprep.subr.bf16.mxu0 0
    %7347 = vmatpush1.bf16.msra.mxu0 %v5012
    %7348 = vmatprep.subr.bf16.mxu0 0
    %7349 = vmatpush1.bf16.msra.mxu0 %v5013
    %7350 = vmatprep.subr.bf16.mxu0 0
    %7351 = vmatpush1.bf16.msra.mxu0 0
    %7352 = vmatprep.subr.bf16.mxu0 0
    %7353 = vmatpush1.bf16.msra.mxu0 0
    %7354 = vmatprep.subr.bf16.mxu0 0
    %7355 = vmatpush1.bf16.msra.mxu0 0
    %7356 = vmatprep.subr.bf16.mxu0 0
    %7357 = vmatpush1.bf16.msra.mxu0 0
    %7358 = vmatprep.subr.bf16.mxu0 0
    %7359 = vmatpush1.bf16.msra.mxu0 0
    %7360 = vmatprep.subr.bf16.mxu0 0
    %7361 = vmatpush1.bf16.msra.mxu0 0
    %7362 = vmatprep.subr.bf16.mxu0 0
    %7363 = vmatpush1.bf16.msra.mxu0 0
    %7364 = vmatprep.subr.bf16.mxu0 0
    %7365 = vmatpush1.bf16.msra.mxu0 0
    %7366 = vmatprep.mubr.bf16.mxu0 0
    %7367 = vmatmul.mubr.bf16.gmra.mrb[0].mxu0 %v4081
    %v7368 = vpop.f32.mrb[0].mxu0
    %v7369 = vadd.f32 %v7176, %v7368
    %v7370 = vpop.f32.mrb[0].mxu0
    %v7371 = vpop.f32.mrb[0].mxu0
    %v7372 = vadd.f32 %v7179, %v7371
    %v7373 = vpop.f32.mrb[0].mxu0
    %7374 = vmatprep.mubr.bf16.mxu0 0
    %7375 = vmatmul.mubr.bf16.gmra.mrb[0].mxu0 %v4125
    %v7376 = vpop.f32.mrb[0].mxu0
    %v7377 = vadd.f32 %v7184, %v7376
    %v7378 = vpop.f32.mrb[0].mxu0
    %v7379 = vpop.f32.mrb[0].mxu0
    %v7380 = vadd.f32 %v7187, %v7379
    %v7381 = vpop.f32.mrb[0].mxu0
    %7382 = vmatprep.mubr.bf16.mxu0 0
    %7383 = vmatmul.mubr.bf16.gmra.mrb[0].mxu0 %v4157
    %v7384 = vpop.f32.mrb[0].mxu0
    %v7385 = vadd.f32 %v7192, %v7384
    %v7386 = vpop.f32.mrb[0].mxu0
    %v7387 = vpop.f32.mrb[0].mxu0
    %v7388 = vadd.f32 %v7195, %v7387
    %v7389 = vpop.f32.mrb[0].mxu0
    %7390 = vmatprep.mubr.bf16.mxu0 0
    %7391 = vmatmul.mubr.bf16.gmra.mrb[0].mxu0 %v4189
    %v7392 = vpop.f32.mrb[0].mxu0
    %v7393 = vadd.f32 %v7200, %v7392
    %v7394 = vpop.f32.mrb[0].mxu0
    %v7395 = vpop.f32.mrb[0].mxu0
    %v7396 = vadd.f32 %v7203, %v7395
    %v7397 = vpop.f32.mrb[0].mxu0
    %7398 = vmatprep.mubr.bf16.mxu0 0
    %7399 = vmatmul.mubr.bf16.gmra.mrb[0].mxu0 %v4221
    %v7400 = vpop.f32.mrb[0].mxu0
    %v7401 = vadd.f32 %v7208, %v7400
    %v7402 = vpop.f32.mrb[0].mxu0
    %v7403 = vpop.f32.mrb[0].mxu0
    %v7404 = vadd.f32 %v7211, %v7403
    %v7405 = vpop.f32.mrb[0].mxu0
    %7406 = vmatprep.mubr.bf16.mxu0 0
    %7407 = vmatmul.mubr.bf16.gmra.mrb[0].mxu0 %v4253
    %v7408 = vpop.f32.mrb[0].mxu0
    %v7409 = vadd.f32 %v7216, %v7408
    %v7410 = vpop.f32.mrb[0].mxu0
    %v7411 = vpop.f32.mrb[0].mxu0
    %v7412 = vadd.f32 %v7219, %v7411
    %v7413 = vpop.f32.mrb[0].mxu0
    %7414 = vmatprep.mubr.bf16.mxu0 0
    %7415 = vmatmul.mubr.bf16.gmra.mrb[0].mxu0 %v4285
    %v7416 = vpop.f32.mrb[0].mxu0
    %v7417 = vadd.f32 %v7224, %v7416
    %v7418 = vpop.f32.mrb[0].mxu0
    %v7419 = vpop.f32.mrb[0].mxu0
    %v7420 = vadd.f32 %v7227, %v7419
    %v7421 = vpop.f32.mrb[0].mxu0
    %7422 = vmatprep.mubr.bf16.mxu0 0
    %7423 = vmatmul.mubr.bf16.gmra.mrb[0].mxu0 %v4317
    %v7424 = vpop.f32.mrb[0].mxu0
    %v7425 = vadd.f32 %v7232, %v7424
    %v7426 = vpop.f32.mrb[0].mxu0
    %v7427 = vpop.f32.mrb[0].mxu0
    %v7428 = vadd.f32 %v7235, %v7427
    %v7429 = vpop.f32.mrb[0].mxu0
    %7430 = vmatprep.mubr.bf16.mxu0 0
    %7431 = vmatmul.mubr.bf16.gmra.mrb[0].mxu0 %v4349
    %v7432 = vpop.f32.mrb[0].mxu0
    %v7433 = vadd.f32 %v7240, %v7432
    %v7434 = vpop.f32.mrb[0].mxu0
    %v7435 = vpop.f32.mrb[0].mxu0
    %v7436 = vadd.f32 %v7243, %v7435
    %v7437 = vpop.f32.mrb[0].mxu0
    %7438 = vmatprep.mubr.bf16.mxu0 0
    %7439 = vmatmul.mubr.bf16.gmra.mrb[0].mxu0 %v4381
    %v7440 = vpop.f32.mrb[0].mxu0
    %v7441 = vadd.f32 %v7248, %v7440
    %v7442 = vpop.f32.mrb[0].mxu0
    %v7443 = vpop.f32.mrb[0].mxu0
    %v7444 = vadd.f32 %v7251, %v7443
    %v7445 = vpop.f32.mrb[0].mxu0
    %7446 = vmatprep.mubr.bf16.mxu0 0
    %7447 = vmatmul.mubr.bf16.gmra.mrb[0].mxu0 %v4413
    %v7448 = vpop.f32.mrb[0].mxu0
    %v7449 = vadd.f32 %v7256, %v7448
    %v7450 = vpop.f32.mrb[0].mxu0
    %v7451 = vpop.f32.mrb[0].mxu0
    %v7452 = vadd.f32 %v7259, %v7451
    %v7453 = vpop.f32.mrb[0].mxu0
    %7454 = vmatprep.mubr.bf16.mxu0 0
    %7455 = vmatmul.mubr.bf16.gmra.mrb[0].mxu0 %v4445
    %v7456 = vpop.f32.mrb[0].mxu0
    %v7457 = vadd.f32 %v7264, %v7456
    %v7458 = vpop.f32.mrb[0].mxu0
    %v7459 = vpop.f32.mrb[0].mxu0
    %v7460 = vadd.f32 %v7267, %v7459
    %v7461 = vpop.f32.mrb[0].mxu0
    %7462 = vmatprep.mubr.bf16.mxu0 0
    %7463 = vmatmul.mubr.bf16.gmra.mrb[0].mxu0 %v4477
    %v7464 = vpop.f32.mrb[0].mxu0
    %v7465 = vadd.f32 %v7272, %v7464
    %v7466 = vpop.f32.mrb[0].mxu0
    %v7467 = vpop.f32.mrb[0].mxu0
    %v7468 = vadd.f32 %v7275, %v7467
    %v7469 = vpop.f32.mrb[0].mxu0
    %7470 = vmatprep.mubr.bf16.mxu0 0
    %7471 = vmatmul.mubr.bf16.gmra.mrb[0].mxu0 %v4509
    %v7472 = vpop.f32.mrb[0].mxu0
    %v7473 = vadd.f32 %v7280, %v7472
    %v7474 = vpop.f32.mrb[0].mxu0
    %v7475 = vpop.f32.mrb[0].mxu0
    %v7476 = vadd.f32 %v7283, %v7475
    %v7477 = vpop.f32.mrb[0].mxu0
    %7478 = vmatprep.mubr.bf16.mxu0 0
    %7479 = vmatmul.mubr.bf16.gmra.mrb[0].mxu0 %v4541
    %v7480 = vpop.f32.mrb[0].mxu0
    %v7481 = vadd.f32 %v7288, %v7480
    %v7482 = vpop.f32.mrb[0].mxu0
    %v7483 = vpop.f32.mrb[0].mxu0
    %v7484 = vadd.f32 %v7291, %v7483
    %v7485 = vpop.f32.mrb[0].mxu0
    %7486 = vmatprep.mubr.bf16.mxu0 0
    %7487 = vmatmul.mubr.bf16.gmra.mrb[0].mxu0 %v4573
    %v7488 = vpop.f32.mrb[0].mxu0
    %v7489 = vadd.f32 %v7296, %v7488
    %v7490 = vpop.f32.mrb[0].mxu0
    %v7491 = vpop.f32.mrb[0].mxu0
    %v7492 = vadd.f32 %v7299, %v7491
    %v7493 = vpop.f32.mrb[0].mxu0
    %7494 = vmatprep.mubr.bf16.mxu0 0
    %7495 = vmatmul.mubr.bf16.gmra.mrb[0].mxu0 %v4605
    %v7496 = vpop.f32.mrb[0].mxu0
    %v7497 = vadd.f32 %v7304, %v7496
    %v7498 = vpop.f32.mrb[0].mxu0
    %v7499 = vpop.f32.mrb[0].mxu0
    %v7500 = vadd.f32 %v7307, %v7499
    %v7501 = vpop.f32.mrb[0].mxu0
    %7502 = vmatprep.mubr.bf16.mxu0 0
    %7503 = vmatmul.mubr.bf16.gmra.mrb[0].mxu0 %v4637
    %v7504 = vpop.f32.mrb[0].mxu0
    %v7505 = vadd.f32 %v7312, %v7504
    %v7506 = vpop.f32.mrb[0].mxu0
    %v7507 = vpop.f32.mrb[0].mxu0
    %v7508 = vadd.f32 %v7315, %v7507
    %v7509 = vpop.f32.mrb[0].mxu0
    %7510 = vmatprep.mubr.bf16.mxu0 0
    %7511 = vmatmul.mubr.bf16.gmra.mrb[0].mxu0 %v4669
    %v7512 = vpop.f32.mrb[0].mxu0
    %v7513 = vadd.f32 %v7320, %v7512
    %v7514 = vpop.f32.mrb[0].mxu0
    %v7515 = vpop.f32.mrb[0].mxu0
    %v7516 = vadd.f32 %v7323, %v7515
    %v7517 = vpop.f32.mrb[0].mxu0
    %7518 = vmatprep.mubr.bf16.mxu0 0
    %7519 = vmatmul.mubr.bf16.gmra.mrb[0].mxu0 %v4716
    %v7520 = vpop.f32.mrb[0].mxu0
    %v7521 = vadd.f32 %v7328, %v7520
    %v7522 = vpop.f32.mrb[0].mxu0
    %v7523 = vpop.f32.mrb[0].mxu0
    %v7524 = vadd.f32 %v7331, %v7523
    %v7525 = vpop.f32.mrb[0].mxu0
    %7526 = vdwg.mxu0
    %v7527 = vmax.f32 %v7369, 0.0
    %v7528 = vmax.f32 %v7372, 0.0
    %v7529 = vmax.f32 %v7377, 0.0
    %v7530 = vmax.f32 %v7380, 0.0
    %v7531 = vmax.f32 %v7385, 0.0
    %v7532 = vmax.f32 %v7388, 0.0
    %v7533 = vmax.f32 %v7393, 0.0
    %v7534 = vmax.f32 %v7396, 0.0
    %v7535 = vmax.f32 %v7401, 0.0
    %v7536 = vmax.f32 %v7404, 0.0
    %v7537 = vmax.f32 %v7409, 0.0
    %v7538 = vmax.f32 %v7412, 0.0
    %v7539 = vmax.f32 %v7417, 0.0
    %v7540 = vmax.f32 %v7420, 0.0
    %v7541 = vmax.f32 %v7425, 0.0
    %v7542 = vmax.f32 %v7428, 0.0
    %v7543 = vmax.f32 %v7433, 0.0
    %v7544 = vmax.f32 %v7436, 0.0
    %v7545 = vmax.f32 %v7441, 0.0
    %v7546 = vmax.f32 %v7444, 0.0
    %v7547 = vmax.f32 %v7449, 0.0
    %v7548 = vmax.f32 %v7452, 0.0
    %v7549 = vmax.f32 %v7457, 0.0
    %v7550 = vmax.f32 %v7460, 0.0
    %v7551 = vmax.f32 %v7465, 0.0
    %v7552 = vmax.f32 %v7468, 0.0
    %v7553 = vmax.f32 %v7473, 0.0
    %v7554 = vmax.f32 %v7476, 0.0
    %v7555 = vmax.f32 %v7481, 0.0
    %v7556 = vmax.f32 %v7484, 0.0
    %v7557 = vmax.f32 %v7489, 0.0
    %v7558 = vmax.f32 %v7492, 0.0
    %v7559 = vmax.f32 %v7497, 0.0
    %v7560 = vmax.f32 %v7500, 0.0
    %v7561 = vmax.f32 %v7505, 0.0
    %v7562 = vmax.f32 %v7508, 0.0
    %v7563 = vmax.f32 %v7513, 0.0
    %v7564 = vmax.f32 %v7516, 0.0
    %v7565 = vmax.f32 %v7521, 0.0
    %v7566 = vmax.f32 %v7524, 0.0
    %v7567 = vmax.f32 %v7527, %v7531
    %v7568 = vmax.f32 %v7528, %v7532
    %v7569 = vmax.f32 %v7529, %v7533
    %v7570 = vmax.f32 %v7530, %v7534
    %v7571 = vmax.f32 %v7535, %v7539
    %v7572 = vmax.f32 %v7536, %v7540
    %v7573 = vmax.f32 %v7537, %v7541
    %v7574 = vmax.f32 %v7538, %v7542
    %v7575 = vmax.f32 %v7543, %v7547
    %v7576 = vmax.f32 %v7544, %v7548
    %v7577 = vmax.f32 %v7545, %v7549
    %v7578 = vmax.f32 %v7546, %v7550
    %v7579 = vmax.f32 %v7551, %v7555
    %v7580 = vmax.f32 %v7552, %v7556
    %v7581 = vmax.f32 %v7553, %v7557
    %v7582 = vmax.f32 %v7554, %v7558
    %v7583 = vmax.f32 %v7559, %v7563
    %v7584 = vmax.f32 %v7560, %v7564
    %v7585 = vmax.f32 %v7561, %v7565
    %v7586 = vmax.f32 %v7562, %v7566
    %vm7607 = vcmask 1046528
    %v7608 = vrot.slane %v7567, 1
    %v7609 = vrot.slane %v7568, 1
    %v7610 = vsel %vm7607, %v7608, %v7609
    %v7611 = vrot.slane %v7569, 1
    %v7612 = vsel %vm7607, %v7609, %v7611
    %v7613 = vrot.slane %v7570, 1
    %v7614 = vsel %vm7607, %v7611, %v7613
    %v7615 = vrot.slane %v7571, 1
    %v7616 = vsel %vm7607, %v7613, %v7615
    %v7617 = vrot.slane %v7572, 1
    %v7618 = vsel %vm7607, %v7615, %v7617
    %v7619 = vrot.slane %v7573, 1
    %v7620 = vsel %vm7607, %v7617, %v7619
    %v7621 = vrot.slane %v7574, 1
    %v7622 = vsel %vm7607, %v7619, %v7621
    %v7623 = vrot.slane %v7575, 1
    %v7624 = vsel %vm7607, %v7621, %v7623
    %v7625 = vrot.slane %v7576, 1
    %v7626 = vsel %vm7607, %v7623, %v7625
    %v7627 = vrot.slane %v7577, 1
    %v7628 = vsel %vm7607, %v7625, %v7627
    %v7629 = vrot.slane %v7578, 1
    %v7630 = vsel %vm7607, %v7627, %v7629
    %v7631 = vrot.slane %v7579, 1
    %v7632 = vsel %vm7607, %v7629, %v7631
    %v7633 = vrot.slane %v7580, 1
    %v7634 = vsel %vm7607, %v7631, %v7633
    %v7635 = vrot.slane %v7581, 1
    %v7636 = vsel %vm7607, %v7633, %v7635
    %v7637 = vrot.slane %v7582, 1
    %v7638 = vsel %vm7607, %v7635, %v7637
    %v7639 = vrot.slane %v7583, 1
    %v7640 = vsel %vm7607, %v7637, %v7639
    %v7641 = vrot.slane %v7584, 1
    %v7642 = vsel %vm7607, %v7639, %v7641
    %v7643 = vrot.slane %v7585, 1
    %v7644 = vsel %vm7607, %v7641, %v7643
    %v7645 = vrot.slane %v7586, 1
    %v7646 = vsel %vm7607, %v7643, %v7645
    %v7668 = vsel %vm7607, %v7645, %v7608
    %v7669 = vmax.f32 %v7567, %v7610
    %v7670 = vmax.f32 %v7568, %v7612
    %v7671 = vmax.f32 %v7569, %v7614
    %v7672 = vmax.f32 %v7570, %v7616
    %v7673 = vmax.f32 %v7571, %v7618
    %v7674 = vmax.f32 %v7572, %v7620
    %v7675 = vmax.f32 %v7573, %v7622
    %v7676 = vmax.f32 %v7574, %v7624
    %v7677 = vmax.f32 %v7575, %v7626
    %v7678 = vmax.f32 %v7576, %v7628
    %v7679 = vmax.f32 %v7577, %v7630
    %v7680 = vmax.f32 %v7578, %v7632
    %v7681 = vmax.f32 %v7579, %v7634
    %v7682 = vmax.f32 %v7580, %v7636
    %v7683 = vmax.f32 %v7581, %v7638
    %v7684 = vmax.f32 %v7582, %v7640
    %v7685 = vmax.f32 %v7583, %v7642
    %v7686 = vmax.f32 %v7584, %v7644
    %v7687 = vmax.f32 %v7585, %v7646
    %v7688 = vmax.f32 %v7586, %v7668
    %v7690 = vrot.slane %v7669, 2
    %v7692 = vrot.slane %v7669, 4
    %v7694 = vrot.slane %v7669, 6
    %v7697 = vrot.slane %v7673, 2
    %v7699 = vrot.slane %v7673, 4
    %v7701 = vrot.slane %v7673, 6
    %v7704 = vrot.slane %v7677, 2
    %v7706 = vrot.slane %v7677, 4
    %v7708 = vrot.slane %v7677, 6
    %v7711 = vrot.slane %v7681, 2
    %v7712 = vrot.slane %v7681, 4
    %v7714 = vrot.slane %v7682, 6
    %v7716 = vrot.slane %v7685, 6
    %v7717 = vrot.slane %v7685, 2
    %v7718 = vrot.slane %v7685, 4
    %v7720 = vrot.slane %v7686, 6
    %v7721 = vrot.slane %v7711, 2
    %v7722 = vrot.slane %v7712, 2
    %v7723 = vrot.slane %v7714, 2
    %v7724 = vrot.slane %v7716, 2
    %v7725 = vrot.slane %v7717, 2
    %v7726 = vrot.slane %v7718, 2
    %v7727 = vrot.slane %v7720, 2
    %v7738 = vrot.slane %v7671, 2
    %v7739 = vrot.slane %v7671, 4
    %v7740 = vrot.slane %v7671, 6
    %v7742 = vrot.slane %v7675, 2
    %v7743 = vrot.slane %v7675, 4
    %v7744 = vrot.slane %v7675, 6
    %v7746 = vrot.slane %v7679, 2
    %v7747 = vrot.slane %v7679, 4
    %v7748 = vrot.slane %v7679, 6
    %v7750 = vrot.slane %v7683, 2
    %v7751 = vrot.slane %v7683, 4
    %v7753 = vrot.slane %v7684, 6
    %v7755 = vrot.slane %v7687, 6
    %v7756 = vrot.slane %v7687, 2
    %v7757 = vrot.slane %v7687, 4
    %v7759 = vrot.slane %v7688, 6
    %v7760 = vrot.slane %v7750, 2
    %v7761 = vrot.slane %v7751, 2
    %v7762 = vrot.slane %v7753, 2
    %v7763 = vrot.slane %v7755, 2
    %v7764 = vrot.slane %v7756, 2
    %v7765 = vrot.slane %v7757, 2
    %v7766 = vrot.slane %v7759, 2
    %v7770 = vrot.slane %v7671, 7
    %v7771 = vrot.slane %v7738, 7
    %v7772 = vrot.slane %v7739, 7
    %v7773 = vrot.slane %v7740, 7
    %v7774 = vrot.slane %v7672, 7
    %v7775 = vrot.slane %v7675, 7
    %v7776 = vrot.slane %v7742, 7
    %v7777 = vrot.slane %v7743, 7
    %v7778 = vrot.slane %v7744, 7
    %v7779 = vrot.slane %v7676, 7
    %v7780 = vrot.slane %v7679, 7
    %v7781 = vrot.slane %v7746, 7
    %v7782 = vrot.slane %v7747, 7
    %v7783 = vrot.slane %v7748, 7
    %v7784 = vrot.slane %v7680, 7
    %v7785 = vrot.slane %v7683, 7
    %v7786 = vrot.slane %v7750, 7
    %v7787 = vrot.slane %v7760, 7
    %v7788 = vrot.slane %v7761, 7
    %v7789 = vrot.slane %v7762, 7
    %v7790 = vrot.slane %v7763, 7
    %v7791 = vrot.slane %v7756, 7
    %v7792 = vrot.slane %v7764, 7
    %v7793 = vrot.slane %v7765, 7
    %v7794 = vrot.slane %v7766, 7
    %vm7820 = vcmask 1040384
    %v7821 = vsel %vm7820, %v7669, %v7770
    %v7822 = vsel %vm7820, %v7690, %v7771
    %v7823 = vsel %vm7820, %v7692, %v7772
    %v7824 = vsel %vm7820, %v7694, %v7773
    %v7825 = vsel %vm7820, %v7670, %v7774
    %v7826 = vsel %vm7820, %v7673, %v7775
    %v7827 = vsel %vm7820, %v7697, %v7776
    %v7828 = vsel %vm7820, %v7699, %v7777
    %v7829 = vsel %vm7820, %v7701, %v7778
    %v7830 = vsel %vm7820, %v7674, %v7779
    %v7831 = vsel %vm7820, %v7677, %v7780
    %v7832 = vsel %vm7820, %v7704, %v7781
    %v7833 = vsel %vm7820, %v7706, %v7782
    %v7834 = vsel %vm7820, %v7708, %v7783
    %v7835 = vsel %vm7820, %v7678, %v7784
    %v7836 = vsel %vm7820, %v7681, %v7785
    %v7837 = vsel %vm7820, %v7711, %v7786
    %v7838 = vsel %vm7820, %v7721, %v7787
    %v7839 = vsel %vm7820, %v7722, %v7788
    %v7840 = vsel %vm7820, %v7723, %v7789
    %v7841 = vsel %vm7820, %v7724, %v7790
    %v7842 = vsel %vm7820, %v7717, %v7791
    %v7843 = vsel %vm7820, %v7725, %v7792
    %v7844 = vsel %vm7820, %v7726, %v7793
    %v7845 = vsel %vm7820, %v7727, %v7794
    %v7846 = vpack.c.bf16 %v7821, %v7821
    %v7847 = vpack.c.bf16 %v7822, %v7822
    %v7848 = vpack.c.bf16 %v7823, %v7823
    %v7849 = vpack.c.bf16 %v7824, %v7824
    %v7850 = vpack.c.bf16 %v7825, %v7825
    %v7851 = vpack.c.bf16 %v7826, %v7826
    %v7852 = vpack.c.bf16 %v7827, %v7827
    %v7853 = vpack.c.bf16 %v7828, %v7828
    %v7854 = vpack.c.bf16 %v7829, %v7829
    %v7855 = vpack.c.bf16 %v7830, %v7830
    %v7856 = vpack.c.bf16 %v7831, %v7831
    %v7857 = vpack.c.bf16 %v7832, %v7832
    %v7858 = vpack.c.bf16 %v7833, %v7833
    %v7859 = vpack.c.bf16 %v7834, %v7834
    %v7860 = vpack.c.bf16 %v7835, %v7835
    %v7861 = vpack.c.bf16 %v7836, %v7836
    %v7862 = vpack.c.bf16 %v7837, %v7837
    %v7863 = vpack.c.bf16 %v7838, %v7838
    %v7864 = vpack.c.bf16 %v7839, %v7839
    %v7865 = vpack.c.bf16 %v7840, %v7840
    %v7866 = vpack.c.bf16 %v7841, %v7841
    %v7867 = vpack.c.bf16 %v7842, %v7842
    %v7868 = vpack.c.bf16 %v7843, %v7843
    %v7869 = vpack.c.bf16 %v7844, %v7844
    %v7870 = vpack.c.bf16 %v7845, %v7845
    %s7871 = sshll.u32 %s4811, 4
    %7872 = dma.done %s464, %s7871
    %v7873 = vld [vmem:[#allocation3] sm:$0xff]
    %v7874 = vld [vmem:[#allocation3 + $0x8] sm:$0xff]
    %v7875 = vld [vmem:[#allocation3 + $0x10] sm:$0xff]
    %v7876 = vld [vmem:[#allocation3 + $0x18] sm:$0xff]
    %v7877 = vld [vmem:[#allocation3 + $0x20] sm:$0xff]
    %v7878 = vld [vmem:[#allocation3 + $0x28] sm:$0xff]
    %v7879 = vld [vmem:[#allocation3 + $0x30] sm:$0xff]
    %v7880 = vld [vmem:[#allocation3 + $0x38] sm:$0xff]
    %v7881 = vld [vmem:[#allocation3 + $0x40] sm:$0xff]
    %v7882 = vld [vmem:[#allocation3 + $0x48] sm:$0xff]
    %v7883 = vld [vmem:[#allocation3 + $0x50] sm:$0xff]
    %v7884 = vld [vmem:[#allocation3 + $0x58] sm:$0xff]
    %v7885 = vld [vmem:[#allocation3 + $0x60] sm:$0xff]
    %v7886 = vld [vmem:[#allocation3 + $0x68] sm:$0xff]
    %v7887 = vld [vmem:[#allocation3 + $0x70] sm:$0xff]
    %v7888 = vld [vmem:[#allocation3 + $0x78] sm:$0xff]
    %v7889 = vld [vmem:[#allocation3 + $0x80] sm:$0xff]
    %v7890 = vld [vmem:[#allocation3 + $0x88] sm:$0xff]
    %v7891 = vld [vmem:[#allocation3 + $0x90] sm:$0xff]
    %v7892 = vld [vmem:[#allocation3 + $0x98] sm:$0xff]
    %v7893 = vld [vmem:[#allocation3 + $0xa0] sm:$0xff]
    %v7894 = vld [vmem:[#allocation3 + $0xa8] sm:$0xff]
    %v7895 = vld [vmem:[#allocation3 + $0xb0] sm:$0xff]
    %v7896 = vld [vmem:[#allocation3 + $0xb8] sm:$0xff]
    %v7897 = vld [vmem:[#allocation3 + $0xc0] sm:$0xff]
    %v7898 = vld [vmem:[#allocation3 + $0xc8] sm:$0xff]
    %v7899 = vld [vmem:[#allocation3 + $0xd0] sm:$0xff]
    %v7900 = vld [vmem:[#allocation3 + $0xd8] sm:$0xff]
    %v7901 = vld [vmem:[#allocation3 + $0xe0] sm:$0xff]
    %v7902 = vld [vmem:[#allocation3 + $0xe8] sm:$0xff]
    %v7903 = vld [vmem:[#allocation3 + $0xf0] sm:$0xff]
    %v7904 = vld [vmem:[#allocation3 + $0xf8] sm:$0xff]
    %v7905 = vld [vmem:[#allocation3 + $0x100] sm:$0xff]
    %v7906 = vld [vmem:[#allocation3 + $0x108] sm:$0xff]
    %v7907 = vld [vmem:[#allocation3 + $0x110] sm:$0xff]
    %v7908 = vld [vmem:[#allocation3 + $0x118] sm:$0xff]
    %v7909 = vld [vmem:[#allocation3 + $0x120] sm:$0xff]
    %v7910 = vld [vmem:[#allocation3 + $0x128] sm:$0xff]
    %v7911 = vld [vmem:[#allocation3 + $0x130] sm:$0xff]
    %v7912 = vld [vmem:[#allocation3 + $0x138] sm:$0xff]
    %v7913 = vld [vmem:[#allocation3 + $0x140] sm:$0xff]
    %v7914 = vld [vmem:[#allocation3 + $0x148] sm:$0xff]
    %v7915 = vld [vmem:[#allocation3 + $0x150] sm:$0xff]
    %v7916 = vld [vmem:[#allocation3 + $0x158] sm:$0xff]
    %v7917 = vld [vmem:[#allocation3 + $0x160] sm:$0xff]
    %v7918 = vld [vmem:[#allocation3 + $0x168] sm:$0xff]
    %v7919 = vld [vmem:[#allocation3 + $0x170] sm:$0xff]
    %v7920 = vld [vmem:[#allocation3 + $0x178] sm:$0xff]
    %v7921 = vld [vmem:[#allocation3 + $0x180] sm:$0xff]
    %v7922 = vld [vmem:[#allocation3 + $0x188] sm:$0xff]
    %v7923 = vld [vmem:[#allocation3 + $0x190] sm:$0xff]
    %v7924 = vld [vmem:[#allocation3 + $0x198] sm:$0xff]
    %v7925 = vld [vmem:[#allocation3 + $0x1a0] sm:$0xff]
    %v7926 = vld [vmem:[#allocation3 + $0x1a8] sm:$0xff]
    %v7927 = vld [vmem:[#allocation3 + $0x1b0] sm:$0xff]
    %v7928 = vld [vmem:[#allocation3 + $0x1b8] sm:$0xff]
    %v7929 = vld [vmem:[#allocation3 + $0x1c0] sm:$0xff]
    %v7930 = vld [vmem:[#allocation3 + $0x1c8] sm:$0xff]
    %v7931 = vld [vmem:[#allocation3 + $0x1d0] sm:$0xff]
    %v7932 = vld [vmem:[#allocation3 + $0x1d8] sm:$0xff]
    %v7933 = vld [vmem:[#allocation3 + $0x1e0] sm:$0xff]
    %v7934 = vld [vmem:[#allocation3 + $0x1e8] sm:$0xff]
    %v7935 = vld [vmem:[#allocation3 + $0x1f0] sm:$0xff]
    %v7936 = vld [vmem:[#allocation3 + $0x1f8] sm:$0xff]
    %v7937 = vld [vmem:[#allocation3 + $0x200] sm:$0xff]
    %v7938 = vld [vmem:[#allocation3 + $0x208] sm:$0xff]
    %v7939 = vld [vmem:[#allocation3 + $0x210] sm:$0xff]
    %v7940 = vld [vmem:[#allocation3 + $0x218] sm:$0xff]
    %v7941 = vld [vmem:[#allocation3 + $0x220] sm:$0xff]
    %v7942 = vld [vmem:[#allocation3 + $0x228] sm:$0xff]
    %v7943 = vld [vmem:[#allocation3 + $0x230] sm:$0xff]
    %v7944 = vld [vmem:[#allocation3 + $0x238] sm:$0xff]
    %v7945 = vld [vmem:[#allocation3 + $0x240] sm:$0xff]
    %v7946 = vld [vmem:[#allocation3 + $0x248] sm:$0xff]
    %v7947 = vld [vmem:[#allocation3 + $0x250] sm:$0xff]
    %v7948 = vld [vmem:[#allocation3 + $0x258] sm:$0xff]
    %v7949 = vld [vmem:[#allocation3 + $0x260] sm:$0xff]
    %v7950 = vld [vmem:[#allocation3 + $0x268] sm:$0xff]
    %v7951 = vld [vmem:[#allocation3 + $0x270] sm:$0xff]
    %v7952 = vld [vmem:[#allocation3 + $0x278] sm:$0xff]
    %v7953 = vld [vmem:[#allocation3 + $0x280] sm:$0xff]
    %v7954 = vld [vmem:[#allocation3 + $0x288] sm:$0xff]
    %v7955 = vld [vmem:[#allocation3 + $0x290] sm:$0xff]
    %v7956 = vld [vmem:[#allocation3 + $0x298] sm:$0xff]
    %v7957 = vld [vmem:[#allocation3 + $0x2a0] sm:$0xff]
    %v7958 = vld [vmem:[#allocation3 + $0x2a8] sm:$0xff]
    %v7959 = vld [vmem:[#allocation3 + $0x2b0] sm:$0xff]
    %v7960 = vld [vmem:[#allocation3 + $0x2b8] sm:$0xff]
    %v7961 = vld [vmem:[#allocation3 + $0x2c0] sm:$0xff]
    %v7962 = vld [vmem:[#allocation3 + $0x2c8] sm:$0xff]
    %v7963 = vld [vmem:[#allocation3 + $0x2d0] sm:$0xff]
    %v7964 = vld [vmem:[#allocation3 + $0x2d8] sm:$0xff]
    %v7965 = vld [vmem:[#allocation3 + $0x2e0] sm:$0xff]
    %v7966 = vld [vmem:[#allocation3 + $0x2e8] sm:$0xff]
    %v7967 = vld [vmem:[#allocation3 + $0x2f0] sm:$0xff]
    %v7968 = vld [vmem:[#allocation3 + $0x2f8] sm:$0xff]
    %v7969 = vld [vmem:[#allocation3 + $0x300] sm:$0xff]
    %v7970 = vld [vmem:[#allocation3 + $0x308] sm:$0xff]
    %v7971 = vld [vmem:[#allocation3 + $0x310] sm:$0xff]
    %v7972 = vld [vmem:[#allocation3 + $0x318] sm:$0xff]
    %v7973 = vld [vmem:[#allocation3 + $0x320] sm:$0xff]
    %v7974 = vld [vmem:[#allocation3 + $0x328] sm:$0xff]
    %v7975 = vld [vmem:[#allocation3 + $0x330] sm:$0xff]
    %v7976 = vld [vmem:[#allocation3 + $0x338] sm:$0xff]
    %v7977 = vld [vmem:[#allocation3 + $0x340] sm:$0xff]
    %v7978 = vld [vmem:[#allocation3 + $0x348] sm:$0xff]
    %v7979 = vld [vmem:[#allocation3 + $0x350] sm:$0xff]
    %v7980 = vld [vmem:[#allocation3 + $0x358] sm:$0xff]
    %v7981 = vld [vmem:[#allocation3 + $0x360] sm:$0xff]
    %v7982 = vld [vmem:[#allocation3 + $0x368] sm:$0xff]
    %v7983 = vld [vmem:[#allocation3 + $0x370] sm:$0xff]
    %v7984 = vld [vmem:[#allocation3 + $0x378] sm:$0xff]
    %v7985 = vld [vmem:[#allocation3 + $0x380] sm:$0xff]
    %v7986 = vld [vmem:[#allocation3 + $0x388] sm:$0xff]
    %v7987 = vld [vmem:[#allocation3 + $0x390] sm:$0xff]
    %v7988 = vld [vmem:[#allocation3 + $0x398] sm:$0xff]
    %v7989 = vld [vmem:[#allocation3 + $0x3a0] sm:$0xff]
    %v7990 = vld [vmem:[#allocation3 + $0x3a8] sm:$0xff]
    %v7991 = vld [vmem:[#allocation3 + $0x3b0] sm:$0xff]
    %v7992 = vld [vmem:[#allocation3 + $0x3b8] sm:$0xff]
    %v7993 = vld [vmem:[#allocation3 + $0x3c0] sm:$0xff]
    %v7994 = vld [vmem:[#allocation3 + $0x3c8] sm:$0xff]
    %v7995 = vld [vmem:[#allocation3 + $0x3d0] sm:$0xff]
    %v7996 = vld [vmem:[#allocation3 + $0x3d8] sm:$0xff]
    %v7997 = vld [vmem:[#allocation3 + $0x3e0] sm:$0xff]
    %v7998 = vld [vmem:[#allocation3 + $0x3e8] sm:$0xff]
    %v7999 = vld [vmem:[#allocation3 + $0x3f0] sm:$0xff]
    %v8000 = vld [vmem:[#allocation3 + $0x3f8] sm:$0xff]
    %v8001 = vld [vmem:[#allocation3 + $0x400] sm:$0xff]
    %v8002 = vld [vmem:[#allocation3 + $0x408] sm:$0xff]
    %v8003 = vld [vmem:[#allocation3 + $0x410] sm:$0xff]
    %v8004 = vld [vmem:[#allocation3 + $0x418] sm:$0xff]
    %v8005 = vld [vmem:[#allocation3 + $0x420] sm:$0xff]
    %v8006 = vld [vmem:[#allocation3 + $0x428] sm:$0xff]
    %v8007 = vld [vmem:[#allocation3 + $0x430] sm:$0xff]
    %v8008 = vld [vmem:[#allocation3 + $0x438] sm:$0xff]
    %v8009 = vld [vmem:[#allocation3 + $0x440] sm:$0xff]
    %v8010 = vld [vmem:[#allocation3 + $0x448] sm:$0xff]
    %v8011 = vld [vmem:[#allocation3 + $0x450] sm:$0xff]
    %v8012 = vld [vmem:[#allocation3 + $0x458] sm:$0xff]
    %v8013 = vld [vmem:[#allocation3 + $0x460] sm:$0xff]
    %v8014 = vld [vmem:[#allocation3 + $0x468] sm:$0xff]
    %v8015 = vld [vmem:[#allocation3 + $0x470] sm:$0xff]
    %v8016 = vld [vmem:[#allocation3 + $0x478] sm:$0xff]
    %v8017 = vld [vmem:[#allocation3 + $0x480] sm:$0xff]
    %v8018 = vld [vmem:[#allocation3 + $0x488] sm:$0xff]
    %v8019 = vld [vmem:[#allocation3 + $0x490] sm:$0xff]
    %v8020 = vld [vmem:[#allocation3 + $0x498] sm:$0xff]
    %v8021 = vld [vmem:[#allocation3 + $0x4a0] sm:$0xff]
    %v8022 = vld [vmem:[#allocation3 + $0x4a8] sm:$0xff]
    %v8023 = vld [vmem:[#allocation3 + $0x4b0] sm:$0xff]
    %v8024 = vld [vmem:[#allocation3 + $0x4b8] sm:$0xff]
    %v8025 = vld [vmem:[#allocation3 + $0x4c0] sm:$0xff]
    %v8026 = vld [vmem:[#allocation3 + $0x4c8] sm:$0xff]
    %v8027 = vld [vmem:[#allocation3 + $0x4d0] sm:$0xff]
    %v8028 = vld [vmem:[#allocation3 + $0x4d8] sm:$0xff]
    %v8029 = vld [vmem:[#allocation3 + $0x4e0] sm:$0xff]
    %v8030 = vld [vmem:[#allocation3 + $0x4e8] sm:$0xff]
    %v8031 = vld [vmem:[#allocation3 + $0x4f0] sm:$0xff]
    %v8032 = vld [vmem:[#allocation3 + $0x4f8] sm:$0xff]
    %v8033 = vld [vmem:[#allocation3 + $0x500] sm:$0xff]
    %v8034 = vld [vmem:[#allocation3 + $0x508] sm:$0xff]
    %v8035 = vld [vmem:[#allocation3 + $0x510] sm:$0xff]
    %v8036 = vld [vmem:[#allocation3 + $0x518] sm:$0xff]
    %v8037 = vld [vmem:[#allocation3 + $0x520] sm:$0xff]
    %v8038 = vld [vmem:[#allocation3 + $0x528] sm:$0xff]
    %v8039 = vld [vmem:[#allocation3 + $0x530] sm:$0xff]
    %v8040 = vld [vmem:[#allocation3 + $0x538] sm:$0xff]
    %v8041 = vld [vmem:[#allocation3 + $0x540] sm:$0xff]
    %v8042 = vld [vmem:[#allocation3 + $0x548] sm:$0xff]
    %v8043 = vld [vmem:[#allocation3 + $0x550] sm:$0xff]
    %v8044 = vld [vmem:[#allocation3 + $0x558] sm:$0xff]
    %v8045 = vld [vmem:[#allocation3 + $0x560] sm:$0xff]
    %v8046 = vld [vmem:[#allocation3 + $0x568] sm:$0xff]
    %v8047 = vld [vmem:[#allocation3 + $0x570] sm:$0xff]
    %v8048 = vld [vmem:[#allocation3 + $0x578] sm:$0xff]
    %v8049 = vld [vmem:[#allocation3 + $0x580] sm:$0xff]
    %v8050 = vld [vmem:[#allocation3 + $0x588] sm:$0xff]
    %v8051 = vld [vmem:[#allocation3 + $0x590] sm:$0xff]
    %v8052 = vld [vmem:[#allocation3 + $0x598] sm:$0xff]
    %v8053 = vld [vmem:[#allocation3 + $0x5a0] sm:$0xff]
    %v8054 = vld [vmem:[#allocation3 + $0x5a8] sm:$0xff]
    %v8055 = vld [vmem:[#allocation3 + $0x5b0] sm:$0xff]
    %v8056 = vld [vmem:[#allocation3 + $0x5b8] sm:$0xff]
    %v8057 = vld [vmem:[#allocation3 + $0x5c0] sm:$0xff]
    %v8058 = vld [vmem:[#allocation3 + $0x5c8] sm:$0xff]
    %v8059 = vld [vmem:[#allocation3 + $0x5d0] sm:$0xff]
    %v8060 = vld [vmem:[#allocation3 + $0x5d8] sm:$0xff]
    %v8061 = vld [vmem:[#allocation3 + $0x5e0] sm:$0xff]
    %v8062 = vld [vmem:[#allocation3 + $0x5e8] sm:$0xff]
    %v8063 = vld [vmem:[#allocation3 + $0x5f0] sm:$0xff]
    %v8064 = vld [vmem:[#allocation3 + $0x5f8] sm:$0xff]
    %v8065 = vld [vmem:[#allocation3 + $0x600] sm:$0xff]
    %v8066 = vld [vmem:[#allocation3 + $0x608] sm:$0xff]
    %v8067 = vld [vmem:[#allocation3 + $0x610] sm:$0xff]
    %v8068 = vld [vmem:[#allocation3 + $0x618] sm:$0xff]
    %v8069 = vld [vmem:[#allocation3 + $0x620] sm:$0xff]
    %v8070 = vld [vmem:[#allocation3 + $0x628] sm:$0xff]
    %v8071 = vld [vmem:[#allocation3 + $0x630] sm:$0xff]
    %v8072 = vld [vmem:[#allocation3 + $0x638] sm:$0xff]
    %v8073 = vlaneseq
    %v8074 = vshrl.u32 %v8073, 7
    %v8075 = vsub.s32 2, %v8074
    %v8076 = vrot.slane %v905, %v8075
    %8077 = vmatprep.subr.bf16.mxu0 0
    %8078 = vmatpush1.bf16.msra.mxu0 %v7873
    %8079 = vmatprep.subr.bf16.mxu0 0
    %8080 = vmatpush1.bf16.msra.mxu0 %v7874
    %8081 = vmatprep.subr.bf16.mxu0 0
    %8082 = vmatpush1.bf16.msra.mxu0 %v7875
    %8083 = vmatprep.subr.bf16.mxu0 0
    %8084 = vmatpush1.bf16.msra.mxu0 %v7876
    %8085 = vmatprep.subr.bf16.mxu0 0
    %8086 = vmatpush1.bf16.msra.mxu0 %v7877
    %8087 = vmatprep.subr.bf16.mxu0 0
    %8088 = vmatpush1.bf16.msra.mxu0 %v7878
    %8089 = vmatprep.subr.bf16.mxu0 0
    %8090 = vmatpush1.bf16.msra.mxu0 %v7879
    %8091 = vmatprep.subr.bf16.mxu0 0
    %8092 = vmatpush1.bf16.msra.mxu0 %v7880
    %8093 = vmatprep.subr.bf16.mxu0 0
    %8094 = vmatpush1.bf16.msra.mxu0 %v7881
    %8095 = vmatprep.subr.bf16.mxu0 0
    %8096 = vmatpush1.bf16.msra.mxu0 %v7882
    %8097 = vmatprep.subr.bf16.mxu0 0
    %8098 = vmatpush1.bf16.msra.mxu0 %v7883
    %8099 = vmatprep.subr.bf16.mxu0 0
    %8100 = vmatpush1.bf16.msra.mxu0 %v7884
    %8101 = vmatprep.subr.bf16.mxu0 0
    %8102 = vmatpush1.bf16.msra.mxu0 %v7885
    %8103 = vmatprep.subr.bf16.mxu0 0
    %8104 = vmatpush1.bf16.msra.mxu0 %v7886
    %8105 = vmatprep.subr.bf16.mxu0 0
    %8106 = vmatpush1.bf16.msra.mxu0 %v7887
    %8107 = vmatprep.subr.bf16.mxu0 0
    %8108 = vmatpush1.bf16.msra.mxu0 %v7888
    %8109 = vmatprep.mubr.bf16.mxu0 %v7847
    %8110 = vmatmul.mubr.bf16.gmra.mrb[0].mxu0 %v7846
    %v8111 = vpop.f32.mrb[0].mxu0
    %v8112 = vadd.f32 %v8076, %v8111
    %v8113 = vpop.f32.mrb[0].mxu0
    %v8114 = vpop.f32.mrb[0].mxu0
    %v8115 = vpop.f32.mrb[0].mxu0
    %8116 = vdwg.mxu0
    %8117 = vmatprep.subr.bf16.mxu0 0
    %8118 = vmatpush1.bf16.msra.mxu0 %v7889
    %8119 = vmatprep.subr.bf16.mxu0 0
    %8120 = vmatpush1.bf16.msra.mxu0 %v7890
    %8121 = vmatprep.subr.bf16.mxu0 0
    %8122 = vmatpush1.bf16.msra.mxu0 %v7891
    %8123 = vmatprep.subr.bf16.mxu0 0
    %8124 = vmatpush1.bf16.msra.mxu0 %v7892
    %8125 = vmatprep.subr.bf16.mxu0 0
    %8126 = vmatpush1.bf16.msra.mxu0 %v7893
    %8127 = vmatprep.subr.bf16.mxu0 0
    %8128 = vmatpush1.bf16.msra.mxu0 %v7894
    %8129 = vmatprep.subr.bf16.mxu0 0
    %8130 = vmatpush1.bf16.msra.mxu0 %v7895
    %8131 = vmatprep.subr.bf16.mxu0 0
    %8132 = vmatpush1.bf16.msra.mxu0 %v7896
    %8133 = vmatprep.subr.bf16.mxu0 0
    %8134 = vmatpush1.bf16.msra.mxu0 %v7897
    %8135 = vmatprep.subr.bf16.mxu0 0
    %8136 = vmatpush1.bf16.msra.mxu0 %v7898
    %8137 = vmatprep.subr.bf16.mxu0 0
    %8138 = vmatpush1.bf16.msra.mxu0 %v7899
    %8139 = vmatprep.subr.bf16.mxu0 0
    %8140 = vmatpush1.bf16.msra.mxu0 %v7900
    %8141 = vmatprep.subr.bf16.mxu0 0
    %8142 = vmatpush1.bf16.msra.mxu0 %v7901
    %8143 = vmatprep.subr.bf16.mxu0 0
    %8144 = vmatpush1.bf16.msra.mxu0 %v7902
    %8145 = vmatprep.subr.bf16.mxu0 0
    %8146 = vmatpush1.bf16.msra.mxu0 %v7903
    %8147 = vmatprep.subr.bf16.mxu0 0
    %8148 = vmatpush1.bf16.msra.mxu0 %v7904
    %8149 = vmatprep.mubr.bf16.mxu0 %v7849
    %8150 = vmatmul.mubr.bf16.gmra.mrb[0].mxu0 %v7848
    %v8151 = vpop.f32.mrb[0].mxu0
    %v8152 = vadd.f32 %v8112, %v8151
    %v8153 = vpop.f32.mrb[0].mxu0
    %v8154 = vpop.f32.mrb[0].mxu0
    %v8155 = vpop.f32.mrb[0].mxu0
    %8156 = vdwg.mxu0
    %8157 = vmatprep.subr.bf16.mxu0 0
    %8158 = vmatpush1.bf16.msra.mxu0 %v7905
    %8159 = vmatprep.subr.bf16.mxu0 0
    %8160 = vmatpush1.bf16.msra.mxu0 %v7906
    %8161 = vmatprep.subr.bf16.mxu0 0
    %8162 = vmatpush1.bf16.msra.mxu0 %v7907
    %8163 = vmatprep.subr.bf16.mxu0 0
    %8164 = vmatpush1.bf16.msra.mxu0 %v7908
    %8165 = vmatprep.subr.bf16.mxu0 0
    %8166 = vmatpush1.bf16.msra.mxu0 %v7909
    %8167 = vmatprep.subr.bf16.mxu0 0
    %8168 = vmatpush1.bf16.msra.mxu0 %v7910
    %8169 = vmatprep.subr.bf16.mxu0 0
    %8170 = vmatpush1.bf16.msra.mxu0 %v7911
    %8171 = vmatprep.subr.bf16.mxu0 0
    %8172 = vmatpush1.bf16.msra.mxu0 %v7912
    %8173 = vmatprep.subr.bf16.mxu0 0
    %8174 = vmatpush1.bf16.msra.mxu0 %v7913
    %8175 = vmatprep.subr.bf16.mxu0 0
    %8176 = vmatpush1.bf16.msra.mxu0 %v7914
    %8177 = vmatprep.subr.bf16.mxu0 0
    %8178 = vmatpush1.bf16.msra.mxu0 %v7915
    %8179 = vmatprep.subr.bf16.mxu0 0
    %8180 = vmatpush1.bf16.msra.mxu0 %v7916
    %8181 = vmatprep.subr.bf16.mxu0 0
    %8182 = vmatpush1.bf16.msra.mxu0 %v7917
    %8183 = vmatprep.subr.bf16.mxu0 0
    %8184 = vmatpush1.bf16.msra.mxu0 %v7918
    %8185 = vmatprep.subr.bf16.mxu0 0
    %8186 = vmatpush1.bf16.msra.mxu0 %v7919
    %8187 = vmatprep.subr.bf16.mxu0 0
    %8188 = vmatpush1.bf16.msra.mxu0 %v7920
    %8189 = vmatprep.mubr.bf16.mxu0 %v7851
    %8190 = vmatmul.mubr.bf16.gmra.mrb[0].mxu0 %v7850
    %v8191 = vpop.f32.mrb[0].mxu0
    %v8192 = vadd.f32 %v8152, %v8191
    %v8193 = vpop.f32.mrb[0].mxu0
    %v8194 = vpop.f32.mrb[0].mxu0
    %v8195 = vpop.f32.mrb[0].mxu0
    %8196 = vdwg.mxu0
    %8197 = vmatprep.subr.bf16.mxu0 0
    %8198 = vmatpush1.bf16.msra.mxu0 %v7921
    %8199 = vmatprep.subr.bf16.mxu0 0
    %8200 = vmatpush1.bf16.msra.mxu0 %v7922
    %8201 = vmatprep.subr.bf16.mxu0 0
    %8202 = vmatpush1.bf16.msra.mxu0 %v7923
    %8203 = vmatprep.subr.bf16.mxu0 0
    %8204 = vmatpush1.bf16.msra.mxu0 %v7924
    %8205 = vmatprep.subr.bf16.mxu0 0
    %8206 = vmatpush1.bf16.msra.mxu0 %v7925
    %8207 = vmatprep.subr.bf16.mxu0 0
    %8208 = vmatpush1.bf16.msra.mxu0 %v7926
    %8209 = vmatprep.subr.bf16.mxu0 0
    %8210 = vmatpush1.bf16.msra.mxu0 %v7927
    %8211 = vmatprep.subr.bf16.mxu0 0
    %8212 = vmatpush1.bf16.msra.mxu0 %v7928
    %8213 = vmatprep.subr.bf16.mxu0 0
    %8214 = vmatpush1.bf16.msra.mxu0 %v7929
    %8215 = vmatprep.subr.bf16.mxu0 0
    %8216 = vmatpush1.bf16.msra.mxu0 %v7930
    %8217 = vmatprep.subr.bf16.mxu0 0
    %8218 = vmatpush1.bf16.msra.mxu0 %v7931
    %8219 = vmatprep.subr.bf16.mxu0 0
    %8220 = vmatpush1.bf16.msra.mxu0 %v7932
    %8221 = vmatprep.subr.bf16.mxu0 0
    %8222 = vmatpush1.bf16.msra.mxu0 %v7933
    %8223 = vmatprep.subr.bf16.mxu0 0
    %8224 = vmatpush1.bf16.msra.mxu0 %v7934
    %8225 = vmatprep.subr.bf16.mxu0 0
    %8226 = vmatpush1.bf16.msra.mxu0 %v7935
    %8227 = vmatprep.subr.bf16.mxu0 0
    %8228 = vmatpush1.bf16.msra.mxu0 %v7936
    %8229 = vmatprep.mubr.bf16.mxu0 %v7853
    %8230 = vmatmul.mubr.bf16.gmra.mrb[0].mxu0 %v7852
    %v8231 = vpop.f32.mrb[0].mxu0
    %v8232 = vadd.f32 %v8192, %v8231
    %v8233 = vpop.f32.mrb[0].mxu0
    %v8234 = vpop.f32.mrb[0].mxu0
    %v8235 = vpop.f32.mrb[0].mxu0
    %8236 = vdwg.mxu0
    %8237 = vmatprep.subr.bf16.mxu0 0
    %8238 = vmatpush1.bf16.msra.mxu0 %v7937
    %8239 = vmatprep.subr.bf16.mxu0 0
    %8240 = vmatpush1.bf16.msra.mxu0 %v7938
    %8241 = vmatprep.subr.bf16.mxu0 0
    %8242 = vmatpush1.bf16.msra.mxu0 %v7939
    %8243 = vmatprep.subr.bf16.mxu0 0
    %8244 = vmatpush1.bf16.msra.mxu0 %v7940
    %8245 = vmatprep.subr.bf16.mxu0 0
    %8246 = vmatpush1.bf16.msra.mxu0 %v7941
    %8247 = vmatprep.subr.bf16.mxu0 0
    %8248 = vmatpush1.bf16.msra.mxu0 %v7942
    %8249 = vmatprep.subr.bf16.mxu0 0
    %8250 = vmatpush1.bf16.msra.mxu0 %v7943
    %8251 = vmatprep.subr.bf16.mxu0 0
    %8252 = vmatpush1.bf16.msra.mxu0 %v7944
    %8253 = vmatprep.subr.bf16.mxu0 0
    %8254 = vmatpush1.bf16.msra.mxu0 %v7945
    %8255 = vmatprep.subr.bf16.mxu0 0
    %8256 = vmatpush1.bf16.msra.mxu0 %v7946
    %8257 = vmatprep.subr.bf16.mxu0 0
    %8258 = vmatpush1.bf16.msra.mxu0 %v7947
    %8259 = vmatprep.subr.bf16.mxu0 0
    %8260 = vmatpush1.bf16.msra.mxu0 %v7948
    %8261 = vmatprep.subr.bf16.mxu0 0
    %8262 = vmatpush1.bf16.msra.mxu0 %v7949
    %8263 = vmatprep.subr.bf16.mxu0 0
    %8264 = vmatpush1.bf16.msra.mxu0 %v7950
    %8265 = vmatprep.subr.bf16.mxu0 0
    %8266 = vmatpush1.bf16.msra.mxu0 %v7951
    %8267 = vmatprep.subr.bf16.mxu0 0
    %8268 = vmatpush1.bf16.msra.mxu0 %v7952
    %8269 = vmatprep.mubr.bf16.mxu0 %v7855
    %8270 = vmatmul.mubr.bf16.gmra.mrb[0].mxu0 %v7854
    %v8271 = vpop.f32.mrb[0].mxu0
    %v8272 = vadd.f32 %v8232, %v8271
    %v8273 = vpop.f32.mrb[0].mxu0
    %v8274 = vpop.f32.mrb[0].mxu0
    %v8275 = vpop.f32.mrb[0].mxu0
    %8276 = vdwg.mxu0
    %8277 = vmatprep.subr.bf16.mxu0 0
    %8278 = vmatpush1.bf16.msra.mxu0 %v7953
    %8279 = vmatprep.subr.bf16.mxu0 0
    %8280 = vmatpush1.bf16.msra.mxu0 %v7954
    %8281 = vmatprep.subr.bf16.mxu0 0
    %8282 = vmatpush1.bf16.msra.mxu0 %v7955
    %8283 = vmatprep.subr.bf16.mxu0 0
    %8284 = vmatpush1.bf16.msra.mxu0 %v7956
    %8285 = vmatprep.subr.bf16.mxu0 0
    %8286 = vmatpush1.bf16.msra.mxu0 %v7957
    %8287 = vmatprep.subr.bf16.mxu0 0
    %8288 = vmatpush1.bf16.msra.mxu0 %v7958
    %8289 = vmatprep.subr.bf16.mxu0 0
    %8290 = vmatpush1.bf16.msra.mxu0 %v7959
    %8291 = vmatprep.subr.bf16.mxu0 0
    %8292 = vmatpush1.bf16.msra.mxu0 %v7960
    %8293 = vmatprep.subr.bf16.mxu0 0
    %8294 = vmatpush1.bf16.msra.mxu0 %v7961
    %8295 = vmatprep.subr.bf16.mxu0 0
    %8296 = vmatpush1.bf16.msra.mxu0 %v7962
    %8297 = vmatprep.subr.bf16.mxu0 0
    %8298 = vmatpush1.bf16.msra.mxu0 %v7963
    %8299 = vmatprep.subr.bf16.mxu0 0
    %8300 = vmatpush1.bf16.msra.mxu0 %v7964
    %8301 = vmatprep.subr.bf16.mxu0 0
    %8302 = vmatpush1.bf16.msra.mxu0 %v7965
    %8303 = vmatprep.subr.bf16.mxu0 0
    %8304 = vmatpush1.bf16.msra.mxu0 %v7966
    %8305 = vmatprep.subr.bf16.mxu0 0
    %8306 = vmatpush1.bf16.msra.mxu0 %v7967
    %8307 = vmatprep.subr.bf16.mxu0 0
    %8308 = vmatpush1.bf16.msra.mxu0 %v7968
    %8309 = vmatprep.mubr.bf16.mxu0 %v7857
    %8310 = vmatmul.mubr.bf16.gmra.mrb[0].mxu0 %v7856
    %v8311 = vpop.f32.mrb[0].mxu0
    %v8312 = vadd.f32 %v8272, %v8311
    %v8313 = vpop.f32.mrb[0].mxu0
    %v8314 = vpop.f32.mrb[0].mxu0
    %v8315 = vpop.f32.mrb[0].mxu0
    %8316 = vdwg.mxu0
    %8317 = vmatprep.subr.bf16.mxu0 0
    %8318 = vmatpush1.bf16.msra.mxu0 %v7969
    %8319 = vmatprep.subr.bf16.mxu0 0
    %8320 = vmatpush1.bf16.msra.mxu0 %v7970
    %8321 = vmatprep.subr.bf16.mxu0 0
    %8322 = vmatpush1.bf16.msra.mxu0 %v7971
    %8323 = vmatprep.subr.bf16.mxu0 0
    %8324 = vmatpush1.bf16.msra.mxu0 %v7972
    %8325 = vmatprep.subr.bf16.mxu0 0
    %8326 = vmatpush1.bf16.msra.mxu0 %v7973
    %8327 = vmatprep.subr.bf16.mxu0 0
    %8328 = vmatpush1.bf16.msra.mxu0 %v7974
    %8329 = vmatprep.subr.bf16.mxu0 0
    %8330 = vmatpush1.bf16.msra.mxu0 %v7975
    %8331 = vmatprep.subr.bf16.mxu0 0
    %8332 = vmatpush1.bf16.msra.mxu0 %v7976
    %8333 = vmatprep.subr.bf16.mxu0 0
    %8334 = vmatpush1.bf16.msra.mxu0 %v7977
    %8335 = vmatprep.subr.bf16.mxu0 0
    %8336 = vmatpush1.bf16.msra.mxu0 %v7978
    %8337 = vmatprep.subr.bf16.mxu0 0
    %8338 = vmatpush1.bf16.msra.mxu0 %v7979
    %8339 = vmatprep.subr.bf16.mxu0 0
    %8340 = vmatpush1.bf16.msra.mxu0 %v7980
    %8341 = vmatprep.subr.bf16.mxu0 0
    %8342 = vmatpush1.bf16.msra.mxu0 %v7981
    %8343 = vmatprep.subr.bf16.mxu0 0
    %8344 = vmatpush1.bf16.msra.mxu0 %v7982
    %8345 = vmatprep.subr.bf16.mxu0 0
    %8346 = vmatpush1.bf16.msra.mxu0 %v7983
    %8347 = vmatprep.subr.bf16.mxu0 0
    %8348 = vmatpush1.bf16.msra.mxu0 %v7984
    %8349 = vmatprep.mubr.bf16.mxu0 %v7859
    %8350 = vmatmul.mubr.bf16.gmra.mrb[0].mxu0 %v7858
    %v8351 = vpop.f32.mrb[0].mxu0
    %v8352 = vadd.f32 %v8312, %v8351
    %v8353 = vpop.f32.mrb[0].mxu0
    %v8354 = vpop.f32.mrb[0].mxu0
    %v8355 = vpop.f32.mrb[0].mxu0
    %8356 = vdwg.mxu0
    %8357 = vmatprep.subr.bf16.mxu0 0
    %8358 = vmatpush1.bf16.msra.mxu0 %v7985
    %8359 = vmatprep.subr.bf16.mxu0 0
    %8360 = vmatpush1.bf16.msra.mxu0 %v7986
    %8361 = vmatprep.subr.bf16.mxu0 0
    %8362 = vmatpush1.bf16.msra.mxu0 %v7987
    %8363 = vmatprep.subr.bf16.mxu0 0
    %8364 = vmatpush1.bf16.msra.mxu0 %v7988
    %8365 = vmatprep.subr.bf16.mxu0 0
    %8366 = vmatpush1.bf16.msra.mxu0 %v7989
    %8367 = vmatprep.subr.bf16.mxu0 0
    %8368 = vmatpush1.bf16.msra.mxu0 %v7990
    %8369 = vmatprep.subr.bf16.mxu0 0
    %8370 = vmatpush1.bf16.msra.mxu0 %v7991
    %8371 = vmatprep.subr.bf16.mxu0 0
    %8372 = vmatpush1.bf16.msra.mxu0 %v7992
    %8373 = vmatprep.subr.bf16.mxu0 0
    %8374 = vmatpush1.bf16.msra.mxu0 %v7993
    %8375 = vmatprep.subr.bf16.mxu0 0
    %8376 = vmatpush1.bf16.msra.mxu0 %v7994
    %8377 = vmatprep.subr.bf16.mxu0 0
    %8378 = vmatpush1.bf16.msra.mxu0 %v7995
    %8379 = vmatprep.subr.bf16.mxu0 0
    %8380 = vmatpush1.bf16.msra.mxu0 %v7996
    %8381 = vmatprep.subr.bf16.mxu0 0
    %8382 = vmatpush1.bf16.msra.mxu0 %v7997
    %8383 = vmatprep.subr.bf16.mxu0 0
    %8384 = vmatpush1.bf16.msra.mxu0 %v7998
    %8385 = vmatprep.subr.bf16.mxu0 0
    %8386 = vmatpush1.bf16.msra.mxu0 %v7999
    %8387 = vmatprep.subr.bf16.mxu0 0
    %8388 = vmatpush1.bf16.msra.mxu0 %v8000
    %8389 = vmatprep.mubr.bf16.mxu0 %v7861
    %8390 = vmatmul.mubr.bf16.gmra.mrb[0].mxu0 %v7860
    %v8391 = vpop.f32.mrb[0].mxu0
    %v8392 = vadd.f32 %v8352, %v8391
    %v8393 = vpop.f32.mrb[0].mxu0
    %v8394 = vpop.f32.mrb[0].mxu0
    %v8395 = vpop.f32.mrb[0].mxu0
    %8396 = vdwg.mxu0
    %8397 = vmatprep.subr.bf16.mxu0 0
    %8398 = vmatpush1.bf16.msra.mxu0 %v8001
    %8399 = vmatprep.subr.bf16.mxu0 0
    %8400 = vmatpush1.bf16.msra.mxu0 %v8002
    %8401 = vmatprep.subr.bf16.mxu0 0
    %8402 = vmatpush1.bf16.msra.mxu0 %v8003
    %8403 = vmatprep.subr.bf16.mxu0 0
    %8404 = vmatpush1.bf16.msra.mxu0 %v8004
    %8405 = vmatprep.subr.bf16.mxu0 0
    %8406 = vmatpush1.bf16.msra.mxu0 %v8005
    %8407 = vmatprep.subr.bf16.mxu0 0
    %8408 = vmatpush1.bf16.msra.mxu0 %v8006
    %8409 = vmatprep.subr.bf16.mxu0 0
    %8410 = vmatpush1.bf16.msra.mxu0 %v8007
    %8411 = vmatprep.subr.bf16.mxu0 0
    %8412 = vmatpush1.bf16.msra.mxu0 %v8008
    %8413 = vmatprep.subr.bf16.mxu0 0
    %8414 = vmatpush1.bf16.msra.mxu0 %v8009
    %8415 = vmatprep.subr.bf16.mxu0 0
    %8416 = vmatpush1.bf16.msra.mxu0 %v8010
    %8417 = vmatprep.subr.bf16.mxu0 0
    %8418 = vmatpush1.bf16.msra.mxu0 %v8011
    %8419 = vmatprep.subr.bf16.mxu0 0
    %8420 = vmatpush1.bf16.msra.mxu0 %v8012
    %8421 = vmatprep.subr.bf16.mxu0 0
    %8422 = vmatpush1.bf16.msra.mxu0 %v8013
    %8423 = vmatprep.subr.bf16.mxu0 0
    %8424 = vmatpush1.bf16.msra.mxu0 %v8014
    %8425 = vmatprep.subr.bf16.mxu0 0
    %8426 = vmatpush1.bf16.msra.mxu0 %v8015
    %8427 = vmatprep.subr.bf16.mxu0 0
    %8428 = vmatpush1.bf16.msra.mxu0 %v8016
    %8429 = vmatprep.mubr.bf16.mxu0 %v7863
    %8430 = vmatmul.mubr.bf16.gmra.mrb[0].mxu0 %v7862
    %v8431 = vpop.f32.mrb[0].mxu0
    %v8432 = vadd.f32 %v8392, %v8431
    %v8433 = vpop.f32.mrb[0].mxu0
    %v8434 = vpop.f32.mrb[0].mxu0
    %v8435 = vpop.f32.mrb[0].mxu0
    %8436 = vdwg.mxu0
    %8437 = vmatprep.subr.bf16.mxu0 0
    %8438 = vmatpush1.bf16.msra.mxu0 %v8017
    %8439 = vmatprep.subr.bf16.mxu0 0
    %8440 = vmatpush1.bf16.msra.mxu0 %v8018
    %8441 = vmatprep.subr.bf16.mxu0 0
    %8442 = vmatpush1.bf16.msra.mxu0 %v8019
    %8443 = vmatprep.subr.bf16.mxu0 0
    %8444 = vmatpush1.bf16.msra.mxu0 %v8020
    %8445 = vmatprep.subr.bf16.mxu0 0
    %8446 = vmatpush1.bf16.msra.mxu0 %v8021
    %8447 = vmatprep.subr.bf16.mxu0 0
    %8448 = vmatpush1.bf16.msra.mxu0 %v8022
    %8449 = vmatprep.subr.bf16.mxu0 0
    %8450 = vmatpush1.bf16.msra.mxu0 %v8023
    %8451 = vmatprep.subr.bf16.mxu0 0
    %8452 = vmatpush1.bf16.msra.mxu0 %v8024
    %8453 = vmatprep.subr.bf16.mxu0 0
    %8454 = vmatpush1.bf16.msra.mxu0 %v8025
    %8455 = vmatprep.subr.bf16.mxu0 0
    %8456 = vmatpush1.bf16.msra.mxu0 %v8026
    %8457 = vmatprep.subr.bf16.mxu0 0
    %8458 = vmatpush1.bf16.msra.mxu0 %v8027
    %8459 = vmatprep.subr.bf16.mxu0 0
    %8460 = vmatpush1.bf16.msra.mxu0 %v8028
    %8461 = vmatprep.subr.bf16.mxu0 0
    %8462 = vmatpush1.bf16.msra.mxu0 %v8029
    %8463 = vmatprep.subr.bf16.mxu0 0
    %8464 = vmatpush1.bf16.msra.mxu0 %v8030
    %8465 = vmatprep.subr.bf16.mxu0 0
    %8466 = vmatpush1.bf16.msra.mxu0 %v8031
    %8467 = vmatprep.subr.bf16.mxu0 0
    %8468 = vmatpush1.bf16.msra.mxu0 %v8032
    %8469 = vmatprep.mubr.bf16.mxu0 %v7865
    %8470 = vmatmul.mubr.bf16.gmra.mrb[0].mxu0 %v7864
    %v8471 = vpop.f32.mrb[0].mxu0
    %v8472 = vadd.f32 %v8432, %v8471
    %v8473 = vpop.f32.mrb[0].mxu0
    %v8474 = vpop.f32.mrb[0].mxu0
    %v8475 = vpop.f32.mrb[0].mxu0
    %8476 = vdwg.mxu0
    %8477 = vmatprep.subr.bf16.mxu0 0
    %8478 = vmatpush1.bf16.msra.mxu0 %v8033
    %8479 = vmatprep.subr.bf16.mxu0 0
    %8480 = vmatpush1.bf16.msra.mxu0 %v8034
    %8481 = vmatprep.subr.bf16.mxu0 0
    %8482 = vmatpush1.bf16.msra.mxu0 %v8035
    %8483 = vmatprep.subr.bf16.mxu0 0
    %8484 = vmatpush1.bf16.msra.mxu0 %v8036
    %8485 = vmatprep.subr.bf16.mxu0 0
    %8486 = vmatpush1.bf16.msra.mxu0 %v8037
    %8487 = vmatprep.subr.bf16.mxu0 0
    %8488 = vmatpush1.bf16.msra.mxu0 %v8038
    %8489 = vmatprep.subr.bf16.mxu0 0
    %8490 = vmatpush1.bf16.msra.mxu0 %v8039
    %8491 = vmatprep.subr.bf16.mxu0 0
    %8492 = vmatpush1.bf16.msra.mxu0 %v8040
    %8493 = vmatprep.subr.bf16.mxu0 0
    %8494 = vmatpush1.bf16.msra.mxu0 %v8041
    %8495 = vmatprep.subr.bf16.mxu0 0
    %8496 = vmatpush1.bf16.msra.mxu0 %v8042
    %8497 = vmatprep.subr.bf16.mxu0 0
    %8498 = vmatpush1.bf16.msra.mxu0 %v8043
    %8499 = vmatprep.subr.bf16.mxu0 0
    %8500 = vmatpush1.bf16.msra.mxu0 %v8044
    %8501 = vmatprep.subr.bf16.mxu0 0
    %8502 = vmatpush1.bf16.msra.mxu0 %v8045
    %8503 = vmatprep.subr.bf16.mxu0 0
    %8504 = vmatpush1.bf16.msra.mxu0 %v8046
    %8505 = vmatprep.subr.bf16.mxu0 0
    %8506 = vmatpush1.bf16.msra.mxu0 %v8047
    %8507 = vmatprep.subr.bf16.mxu0 0
    %8508 = vmatpush1.bf16.msra.mxu0 %v8048
    %8509 = vmatprep.mubr.bf16.mxu0 %v7867
    %8510 = vmatmul.mubr.bf16.gmra.mrb[0].mxu0 %v7866
    %v8511 = vpop.f32.mrb[0].mxu0
    %v8512 = vadd.f32 %v8472, %v8511
    %v8513 = vpop.f32.mrb[0].mxu0
    %v8514 = vpop.f32.mrb[0].mxu0
    %v8515 = vpop.f32.mrb[0].mxu0
    %8516 = vdwg.mxu0
    %8517 = vmatprep.subr.bf16.mxu0 0
    %8518 = vmatpush1.bf16.msra.mxu0 %v8049
    %8519 = vmatprep.subr.bf16.mxu0 0
    %8520 = vmatpush1.bf16.msra.mxu0 %v8050
    %8521 = vmatprep.subr.bf16.mxu0 0
    %8522 = vmatpush1.bf16.msra.mxu0 %v8051
    %8523 = vmatprep.subr.bf16.mxu0 0
    %8524 = vmatpush1.bf16.msra.mxu0 %v8052
    %8525 = vmatprep.subr.bf16.mxu0 0
    %8526 = vmatpush1.bf16.msra.mxu0 %v8053
    %8527 = vmatprep.subr.bf16.mxu0 0
    %8528 = vmatpush1.bf16.msra.mxu0 %v8054
    %8529 = vmatprep.subr.bf16.mxu0 0
    %8530 = vmatpush1.bf16.msra.mxu0 %v8055
    %8531 = vmatprep.subr.bf16.mxu0 0
    %8532 = vmatpush1.bf16.msra.mxu0 %v8056
    %8533 = vmatprep.subr.bf16.mxu0 0
    %8534 = vmatpush1.bf16.msra.mxu0 %v8057
    %8535 = vmatprep.subr.bf16.mxu0 0
    %8536 = vmatpush1.bf16.msra.mxu0 %v8058
    %8537 = vmatprep.subr.bf16.mxu0 0
    %8538 = vmatpush1.bf16.msra.mxu0 %v8059
    %8539 = vmatprep.subr.bf16.mxu0 0
    %8540 = vmatpush1.bf16.msra.mxu0 %v8060
    %8541 = vmatprep.subr.bf16.mxu0 0
    %8542 = vmatpush1.bf16.msra.mxu0 %v8061
    %8543 = vmatprep.subr.bf16.mxu0 0
    %8544 = vmatpush1.bf16.msra.mxu0 %v8062
    %8545 = vmatprep.subr.bf16.mxu0 0
    %8546 = vmatpush1.bf16.msra.mxu0 %v8063
    %8547 = vmatprep.subr.bf16.mxu0 0
    %8548 = vmatpush1.bf16.msra.mxu0 %v8064
    %8549 = vmatprep.mubr.bf16.mxu0 %v7869
    %8550 = vmatmul.mubr.bf16.gmra.mrb[0].mxu0 %v7868
    %v8551 = vpop.f32.mrb[0].mxu0
    %v8552 = vadd.f32 %v8512, %v8551
    %v8553 = vpop.f32.mrb[0].mxu0
    %v8554 = vpop.f32.mrb[0].mxu0
    %v8555 = vpop.f32.mrb[0].mxu0
    %8556 = vdwg.mxu0
    %8557 = vmatprep.subr.bf16.mxu0 0
    %8558 = vmatpush1.bf16.msra.mxu0 %v8065
    %8559 = vmatprep.subr.bf16.mxu0 0
    %8560 = vmatpush1.bf16.msra.mxu0 %v8066
    %8561 = vmatprep.subr.bf16.mxu0 0
    %8562 = vmatpush1.bf16.msra.mxu0 %v8067
    %8563 = vmatprep.subr.bf16.mxu0 0
    %8564 = vmatpush1.bf16.msra.mxu0 %v8068
    %8565 = vmatprep.subr.bf16.mxu0 0
    %8566 = vmatpush1.bf16.msra.mxu0 %v8069
    %8567 = vmatprep.subr.bf16.mxu0 0
    %8568 = vmatpush1.bf16.msra.mxu0 %v8070
    %8569 = vmatprep.subr.bf16.mxu0 0
    %8570 = vmatpush1.bf16.msra.mxu0 %v8071
    %8571 = vmatprep.subr.bf16.mxu0 0
    %8572 = vmatpush1.bf16.msra.mxu0 %v8072
    %8573 = vmatprep.subr.bf16.mxu0 0
    %8574 = vmatpush1.bf16.msra.mxu0 0
    %8575 = vmatprep.subr.bf16.mxu0 0
    %8576 = vmatpush1.bf16.msra.mxu0 0
    %8577 = vmatprep.subr.bf16.mxu0 0
    %8578 = vmatpush1.bf16.msra.mxu0 0
    %8579 = vmatprep.subr.bf16.mxu0 0
    %8580 = vmatpush1.bf16.msra.mxu0 0
    %8581 = vmatprep.subr.bf16.mxu0 0
    %8582 = vmatpush1.bf16.msra.mxu0 0
    %8583 = vmatprep.subr.bf16.mxu0 0
    %8584 = vmatpush1.bf16.msra.mxu0 0
    %8585 = vmatprep.subr.bf16.mxu0 0
    %8586 = vmatpush1.bf16.msra.mxu0 0
    %8587 = vmatprep.subr.bf16.mxu0 0
    %8588 = vmatpush1.bf16.msra.mxu0 0
    %8589 = vmatprep.mubr.bf16.mxu0 0
    %8590 = vmatmul.mubr.bf16.gmra.mrb[0].mxu0 %v7870
    %v8591 = vpop.f32.mrb[0].mxu0
    %v8592 = vadd.f32 %v8552, %v8591
    %v8593 = vpop.f32.mrb[0].mxu0
    %v8594 = vpop.f32.mrb[0].mxu0
    %v8595 = vpop.f32.mrb[0].mxu0
    %8596 = vdwg.mxu0
    %v8597 = vmax.f32 %v8592, 0.0
    %v8598 = vpack.c.bf16 %v8597, %v8597
    %v8599 = vld [vmem:[%s4] sm:$0xf]
    %v8600 = vld [vmem:[%s4 + $0x4] sm:$0xf]
    %v8601 = vld [vmem:[%s4 + $0x8] sm:$0xf]
    %v8602 = vld [vmem:[%s4 + $0xc] sm:$0xf]
    %v8603 = vld [vmem:[%s4 + $0x10] sm:$0xf]
    %v8604 = vld [vmem:[%s4 + $0x14] sm:$0xf]
    %v8605 = vld [vmem:[%s4 + $0x18] sm:$0xf]
    %v8606 = vld [vmem:[%s4 + $0x1c] sm:$0xf]
    %v8607 = vld [vmem:[%s4 + $0x20] sm:$0xf]
    %v8608 = vld [vmem:[%s4 + $0x24] sm:$0xf]
    %v8609 = vld [vmem:[%s4 + $0x28] sm:$0xf]
    %v8610 = vld [vmem:[%s4 + $0x2c] sm:$0xf]
    %v8611 = vld [vmem:[%s4 + $0x30] sm:$0xf]
    %v8612 = vld [vmem:[%s4 + $0x34] sm:$0xf]
    %v8613 = vld [vmem:[%s4 + $0x38] sm:$0xf]
    %v8614 = vld [vmem:[%s4 + $0x3c] sm:$0xf]
    %v8615 = vlaneseq
    %v8616 = vshrl.u32 %v8615, 7
    %v8617 = vsub.s32 3, %v8616
    %v8618 = vrot.slane %v905, %v8617
    %v8635 = vunpack.c.l.b16 %v8599
    %v8636 = vunpack.c.l.b16 %v8600
    %v8637 = vunpack.c.l.b16 %v8601
    %v8638 = vunpack.c.l.b16 %v8602
    %v8639 = vunpack.c.l.b16 %v8603
    %v8640 = vunpack.c.l.b16 %v8604
    %v8641 = vunpack.c.l.b16 %v8605
    %v8642 = vunpack.c.l.b16 %v8606
    %v8643 = vunpack.c.l.b16 %v8607
    %v8644 = vunpack.c.l.b16 %v8608
    %v8645 = vunpack.c.l.b16 %v8609
    %v8646 = vunpack.c.l.b16 %v8610
    %v8647 = vunpack.c.l.b16 %v8611
    %v8648 = vunpack.c.l.b16 %v8612
    %v8649 = vunpack.c.l.b16 %v8613
    %v8650 = vunpack.c.l.b16 %v8614
    %v8651 = vpack.c.b16 %v8636, %v8635
    %v8652 = vpack.c.b16 %v8638, %v8637
    %v8653 = vpack.c.b16 %v8640, %v8639
    %v8654 = vpack.c.b16 %v8642, %v8641
    %v8655 = vpack.c.b16 %v8644, %v8643
    %v8656 = vpack.c.b16 %v8646, %v8645
    %v8657 = vpack.c.b16 %v8648, %v8647
    %v8658 = vpack.c.b16 %v8650, %v8649
    %8667 = vmatprep.subr.bf16.mxu0 0
    %8668 = vmatpush1.bf16.msra.mxu0 %v8651
    %8669 = vmatprep.subr.bf16.mxu0 0
    %8670 = vmatpush1.bf16.msra.mxu0 %v8652
    %8671 = vmatprep.subr.bf16.mxu0 0
    %8672 = vmatpush1.bf16.msra.mxu0 %v8653
    %8673 = vmatprep.subr.bf16.mxu0 0
    %8674 = vmatpush1.bf16.msra.mxu0 %v8654
    %8675 = vmatprep.subr.bf16.mxu0 0
    %8676 = vmatpush1.bf16.msra.mxu0 %v8655
    %8677 = vmatprep.subr.bf16.mxu0 0
    %8678 = vmatpush1.bf16.msra.mxu0 %v8656
    %8679 = vmatprep.subr.bf16.mxu0 0
    %8680 = vmatpush1.bf16.msra.mxu0 %v8657
    %8681 = vmatprep.subr.bf16.mxu0 0
    %8682 = vmatpush1.bf16.msra.mxu0 %v8658
    %8683 = vmatprep.subr.bf16.mxu0 0
    %8684 = vmatpush1.bf16.msra.mxu0 0
    %8685 = vmatprep.subr.bf16.mxu0 0
    %8686 = vmatpush1.bf16.msra.mxu0 0
    %8687 = vmatprep.subr.bf16.mxu0 0
    %8688 = vmatpush1.bf16.msra.mxu0 0
    %8689 = vmatprep.subr.bf16.mxu0 0
    %8690 = vmatpush1.bf16.msra.mxu0 0
    %8691 = vmatprep.subr.bf16.mxu0 0
    %8692 = vmatpush1.bf16.msra.mxu0 0
    %8693 = vmatprep.subr.bf16.mxu0 0
    %8694 = vmatpush1.bf16.msra.mxu0 0
    %8695 = vmatprep.subr.bf16.mxu0 0
    %8696 = vmatpush1.bf16.msra.mxu0 0
    %8697 = vmatprep.subr.bf16.mxu0 0
    %8698 = vmatpush1.bf16.msra.mxu0 0
    %8699 = vmatprep.mubr.bf16.mxu0 0
    %8700 = vmatmul.mubr.bf16.gmra.mrb[0].mxu0 %v8598
    %v8701 = vpop.f32.mrb[0].mxu0
    %v8702 = vadd.f32 %v8618, %v8701
    %v8703 = vpop.f32.mrb[0].mxu0
    %v8704 = vpop.f32.mrb[0].mxu0
    %v8705 = vpop.f32.mrb[0].mxu0
    %8706 = vdwg.mxu0
    %v8707 = vmax.f32 %v8702, 0.0
    %v8708 = vpack.c.bf16 %v8707, %v8707
    %v8709 = vld [vmem:[%s5] sm:$0xf]
    %v8710 = vld [vmem:[%s5 + $0x4] sm:$0xf]
    %v8711 = vld [vmem:[%s5 + $0x8] sm:$0xf]
    %v8712 = vld [vmem:[%s5 + $0xc] sm:$0xf]
    %v8713 = vld [vmem:[%s5 + $0x10] sm:$0xf]
    %v8714 = vld [vmem:[%s5 + $0x14] sm:$0xf]
    %v8715 = vld [vmem:[%s5 + $0x18] sm:$0xf]
    %v8716 = vld [vmem:[%s5 + $0x1c] sm:$0xf]
    %v8717 = vld [vmem:[%s5 + $0x20] sm:$0xf]
    %v8718 = vld [vmem:[%s5 + $0x24] sm:$0xf]
    %v8719 = vld [vmem:[%s5 + $0x28] sm:$0xf]
    %v8720 = vld [vmem:[%s5 + $0x2c] sm:$0xf]
    %v8721 = vld [vmem:[%s5 + $0x30] sm:$0xf]
    %v8722 = vld [vmem:[%s5 + $0x34] sm:$0xf]
    %v8723 = vld [vmem:[%s5 + $0x38] sm:$0xf]
    %v8724 = vld [vmem:[%s5 + $0x3c] sm:$0xf]
    %v8725 = vlaneseq
    %v8726 = vshrl.u32 %v8725, 7
    %v8727 = vsub.s32 4, %v8726
    %v8728 = vrot.slane %v905, %v8727
    %v8745 = vunpack.c.l.b16 %v8709
    %v8746 = vunpack.c.l.b16 %v8710
    %v8747 = vunpack.c.l.b16 %v8711
    %v8748 = vunpack.c.l.b16 %v8712
    %v8749 = vunpack.c.l.b16 %v8713
    %v8750 = vunpack.c.l.b16 %v8714
    %v8751 = vunpack.c.l.b16 %v8715
    %v8752 = vunpack.c.l.b16 %v8716
    %v8753 = vunpack.c.l.b16 %v8717
    %v8754 = vunpack.c.l.b16 %v8718
    %v8755 = vunpack.c.l.b16 %v8719
    %v8756 = vunpack.c.l.b16 %v8720
    %v8757 = vunpack.c.l.b16 %v8721
    %v8758 = vunpack.c.l.b16 %v8722
    %v8759 = vunpack.c.l.b16 %v8723
    %v8760 = vunpack.c.l.b16 %v8724
    %v8761 = vpack.c.b16 %v8746, %v8745
    %v8762 = vpack.c.b16 %v8748, %v8747
    %v8763 = vpack.c.b16 %v8750, %v8749
    %v8764 = vpack.c.b16 %v8752, %v8751
    %v8765 = vpack.c.b16 %v8754, %v8753
    %v8766 = vpack.c.b16 %v8756, %v8755
    %v8767 = vpack.c.b16 %v8758, %v8757
    %v8768 = vpack.c.b16 %v8760, %v8759
    %8777 = vmatprep.subr.bf16.mxu0 0
    %8778 = vmatpush1.bf16.msra.mxu0 %v8761
    %8779 = vmatprep.subr.bf16.mxu0 0
    %8780 = vmatpush1.bf16.msra.mxu0 %v8762
    %8781 = vmatprep.subr.bf16.mxu0 0
    %8782 = vmatpush1.bf16.msra.mxu0 %v8763
    %8783 = vmatprep.subr.bf16.mxu0 0
    %8784 = vmatpush1.bf16.msra.mxu0 %v8764
    %8785 = vmatprep.subr.bf16.mxu0 0
    %8786 = vmatpush1.bf16.msra.mxu0 %v8765
    %8787 = vmatprep.subr.bf16.mxu0 0
    %8788 = vmatpush1.bf16.msra.mxu0 %v8766
    %8789 = vmatprep.subr.bf16.mxu0 0
    %8790 = vmatpush1.bf16.msra.mxu0 %v8767
    %8791 = vmatprep.subr.bf16.mxu0 0
    %8792 = vmatpush1.bf16.msra.mxu0 %v8768
    %8793 = vmatprep.subr.bf16.mxu0 0
    %8794 = vmatpush1.bf16.msra.mxu0 0
    %8795 = vmatprep.subr.bf16.mxu0 0
    %8796 = vmatpush1.bf16.msra.mxu0 0
    %8797 = vmatprep.subr.bf16.mxu0 0
    %8798 = vmatpush1.bf16.msra.mxu0 0
    %8799 = vmatprep.subr.bf16.mxu0 0
    %8800 = vmatpush1.bf16.msra.mxu0 0
    %8801 = vmatprep.subr.bf16.mxu0 0
    %8802 = vmatpush1.bf16.msra.mxu0 0
    %8803 = vmatprep.subr.bf16.mxu0 0
    %8804 = vmatpush1.bf16.msra.mxu0 0
    %8805 = vmatprep.subr.bf16.mxu0 0
    %8806 = vmatpush1.bf16.msra.mxu0 0
    %8807 = vmatprep.subr.bf16.mxu0 0
    %8808 = vmatpush1.bf16.msra.mxu0 0
    %8809 = vmatprep.mubr.bf16.mxu0 0
    %8810 = vmatmul.mubr.bf16.gmra.mrb[0].mxu0 %v8708
    %v8811 = vpop.f32.mrb[0].mxu0
    %v8812 = vadd.f32 %v8728, %v8811
    %v8813 = vpop.f32.mrb[0].mxu0
    %v8814 = vpop.f32.mrb[0].mxu0
    %v8815 = vpop.f32.mrb[0].mxu0
    %8816 = vdwg.mxu0
    %8817 = vst [vmem:[#allocation5] sm:$0x3] %v8812
    // Predicated region
    $region90: #{_lenet_forward.1} parent=1 // pred_check
      _
    $region91: #{_lenet_forward.1} parent=1 // pred_check_branch
      %8819 = sbr.rel (0) target = $region93
    $region92: #{_lenet_forward.1} parent=1 // pred_region
      %s8821 = ssub.s32 32, 32
      %8822 = vsyncadd [#allocation6], %s8821
      %s8824 = sshll.u32 [#allocation5], 4
      %s8825 = int_to_ptr.vmem [resolvable:$true] %s8824
      %8827 = dma.vmem_to_hbm [thread:$0]  %s8825, 32, %s7, [#allocation6]
    $region93: #{_lenet_forward.1} parent=1 // pred_fallthru
      _
    // Predicated region
    $region94: #{_lenet_forward.1} parent=1 // pred_check
      _
    $region95: #{_lenet_forward.1} parent=1 // pred_check_branch
      %8829 = sbr.rel (0) target = $region97
    $region96: #{_lenet_forward.1} parent=1 // pred_region
      %8830 = dma.done [#allocation6], 32
    $region97: #{_lenet_forward.1} parent=1 // pred_fallthru
      _
    %8831 = vsyncpa [#allocation6], 1
  %8832 = vsyncmov [#allocation4]
  %s8833 = vpop.sfrf %8832
  %p8834 = scmp.eq.s32.totalorder %s8833, 0
  %p8835 = pneg %p8834
  %8837 = shalt.err (%p8835)
  %s8838 = scalar_lea.sflag [#allocation4], 1
  %8839 = vsyncmov %s8838
  %s8840 = vpop.sfrf %8839
  %p8841 = scmp.eq.s32.totalorder %s8840, 0
  %p8842 = pneg %p8841
  %8844 = shalt.err (%p8842)

</llo_original>
